<compile_context>
chip_gen: v7x
topology: tpu7x:2x2x1
jax: 0.10.0
libtpu: 0.0.40
codegen_flags: <defaults>
</compile_context>

<pallas_src>
import jax
import jax.numpy as jnp
from jax import lax
from jax.experimental import pallas as pl
from jax.experimental.pallas import tpu as pltpu

# Module hyper-parameters.
C_IN, C_OUT = 3, 32
K, STRIDE, PAD = 5, 2, 1
POOL_K, POOL_PAD = 3, 1
MIN_V, MAX_V = 0.0, 6.4      # python floats (safe to bake into the kernel)
NEG = -1.0e30                # python float "-inf" sentinel for masked lanes


def _round_up(v, m):
    return (v + m - 1) // m * m


def model_forward(x, w_t, bias):
    """relu -> ConvTranspose2d(3,32,5,stride=2,pad=1) -> MaxPool2d(3,1,1) -> clamp."""
    B, cin, H, W = x.shape
    assert cin == C_IN
    f32 = jnp.float32
    x = x.astype(f32)

    # ---------------- geometry (all Python ints) ----------------
    HD, WD = (H - 1) * STRIDE + 1, (W - 1) * STRIDE + 1      # dilated input
    PEXT = K - 1 - PAD                                       # extra zero padding
    HP, WP = HD + 2 * PEXT, WD + 2 * PEXT                    # padded dilated input
    HO = (H - 1) * STRIDE - 2 * PAD + K                      # conv output height
    WO = (W - 1) * STRIDE - 2 * PAD + K                      # conv output width
    NPG = (HO - 1) * WP + WO        # flat "grid-domain" extent (row stride = WP)
    KT = K * K * C_IN               # 75 conv taps
    KTP = _round_up(KT + 1, 8)      # 80: 75 taps + 1 bias row + sublane padding
    G = WP + 3                      # left guard lanes (>= WP+1) for the pool shifts
    NOUT = _round_up(NPG, 128)      # lane-dense output width per (b, co)
    NW = _round_up(G + NOUT + WP + 1, 128)        # working width inside the kernel
    XOFF = G                        # where the real data starts inside xin
    XLEN = _round_up(XOFF + (K - 1) * (WP + 1) + NW, 128)    # padded flat input len

    # ------------- XLA-side glue (tiny): relu + dilation + flat padding -------------
    xr = jnp.maximum(x, 0.0)                                  # relu (dilation zeros are relu-invariant)
    xd = jnp.zeros((B, C_IN, HP, WP), f32)
    xd = xd.at[:, :, PEXT:PEXT + HD:STRIDE, PEXT:PEXT + WD:STRIDE].set(xr)
    xin = jnp.zeros((B, C_IN, XLEN), f32)
    xin = xin.at[:, :, XOFF:XOFF + HP * WP].set(xd.reshape(B, C_IN, HP * WP))

    # ConvTranspose weight (C_IN, C_OUT, K, K) -> direct-conv matrix [co, (kh,kw,ci)],
    # spatially flipped; bias folded as an extra column (matches the "ones" patch row).
    w_flip = w_t[:, :, ::-1, ::-1].astype(f32)                # (C_IN, C_OUT, K, K)
    w2 = jnp.transpose(w_flip, (1, 2, 3, 0)).reshape(C_OUT, KT)
    w_full = jnp.zeros((C_OUT, KTP), f32)
    w_full = w_full.at[:, :KT].set(w2).at[:, KT].set(bias.astype(f32))

    # Hoisted valid-lane mask in the guarded grid-domain layout:
    # lane j <-> grid position p = j - G = h*WP + w ; valid iff 0<=p<NPG and (p % WP) < WO.
    jj = jnp.arange(NW)
    pp = jj - G
    valid = (pp >= 0) & (pp < NPG) & ((pp % WP) < WO)
    mask = valid.astype(f32).reshape(1, NW)

    def fused_kernel(x_ref, w_ref, m_ref, o_ref, patch_ref):
        # x_ref:     (1, C_IN, XLEN)  relu'd dilated padded input (flat)   [VMEM]
        # w_ref:     (C_OUT, KTP)     direct-conv weights + bias column    [VMEM]
        # m_ref:     (1, NW)          0/1 valid-lane mask                  [VMEM]
        # o_ref:     (1, C_OUT, NOUT) pooled + clamped output (lane-dense) [VMEM]
        # patch_ref: (KTP, NW)        im2col staging scratch               [VMEM]
        xall = x_ref[0]                                      # (C_IN, XLEN)

        # ---- in-kernel im2col: each tap is one contiguous lane slice ----
        for kh in range(K):
            for kw in range(K):
                t = kh * K + kw
                off = kh * WP + kw                            # static lane offset
                patch_ref[C_IN * t:C_IN * (t + 1), :] = xall[:, off:off + NW]
        patch_ref[KT:KT + 1, :] = jnp.ones((1, NW), jnp.float32)          # bias tap
        patch_ref[KT + 1:KTP, :] = jnp.zeros((KTP - KT - 1, NW), jnp.float32)

        # ---- ConvTranspose2d (+bias) as ONE MXU matmul -> (C_OUT, NW) ----
        acc = jnp.dot(w_ref[...], patch_ref[...],
                      preferred_element_type=jnp.float32,
                      precision=lax.Precision.HIGHEST)

        # ---- mask invalid lanes (guards / inter-row garbage / tail padding) ----
        accm = jnp.where(m_ref[...] > 0.5, acc, NEG)

        # ---- separable 3x3 / stride-1 max pool via static shifted slices ----
        # rowm[:, i] = max(accm[:, i], accm[:, i+1], accm[:, i+2])  (center lane i+1)
        rowm = jnp.maximum(jnp.maximum(accm[:, 0:NW - 2], accm[:, 1:NW - 1]),
                           accm[:, 2:NW])
        up = rowm[:, G - WP - 1:G - WP - 1 + NOUT]   # row above  (center p - WP)
        mid = rowm[:, G - 1:G - 1 + NOUT]            # same row   (center p)
        down = rowm[:, G + WP - 1:G + WP - 1 + NOUT]  # row below  (center p + WP)
        pooled = jnp.maximum(jnp.maximum(up, mid), down)

        o_ref[0] = jnp.clip(pooled, MIN_V, MAX_V)

    out_flat = pl.pallas_call(
        fused_kernel,
        out_shape=jax.ShapeDtypeStruct((B, C_OUT, NOUT), f32),
        grid=(B,),
        in_specs=[
            pl.BlockSpec((1, C_IN, XLEN), lambda b: (b, 0, 0)),
            pl.BlockSpec((C_OUT, KTP), lambda b: (0, 0)),
            pl.BlockSpec((1, NW), lambda b: (0, 0)),
        ],
        out_specs=pl.BlockSpec((1, C_OUT, NOUT), lambda b: (b, 0, 0)),
        scratch_shapes=[pltpu.VMEM((KTP, NW), f32)],
        compiler_params=pltpu.CompilerParams(
            dimension_semantics=("parallel",)),
    )(xin, w_full, mask)

    # Un-embed the grid-domain layout: lane q = h*WP + w  ->  (h, w).
    out = out_flat[:, :, :HO * WP].reshape(B, C_OUT, HO, WP)[:, :, :, :WO]
    return out


def _reference(x, w_t, bias):
    """Pure-JAX reference of the same forward pass (correctness check)."""
    xr = jnp.maximum(x.astype(jnp.float32), 0.0)
    pext = K - 1 - PAD
    w_oihw = jnp.transpose(w_t[:, :, ::-1, ::-1], (1, 0, 2, 3))
    y = lax.conv_general_dilated(
        xr, w_oihw.astype(jnp.float32), window_strides=(1, 1),
        padding=[(pext, pext), (pext, pext)], lhs_dilation=(STRIDE, STRIDE),
        dimension_numbers=("NCHW", "OIHW", "NCHW"),
        precision=lax.Precision.HIGHEST)
    y = y + bias[None, :, None, None]
    yp = lax.reduce_window(
        y, -jnp.inf, lax.max, (1, 1, POOL_K, POOL_K), (1, 1, 1, 1),
        [(0, 0), (0, 0), (POOL_PAD, POOL_PAD), (POOL_PAD, POOL_PAD)])
    return jnp.clip(yp, MIN_V, MAX_V)


if __name__ == "__main__":
    key = jax.random.PRNGKey(0)
    kx, kw, kb = jax.random.split(key, 3)
    B, H, W = 2, 16, 16
    x = jax.random.normal(kx, (B, C_IN, H, W), jnp.float32)
    # ConvTranspose2d weight shape in PyTorch: (in_channels, out_channels, kH, kW)
    bound = 1.0 / float((C_OUT * K * K) ** 0.5)
    w_t = jax.random.uniform(kw, (C_IN, C_OUT, K, K), jnp.float32, -bound, bound)
    bias = jax.random.uniform(kb, (C_OUT,), jnp.float32, -bound, bound)

    out = jax.block_until_ready(jax.jit(model_forward)(x, w_t, bias))
    assert out.shape == (B, C_OUT, 33, 33), out.shape

    ref = jax.block_until_ready(_reference(x, w_t, bias))
    if not bool(jnp.allclose(out, ref, atol=1e-3, rtol=1e-3)):
        raise AssertionError("Pallas result mismatch vs JAX reference")

    print("KERNEL_OK")
</pallas_src>

<mosaic_0001>
module attributes {stable_mosaic.version = 11 : i64} {
  func.func @fused_kernel(%arg0: i32, %arg1: memref<1x3x1664xf32, #tpu.memory_space<vmem>>, %arg2: memref<32x80xf32, #tpu.memory_space<vmem>>, %arg3: memref<1x1408xf32, #tpu.memory_space<vmem>>, %arg4: memref<1x32x1280xf32, #tpu.memory_space<vmem>>, %arg5: memref<80x1408xf32, #tpu.memory_space<vmem>>) attributes {dimension_semantics = [#tpu.dimension_semantics<parallel>], iteration_bounds = array<i64: 2>, scalar_prefetch = 0 : i64, scratch_operands = 1 : i64, tpu.core_type = #tpu.core_type<tc>, window_params = [{transform_indices = @transform_0, window_bounds = array<i64: 1, 3, 1664>}, {pipeline_mode = #tpu.pipeline_mode<synchronous>, transform_indices = @transform_1, window_bounds = array<i64: 32, 80>}, {pipeline_mode = #tpu.pipeline_mode<synchronous>, transform_indices = @transform_2, window_bounds = array<i64: 1, 1408>}, {transform_indices = @transform_3, window_bounds = array<i64: 1, 32, 1280>}]} {
    %c0 = arith.constant 0 : index
    %c0_0 = arith.constant 0 : index
    %c0_1 = arith.constant 0 : index
    %0 = vector.load %arg1[%c0, %c0_0, %c0_1] : memref<1x3x1664xf32, #tpu.memory_space<vmem>>, vector<1x3x1664xf32>
    %1 = vector.shape_cast %0 : vector<1x3x1664xf32> to vector<3x1664xf32>
    %2 = vector.extract_strided_slice %1 {offsets = [0, 0], sizes = [3, 1408], strides = [1, 1]} : vector<3x1664xf32> to vector<3x1408xf32>
    %c0_2 = arith.constant 0 : index
    %c0_3 = arith.constant 0 : index
    %3 = vector.load %arg5[%c0_2, %c0_3] : memref<80x1408xf32, #tpu.memory_space<vmem>>, vector<3x1408xf32>
    tpu.vector_store %arg5[%c0_2, %c0_3], %2 {strides = array<i32>} : memref<80x1408xf32, #tpu.memory_space<vmem>>, vector<3x1408xf32>,
    %4 = vector.extract_strided_slice %1 {offsets = [0, 1], sizes = [3, 1408], strides = [1, 1]} : vector<3x1664xf32> to vector<3x1408xf32>
    %c3 = arith.constant 3 : index
    %c0_4 = arith.constant 0 : index
    %5 = vector.load %arg5[%c3, %c0_4] : memref<80x1408xf32, #tpu.memory_space<vmem>>, vector<3x1408xf32>
    tpu.vector_store %arg5[%c3, %c0_4], %4 {strides = array<i32>} : memref<80x1408xf32, #tpu.memory_space<vmem>>, vector<3x1408xf32>,
    %6 = vector.extract_strided_slice %1 {offsets = [0, 2], sizes = [3, 1408], strides = [1, 1]} : vector<3x1664xf32> to vector<3x1408xf32>
    %c6 = arith.constant 6 : index
    %c0_5 = arith.constant 0 : index
    %7 = vector.load %arg5[%c6, %c0_5] : memref<80x1408xf32, #tpu.memory_space<vmem>>, vector<3x1408xf32>
    tpu.vector_store %arg5[%c6, %c0_5], %6 {strides = array<i32>} : memref<80x1408xf32, #tpu.memory_space<vmem>>, vector<3x1408xf32>,
    %8 = vector.extract_strided_slice %1 {offsets = [0, 3], sizes = [3, 1408], strides = [1, 1]} : vector<3x1664xf32> to vector<3x1408xf32>
    %c9 = arith.constant 9 : index
    %c0_6 = arith.constant 0 : index
    %9 = vector.load %arg5[%c9, %c0_6] : memref<80x1408xf32, #tpu.memory_space<vmem>>, vector<3x1408xf32>
    tpu.vector_store %arg5[%c9, %c0_6], %8 {strides = array<i32>} : memref<80x1408xf32, #tpu.memory_space<vmem>>, vector<3x1408xf32>,
    %10 = vector.extract_strided_slice %1 {offsets = [0, 4], sizes = [3, 1408], strides = [1, 1]} : vector<3x1664xf32> to vector<3x1408xf32>
    %c12 = arith.constant 12 : index
    %c0_7 = arith.constant 0 : index
    %11 = vector.load %arg5[%c12, %c0_7] : memref<80x1408xf32, #tpu.memory_space<vmem>>, vector<3x1408xf32>
    tpu.vector_store %arg5[%c12, %c0_7], %10 {strides = array<i32>} : memref<80x1408xf32, #tpu.memory_space<vmem>>, vector<3x1408xf32>,
    %12 = vector.extract_strided_slice %1 {offsets = [0, 37], sizes = [3, 1408], strides = [1, 1]} : vector<3x1664xf32> to vector<3x1408xf32>
    %c15 = arith.constant 15 : index
    %c0_8 = arith.constant 0 : index
    %13 = vector.load %arg5[%c15, %c0_8] : memref<80x1408xf32, #tpu.memory_space<vmem>>, vector<3x1408xf32>
    tpu.vector_store %arg5[%c15, %c0_8], %12 {strides = array<i32>} : memref<80x1408xf32, #tpu.memory_space<vmem>>, vector<3x1408xf32>,
    %14 = vector.extract_strided_slice %1 {offsets = [0, 38], sizes = [3, 1408], strides = [1, 1]} : vector<3x1664xf32> to vector<3x1408xf32>
    %c18 = arith.constant 18 : index
    %c0_9 = arith.constant 0 : index
    %15 = vector.load %arg5[%c18, %c0_9] : memref<80x1408xf32, #tpu.memory_space<vmem>>, vector<3x1408xf32>
    tpu.vector_store %arg5[%c18, %c0_9], %14 {strides = array<i32>} : memref<80x1408xf32, #tpu.memory_space<vmem>>, vector<3x1408xf32>,
    %16 = vector.extract_strided_slice %1 {offsets = [0, 39], sizes = [3, 1408], strides = [1, 1]} : vector<3x1664xf32> to vector<3x1408xf32>
    %c21 = arith.constant 21 : index
    %c0_10 = arith.constant 0 : index
    %17 = vector.load %arg5[%c21, %c0_10] : memref<80x1408xf32, #tpu.memory_space<vmem>>, vector<3x1408xf32>
    tpu.vector_store %arg5[%c21, %c0_10], %16 {strides = array<i32>} : memref<80x1408xf32, #tpu.memory_space<vmem>>, vector<3x1408xf32>,
    %18 = vector.extract_strided_slice %1 {offsets = [0, 40], sizes = [3, 1408], strides = [1, 1]} : vector<3x1664xf32> to vector<3x1408xf32>
    %c24 = arith.constant 24 : index
    %c0_11 = arith.constant 0 : index
    %19 = vector.load %arg5[%c24, %c0_11] : memref<80x1408xf32, #tpu.memory_space<vmem>>, vector<3x1408xf32>
    tpu.vector_store %arg5[%c24, %c0_11], %18 {strides = array<i32>} : memref<80x1408xf32, #tpu.memory_space<vmem>>, vector<3x1408xf32>,
    %20 = vector.extract_strided_slice %1 {offsets = [0, 41], sizes = [3, 1408], strides = [1, 1]} : vector<3x1664xf32> to vector<3x1408xf32>
    %c27 = arith.constant 27 : index
    %c0_12 = arith.constant 0 : index
    %21 = vector.load %arg5[%c27, %c0_12] : memref<80x1408xf32, #tpu.memory_space<vmem>>, vector<3x1408xf32>
    tpu.vector_store %arg5[%c27, %c0_12], %20 {strides = array<i32>} : memref<80x1408xf32, #tpu.memory_space<vmem>>, vector<3x1408xf32>,
    %22 = vector.extract_strided_slice %1 {offsets = [0, 74], sizes = [3, 1408], strides = [1, 1]} : vector<3x1664xf32> to vector<3x1408xf32>
    %c30 = arith.constant 30 : index
    %c0_13 = arith.constant 0 : index
    %23 = vector.load %arg5[%c30, %c0_13] : memref<80x1408xf32, #tpu.memory_space<vmem>>, vector<3x1408xf32>
    tpu.vector_store %arg5[%c30, %c0_13], %22 {strides = array<i32>} : memref<80x1408xf32, #tpu.memory_space<vmem>>, vector<3x1408xf32>,
    %24 = vector.extract_strided_slice %1 {offsets = [0, 75], sizes = [3, 1408], strides = [1, 1]} : vector<3x1664xf32> to vector<3x1408xf32>
    %c33 = arith.constant 33 : index
    %c0_14 = arith.constant 0 : index
    %25 = vector.load %arg5[%c33, %c0_14] : memref<80x1408xf32, #tpu.memory_space<vmem>>, vector<3x1408xf32>
    tpu.vector_store %arg5[%c33, %c0_14], %24 {strides = array<i32>} : memref<80x1408xf32, #tpu.memory_space<vmem>>, vector<3x1408xf32>,
    %26 = vector.extract_strided_slice %1 {offsets = [0, 76], sizes = [3, 1408], strides = [1, 1]} : vector<3x1664xf32> to vector<3x1408xf32>
    %c36 = arith.constant 36 : index
    %c0_15 = arith.constant 0 : index
    %27 = vector.load %arg5[%c36, %c0_15] : memref<80x1408xf32, #tpu.memory_space<vmem>>, vector<3x1408xf32>
    tpu.vector_store %arg5[%c36, %c0_15], %26 {strides = array<i32>} : memref<80x1408xf32, #tpu.memory_space<vmem>>, vector<3x1408xf32>,
    %28 = vector.extract_strided_slice %1 {offsets = [0, 77], sizes = [3, 1408], strides = [1, 1]} : vector<3x1664xf32> to vector<3x1408xf32>
    %c39 = arith.constant 39 : index
    %c0_16 = arith.constant 0 : index
    %29 = vector.load %arg5[%c39, %c0_16] : memref<80x1408xf32, #tpu.memory_space<vmem>>, vector<3x1408xf32>
    tpu.vector_store %arg5[%c39, %c0_16], %28 {strides = array<i32>} : memref<80x1408xf32, #tpu.memory_space<vmem>>, vector<3x1408xf32>,
    %30 = vector.extract_strided_slice %1 {offsets = [0, 78], sizes = [3, 1408], strides = [1, 1]} : vector<3x1664xf32> to vector<3x1408xf32>
    %c42 = arith.constant 42 : index
    %c0_17 = arith.constant 0 : index
    %31 = vector.load %arg5[%c42, %c0_17] : memref<80x1408xf32, #tpu.memory_space<vmem>>, vector<3x1408xf32>
    tpu.vector_store %arg5[%c42, %c0_17], %30 {strides = array<i32>} : memref<80x1408xf32, #tpu.memory_space<vmem>>, vector<3x1408xf32>,
    %32 = vector.extract_strided_slice %1 {offsets = [0, 111], sizes = [3, 1408], strides = [1, 1]} : vector<3x1664xf32> to vector<3x1408xf32>
    %c45 = arith.constant 45 : index
    %c0_18 = arith.constant 0 : index
    %33 = vector.load %arg5[%c45, %c0_18] : memref<80x1408xf32, #tpu.memory_space<vmem>>, vector<3x1408xf32>
    tpu.vector_store %arg5[%c45, %c0_18], %32 {strides = array<i32>} : memref<80x1408xf32, #tpu.memory_space<vmem>>, vector<3x1408xf32>,
    %34 = vector.extract_strided_slice %1 {offsets = [0, 112], sizes = [3, 1408], strides = [1, 1]} : vector<3x1664xf32> to vector<3x1408xf32>
    %c48 = arith.constant 48 : index
    %c0_19 = arith.constant 0 : index
    %35 = vector.load %arg5[%c48, %c0_19] : memref<80x1408xf32, #tpu.memory_space<vmem>>, vector<3x1408xf32>
    tpu.vector_store %arg5[%c48, %c0_19], %34 {strides = array<i32>} : memref<80x1408xf32, #tpu.memory_space<vmem>>, vector<3x1408xf32>,
    %36 = vector.extract_strided_slice %1 {offsets = [0, 113], sizes = [3, 1408], strides = [1, 1]} : vector<3x1664xf32> to vector<3x1408xf32>
    %c51 = arith.constant 51 : index
    %c0_20 = arith.constant 0 : index
    %37 = vector.load %arg5[%c51, %c0_20] : memref<80x1408xf32, #tpu.memory_space<vmem>>, vector<3x1408xf32>
    tpu.vector_store %arg5[%c51, %c0_20], %36 {strides = array<i32>} : memref<80x1408xf32, #tpu.memory_space<vmem>>, vector<3x1408xf32>,
    %38 = vector.extract_strided_slice %1 {offsets = [0, 114], sizes = [3, 1408], strides = [1, 1]} : vector<3x1664xf32> to vector<3x1408xf32>
    %c54 = arith.constant 54 : index
    %c0_21 = arith.constant 0 : index
    %39 = vector.load %arg5[%c54, %c0_21] : memref<80x1408xf32, #tpu.memory_space<vmem>>, vector<3x1408xf32>
    tpu.vector_store %arg5[%c54, %c0_21], %38 {strides = array<i32>} : memref<80x1408xf32, #tpu.memory_space<vmem>>, vector<3x1408xf32>,
    %40 = vector.extract_strided_slice %1 {offsets = [0, 115], sizes = [3, 1408], strides = [1, 1]} : vector<3x1664xf32> to vector<3x1408xf32>
    %c57 = arith.constant 57 : index
    %c0_22 = arith.constant 0 : index
    %41 = vector.load %arg5[%c57, %c0_22] : memref<80x1408xf32, #tpu.memory_space<vmem>>, vector<3x1408xf32>
    tpu.vector_store %arg5[%c57, %c0_22], %40 {strides = array<i32>} : memref<80x1408xf32, #tpu.memory_space<vmem>>, vector<3x1408xf32>,
    %42 = vector.extract_strided_slice %1 {offsets = [0, 148], sizes = [3, 1408], strides = [1, 1]} : vector<3x1664xf32> to vector<3x1408xf32>
    %c60 = arith.constant 60 : index
    %c0_23 = arith.constant 0 : index
    %43 = vector.load %arg5[%c60, %c0_23] : memref<80x1408xf32, #tpu.memory_space<vmem>>, vector<3x1408xf32>
    tpu.vector_store %arg5[%c60, %c0_23], %42 {strides = array<i32>} : memref<80x1408xf32, #tpu.memory_space<vmem>>, vector<3x1408xf32>,
    %44 = vector.extract_strided_slice %1 {offsets = [0, 149], sizes = [3, 1408], strides = [1, 1]} : vector<3x1664xf32> to vector<3x1408xf32>
    %c63 = arith.constant 63 : index
    %c0_24 = arith.constant 0 : index
    %45 = vector.load %arg5[%c63, %c0_24] : memref<80x1408xf32, #tpu.memory_space<vmem>>, vector<3x1408xf32>
    tpu.vector_store %arg5[%c63, %c0_24], %44 {strides = array<i32>} : memref<80x1408xf32, #tpu.memory_space<vmem>>, vector<3x1408xf32>,
    %46 = vector.extract_strided_slice %1 {offsets = [0, 150], sizes = [3, 1408], strides = [1, 1]} : vector<3x1664xf32> to vector<3x1408xf32>
    %c66 = arith.constant 66 : index
    %c0_25 = arith.constant 0 : index
    %47 = vector.load %arg5[%c66, %c0_25] : memref<80x1408xf32, #tpu.memory_space<vmem>>, vector<3x1408xf32>
    tpu.vector_store %arg5[%c66, %c0_25], %46 {strides = array<i32>} : memref<80x1408xf32, #tpu.memory_space<vmem>>, vector<3x1408xf32>,
    %48 = vector.extract_strided_slice %1 {offsets = [0, 151], sizes = [3, 1408], strides = [1, 1]} : vector<3x1664xf32> to vector<3x1408xf32>
    %c69 = arith.constant 69 : index
    %c0_26 = arith.constant 0 : index
    %49 = vector.load %arg5[%c69, %c0_26] : memref<80x1408xf32, #tpu.memory_space<vmem>>, vector<3x1408xf32>
    tpu.vector_store %arg5[%c69, %c0_26], %48 {strides = array<i32>} : memref<80x1408xf32, #tpu.memory_space<vmem>>, vector<3x1408xf32>,
    %50 = vector.extract_strided_slice %1 {offsets = [0, 152], sizes = [3, 1408], strides = [1, 1]} : vector<3x1664xf32> to vector<3x1408xf32>
    %c72 = arith.constant 72 : index
    %c0_27 = arith.constant 0 : index
    %51 = vector.load %arg5[%c72, %c0_27] : memref<80x1408xf32, #tpu.memory_space<vmem>>, vector<3x1408xf32>
    tpu.vector_store %arg5[%c72, %c0_27], %50 {strides = array<i32>} : memref<80x1408xf32, #tpu.memory_space<vmem>>, vector<3x1408xf32>,
    %cst = arith.constant 1.000000e+00 : f32
    %52 = vector.broadcast %cst : f32 to vector<1x1408xf32>
    %c75 = arith.constant 75 : index
    %c0_28 = arith.constant 0 : index
    %53 = vector.load %arg5[%c75, %c0_28] : memref<80x1408xf32, #tpu.memory_space<vmem>>, vector<1x1408xf32>
    tpu.vector_store %arg5[%c75, %c0_28], %52 {strides = array<i32>} : memref<80x1408xf32, #tpu.memory_space<vmem>>, vector<1x1408xf32>,
    %cst_29 = arith.constant 0.000000e+00 : f32
    %54 = vector.broadcast %cst_29 : f32 to vector<4x1408xf32>
    %c76 = arith.constant 76 : index
    %c0_30 = arith.constant 0 : index
    %55 = vector.load %arg5[%c76, %c0_30] : memref<80x1408xf32, #tpu.memory_space<vmem>>, vector<4x1408xf32>
    tpu.vector_store %arg5[%c76, %c0_30], %54 {strides = array<i32>} : memref<80x1408xf32, #tpu.memory_space<vmem>>, vector<4x1408xf32>,
    %c0_31 = arith.constant 0 : index
    %c0_32 = arith.constant 0 : index
    %56 = vector.load %arg2[%c0_31, %c0_32] : memref<32x80xf32, #tpu.memory_space<vmem>>, vector<32x80xf32>
    %c0_33 = arith.constant 0 : index
    %c0_34 = arith.constant 0 : index
    %57 = vector.load %arg5[%c0_33, %c0_34] : memref<80x1408xf32, #tpu.memory_space<vmem>>, vector<80x1408xf32>
    %cst_35 = arith.constant dense<0.000000e+00> : vector<32x1408xf32>
    %58 = tpu.matmul %56, %57, %cst_35 {dimension_numbers = #tpu.dot_dimension_numbers<[1], [0], [0], [1], [0, 0, 1, 1], [], []>, precision = #tpu.contract_precision<fp32>} : vector<32x80xf32>, vector<80x1408xf32>, vector<32x1408xf32> -> vector<32x1408xf32>
    %c0_36 = arith.constant 0 : index
    %c0_37 = arith.constant 0 : index
    %59 = vector.load %arg3[%c0_36, %c0_37] : memref<1x1408xf32, #tpu.memory_space<vmem>>, vector<1x1408xf32>
    %cst_38 = arith.constant 5.000000e-01 : f32
    %60 = vector.broadcast %cst_38 : f32 to vector<1x1408xf32>
    %61 = arith.cmpf ogt, %59, %60 : vector<1x1408xf32>
    %cst_39 = arith.constant -1.000000e+30 : f32
    %62 = vector.shape_cast %61 : vector<1x1408xi1> to vector<1x1408xi1>
    %63 = vector.broadcast %62 : vector<1x1408xi1> to vector<32x1408xi1>
    %64 = vector.broadcast %cst_39 : f32 to vector<32x1408xf32>
    %65 = arith.select %63, %58, %64 : vector<32x1408xi1>, vector<32x1408xf32>
    %66 = vector.extract_strided_slice %65 {offsets = [0, 0], sizes = [32, 1406], strides = [1, 1]} : vector<32x1408xf32> to vector<32x1406xf32>
    %67 = vector.extract_strided_slice %65 {offsets = [0, 1], sizes = [32, 1406], strides = [1, 1]} : vector<32x1408xf32> to vector<32x1406xf32>
    %68 = arith.maximumf %66, %67 : vector<32x1406xf32>
    %69 = vector.extract_strided_slice %65 {offsets = [0, 2], sizes = [32, 1406], strides = [1, 1]} : vector<32x1408xf32> to vector<32x1406xf32>
    %70 = arith.maximumf %68, %69 : vector<32x1406xf32>
    %71 = vector.extract_strided_slice %70 {offsets = [0, 2], sizes = [32, 1280], strides = [1, 1]} : vector<32x1406xf32> to vector<32x1280xf32>
    %72 = vector.extract_strided_slice %70 {offsets = [0, 39], sizes = [32, 1280], strides = [1, 1]} : vector<32x1406xf32> to vector<32x1280xf32>
    %73 = vector.extract_strided_slice %70 {offsets = [0, 76], sizes = [32, 1280], strides = [1, 1]} : vector<32x1406xf32> to vector<32x1280xf32>
    %74 = arith.maximumf %71, %72 : vector<32x1280xf32>
    %75 = arith.maximumf %74, %73 : vector<32x1280xf32>
    %cst_40 = arith.constant 0.000000e+00 : f32
    %cst_41 = arith.constant 6.400000e+00 : f32
    %76 = vector.broadcast %cst_40 : f32 to vector<32x1280xf32>
    %77 = arith.maximumf %76, %75 : vector<32x1280xf32>
    %78 = vector.broadcast %cst_41 : f32 to vector<32x1280xf32>
    %79 = arith.minimumf %78, %77 : vector<32x1280xf32>
    %c0_42 = arith.constant 0 : index
    %c0_43 = arith.constant 0 : index
    %c0_44 = arith.constant 0 : index
    %80 = vector.load %arg4[%c0_42, %c0_43, %c0_44] : memref<1x32x1280xf32, #tpu.memory_space<vmem>>, vector<1x32x1280xf32>
    %81 = vector.shape_cast %80 : vector<1x32x1280xf32> to vector<32x1280xf32>
    %82 = vector.shape_cast %79 : vector<32x1280xf32> to vector<1x32x1280xf32>
    tpu.vector_store %arg4[%c0_42, %c0_43, %c0_44], %82 {strides = array<i32>} : memref<1x32x1280xf32, #tpu.memory_space<vmem>>, vector<1x32x1280xf32>,
    return
  }
  func.func @transform_0(%arg0: i32) -> (i32, i32, i32) {
    %c0_i32 = arith.constant 0 : i32
    %c0_i32_0 = arith.constant 0 : i32
    %c0_i32_1 = arith.constant 0 : i32
    return %arg0, %c0_i32, %c0_i32_0 : i32, i32, i32
  }
  func.func @transform_1(%arg0: i32) -> (i32, i32) {
    %c0_i32 = arith.constant 0 : i32
    %c0_i32_0 = arith.constant 0 : i32
    %c0_i32_1 = arith.constant 0 : i32
    return %c0_i32, %c0_i32_0 : i32, i32
  }
  func.func @transform_2(%arg0: i32) -> (i32, i32) {
    %c0_i32 = arith.constant 0 : i32
    %c0_i32_0 = arith.constant 0 : i32
    %c0_i32_1 = arith.constant 0 : i32
    return %c0_i32, %c0_i32_0 : i32, i32
  }
  func.func @transform_3(%arg0: i32) -> (i32, i32, i32) {
    %c0_i32 = arith.constant 0 : i32
    %c0_i32_0 = arith.constant 0 : i32
    %c0_i32_1 = arith.constant 0 : i32
    return %arg0, %c0_i32, %c0_i32_0 : i32, i32, i32
  }
}

</mosaic_0001>

<llo_original>
// kernel: model_forward.1
$region0: #{model_forward.1}
  #allocation0 [shape = 'u32[]', space=smem, size = 0x4, offset = 0x4, fixed_abs, tag = 'smem constant byte address 0x4 - core index']
  #allocation1 [shape = 'u32[144,128]{1,0:T(1,128)}', space=vmem, size = 0x12000, scoped, tag = 'internal scratch']
  #allocation2 [shape = 'f32[80,1408]{1,0:T(8,128)}', space=vmem, size = 0x6e000, scoped, tag = 'scratch operand']
  %s0 = inlined_call_operand.vmem [shape: f32[2,3,1664], index: 0, kind: input, shape index: {}]
  %s1 = inlined_call_operand.vmem [shape: f32[32,80], index: 1, kind: input, shape index: {}]
  %s2 = inlined_call_operand.vmem [shape: f32[1,1408], index: 2, kind: input, shape index: {}]
  %s3 = inlined_call_operand.vmem [shape: f32[2,32,1280], index: 3, kind: output, shape index: {}]
  %s4 = sld [smem:[#allocation0]]
  $region45: #{model_forward.1} parent=0
    _
  %s6 = ssub.s32 1, %s4
  %s7 = scalar_select 0, %s6, %s4
  loop: start=0, step=1, limit=4
  $region2: #{model_forward.1} parent=0 // loop_pre_header
    _
  $region3: #{model_forward.1} parent=0 // loop_header
    %s9 = sphi 0, %s13
    %p10 = scmp.ge.s32.totalorder %s9, 4
    %s19 = sphi 0, %s21
    %s22 = sphi 0, %s19
    %s23 = sphi 0, %s22
    %s39 = sphi 0, %s23
    %s43 = sphi 0, %s43
    %s45 = sphi 0, %s43
    %s46 = sphi 0, %s45
    %s60 = sphi 0, %s46
    %s64 = sphi 0, %s64
    %s66 = sphi 0, %s64
    %s67 = sphi 0, %s66
    %s81 = sphi 0, %s67
    %s87 = sphi 0, %s89
    %s90 = sphi 0, %s87
    %s91 = sphi 0, %s90
    %s107 = sphi 0, %s91
  $region4: #{model_forward.1} parent=0 // loop_header_branch
    %12 = sbr.rel (%p10) target = $region8
  $region5: #{model_forward.1} parent=0 // loop_body
    %s14 = ssub.s32 %s9, 1
    %s15 = ssub.s32 %s9, 2
    %s16 = sadd.s32 %s9, 1
    %s17 = ssub.s32 %s9, %s16
    %p18 = scmp.eq.s32.totalorder %s17, 0
    %s20 = sadd.s32 %s19, 1
    %s21 = scalar_select %p18, %s19, %s20
    %p24 = pneg %p18
    %p25 = scmp.eq.s32.totalorder %s9, 1
    %p26 = por %p24, %p25
    %p27 = scmp.ne.s32.totalorder %s19, %s22
    %p28 = scmp.eq.s32.totalorder %s9, 0
    %p29 = por %p27, %p28
    %p30 = scmp.ne.s32.totalorder %s19, %s22
    %p31 = scmp.eq.s32.totalorder %s14, 1
    %p32 = por %p30, %p31
    %p33 = scmp.ne.s32.totalorder %s22, %s23
    %p34 = scmp.eq.s32.totalorder %s14, 0
    %p35 = por %p33, %p34
    %p36 = scmp.ne.s32.totalorder %s22, %s23
    %p37 = scmp.eq.s32.totalorder %s15, 1
    %p38 = por %p36, %p37
    %p40 = scmp.ne.s32.totalorder %s23, %s39
    %p41 = scmp.eq.s32.totalorder %s15, 0
    %p42 = por %p40, %p41
    %s44 = sadd.s32 %s43, 1
    %p47 = scmp.eq.s32.totalorder %s9, 1
    %p48 = scmp.ne.s32.totalorder %s43, %s45
    %p49 = scmp.eq.s32.totalorder %s9, 0
    %p50 = por %p48, %p49
    %p51 = scmp.ne.s32.totalorder %s43, %s45
    %p52 = scmp.eq.s32.totalorder %s14, 1
    %p53 = por %p51, %p52
    %p54 = scmp.ne.s32.totalorder %s45, %s46
    %p55 = scmp.eq.s32.totalorder %s14, 0
    %p56 = por %p54, %p55
    %p57 = scmp.ne.s32.totalorder %s45, %s46
    %p58 = scmp.eq.s32.totalorder %s15, 1
    %p59 = por %p57, %p58
    %p61 = scmp.ne.s32.totalorder %s46, %s60
    %p62 = scmp.eq.s32.totalorder %s15, 0
    %p63 = por %p61, %p62
    %s65 = sadd.s32 %s64, 1
    %p68 = scmp.eq.s32.totalorder %s9, 1
    %p69 = scmp.ne.s32.totalorder %s64, %s66
    %p70 = scmp.eq.s32.totalorder %s9, 0
    %p71 = por %p69, %p70
    %p72 = scmp.ne.s32.totalorder %s64, %s66
    %p73 = scmp.eq.s32.totalorder %s14, 1
    %p74 = por %p72, %p73
    %p75 = scmp.ne.s32.totalorder %s66, %s67
    %p76 = scmp.eq.s32.totalorder %s14, 0
    %p77 = por %p75, %p76
    %p78 = scmp.ne.s32.totalorder %s66, %s67
    %p79 = scmp.eq.s32.totalorder %s15, 1
    %p80 = por %p78, %p79
    %p82 = scmp.ne.s32.totalorder %s67, %s81
    %p83 = scmp.eq.s32.totalorder %s15, 0
    %p84 = por %p82, %p83
    %s85 = ssub.s32 %s9, %s16
    %p86 = scmp.eq.s32.totalorder %s85, 0
    %s88 = sadd.s32 %s87, 1
    %s89 = scalar_select %p86, %s87, %s88
    %p92 = pneg %p86
    %p93 = scmp.eq.s32.totalorder %s9, 1
    %p94 = por %p92, %p93
    %p95 = scmp.ne.s32.totalorder %s87, %s90
    %p96 = scmp.eq.s32.totalorder %s9, 0
    %p97 = por %p95, %p96
    %p98 = scmp.ne.s32.totalorder %s87, %s90
    %p99 = scmp.eq.s32.totalorder %s14, 1
    %p100 = por %p98, %p99
    %p101 = scmp.ne.s32.totalorder %s90, %s91
    %p102 = scmp.eq.s32.totalorder %s14, 0
    %p103 = por %p101, %p102
    %p104 = scmp.ne.s32.totalorder %s90, %s91
    %p105 = scmp.eq.s32.totalorder %s15, 1
    %p106 = por %p104, %p105
    %p108 = scmp.ne.s32.totalorder %s91, %s107
    %p109 = scmp.eq.s32.totalorder %s15, 0
    %p110 = por %p108, %p109
    %p111 = scmp.le.s32.totalorder 1, %s9
    %p112 = scmp.lt.s32.totalorder %s9, 3
    %p113 = pnand %p111, %p112
    %p114 = pneg %p113
    // Predicated region
    $region9: #{model_forward.1} parent=5 // pred_check
      _
    $region10: #{model_forward.1} parent=5 // pred_check_branch
      %116 = sbr.rel (%p113) target = $region12
    $region11: #{model_forward.1} parent=5 // pred_region
      %s117 = ssub.s32 %s9, 1
      // Predicated region
      $region13: #{model_forward.1} parent=11 // pred_check
        %p118 = pneg %p56
      $region14: #{model_forward.1} parent=11 // pred_check_branch
        %120 = sbr.rel (%p118) target = $region16
      $region15: #{model_forward.1} parent=11 // pred_region
        _
      $region16: #{model_forward.1} parent=11 // pred_fallthru
        _
      // Predicated region
      $region17: #{model_forward.1} parent=11 // pred_check
        %p121 = pneg %p77
      $region18: #{model_forward.1} parent=11 // pred_check_branch
        %123 = sbr.rel (%p121) target = $region20
      $region19: #{model_forward.1} parent=11 // pred_region
        _
      $region20: #{model_forward.1} parent=11 // pred_fallthru
        _
    $region12: #{model_forward.1} parent=5 // pred_fallthru
      _
    %p124 = scmp.lt.s32.totalorder %s9, 2
    // Predicated region
    $region21: #{model_forward.1} parent=5 // pred_check
      %p125 = pneg %p124
    $region22: #{model_forward.1} parent=5 // pred_check_branch
      %127 = sbr.rel (%p125) target = $region24
    $region23: #{model_forward.1} parent=5 // pred_region
      // Predicated region
      $region25: #{model_forward.1} parent=23 // pred_check
        %p128 = pneg %p29
      $region26: #{model_forward.1} parent=23 // pred_check_branch
        %130 = sbr.rel (%p128) target = $region28
      $region27: #{model_forward.1} parent=23 // pred_region
        %p131 = scmp.lt.s32.totalorder %s9, 1
        %s132 = scalar_select %p131, %s9, 1
        %s133 = smul.addr %s132, 13
        %s134 = smul.addr %s133, 4
        %s135 = scalar_lea.vmem %s0, %s134
      $region28: #{model_forward.1} parent=23 // pred_fallthru
        _
    $region24: #{model_forward.1} parent=5 // pred_fallthru
      _
    %p136 = scmp.le.s32.totalorder 1, %s9
    %p137 = scmp.lt.s32.totalorder %s9, 3
    %p138 = pnand %p136, %p137
    %p139 = pneg %p138
    // Predicated region
    $region29: #{model_forward.1} parent=5 // pred_check
      _
    $region30: #{model_forward.1} parent=5 // pred_check_branch
      %141 = sbr.rel (%p138) target = $region32
    $region31: #{model_forward.1} parent=5 // pred_region
      %s142 = ssub.s32 %s9, 1
      %p143 = scmp.lt.s32.totalorder %s14, 1
      %s144 = scalar_select %p143, %s14, 1
      %s145 = smul.addr %s144, 13
      %s146 = smul.addr %s145, 4
      %s147 = scalar_lea.vmem %s0, %s146
      %p148 = pneg %p35
      %p149 = pneg %p32
      %p150 = pneg %p56
      %p151 = pneg %p53
      %p152 = pneg %p77
      %p153 = pneg %p74
      %p154 = pneg %p103
      %p155 = pneg %p100
      %p156 = scmp.lt.s32.totalorder %s14, 1
      %s157 = scalar_select %p156, %s14, 1
      %s158 = smul.addr %s157, 40
      %s159 = smul.addr %s158, 8
      %s160 = scalar_lea.vmem %s3, %s159
      %p161 = scmp.lt.s32.totalorder %s14, 1
      %s162 = scalar_select %p161, %s14, 1
      %s163 = smul.addr %s162, 13
      %s164 = smul.addr %s163, 4
      %s165 = scalar_lea.vmem %s0, %s164
      %p166 = scmp.lt.s32.totalorder %s14, 1
      %s167 = scalar_select %p166, %s14, 1
      %s168 = smul.addr %s167, 40
      %s169 = smul.addr %s168, 8
      %s170 = scalar_lea.vmem %s3, %s169
      %v171 = vld [vmem:[%s165] sm:$0x77]
      %v172 = vld [vmem:[%s165 + $0x8] sm:$0x77]
      %v173 = vld [vmem:[%s165 + $0x10] sm:$0x77]
      %v174 = vld [vmem:[%s165 + $0x18] sm:$0x77]
      %v175 = vld [vmem:[%s165 + $0x20] sm:$0x77]
      %v176 = vld [vmem:[%s165 + $0x28] sm:$0x77]
      %v177 = vld [vmem:[%s165 + $0x30] sm:$0x7]
      %v184 = vcombine.high %v171, %v171
      %v185 = vcombine.high %v172, %v172
      %v186 = vcombine.high %v173, %v173
      %v187 = vcombine.high %v174, %v174
      %v188 = vcombine.high %v175, %v175
      %194 = vst [vmem:[#allocation2] sm:$0x7] %v171
      %195 = vst [vmem:[#allocation2 + $0x8] sm:$0x7] %v184
      %196 = vst [vmem:[#allocation2 + $0x10] sm:$0x7] %v172
      %197 = vst [vmem:[#allocation2 + $0x18] sm:$0x7] %v185
      %198 = vst [vmem:[#allocation2 + $0x20] sm:$0x7] %v173
      %199 = vst [vmem:[#allocation2 + $0x28] sm:$0x7] %v186
      %200 = vst [vmem:[#allocation2 + $0x30] sm:$0x7] %v174
      %201 = vst [vmem:[#allocation2 + $0x38] sm:$0x7] %v187
      %202 = vst [vmem:[#allocation2 + $0x40] sm:$0x7] %v175
      %203 = vst [vmem:[#allocation2 + $0x48] sm:$0x7] %v188
      %204 = vst [vmem:[#allocation2 + $0x50] sm:$0x7] %v176
      %v205 = vcombine.high %v176, %v176
      %v206 = vrot.slane %v171, 5
      %v207 = vrot.slane %v184, 5
      %v208 = vrot.slane %v172, 5
      %v209 = vrot.slane %v185, 5
      %v210 = vrot.slane %v173, 5
      %v211 = vrot.slane %v186, 5
      %v212 = vrot.slane %v174, 5
      %v213 = vrot.slane %v187, 5
      %v214 = vrot.slane %v175, 5
      %v215 = vrot.slane %v188, 5
      %v216 = vrot.slane %v176, 5
      %v217 = vrot.slane %v205, 5
      %218 = vrot.lane.b32.xlu0 %v206, 127
      %v219 = vpop.permute.xlu0 %218
      %220 = vrot.lane.b32.xlu0 %v207, 127
      %v221 = vpop.permute.xlu0 %220
      %222 = vrot.lane.b32.xlu0 %v208, 127
      %v223 = vpop.permute.xlu0 %222
      %224 = vrot.lane.b32.xlu0 %v209, 127
      %v225 = vpop.permute.xlu0 %224
      %226 = vrot.lane.b32.xlu0 %v210, 127
      %v227 = vpop.permute.xlu0 %226
      %228 = vrot.lane.b32.xlu0 %v211, 127
      %v229 = vpop.permute.xlu0 %228
      %230 = vrot.lane.b32.xlu0 %v212, 127
      %v231 = vpop.permute.xlu0 %230
      %232 = vrot.lane.b32.xlu0 %v213, 127
      %v233 = vpop.permute.xlu0 %232
      %234 = vrot.lane.b32.xlu0 %v214, 127
      %v235 = vpop.permute.xlu0 %234
      %236 = vrot.lane.b32.xlu0 %v215, 127
      %v237 = vpop.permute.xlu0 %236
      %238 = vrot.lane.b32.xlu0 %v216, 127
      %v239 = vpop.permute.xlu0 %238
      %240 = vrot.lane.b32.xlu0 %v217, 127
      %v241 = vpop.permute.xlu0 %240
      %vm242 = vcmask 1039360
      %v243 = vsel %vm242, %v219, %v221
      %v244 = vsel %vm242, %v221, %v223
      %v245 = vsel %vm242, %v223, %v225
      %v246 = vsel %vm242, %v225, %v227
      %v247 = vsel %vm242, %v227, %v229
      %v248 = vsel %vm242, %v229, %v231
      %v249 = vsel %vm242, %v231, %v233
      %v250 = vsel %vm242, %v233, %v235
      %v251 = vsel %vm242, %v235, %v237
      %v252 = vsel %vm242, %v237, %v239
      %v253 = vsel %vm242, %v239, %v241
      %265 = vst [vmem:[#allocation2] sm:$0x38] %v243
      %266 = vst [vmem:[#allocation2 + $0x8] sm:$0x38] %v244
      %267 = vst [vmem:[#allocation2 + $0x10] sm:$0x38] %v245
      %268 = vst [vmem:[#allocation2 + $0x18] sm:$0x38] %v246
      %269 = vst [vmem:[#allocation2 + $0x20] sm:$0x38] %v247
      %270 = vst [vmem:[#allocation2 + $0x28] sm:$0x38] %v248
      %271 = vst [vmem:[#allocation2 + $0x30] sm:$0x38] %v249
      %272 = vst [vmem:[#allocation2 + $0x38] sm:$0x38] %v250
      %273 = vst [vmem:[#allocation2 + $0x40] sm:$0x38] %v251
      %274 = vst [vmem:[#allocation2 + $0x48] sm:$0x38] %v252
      %275 = vst [vmem:[#allocation2 + $0x50] sm:$0x38] %v253
      %v276 = vrot.slane %v171, 2
      %v277 = vrot.slane %v184, 2
      %v278 = vrot.slane %v172, 2
      %v279 = vrot.slane %v185, 2
      %v280 = vrot.slane %v173, 2
      %v281 = vrot.slane %v186, 2
      %v282 = vrot.slane %v174, 2
      %v283 = vrot.slane %v187, 2
      %v284 = vrot.slane %v175, 2
      %v285 = vrot.slane %v188, 2
      %v286 = vrot.slane %v176, 2
      %v287 = vrot.slane %v205, 2
      %288 = vrot.lane.b32.xlu0 %v276, 126
      %v289 = vpop.permute.xlu0 %288
      %290 = vrot.lane.b32.xlu0 %v277, 126
      %v291 = vpop.permute.xlu0 %290
      %292 = vrot.lane.b32.xlu0 %v278, 126
      %v293 = vpop.permute.xlu0 %292
      %294 = vrot.lane.b32.xlu0 %v279, 126
      %v295 = vpop.permute.xlu0 %294
      %296 = vrot.lane.b32.xlu0 %v280, 126
      %v297 = vpop.permute.xlu0 %296
      %298 = vrot.lane.b32.xlu0 %v281, 126
      %v299 = vpop.permute.xlu0 %298
      %300 = vrot.lane.b32.xlu0 %v282, 126
      %v301 = vpop.permute.xlu0 %300
      %302 = vrot.lane.b32.xlu0 %v283, 126
      %v303 = vpop.permute.xlu0 %302
      %304 = vrot.lane.b32.xlu0 %v284, 126
      %v305 = vpop.permute.xlu0 %304
      %306 = vrot.lane.b32.xlu0 %v285, 126
      %v307 = vpop.permute.xlu0 %306
      %308 = vrot.lane.b32.xlu0 %v286, 126
      %v309 = vpop.permute.xlu0 %308
      %310 = vrot.lane.b32.xlu0 %v287, 126
      %v311 = vpop.permute.xlu0 %310
      %vm312 = vcmask 1031168
      %v313 = vsel %vm312, %v289, %v291
      %v314 = vsel %vm312, %v291, %v293
      %v315 = vsel %vm312, %v293, %v295
      %v316 = vsel %vm312, %v295, %v297
      %v317 = vsel %vm312, %v297, %v299
      %v318 = vsel %vm312, %v299, %v301
      %v319 = vsel %vm312, %v301, %v303
      %v320 = vsel %vm312, %v303, %v305
      %v321 = vsel %vm312, %v305, %v307
      %v322 = vsel %vm312, %v307, %v309
      %v323 = vsel %vm312, %v309, %v311
      %335 = vst [vmem:[#allocation2] sm:$0xc0] %v313
      %336 = vst [vmem:[#allocation2 + $0x8] sm:$0xc0] %v314
      %337 = vst [vmem:[#allocation2 + $0x10] sm:$0xc0] %v315
      %338 = vst [vmem:[#allocation2 + $0x18] sm:$0xc0] %v316
      %339 = vst [vmem:[#allocation2 + $0x20] sm:$0xc0] %v317
      %340 = vst [vmem:[#allocation2 + $0x28] sm:$0xc0] %v318
      %341 = vst [vmem:[#allocation2 + $0x30] sm:$0xc0] %v319
      %342 = vst [vmem:[#allocation2 + $0x38] sm:$0xc0] %v320
      %343 = vst [vmem:[#allocation2 + $0x40] sm:$0xc0] %v321
      %344 = vst [vmem:[#allocation2 + $0x48] sm:$0xc0] %v322
      %345 = vst [vmem:[#allocation2 + $0x50] sm:$0xc0] %v323
      %346 = vst [vmem:[#allocation2 + $0x58] sm:$0x1] %v313
      %347 = vst [vmem:[#allocation2 + $0x60] sm:$0x1] %v314
      %348 = vst [vmem:[#allocation2 + $0x68] sm:$0x1] %v315
      %349 = vst [vmem:[#allocation2 + $0x70] sm:$0x1] %v316
      %350 = vst [vmem:[#allocation2 + $0x78] sm:$0x1] %v317
      %351 = vst [vmem:[#allocation2 + $0x80] sm:$0x1] %v318
      %352 = vst [vmem:[#allocation2 + $0x88] sm:$0x1] %v319
      %353 = vst [vmem:[#allocation2 + $0x90] sm:$0x1] %v320
      %354 = vst [vmem:[#allocation2 + $0x98] sm:$0x1] %v321
      %355 = vst [vmem:[#allocation2 + $0xa0] sm:$0x1] %v322
      %356 = vst [vmem:[#allocation2 + $0xa8] sm:$0x1] %v323
      %v357 = vrot.slane %v171, 7
      %v358 = vrot.slane %v184, 7
      %v359 = vrot.slane %v172, 7
      %v360 = vrot.slane %v185, 7
      %v361 = vrot.slane %v173, 7
      %v362 = vrot.slane %v186, 7
      %v363 = vrot.slane %v174, 7
      %v364 = vrot.slane %v187, 7
      %v365 = vrot.slane %v175, 7
      %v366 = vrot.slane %v188, 7
      %v367 = vrot.slane %v176, 7
      %v368 = vrot.slane %v205, 7
      %369 = vrot.lane.b32.xlu0 %v357, 125
      %v370 = vpop.permute.xlu0 %369
      %371 = vrot.lane.b32.xlu0 %v358, 125
      %v372 = vpop.permute.xlu0 %371
      %373 = vrot.lane.b32.xlu0 %v359, 125
      %v374 = vpop.permute.xlu0 %373
      %375 = vrot.lane.b32.xlu0 %v360, 125
      %v376 = vpop.permute.xlu0 %375
      %377 = vrot.lane.b32.xlu0 %v361, 125
      %v378 = vpop.permute.xlu0 %377
      %379 = vrot.lane.b32.xlu0 %v362, 125
      %v380 = vpop.permute.xlu0 %379
      %381 = vrot.lane.b32.xlu0 %v363, 125
      %v382 = vpop.permute.xlu0 %381
      %383 = vrot.lane.b32.xlu0 %v364, 125
      %v384 = vpop.permute.xlu0 %383
      %385 = vrot.lane.b32.xlu0 %v365, 125
      %v386 = vpop.permute.xlu0 %385
      %387 = vrot.lane.b32.xlu0 %v366, 125
      %v388 = vpop.permute.xlu0 %387
      %389 = vrot.lane.b32.xlu0 %v367, 125
      %v390 = vpop.permute.xlu0 %389
      %391 = vrot.lane.b32.xlu0 %v368, 125
      %v392 = vpop.permute.xlu0 %391
      %vm393 = vcmask 1022976
      %v394 = vsel %vm393, %v370, %v372
      %v395 = vsel %vm393, %v372, %v374
      %v396 = vsel %vm393, %v374, %v376
      %v397 = vsel %vm393, %v376, %v378
      %v398 = vsel %vm393, %v378, %v380
      %v399 = vsel %vm393, %v380, %v382
      %v400 = vsel %vm393, %v382, %v384
      %v401 = vsel %vm393, %v384, %v386
      %v402 = vsel %vm393, %v386, %v388
      %v403 = vsel %vm393, %v388, %v390
      %v404 = vsel %vm393, %v390, %v392
      %416 = vst [vmem:[#allocation2 + $0x58] sm:$0xe] %v394
      %417 = vst [vmem:[#allocation2 + $0x60] sm:$0xe] %v395
      %418 = vst [vmem:[#allocation2 + $0x68] sm:$0xe] %v396
      %419 = vst [vmem:[#allocation2 + $0x70] sm:$0xe] %v397
      %420 = vst [vmem:[#allocation2 + $0x78] sm:$0xe] %v398
      %421 = vst [vmem:[#allocation2 + $0x80] sm:$0xe] %v399
      %422 = vst [vmem:[#allocation2 + $0x88] sm:$0xe] %v400
      %423 = vst [vmem:[#allocation2 + $0x90] sm:$0xe] %v401
      %424 = vst [vmem:[#allocation2 + $0x98] sm:$0xe] %v402
      %425 = vst [vmem:[#allocation2 + $0xa0] sm:$0xe] %v403
      %426 = vst [vmem:[#allocation2 + $0xa8] sm:$0xe] %v404
      %v427 = vcombine.low %v171, %v171
      %v428 = vcombine.low %v172, %v172
      %v429 = vcombine.low %v173, %v173
      %v430 = vcombine.low %v174, %v174
      %v431 = vcombine.low %v175, %v175
      %v432 = vcombine.low %v176, %v176
      %433 = vrot.lane.b32.xlu0 %v427, 124
      %v434 = vpop.permute.xlu0 %433
      %435 = vrot.lane.b32.xlu0 %v171, 124
      %v436 = vpop.permute.xlu0 %435
      %437 = vrot.lane.b32.xlu0 %v428, 124
      %v438 = vpop.permute.xlu0 %437
      %439 = vrot.lane.b32.xlu0 %v172, 124
      %v440 = vpop.permute.xlu0 %439
      %441 = vrot.lane.b32.xlu0 %v429, 124
      %v442 = vpop.permute.xlu0 %441
      %443 = vrot.lane.b32.xlu0 %v173, 124
      %v444 = vpop.permute.xlu0 %443
      %445 = vrot.lane.b32.xlu0 %v430, 124
      %v446 = vpop.permute.xlu0 %445
      %447 = vrot.lane.b32.xlu0 %v174, 124
      %v448 = vpop.permute.xlu0 %447
      %449 = vrot.lane.b32.xlu0 %v431, 124
      %v450 = vpop.permute.xlu0 %449
      %451 = vrot.lane.b32.xlu0 %v175, 124
      %v452 = vpop.permute.xlu0 %451
      %453 = vrot.lane.b32.xlu0 %v432, 124
      %v454 = vpop.permute.xlu0 %453
      %455 = vrot.lane.b32.xlu0 %v176, 124
      %v456 = vpop.permute.xlu0 %455
      %vm457 = vcmask 1014784
      %v458 = vsel %vm457, %v434, %v436
      %v459 = vsel %vm457, %v436, %v438
      %v460 = vsel %vm457, %v438, %v440
      %v461 = vsel %vm457, %v440, %v442
      %v462 = vsel %vm457, %v442, %v444
      %v463 = vsel %vm457, %v444, %v446
      %v464 = vsel %vm457, %v446, %v448
      %v465 = vsel %vm457, %v448, %v450
      %v466 = vsel %vm457, %v450, %v452
      %v467 = vsel %vm457, %v452, %v454
      %v468 = vsel %vm457, %v454, %v456
      %480 = vst [vmem:[#allocation2 + $0x58] sm:$0x70] %v458
      %481 = vst [vmem:[#allocation2 + $0x60] sm:$0x70] %v459
      %482 = vst [vmem:[#allocation2 + $0x68] sm:$0x70] %v460
      %483 = vst [vmem:[#allocation2 + $0x70] sm:$0x70] %v461
      %484 = vst [vmem:[#allocation2 + $0x78] sm:$0x70] %v462
      %485 = vst [vmem:[#allocation2 + $0x80] sm:$0x70] %v463
      %486 = vst [vmem:[#allocation2 + $0x88] sm:$0x70] %v464
      %487 = vst [vmem:[#allocation2 + $0x90] sm:$0x70] %v465
      %488 = vst [vmem:[#allocation2 + $0x98] sm:$0x70] %v466
      %489 = vst [vmem:[#allocation2 + $0xa0] sm:$0x70] %v467
      %490 = vst [vmem:[#allocation2 + $0xa8] sm:$0x70] %v468
      %v491 = vrot.slane %v171, 1
      %v492 = vrot.slane %v184, 1
      %v493 = vrot.slane %v172, 1
      %v494 = vrot.slane %v185, 1
      %v495 = vrot.slane %v173, 1
      %v496 = vrot.slane %v186, 1
      %v497 = vrot.slane %v174, 1
      %v498 = vrot.slane %v187, 1
      %v499 = vrot.slane %v175, 1
      %v500 = vrot.slane %v188, 1
      %v501 = vrot.slane %v176, 1
      %v502 = vrot.slane %v205, 1
      %503 = vrot.lane.b32.xlu0 %v491, 91
      %v504 = vpop.permute.xlu0 %503
      %505 = vrot.lane.b32.xlu0 %v492, 91
      %v506 = vpop.permute.xlu0 %505
      %507 = vrot.lane.b32.xlu0 %v493, 91
      %v508 = vpop.permute.xlu0 %507
      %509 = vrot.lane.b32.xlu0 %v494, 91
      %v510 = vpop.permute.xlu0 %509
      %511 = vrot.lane.b32.xlu0 %v495, 91
      %v512 = vpop.permute.xlu0 %511
      %513 = vrot.lane.b32.xlu0 %v496, 91
      %v514 = vpop.permute.xlu0 %513
      %515 = vrot.lane.b32.xlu0 %v497, 91
      %v516 = vpop.permute.xlu0 %515
      %517 = vrot.lane.b32.xlu0 %v498, 91
      %v518 = vpop.permute.xlu0 %517
      %519 = vrot.lane.b32.xlu0 %v499, 91
      %v520 = vpop.permute.xlu0 %519
      %521 = vrot.lane.b32.xlu0 %v500, 91
      %v522 = vpop.permute.xlu0 %521
      %523 = vrot.lane.b32.xlu0 %v501, 91
      %v524 = vpop.permute.xlu0 %523
      %525 = vrot.lane.b32.xlu0 %v502, 91
      %v526 = vpop.permute.xlu0 %525
      %vm527 = vcmask 744448
      %v528 = vsel %vm527, %v504, %v506
      %v529 = vsel %vm527, %v506, %v508
      %v530 = vsel %vm527, %v508, %v510
      %v531 = vsel %vm527, %v510, %v512
      %v532 = vsel %vm527, %v512, %v514
      %v533 = vsel %vm527, %v514, %v516
      %v534 = vsel %vm527, %v516, %v518
      %v535 = vsel %vm527, %v518, %v520
      %v536 = vsel %vm527, %v520, %v522
      %v537 = vsel %vm527, %v522, %v524
      %v538 = vsel %vm527, %v524, %v526
      %550 = vst [vmem:[#allocation2 + $0x58] sm:$0x80] %v528
      %551 = vst [vmem:[#allocation2 + $0x60] sm:$0x80] %v529
      %552 = vst [vmem:[#allocation2 + $0x68] sm:$0x80] %v530
      %553 = vst [vmem:[#allocation2 + $0x70] sm:$0x80] %v531
      %554 = vst [vmem:[#allocation2 + $0x78] sm:$0x80] %v532
      %555 = vst [vmem:[#allocation2 + $0x80] sm:$0x80] %v533
      %556 = vst [vmem:[#allocation2 + $0x88] sm:$0x80] %v534
      %557 = vst [vmem:[#allocation2 + $0x90] sm:$0x80] %v535
      %558 = vst [vmem:[#allocation2 + $0x98] sm:$0x80] %v536
      %559 = vst [vmem:[#allocation2 + $0xa0] sm:$0x80] %v537
      %560 = vst [vmem:[#allocation2 + $0xa8] sm:$0x80] %v538
      %561 = vst [vmem:[#allocation2 + $0xb0] sm:$0x3] %v528
      %562 = vst [vmem:[#allocation2 + $0xb8] sm:$0x3] %v529
      %563 = vst [vmem:[#allocation2 + $0xc0] sm:$0x3] %v530
      %564 = vst [vmem:[#allocation2 + $0xc8] sm:$0x3] %v531
      %565 = vst [vmem:[#allocation2 + $0xd0] sm:$0x3] %v532
      %566 = vst [vmem:[#allocation2 + $0xd8] sm:$0x3] %v533
      %567 = vst [vmem:[#allocation2 + $0xe0] sm:$0x3] %v534
      %568 = vst [vmem:[#allocation2 + $0xe8] sm:$0x3] %v535
      %569 = vst [vmem:[#allocation2 + $0xf0] sm:$0x3] %v536
      %570 = vst [vmem:[#allocation2 + $0xf8] sm:$0x3] %v537
      %571 = vst [vmem:[#allocation2 + $0x100] sm:$0x3] %v538
      %v572 = vrot.slane %v171, 6
      %v573 = vrot.slane %v184, 6
      %v574 = vrot.slane %v172, 6
      %v575 = vrot.slane %v185, 6
      %v576 = vrot.slane %v173, 6
      %v577 = vrot.slane %v186, 6
      %v578 = vrot.slane %v174, 6
      %v579 = vrot.slane %v187, 6
      %v580 = vrot.slane %v175, 6
      %v581 = vrot.slane %v188, 6
      %v582 = vrot.slane %v176, 6
      %v583 = vrot.slane %v205, 6
      %584 = vrot.lane.b32.xlu0 %v572, 90
      %v585 = vpop.permute.xlu0 %584
      %586 = vrot.lane.b32.xlu0 %v573, 90
      %v587 = vpop.permute.xlu0 %586
      %588 = vrot.lane.b32.xlu0 %v574, 90
      %v589 = vpop.permute.xlu0 %588
      %590 = vrot.lane.b32.xlu0 %v575, 90
      %v591 = vpop.permute.xlu0 %590
      %592 = vrot.lane.b32.xlu0 %v576, 90
      %v593 = vpop.permute.xlu0 %592
      %594 = vrot.lane.b32.xlu0 %v577, 90
      %v595 = vpop.permute.xlu0 %594
      %596 = vrot.lane.b32.xlu0 %v578, 90
      %v597 = vpop.permute.xlu0 %596
      %598 = vrot.lane.b32.xlu0 %v579, 90
      %v599 = vpop.permute.xlu0 %598
      %600 = vrot.lane.b32.xlu0 %v580, 90
      %v601 = vpop.permute.xlu0 %600
      %602 = vrot.lane.b32.xlu0 %v581, 90
      %v603 = vpop.permute.xlu0 %602
      %604 = vrot.lane.b32.xlu0 %v582, 90
      %v605 = vpop.permute.xlu0 %604
      %606 = vrot.lane.b32.xlu0 %v583, 90
      %v607 = vpop.permute.xlu0 %606
      %vm608 = vcmask 736256
      %v609 = vsel %vm608, %v585, %v587
      %v610 = vsel %vm608, %v587, %v589
      %v611 = vsel %vm608, %v589, %v591
      %v612 = vsel %vm608, %v591, %v593
      %v613 = vsel %vm608, %v593, %v595
      %v614 = vsel %vm608, %v595, %v597
      %v615 = vsel %vm608, %v597, %v599
      %v616 = vsel %vm608, %v599, %v601
      %v617 = vsel %vm608, %v601, %v603
      %v618 = vsel %vm608, %v603, %v605
      %v619 = vsel %vm608, %v605, %v607
      %631 = vst [vmem:[#allocation2 + $0xb0] sm:$0x1c] %v609
      %632 = vst [vmem:[#allocation2 + $0xb8] sm:$0x1c] %v610
      %633 = vst [vmem:[#allocation2 + $0xc0] sm:$0x1c] %v611
      %634 = vst [vmem:[#allocation2 + $0xc8] sm:$0x1c] %v612
      %635 = vst [vmem:[#allocation2 + $0xd0] sm:$0x1c] %v613
      %636 = vst [vmem:[#allocation2 + $0xd8] sm:$0x1c] %v614
      %637 = vst [vmem:[#allocation2 + $0xe0] sm:$0x1c] %v615
      %638 = vst [vmem:[#allocation2 + $0xe8] sm:$0x1c] %v616
      %639 = vst [vmem:[#allocation2 + $0xf0] sm:$0x1c] %v617
      %640 = vst [vmem:[#allocation2 + $0xf8] sm:$0x1c] %v618
      %641 = vst [vmem:[#allocation2 + $0x100] sm:$0x1c] %v619
      %v642 = vrot.slane %v171, 3
      %v643 = vrot.slane %v184, 3
      %v644 = vrot.slane %v172, 3
      %v645 = vrot.slane %v185, 3
      %v646 = vrot.slane %v173, 3
      %v647 = vrot.slane %v186, 3
      %v648 = vrot.slane %v174, 3
      %v649 = vrot.slane %v187, 3
      %v650 = vrot.slane %v175, 3
      %v651 = vrot.slane %v188, 3
      %v652 = vrot.slane %v176, 3
      %v653 = vrot.slane %v205, 3
      %654 = vrot.lane.b32.xlu0 %v642, 89
      %v655 = vpop.permute.xlu0 %654
      %656 = vrot.lane.b32.xlu0 %v643, 89
      %v657 = vpop.permute.xlu0 %656
      %658 = vrot.lane.b32.xlu0 %v644, 89
      %v659 = vpop.permute.xlu0 %658
      %660 = vrot.lane.b32.xlu0 %v645, 89
      %v661 = vpop.permute.xlu0 %660
      %662 = vrot.lane.b32.xlu0 %v646, 89
      %v663 = vpop.permute.xlu0 %662
      %664 = vrot.lane.b32.xlu0 %v647, 89
      %v665 = vpop.permute.xlu0 %664
      %666 = vrot.lane.b32.xlu0 %v648, 89
      %v667 = vpop.permute.xlu0 %666
      %668 = vrot.lane.b32.xlu0 %v649, 89
      %v669 = vpop.permute.xlu0 %668
      %670 = vrot.lane.b32.xlu0 %v650, 89
      %v671 = vpop.permute.xlu0 %670
      %672 = vrot.lane.b32.xlu0 %v651, 89
      %v673 = vpop.permute.xlu0 %672
      %674 = vrot.lane.b32.xlu0 %v652, 89
      %v675 = vpop.permute.xlu0 %674
      %676 = vrot.lane.b32.xlu0 %v653, 89
      %v677 = vpop.permute.xlu0 %676
      %vm678 = vcmask 728064
      %v679 = vsel %vm678, %v655, %v657
      %v680 = vsel %vm678, %v657, %v659
      %v681 = vsel %vm678, %v659, %v661
      %v682 = vsel %vm678, %v661, %v663
      %v683 = vsel %vm678, %v663, %v665
      %v684 = vsel %vm678, %v665, %v667
      %v685 = vsel %vm678, %v667, %v669
      %v686 = vsel %vm678, %v669, %v671
      %v687 = vsel %vm678, %v671, %v673
      %v688 = vsel %vm678, %v673, %v675
      %v689 = vsel %vm678, %v675, %v677
      %701 = vst [vmem:[#allocation2 + $0xb0] sm:$0xe0] %v679
      %702 = vst [vmem:[#allocation2 + $0xb8] sm:$0xe0] %v680
      %703 = vst [vmem:[#allocation2 + $0xc0] sm:$0xe0] %v681
      %704 = vst [vmem:[#allocation2 + $0xc8] sm:$0xe0] %v682
      %705 = vst [vmem:[#allocation2 + $0xd0] sm:$0xe0] %v683
      %706 = vst [vmem:[#allocation2 + $0xd8] sm:$0xe0] %v684
      %707 = vst [vmem:[#allocation2 + $0xe0] sm:$0xe0] %v685
      %708 = vst [vmem:[#allocation2 + $0xe8] sm:$0xe0] %v686
      %709 = vst [vmem:[#allocation2 + $0xf0] sm:$0xe0] %v687
      %710 = vst [vmem:[#allocation2 + $0xf8] sm:$0xe0] %v688
      %711 = vst [vmem:[#allocation2 + $0x100] sm:$0xe0] %v689
      %712 = vrot.lane.b32.xlu0 %v171, 88
      %v713 = vpop.permute.xlu0 %712
      %714 = vrot.lane.b32.xlu0 %v184, 88
      %v715 = vpop.permute.xlu0 %714
      %716 = vrot.lane.b32.xlu0 %v172, 88
      %v717 = vpop.permute.xlu0 %716
      %718 = vrot.lane.b32.xlu0 %v185, 88
      %v719 = vpop.permute.xlu0 %718
      %720 = vrot.lane.b32.xlu0 %v173, 88
      %v721 = vpop.permute.xlu0 %720
      %722 = vrot.lane.b32.xlu0 %v186, 88
      %v723 = vpop.permute.xlu0 %722
      %724 = vrot.lane.b32.xlu0 %v174, 88
      %v725 = vpop.permute.xlu0 %724
      %726 = vrot.lane.b32.xlu0 %v187, 88
      %v727 = vpop.permute.xlu0 %726
      %728 = vrot.lane.b32.xlu0 %v175, 88
      %v729 = vpop.permute.xlu0 %728
      %730 = vrot.lane.b32.xlu0 %v188, 88
      %v731 = vpop.permute.xlu0 %730
      %732 = vrot.lane.b32.xlu0 %v176, 88
      %v733 = vpop.permute.xlu0 %732
      %734 = vrot.lane.b32.xlu0 %v205, 88
      %v735 = vpop.permute.xlu0 %734
      %vm736 = vcmask 719872
      %v737 = vsel %vm736, %v713, %v715
      %v738 = vsel %vm736, %v715, %v717
      %v739 = vsel %vm736, %v717, %v719
      %v740 = vsel %vm736, %v719, %v721
      %v741 = vsel %vm736, %v721, %v723
      %v742 = vsel %vm736, %v723, %v725
      %v743 = vsel %vm736, %v725, %v727
      %v744 = vsel %vm736, %v727, %v729
      %v745 = vsel %vm736, %v729, %v731
      %v746 = vsel %vm736, %v731, %v733
      %v747 = vsel %vm736, %v733, %v735
      %759 = vst [vmem:[#allocation2 + $0x108] sm:$0x7] %v737
      %760 = vst [vmem:[#allocation2 + $0x110] sm:$0x7] %v738
      %761 = vst [vmem:[#allocation2 + $0x118] sm:$0x7] %v739
      %762 = vst [vmem:[#allocation2 + $0x120] sm:$0x7] %v740
      %763 = vst [vmem:[#allocation2 + $0x128] sm:$0x7] %v741
      %764 = vst [vmem:[#allocation2 + $0x130] sm:$0x7] %v742
      %765 = vst [vmem:[#allocation2 + $0x138] sm:$0x7] %v743
      %766 = vst [vmem:[#allocation2 + $0x140] sm:$0x7] %v744
      %767 = vst [vmem:[#allocation2 + $0x148] sm:$0x7] %v745
      %768 = vst [vmem:[#allocation2 + $0x150] sm:$0x7] %v746
      %769 = vst [vmem:[#allocation2 + $0x158] sm:$0x7] %v747
      %770 = vrot.lane.b32.xlu0 %v206, 87
      %v771 = vpop.permute.xlu0 %770
      %772 = vrot.lane.b32.xlu0 %v207, 87
      %v773 = vpop.permute.xlu0 %772
      %774 = vrot.lane.b32.xlu0 %v208, 87
      %v775 = vpop.permute.xlu0 %774
      %776 = vrot.lane.b32.xlu0 %v209, 87
      %v777 = vpop.permute.xlu0 %776
      %778 = vrot.lane.b32.xlu0 %v210, 87
      %v779 = vpop.permute.xlu0 %778
      %780 = vrot.lane.b32.xlu0 %v211, 87
      %v781 = vpop.permute.xlu0 %780
      %782 = vrot.lane.b32.xlu0 %v212, 87
      %v783 = vpop.permute.xlu0 %782
      %784 = vrot.lane.b32.xlu0 %v213, 87
      %v785 = vpop.permute.xlu0 %784
      %786 = vrot.lane.b32.xlu0 %v214, 87
      %v787 = vpop.permute.xlu0 %786
      %788 = vrot.lane.b32.xlu0 %v215, 87
      %v789 = vpop.permute.xlu0 %788
      %790 = vrot.lane.b32.xlu0 %v216, 87
      %v791 = vpop.permute.xlu0 %790
      %792 = vrot.lane.b32.xlu0 %v217, 87
      %v793 = vpop.permute.xlu0 %792
      %vm794 = vcmask 711680
      %v795 = vsel %vm794, %v771, %v773
      %v796 = vsel %vm794, %v773, %v775
      %v797 = vsel %vm794, %v775, %v777
      %v798 = vsel %vm794, %v777, %v779
      %v799 = vsel %vm794, %v779, %v781
      %v800 = vsel %vm794, %v781, %v783
      %v801 = vsel %vm794, %v783, %v785
      %v802 = vsel %vm794, %v785, %v787
      %v803 = vsel %vm794, %v787, %v789
      %v804 = vsel %vm794, %v789, %v791
      %v805 = vsel %vm794, %v791, %v793
      %817 = vst [vmem:[#allocation2 + $0x108] sm:$0x38] %v795
      %818 = vst [vmem:[#allocation2 + $0x110] sm:$0x38] %v796
      %819 = vst [vmem:[#allocation2 + $0x118] sm:$0x38] %v797
      %820 = vst [vmem:[#allocation2 + $0x120] sm:$0x38] %v798
      %821 = vst [vmem:[#allocation2 + $0x128] sm:$0x38] %v799
      %822 = vst [vmem:[#allocation2 + $0x130] sm:$0x38] %v800
      %823 = vst [vmem:[#allocation2 + $0x138] sm:$0x38] %v801
      %824 = vst [vmem:[#allocation2 + $0x140] sm:$0x38] %v802
      %825 = vst [vmem:[#allocation2 + $0x148] sm:$0x38] %v803
      %826 = vst [vmem:[#allocation2 + $0x150] sm:$0x38] %v804
      %827 = vst [vmem:[#allocation2 + $0x158] sm:$0x38] %v805
      %828 = vrot.lane.b32.xlu0 %v276, 54
      %v829 = vpop.permute.xlu0 %828
      %830 = vrot.lane.b32.xlu0 %v277, 54
      %v831 = vpop.permute.xlu0 %830
      %832 = vrot.lane.b32.xlu0 %v278, 54
      %v833 = vpop.permute.xlu0 %832
      %834 = vrot.lane.b32.xlu0 %v279, 54
      %v835 = vpop.permute.xlu0 %834
      %836 = vrot.lane.b32.xlu0 %v280, 54
      %v837 = vpop.permute.xlu0 %836
      %838 = vrot.lane.b32.xlu0 %v281, 54
      %v839 = vpop.permute.xlu0 %838
      %840 = vrot.lane.b32.xlu0 %v282, 54
      %v841 = vpop.permute.xlu0 %840
      %842 = vrot.lane.b32.xlu0 %v283, 54
      %v843 = vpop.permute.xlu0 %842
      %844 = vrot.lane.b32.xlu0 %v284, 54
      %v845 = vpop.permute.xlu0 %844
      %846 = vrot.lane.b32.xlu0 %v285, 54
      %v847 = vpop.permute.xlu0 %846
      %848 = vrot.lane.b32.xlu0 %v286, 54
      %v849 = vpop.permute.xlu0 %848
      %850 = vrot.lane.b32.xlu0 %v287, 54
      %v851 = vpop.permute.xlu0 %850
      %vm852 = vcmask 441344
      %v853 = vsel %vm852, %v829, %v831
      %v854 = vsel %vm852, %v831, %v833
      %v855 = vsel %vm852, %v833, %v835
      %v856 = vsel %vm852, %v835, %v837
      %v857 = vsel %vm852, %v837, %v839
      %v858 = vsel %vm852, %v839, %v841
      %v859 = vsel %vm852, %v841, %v843
      %v860 = vsel %vm852, %v843, %v845
      %v861 = vsel %vm852, %v845, %v847
      %v862 = vsel %vm852, %v847, %v849
      %v863 = vsel %vm852, %v849, %v851
      %875 = vst [vmem:[#allocation2 + $0x108] sm:$0xc0] %v853
      %876 = vst [vmem:[#allocation2 + $0x110] sm:$0xc0] %v854
      %877 = vst [vmem:[#allocation2 + $0x118] sm:$0xc0] %v855
      %878 = vst [vmem:[#allocation2 + $0x120] sm:$0xc0] %v856
      %879 = vst [vmem:[#allocation2 + $0x128] sm:$0xc0] %v857
      %880 = vst [vmem:[#allocation2 + $0x130] sm:$0xc0] %v858
      %881 = vst [vmem:[#allocation2 + $0x138] sm:$0xc0] %v859
      %882 = vst [vmem:[#allocation2 + $0x140] sm:$0xc0] %v860
      %883 = vst [vmem:[#allocation2 + $0x148] sm:$0xc0] %v861
      %884 = vst [vmem:[#allocation2 + $0x150] sm:$0xc0] %v862
      %885 = vst [vmem:[#allocation2 + $0x158] sm:$0xc0] %v863
      %886 = vst [vmem:[#allocation2 + $0x160] sm:$0x1] %v853
      %887 = vst [vmem:[#allocation2 + $0x168] sm:$0x1] %v854
      %888 = vst [vmem:[#allocation2 + $0x170] sm:$0x1] %v855
      %889 = vst [vmem:[#allocation2 + $0x178] sm:$0x1] %v856
      %890 = vst [vmem:[#allocation2 + $0x180] sm:$0x1] %v857
      %891 = vst [vmem:[#allocation2 + $0x188] sm:$0x1] %v858
      %892 = vst [vmem:[#allocation2 + $0x190] sm:$0x1] %v859
      %893 = vst [vmem:[#allocation2 + $0x198] sm:$0x1] %v860
      %894 = vst [vmem:[#allocation2 + $0x1a0] sm:$0x1] %v861
      %895 = vst [vmem:[#allocation2 + $0x1a8] sm:$0x1] %v862
      %896 = vst [vmem:[#allocation2 + $0x1b0] sm:$0x1] %v863
      %897 = vrot.lane.b32.xlu0 %v357, 53
      %v898 = vpop.permute.xlu0 %897
      %899 = vrot.lane.b32.xlu0 %v358, 53
      %v900 = vpop.permute.xlu0 %899
      %901 = vrot.lane.b32.xlu0 %v359, 53
      %v902 = vpop.permute.xlu0 %901
      %903 = vrot.lane.b32.xlu0 %v360, 53
      %v904 = vpop.permute.xlu0 %903
      %905 = vrot.lane.b32.xlu0 %v361, 53
      %v906 = vpop.permute.xlu0 %905
      %907 = vrot.lane.b32.xlu0 %v362, 53
      %v908 = vpop.permute.xlu0 %907
      %909 = vrot.lane.b32.xlu0 %v363, 53
      %v910 = vpop.permute.xlu0 %909
      %911 = vrot.lane.b32.xlu0 %v364, 53
      %v912 = vpop.permute.xlu0 %911
      %913 = vrot.lane.b32.xlu0 %v365, 53
      %v914 = vpop.permute.xlu0 %913
      %915 = vrot.lane.b32.xlu0 %v366, 53
      %v916 = vpop.permute.xlu0 %915
      %917 = vrot.lane.b32.xlu0 %v367, 53
      %v918 = vpop.permute.xlu0 %917
      %919 = vrot.lane.b32.xlu0 %v368, 53
      %v920 = vpop.permute.xlu0 %919
      %vm921 = vcmask 433152
      %v922 = vsel %vm921, %v898, %v900
      %v923 = vsel %vm921, %v900, %v902
      %v924 = vsel %vm921, %v902, %v904
      %v925 = vsel %vm921, %v904, %v906
      %v926 = vsel %vm921, %v906, %v908
      %v927 = vsel %vm921, %v908, %v910
      %v928 = vsel %vm921, %v910, %v912
      %v929 = vsel %vm921, %v912, %v914
      %v930 = vsel %vm921, %v914, %v916
      %v931 = vsel %vm921, %v916, %v918
      %v932 = vsel %vm921, %v918, %v920
      %944 = vst [vmem:[#allocation2 + $0x160] sm:$0xe] %v922
      %945 = vst [vmem:[#allocation2 + $0x168] sm:$0xe] %v923
      %946 = vst [vmem:[#allocation2 + $0x170] sm:$0xe] %v924
      %947 = vst [vmem:[#allocation2 + $0x178] sm:$0xe] %v925
      %948 = vst [vmem:[#allocation2 + $0x180] sm:$0xe] %v926
      %949 = vst [vmem:[#allocation2 + $0x188] sm:$0xe] %v927
      %950 = vst [vmem:[#allocation2 + $0x190] sm:$0xe] %v928
      %951 = vst [vmem:[#allocation2 + $0x198] sm:$0xe] %v929
      %952 = vst [vmem:[#allocation2 + $0x1a0] sm:$0xe] %v930
      %953 = vst [vmem:[#allocation2 + $0x1a8] sm:$0xe] %v931
      %954 = vst [vmem:[#allocation2 + $0x1b0] sm:$0xe] %v932
      %955 = vrot.lane.b32.xlu0 %v427, 52
      %v956 = vpop.permute.xlu0 %955
      %957 = vrot.lane.b32.xlu0 %v171, 52
      %v958 = vpop.permute.xlu0 %957
      %959 = vrot.lane.b32.xlu0 %v428, 52
      %v960 = vpop.permute.xlu0 %959
      %961 = vrot.lane.b32.xlu0 %v172, 52
      %v962 = vpop.permute.xlu0 %961
      %963 = vrot.lane.b32.xlu0 %v429, 52
      %v964 = vpop.permute.xlu0 %963
      %965 = vrot.lane.b32.xlu0 %v173, 52
      %v966 = vpop.permute.xlu0 %965
      %967 = vrot.lane.b32.xlu0 %v430, 52
      %v968 = vpop.permute.xlu0 %967
      %969 = vrot.lane.b32.xlu0 %v174, 52
      %v970 = vpop.permute.xlu0 %969
      %971 = vrot.lane.b32.xlu0 %v431, 52
      %v972 = vpop.permute.xlu0 %971
      %973 = vrot.lane.b32.xlu0 %v175, 52
      %v974 = vpop.permute.xlu0 %973
      %975 = vrot.lane.b32.xlu0 %v432, 52
      %v976 = vpop.permute.xlu0 %975
      %977 = vrot.lane.b32.xlu0 %v176, 52
      %v978 = vpop.permute.xlu0 %977
      %vm979 = vcmask 424960
      %v980 = vsel %vm979, %v956, %v958
      %v981 = vsel %vm979, %v958, %v960
      %v982 = vsel %vm979, %v960, %v962
      %v983 = vsel %vm979, %v962, %v964
      %v984 = vsel %vm979, %v964, %v966
      %v985 = vsel %vm979, %v966, %v968
      %v986 = vsel %vm979, %v968, %v970
      %v987 = vsel %vm979, %v970, %v972
      %v988 = vsel %vm979, %v972, %v974
      %v989 = vsel %vm979, %v974, %v976
      %v990 = vsel %vm979, %v976, %v978
      %1002 = vst [vmem:[#allocation2 + $0x160] sm:$0x70] %v980
      %1003 = vst [vmem:[#allocation2 + $0x168] sm:$0x70] %v981
      %1004 = vst [vmem:[#allocation2 + $0x170] sm:$0x70] %v982
      %1005 = vst [vmem:[#allocation2 + $0x178] sm:$0x70] %v983
      %1006 = vst [vmem:[#allocation2 + $0x180] sm:$0x70] %v984
      %1007 = vst [vmem:[#allocation2 + $0x188] sm:$0x70] %v985
      %1008 = vst [vmem:[#allocation2 + $0x190] sm:$0x70] %v986
      %1009 = vst [vmem:[#allocation2 + $0x198] sm:$0x70] %v987
      %1010 = vst [vmem:[#allocation2 + $0x1a0] sm:$0x70] %v988
      %1011 = vst [vmem:[#allocation2 + $0x1a8] sm:$0x70] %v989
      %1012 = vst [vmem:[#allocation2 + $0x1b0] sm:$0x70] %v990
      %1013 = vrot.lane.b32.xlu0 %v491, 51
      %v1014 = vpop.permute.xlu0 %1013
      %1015 = vrot.lane.b32.xlu0 %v492, 51
      %v1016 = vpop.permute.xlu0 %1015
      %1017 = vrot.lane.b32.xlu0 %v493, 51
      %v1018 = vpop.permute.xlu0 %1017
      %1019 = vrot.lane.b32.xlu0 %v494, 51
      %v1020 = vpop.permute.xlu0 %1019
      %1021 = vrot.lane.b32.xlu0 %v495, 51
      %v1022 = vpop.permute.xlu0 %1021
      %1023 = vrot.lane.b32.xlu0 %v496, 51
      %v1024 = vpop.permute.xlu0 %1023
      %1025 = vrot.lane.b32.xlu0 %v497, 51
      %v1026 = vpop.permute.xlu0 %1025
      %1027 = vrot.lane.b32.xlu0 %v498, 51
      %v1028 = vpop.permute.xlu0 %1027
      %1029 = vrot.lane.b32.xlu0 %v499, 51
      %v1030 = vpop.permute.xlu0 %1029
      %1031 = vrot.lane.b32.xlu0 %v500, 51
      %v1032 = vpop.permute.xlu0 %1031
      %1033 = vrot.lane.b32.xlu0 %v501, 51
      %v1034 = vpop.permute.xlu0 %1033
      %1035 = vrot.lane.b32.xlu0 %v502, 51
      %v1036 = vpop.permute.xlu0 %1035
      %vm1037 = vcmask 416768
      %v1038 = vsel %vm1037, %v1014, %v1016
      %v1039 = vsel %vm1037, %v1016, %v1018
      %v1040 = vsel %vm1037, %v1018, %v1020
      %v1041 = vsel %vm1037, %v1020, %v1022
      %v1042 = vsel %vm1037, %v1022, %v1024
      %v1043 = vsel %vm1037, %v1024, %v1026
      %v1044 = vsel %vm1037, %v1026, %v1028
      %v1045 = vsel %vm1037, %v1028, %v1030
      %v1046 = vsel %vm1037, %v1030, %v1032
      %v1047 = vsel %vm1037, %v1032, %v1034
      %v1048 = vsel %vm1037, %v1034, %v1036
      %1060 = vst [vmem:[#allocation2 + $0x160] sm:$0x80] %v1038
      %1061 = vst [vmem:[#allocation2 + $0x168] sm:$0x80] %v1039
      %1062 = vst [vmem:[#allocation2 + $0x170] sm:$0x80] %v1040
      %1063 = vst [vmem:[#allocation2 + $0x178] sm:$0x80] %v1041
      %1064 = vst [vmem:[#allocation2 + $0x180] sm:$0x80] %v1042
      %1065 = vst [vmem:[#allocation2 + $0x188] sm:$0x80] %v1043
      %1066 = vst [vmem:[#allocation2 + $0x190] sm:$0x80] %v1044
      %1067 = vst [vmem:[#allocation2 + $0x198] sm:$0x80] %v1045
      %1068 = vst [vmem:[#allocation2 + $0x1a0] sm:$0x80] %v1046
      %1069 = vst [vmem:[#allocation2 + $0x1a8] sm:$0x80] %v1047
      %1070 = vst [vmem:[#allocation2 + $0x1b0] sm:$0x80] %v1048
      %1071 = vst [vmem:[#allocation2 + $0x1b8] sm:$0x3] %v1038
      %1072 = vst [vmem:[#allocation2 + $0x1c0] sm:$0x3] %v1039
      %1073 = vst [vmem:[#allocation2 + $0x1c8] sm:$0x3] %v1040
      %1074 = vst [vmem:[#allocation2 + $0x1d0] sm:$0x3] %v1041
      %1075 = vst [vmem:[#allocation2 + $0x1d8] sm:$0x3] %v1042
      %1076 = vst [vmem:[#allocation2 + $0x1e0] sm:$0x3] %v1043
      %1077 = vst [vmem:[#allocation2 + $0x1e8] sm:$0x3] %v1044
      %1078 = vst [vmem:[#allocation2 + $0x1f0] sm:$0x3] %v1045
      %1079 = vst [vmem:[#allocation2 + $0x1f8] sm:$0x3] %v1046
      %1080 = vst [vmem:[#allocation2 + $0x200] sm:$0x3] %v1047
      %1081 = vst [vmem:[#allocation2 + $0x208] sm:$0x3] %v1048
      %1082 = vrot.lane.b32.xlu0 %v572, 50
      %v1083 = vpop.permute.xlu0 %1082
      %1084 = vrot.lane.b32.xlu0 %v573, 50
      %v1085 = vpop.permute.xlu0 %1084
      %1086 = vrot.lane.b32.xlu0 %v574, 50
      %v1087 = vpop.permute.xlu0 %1086
      %1088 = vrot.lane.b32.xlu0 %v575, 50
      %v1089 = vpop.permute.xlu0 %1088
      %1090 = vrot.lane.b32.xlu0 %v576, 50
      %v1091 = vpop.permute.xlu0 %1090
      %1092 = vrot.lane.b32.xlu0 %v577, 50
      %v1093 = vpop.permute.xlu0 %1092
      %1094 = vrot.lane.b32.xlu0 %v578, 50
      %v1095 = vpop.permute.xlu0 %1094
      %1096 = vrot.lane.b32.xlu0 %v579, 50
      %v1097 = vpop.permute.xlu0 %1096
      %1098 = vrot.lane.b32.xlu0 %v580, 50
      %v1099 = vpop.permute.xlu0 %1098
      %1100 = vrot.lane.b32.xlu0 %v581, 50
      %v1101 = vpop.permute.xlu0 %1100
      %1102 = vrot.lane.b32.xlu0 %v582, 50
      %v1103 = vpop.permute.xlu0 %1102
      %1104 = vrot.lane.b32.xlu0 %v583, 50
      %v1105 = vpop.permute.xlu0 %1104
      %vm1106 = vcmask 408576
      %v1107 = vsel %vm1106, %v1083, %v1085
      %v1108 = vsel %vm1106, %v1085, %v1087
      %v1109 = vsel %vm1106, %v1087, %v1089
      %v1110 = vsel %vm1106, %v1089, %v1091
      %v1111 = vsel %vm1106, %v1091, %v1093
      %v1112 = vsel %vm1106, %v1093, %v1095
      %v1113 = vsel %vm1106, %v1095, %v1097
      %v1114 = vsel %vm1106, %v1097, %v1099
      %v1115 = vsel %vm1106, %v1099, %v1101
      %v1116 = vsel %vm1106, %v1101, %v1103
      %v1117 = vsel %vm1106, %v1103, %v1105
      %1129 = vst [vmem:[#allocation2 + $0x1b8] sm:$0x1c] %v1107
      %1130 = vst [vmem:[#allocation2 + $0x1c0] sm:$0x1c] %v1108
      %1131 = vst [vmem:[#allocation2 + $0x1c8] sm:$0x1c] %v1109
      %1132 = vst [vmem:[#allocation2 + $0x1d0] sm:$0x1c] %v1110
      %1133 = vst [vmem:[#allocation2 + $0x1d8] sm:$0x1c] %v1111
      %1134 = vst [vmem:[#allocation2 + $0x1e0] sm:$0x1c] %v1112
      %1135 = vst [vmem:[#allocation2 + $0x1e8] sm:$0x1c] %v1113
      %1136 = vst [vmem:[#allocation2 + $0x1f0] sm:$0x1c] %v1114
      %1137 = vst [vmem:[#allocation2 + $0x1f8] sm:$0x1c] %v1115
      %1138 = vst [vmem:[#allocation2 + $0x200] sm:$0x1c] %v1116
      %1139 = vst [vmem:[#allocation2 + $0x208] sm:$0x1c] %v1117
      %1140 = vrot.lane.b32.xlu0 %v642, 17
      %v1141 = vpop.permute.xlu0 %1140
      %1142 = vrot.lane.b32.xlu0 %v643, 17
      %v1143 = vpop.permute.xlu0 %1142
      %1144 = vrot.lane.b32.xlu0 %v644, 17
      %v1145 = vpop.permute.xlu0 %1144
      %1146 = vrot.lane.b32.xlu0 %v645, 17
      %v1147 = vpop.permute.xlu0 %1146
      %1148 = vrot.lane.b32.xlu0 %v646, 17
      %v1149 = vpop.permute.xlu0 %1148
      %1150 = vrot.lane.b32.xlu0 %v647, 17
      %v1151 = vpop.permute.xlu0 %1150
      %1152 = vrot.lane.b32.xlu0 %v648, 17
      %v1153 = vpop.permute.xlu0 %1152
      %1154 = vrot.lane.b32.xlu0 %v649, 17
      %v1155 = vpop.permute.xlu0 %1154
      %1156 = vrot.lane.b32.xlu0 %v650, 17
      %v1157 = vpop.permute.xlu0 %1156
      %1158 = vrot.lane.b32.xlu0 %v651, 17
      %v1159 = vpop.permute.xlu0 %1158
      %1160 = vrot.lane.b32.xlu0 %v652, 17
      %v1161 = vpop.permute.xlu0 %1160
      %1162 = vrot.lane.b32.xlu0 %v653, 17
      %v1163 = vpop.permute.xlu0 %1162
      %vm1164 = vcmask 138240
      %v1165 = vsel %vm1164, %v1141, %v1143
      %v1166 = vsel %vm1164, %v1143, %v1145
      %v1167 = vsel %vm1164, %v1145, %v1147
      %v1168 = vsel %vm1164, %v1147, %v1149
      %v1169 = vsel %vm1164, %v1149, %v1151
      %v1170 = vsel %vm1164, %v1151, %v1153
      %v1171 = vsel %vm1164, %v1153, %v1155
      %v1172 = vsel %vm1164, %v1155, %v1157
      %v1173 = vsel %vm1164, %v1157, %v1159
      %v1174 = vsel %vm1164, %v1159, %v1161
      %v1175 = vsel %vm1164, %v1161, %v1163
      %1187 = vst [vmem:[#allocation2 + $0x1b8] sm:$0xe0] %v1165
      %1188 = vst [vmem:[#allocation2 + $0x1c0] sm:$0xe0] %v1166
      %1189 = vst [vmem:[#allocation2 + $0x1c8] sm:$0xe0] %v1167
      %1190 = vst [vmem:[#allocation2 + $0x1d0] sm:$0xe0] %v1168
      %1191 = vst [vmem:[#allocation2 + $0x1d8] sm:$0xe0] %v1169
      %1192 = vst [vmem:[#allocation2 + $0x1e0] sm:$0xe0] %v1170
      %1193 = vst [vmem:[#allocation2 + $0x1e8] sm:$0xe0] %v1171
      %1194 = vst [vmem:[#allocation2 + $0x1f0] sm:$0xe0] %v1172
      %1195 = vst [vmem:[#allocation2 + $0x1f8] sm:$0xe0] %v1173
      %1196 = vst [vmem:[#allocation2 + $0x200] sm:$0xe0] %v1174
      %1197 = vst [vmem:[#allocation2 + $0x208] sm:$0xe0] %v1175
      %1198 = vrot.lane.b32.xlu0 %v171, 16
      %v1199 = vpop.permute.xlu0 %1198
      %1200 = vrot.lane.b32.xlu0 %v184, 16
      %v1201 = vpop.permute.xlu0 %1200
      %1202 = vrot.lane.b32.xlu0 %v172, 16
      %v1203 = vpop.permute.xlu0 %1202
      %1204 = vrot.lane.b32.xlu0 %v185, 16
      %v1205 = vpop.permute.xlu0 %1204
      %1206 = vrot.lane.b32.xlu0 %v173, 16
      %v1207 = vpop.permute.xlu0 %1206
      %1208 = vrot.lane.b32.xlu0 %v186, 16
      %v1209 = vpop.permute.xlu0 %1208
      %1210 = vrot.lane.b32.xlu0 %v174, 16
      %v1211 = vpop.permute.xlu0 %1210
      %1212 = vrot.lane.b32.xlu0 %v187, 16
      %v1213 = vpop.permute.xlu0 %1212
      %1214 = vrot.lane.b32.xlu0 %v175, 16
      %v1215 = vpop.permute.xlu0 %1214
      %1216 = vrot.lane.b32.xlu0 %v188, 16
      %v1217 = vpop.permute.xlu0 %1216
      %1218 = vrot.lane.b32.xlu0 %v176, 16
      %v1219 = vpop.permute.xlu0 %1218
      %1220 = vrot.lane.b32.xlu0 %v205, 16
      %v1221 = vpop.permute.xlu0 %1220
      %vm1222 = vcmask 130048
      %v1223 = vsel %vm1222, %v1199, %v1201
      %v1224 = vsel %vm1222, %v1201, %v1203
      %v1225 = vsel %vm1222, %v1203, %v1205
      %v1226 = vsel %vm1222, %v1205, %v1207
      %v1227 = vsel %vm1222, %v1207, %v1209
      %v1228 = vsel %vm1222, %v1209, %v1211
      %v1229 = vsel %vm1222, %v1211, %v1213
      %v1230 = vsel %vm1222, %v1213, %v1215
      %v1231 = vsel %vm1222, %v1215, %v1217
      %v1232 = vsel %vm1222, %v1217, %v1219
      %v1233 = vsel %vm1222, %v1219, %v1221
      %1245 = vst [vmem:[#allocation2 + $0x210] sm:$0x7] %v1223
      %1246 = vst [vmem:[#allocation2 + $0x218] sm:$0x7] %v1224
      %1247 = vst [vmem:[#allocation2 + $0x220] sm:$0x7] %v1225
      %1248 = vst [vmem:[#allocation2 + $0x228] sm:$0x7] %v1226
      %1249 = vst [vmem:[#allocation2 + $0x230] sm:$0x7] %v1227
      %1250 = vst [vmem:[#allocation2 + $0x238] sm:$0x7] %v1228
      %1251 = vst [vmem:[#allocation2 + $0x240] sm:$0x7] %v1229
      %1252 = vst [vmem:[#allocation2 + $0x248] sm:$0x7] %v1230
      %1253 = vst [vmem:[#allocation2 + $0x250] sm:$0x7] %v1231
      %1254 = vst [vmem:[#allocation2 + $0x258] sm:$0x7] %v1232
      %1255 = vst [vmem:[#allocation2 + $0x260] sm:$0x7] %v1233
      %1256 = vrot.lane.b32.xlu0 %v206, 15
      %v1257 = vpop.permute.xlu0 %1256
      %1258 = vrot.lane.b32.xlu0 %v207, 15
      %v1259 = vpop.permute.xlu0 %1258
      %1260 = vrot.lane.b32.xlu0 %v208, 15
      %v1261 = vpop.permute.xlu0 %1260
      %1262 = vrot.lane.b32.xlu0 %v209, 15
      %v1263 = vpop.permute.xlu0 %1262
      %1264 = vrot.lane.b32.xlu0 %v210, 15
      %v1265 = vpop.permute.xlu0 %1264
      %1266 = vrot.lane.b32.xlu0 %v211, 15
      %v1267 = vpop.permute.xlu0 %1266
      %1268 = vrot.lane.b32.xlu0 %v212, 15
      %v1269 = vpop.permute.xlu0 %1268
      %1270 = vrot.lane.b32.xlu0 %v213, 15
      %v1271 = vpop.permute.xlu0 %1270
      %1272 = vrot.lane.b32.xlu0 %v214, 15
      %v1273 = vpop.permute.xlu0 %1272
      %1274 = vrot.lane.b32.xlu0 %v215, 15
      %v1275 = vpop.permute.xlu0 %1274
      %1276 = vrot.lane.b32.xlu0 %v216, 15
      %v1277 = vpop.permute.xlu0 %1276
      %1278 = vrot.lane.b32.xlu0 %v217, 15
      %v1279 = vpop.permute.xlu0 %1278
      %vm1280 = vcmask 121856
      %v1281 = vsel %vm1280, %v1257, %v1259
      %v1282 = vsel %vm1280, %v1259, %v1261
      %v1283 = vsel %vm1280, %v1261, %v1263
      %v1284 = vsel %vm1280, %v1263, %v1265
      %v1285 = vsel %vm1280, %v1265, %v1267
      %v1286 = vsel %vm1280, %v1267, %v1269
      %v1287 = vsel %vm1280, %v1269, %v1271
      %v1288 = vsel %vm1280, %v1271, %v1273
      %v1289 = vsel %vm1280, %v1273, %v1275
      %v1290 = vsel %vm1280, %v1275, %v1277
      %v1291 = vsel %vm1280, %v1277, %v1279
      %1303 = vst [vmem:[#allocation2 + $0x210] sm:$0x38] %v1281
      %1304 = vst [vmem:[#allocation2 + $0x218] sm:$0x38] %v1282
      %1305 = vst [vmem:[#allocation2 + $0x220] sm:$0x38] %v1283
      %1306 = vst [vmem:[#allocation2 + $0x228] sm:$0x38] %v1284
      %1307 = vst [vmem:[#allocation2 + $0x230] sm:$0x38] %v1285
      %1308 = vst [vmem:[#allocation2 + $0x238] sm:$0x38] %v1286
      %1309 = vst [vmem:[#allocation2 + $0x240] sm:$0x38] %v1287
      %1310 = vst [vmem:[#allocation2 + $0x248] sm:$0x38] %v1288
      %1311 = vst [vmem:[#allocation2 + $0x250] sm:$0x38] %v1289
      %1312 = vst [vmem:[#allocation2 + $0x258] sm:$0x38] %v1290
      %1313 = vst [vmem:[#allocation2 + $0x260] sm:$0x38] %v1291
      %1314 = vrot.lane.b32.xlu0 %v276, 14
      %v1315 = vpop.permute.xlu0 %1314
      %1316 = vrot.lane.b32.xlu0 %v277, 14
      %v1317 = vpop.permute.xlu0 %1316
      %1318 = vrot.lane.b32.xlu0 %v278, 14
      %v1319 = vpop.permute.xlu0 %1318
      %1320 = vrot.lane.b32.xlu0 %v279, 14
      %v1321 = vpop.permute.xlu0 %1320
      %1322 = vrot.lane.b32.xlu0 %v280, 14
      %v1323 = vpop.permute.xlu0 %1322
      %1324 = vrot.lane.b32.xlu0 %v281, 14
      %v1325 = vpop.permute.xlu0 %1324
      %1326 = vrot.lane.b32.xlu0 %v282, 14
      %v1327 = vpop.permute.xlu0 %1326
      %1328 = vrot.lane.b32.xlu0 %v283, 14
      %v1329 = vpop.permute.xlu0 %1328
      %1330 = vrot.lane.b32.xlu0 %v284, 14
      %v1331 = vpop.permute.xlu0 %1330
      %1332 = vrot.lane.b32.xlu0 %v285, 14
      %v1333 = vpop.permute.xlu0 %1332
      %1334 = vrot.lane.b32.xlu0 %v286, 14
      %v1335 = vpop.permute.xlu0 %1334
      %1336 = vrot.lane.b32.xlu0 %v287, 14
      %v1337 = vpop.permute.xlu0 %1336
      %vm1338 = vcmask 113664
      %v1339 = vsel %vm1338, %v1315, %v1317
      %v1340 = vsel %vm1338, %v1317, %v1319
      %v1341 = vsel %vm1338, %v1319, %v1321
      %v1342 = vsel %vm1338, %v1321, %v1323
      %v1343 = vsel %vm1338, %v1323, %v1325
      %v1344 = vsel %vm1338, %v1325, %v1327
      %v1345 = vsel %vm1338, %v1327, %v1329
      %v1346 = vsel %vm1338, %v1329, %v1331
      %v1347 = vsel %vm1338, %v1331, %v1333
      %v1348 = vsel %vm1338, %v1333, %v1335
      %v1349 = vsel %vm1338, %v1335, %v1337
      %1361 = vst [vmem:[#allocation2 + $0x210] sm:$0xc0] %v1339
      %1362 = vst [vmem:[#allocation2 + $0x218] sm:$0xc0] %v1340
      %1363 = vst [vmem:[#allocation2 + $0x220] sm:$0xc0] %v1341
      %1364 = vst [vmem:[#allocation2 + $0x228] sm:$0xc0] %v1342
      %1365 = vst [vmem:[#allocation2 + $0x230] sm:$0xc0] %v1343
      %1366 = vst [vmem:[#allocation2 + $0x238] sm:$0xc0] %v1344
      %1367 = vst [vmem:[#allocation2 + $0x240] sm:$0xc0] %v1345
      %1368 = vst [vmem:[#allocation2 + $0x248] sm:$0xc0] %v1346
      %1369 = vst [vmem:[#allocation2 + $0x250] sm:$0xc0] %v1347
      %1370 = vst [vmem:[#allocation2 + $0x258] sm:$0xc0] %v1348
      %1371 = vst [vmem:[#allocation2 + $0x260] sm:$0xc0] %v1349
      %1372 = vst [vmem:[#allocation2 + $0x268] sm:$0x1] %v1339
      %1373 = vst [vmem:[#allocation2 + $0x270] sm:$0x1] %v1340
      %1374 = vst [vmem:[#allocation2 + $0x278] sm:$0x1] %v1341
      %1375 = vst [vmem:[#allocation2 + $0x280] sm:$0x1] %v1342
      %1376 = vst [vmem:[#allocation2 + $0x288] sm:$0x1] %v1343
      %1377 = vst [vmem:[#allocation2 + $0x290] sm:$0x1] %v1344
      %1378 = vst [vmem:[#allocation2 + $0x298] sm:$0x1] %v1345
      %1379 = vst [vmem:[#allocation2 + $0x2a0] sm:$0x1] %v1346
      %1380 = vst [vmem:[#allocation2 + $0x2a8] sm:$0x1] %v1347
      %1381 = vst [vmem:[#allocation2 + $0x2b0] sm:$0x1] %v1348
      %1382 = vst [vmem:[#allocation2 + $0x2b8] sm:$0x1] %v1349
      %1383 = vrot.lane.b32.xlu0 %v357, 13
      %v1384 = vpop.permute.xlu0 %1383
      %1385 = vrot.lane.b32.xlu0 %v358, 13
      %v1386 = vpop.permute.xlu0 %1385
      %1387 = vrot.lane.b32.xlu0 %v359, 13
      %v1388 = vpop.permute.xlu0 %1387
      %1389 = vrot.lane.b32.xlu0 %v360, 13
      %v1390 = vpop.permute.xlu0 %1389
      %1391 = vrot.lane.b32.xlu0 %v361, 13
      %v1392 = vpop.permute.xlu0 %1391
      %1393 = vrot.lane.b32.xlu0 %v362, 13
      %v1394 = vpop.permute.xlu0 %1393
      %1395 = vrot.lane.b32.xlu0 %v363, 13
      %v1396 = vpop.permute.xlu0 %1395
      %1397 = vrot.lane.b32.xlu0 %v364, 13
      %v1398 = vpop.permute.xlu0 %1397
      %1399 = vrot.lane.b32.xlu0 %v365, 13
      %v1400 = vpop.permute.xlu0 %1399
      %1401 = vrot.lane.b32.xlu0 %v366, 13
      %v1402 = vpop.permute.xlu0 %1401
      %1403 = vrot.lane.b32.xlu0 %v367, 13
      %v1404 = vpop.permute.xlu0 %1403
      %1405 = vrot.lane.b32.xlu0 %v368, 13
      %v1406 = vpop.permute.xlu0 %1405
      %vm1407 = vcmask 105472
      %v1408 = vsel %vm1407, %v1384, %v1386
      %v1409 = vsel %vm1407, %v1386, %v1388
      %v1410 = vsel %vm1407, %v1388, %v1390
      %v1411 = vsel %vm1407, %v1390, %v1392
      %v1412 = vsel %vm1407, %v1392, %v1394
      %v1413 = vsel %vm1407, %v1394, %v1396
      %v1414 = vsel %vm1407, %v1396, %v1398
      %v1415 = vsel %vm1407, %v1398, %v1400
      %v1416 = vsel %vm1407, %v1400, %v1402
      %v1417 = vsel %vm1407, %v1402, %v1404
      %v1418 = vsel %vm1407, %v1404, %v1406
      %1430 = vst [vmem:[#allocation2 + $0x268] sm:$0xe] %v1408
      %1431 = vst [vmem:[#allocation2 + $0x270] sm:$0xe] %v1409
      %1432 = vst [vmem:[#allocation2 + $0x278] sm:$0xe] %v1410
      %1433 = vst [vmem:[#allocation2 + $0x280] sm:$0xe] %v1411
      %1434 = vst [vmem:[#allocation2 + $0x288] sm:$0xe] %v1412
      %1435 = vst [vmem:[#allocation2 + $0x290] sm:$0xe] %v1413
      %1436 = vst [vmem:[#allocation2 + $0x298] sm:$0xe] %v1414
      %1437 = vst [vmem:[#allocation2 + $0x2a0] sm:$0xe] %v1415
      %1438 = vst [vmem:[#allocation2 + $0x2a8] sm:$0xe] %v1416
      %1439 = vst [vmem:[#allocation2 + $0x2b0] sm:$0xe] %v1417
      %1440 = vst [vmem:[#allocation2 + $0x2b8] sm:$0xe] %v1418
      %v1442 = vcombine.low %v177, %v177
      %1443 = vrot.lane.b32.xlu0 %v171, 108
      %v1444 = vpop.permute.xlu0 %1443
      %1445 = vrot.lane.b32.xlu0 %v428, 108
      %v1446 = vpop.permute.xlu0 %1445
      %1447 = vrot.lane.b32.xlu0 %v172, 108
      %v1448 = vpop.permute.xlu0 %1447
      %1449 = vrot.lane.b32.xlu0 %v429, 108
      %v1450 = vpop.permute.xlu0 %1449
      %1451 = vrot.lane.b32.xlu0 %v173, 108
      %v1452 = vpop.permute.xlu0 %1451
      %1453 = vrot.lane.b32.xlu0 %v430, 108
      %v1454 = vpop.permute.xlu0 %1453
      %1455 = vrot.lane.b32.xlu0 %v174, 108
      %v1456 = vpop.permute.xlu0 %1455
      %1457 = vrot.lane.b32.xlu0 %v431, 108
      %v1458 = vpop.permute.xlu0 %1457
      %1459 = vrot.lane.b32.xlu0 %v175, 108
      %v1460 = vpop.permute.xlu0 %1459
      %1461 = vrot.lane.b32.xlu0 %v432, 108
      %v1462 = vpop.permute.xlu0 %1461
      %1463 = vrot.lane.b32.xlu0 %v176, 108
      %v1464 = vpop.permute.xlu0 %1463
      %1465 = vrot.lane.b32.xlu0 %v1442, 108
      %v1466 = vpop.permute.xlu0 %1465
      %vm1467 = vcmask 883712
      %v1468 = vsel %vm1467, %v1444, %v1446
      %v1469 = vsel %vm1467, %v1446, %v1448
      %v1470 = vsel %vm1467, %v1448, %v1450
      %v1471 = vsel %vm1467, %v1450, %v1452
      %v1472 = vsel %vm1467, %v1452, %v1454
      %v1473 = vsel %vm1467, %v1454, %v1456
      %v1474 = vsel %vm1467, %v1456, %v1458
      %v1475 = vsel %vm1467, %v1458, %v1460
      %v1476 = vsel %vm1467, %v1460, %v1462
      %v1477 = vsel %vm1467, %v1462, %v1464
      %v1478 = vsel %vm1467, %v1464, %v1466
      %1490 = vst [vmem:[#allocation2 + $0x268] sm:$0x70] %v1468
      %1491 = vst [vmem:[#allocation2 + $0x270] sm:$0x70] %v1469
      %1492 = vst [vmem:[#allocation2 + $0x278] sm:$0x70] %v1470
      %1493 = vst [vmem:[#allocation2 + $0x280] sm:$0x70] %v1471
      %1494 = vst [vmem:[#allocation2 + $0x288] sm:$0x70] %v1472
      %1495 = vst [vmem:[#allocation2 + $0x290] sm:$0x70] %v1473
      %1496 = vst [vmem:[#allocation2 + $0x298] sm:$0x70] %v1474
      %1497 = vst [vmem:[#allocation2 + $0x2a0] sm:$0x70] %v1475
      %1498 = vst [vmem:[#allocation2 + $0x2a8] sm:$0x70] %v1476
      %1499 = vst [vmem:[#allocation2 + $0x2b0] sm:$0x70] %v1477
      %1500 = vst [vmem:[#allocation2 + $0x2b8] sm:$0x70] %v1478
      %v1501 = vrot.slane %v177, 1
      %1502 = vrot.lane.b32.xlu0 %v492, 107
      %v1503 = vpop.permute.xlu0 %1502
      %1504 = vrot.lane.b32.xlu0 %v493, 107
      %v1505 = vpop.permute.xlu0 %1504
      %1506 = vrot.lane.b32.xlu0 %v494, 107
      %v1507 = vpop.permute.xlu0 %1506
      %1508 = vrot.lane.b32.xlu0 %v495, 107
      %v1509 = vpop.permute.xlu0 %1508
      %1510 = vrot.lane.b32.xlu0 %v496, 107
      %v1511 = vpop.permute.xlu0 %1510
      %1512 = vrot.lane.b32.xlu0 %v497, 107
      %v1513 = vpop.permute.xlu0 %1512
      %1514 = vrot.lane.b32.xlu0 %v498, 107
      %v1515 = vpop.permute.xlu0 %1514
      %1516 = vrot.lane.b32.xlu0 %v499, 107
      %v1517 = vpop.permute.xlu0 %1516
      %1518 = vrot.lane.b32.xlu0 %v500, 107
      %v1519 = vpop.permute.xlu0 %1518
      %1520 = vrot.lane.b32.xlu0 %v501, 107
      %v1521 = vpop.permute.xlu0 %1520
      %1522 = vrot.lane.b32.xlu0 %v502, 107
      %v1523 = vpop.permute.xlu0 %1522
      %1524 = vrot.lane.b32.xlu0 %v1501, 107
      %v1525 = vpop.permute.xlu0 %1524
      %vm1526 = vcmask 875520
      %v1527 = vsel %vm1526, %v1503, %v1505
      %v1528 = vsel %vm1526, %v1505, %v1507
      %v1529 = vsel %vm1526, %v1507, %v1509
      %v1530 = vsel %vm1526, %v1509, %v1511
      %v1531 = vsel %vm1526, %v1511, %v1513
      %v1532 = vsel %vm1526, %v1513, %v1515
      %v1533 = vsel %vm1526, %v1515, %v1517
      %v1534 = vsel %vm1526, %v1517, %v1519
      %v1535 = vsel %vm1526, %v1519, %v1521
      %v1536 = vsel %vm1526, %v1521, %v1523
      %v1537 = vsel %vm1526, %v1523, %v1525
      %1549 = vst [vmem:[#allocation2 + $0x268] sm:$0x80] %v1527
      %1550 = vst [vmem:[#allocation2 + $0x270] sm:$0x80] %v1528
      %1551 = vst [vmem:[#allocation2 + $0x278] sm:$0x80] %v1529
      %1552 = vst [vmem:[#allocation2 + $0x280] sm:$0x80] %v1530
      %1553 = vst [vmem:[#allocation2 + $0x288] sm:$0x80] %v1531
      %1554 = vst [vmem:[#allocation2 + $0x290] sm:$0x80] %v1532
      %1555 = vst [vmem:[#allocation2 + $0x298] sm:$0x80] %v1533
      %1556 = vst [vmem:[#allocation2 + $0x2a0] sm:$0x80] %v1534
      %1557 = vst [vmem:[#allocation2 + $0x2a8] sm:$0x80] %v1535
      %1558 = vst [vmem:[#allocation2 + $0x2b0] sm:$0x80] %v1536
      %1559 = vst [vmem:[#allocation2 + $0x2b8] sm:$0x80] %v1537
      %1560 = vst [vmem:[#allocation2 + $0x2c0] sm:$0x3] %v1527
      %1561 = vst [vmem:[#allocation2 + $0x2c8] sm:$0x3] %v1528
      %1562 = vst [vmem:[#allocation2 + $0x2d0] sm:$0x3] %v1529
      %1563 = vst [vmem:[#allocation2 + $0x2d8] sm:$0x3] %v1530
      %1564 = vst [vmem:[#allocation2 + $0x2e0] sm:$0x3] %v1531
      %1565 = vst [vmem:[#allocation2 + $0x2e8] sm:$0x3] %v1532
      %1566 = vst [vmem:[#allocation2 + $0x2f0] sm:$0x3] %v1533
      %1567 = vst [vmem:[#allocation2 + $0x2f8] sm:$0x3] %v1534
      %1568 = vst [vmem:[#allocation2 + $0x300] sm:$0x3] %v1535
      %1569 = vst [vmem:[#allocation2 + $0x308] sm:$0x3] %v1536
      %1570 = vst [vmem:[#allocation2 + $0x310] sm:$0x3] %v1537
      %v1571 = vrot.slane %v177, 6
      %1572 = vrot.lane.b32.xlu0 %v573, 106
      %v1573 = vpop.permute.xlu0 %1572
      %1574 = vrot.lane.b32.xlu0 %v574, 106
      %v1575 = vpop.permute.xlu0 %1574
      %1576 = vrot.lane.b32.xlu0 %v575, 106
      %v1577 = vpop.permute.xlu0 %1576
      %1578 = vrot.lane.b32.xlu0 %v576, 106
      %v1579 = vpop.permute.xlu0 %1578
      %1580 = vrot.lane.b32.xlu0 %v577, 106
      %v1581 = vpop.permute.xlu0 %1580
      %1582 = vrot.lane.b32.xlu0 %v578, 106
      %v1583 = vpop.permute.xlu0 %1582
      %1584 = vrot.lane.b32.xlu0 %v579, 106
      %v1585 = vpop.permute.xlu0 %1584
      %1586 = vrot.lane.b32.xlu0 %v580, 106
      %v1587 = vpop.permute.xlu0 %1586
      %1588 = vrot.lane.b32.xlu0 %v581, 106
      %v1589 = vpop.permute.xlu0 %1588
      %1590 = vrot.lane.b32.xlu0 %v582, 106
      %v1591 = vpop.permute.xlu0 %1590
      %1592 = vrot.lane.b32.xlu0 %v583, 106
      %v1593 = vpop.permute.xlu0 %1592
      %1594 = vrot.lane.b32.xlu0 %v1571, 106
      %v1595 = vpop.permute.xlu0 %1594
      %vm1596 = vcmask 867328
      %v1597 = vsel %vm1596, %v1573, %v1575
      %v1598 = vsel %vm1596, %v1575, %v1577
      %v1599 = vsel %vm1596, %v1577, %v1579
      %v1600 = vsel %vm1596, %v1579, %v1581
      %v1601 = vsel %vm1596, %v1581, %v1583
      %v1602 = vsel %vm1596, %v1583, %v1585
      %v1603 = vsel %vm1596, %v1585, %v1587
      %v1604 = vsel %vm1596, %v1587, %v1589
      %v1605 = vsel %vm1596, %v1589, %v1591
      %v1606 = vsel %vm1596, %v1591, %v1593
      %v1607 = vsel %vm1596, %v1593, %v1595
      %1619 = vst [vmem:[#allocation2 + $0x2c0] sm:$0x1c] %v1597
      %1620 = vst [vmem:[#allocation2 + $0x2c8] sm:$0x1c] %v1598
      %1621 = vst [vmem:[#allocation2 + $0x2d0] sm:$0x1c] %v1599
      %1622 = vst [vmem:[#allocation2 + $0x2d8] sm:$0x1c] %v1600
      %1623 = vst [vmem:[#allocation2 + $0x2e0] sm:$0x1c] %v1601
      %1624 = vst [vmem:[#allocation2 + $0x2e8] sm:$0x1c] %v1602
      %1625 = vst [vmem:[#allocation2 + $0x2f0] sm:$0x1c] %v1603
      %1626 = vst [vmem:[#allocation2 + $0x2f8] sm:$0x1c] %v1604
      %1627 = vst [vmem:[#allocation2 + $0x300] sm:$0x1c] %v1605
      %1628 = vst [vmem:[#allocation2 + $0x308] sm:$0x1c] %v1606
      %1629 = vst [vmem:[#allocation2 + $0x310] sm:$0x1c] %v1607
      %v1630 = vrot.slane %v177, 3
      %1631 = vrot.lane.b32.xlu0 %v643, 105
      %v1632 = vpop.permute.xlu0 %1631
      %1633 = vrot.lane.b32.xlu0 %v644, 105
      %v1634 = vpop.permute.xlu0 %1633
      %1635 = vrot.lane.b32.xlu0 %v645, 105
      %v1636 = vpop.permute.xlu0 %1635
      %1637 = vrot.lane.b32.xlu0 %v646, 105
      %v1638 = vpop.permute.xlu0 %1637
      %1639 = vrot.lane.b32.xlu0 %v647, 105
      %v1640 = vpop.permute.xlu0 %1639
      %1641 = vrot.lane.b32.xlu0 %v648, 105
      %v1642 = vpop.permute.xlu0 %1641
      %1643 = vrot.lane.b32.xlu0 %v649, 105
      %v1644 = vpop.permute.xlu0 %1643
      %1645 = vrot.lane.b32.xlu0 %v650, 105
      %v1646 = vpop.permute.xlu0 %1645
      %1647 = vrot.lane.b32.xlu0 %v651, 105
      %v1648 = vpop.permute.xlu0 %1647
      %1649 = vrot.lane.b32.xlu0 %v652, 105
      %v1650 = vpop.permute.xlu0 %1649
      %1651 = vrot.lane.b32.xlu0 %v653, 105
      %v1652 = vpop.permute.xlu0 %1651
      %1653 = vrot.lane.b32.xlu0 %v1630, 105
      %v1654 = vpop.permute.xlu0 %1653
      %vm1655 = vcmask 859136
      %v1656 = vsel %vm1655, %v1632, %v1634
      %v1657 = vsel %vm1655, %v1634, %v1636
      %v1658 = vsel %vm1655, %v1636, %v1638
      %v1659 = vsel %vm1655, %v1638, %v1640
      %v1660 = vsel %vm1655, %v1640, %v1642
      %v1661 = vsel %vm1655, %v1642, %v1644
      %v1662 = vsel %vm1655, %v1644, %v1646
      %v1663 = vsel %vm1655, %v1646, %v1648
      %v1664 = vsel %vm1655, %v1648, %v1650
      %v1665 = vsel %vm1655, %v1650, %v1652
      %v1666 = vsel %vm1655, %v1652, %v1654
      %1678 = vst [vmem:[#allocation2 + $0x2c0] sm:$0xe0] %v1656
      %1679 = vst [vmem:[#allocation2 + $0x2c8] sm:$0xe0] %v1657
      %1680 = vst [vmem:[#allocation2 + $0x2d0] sm:$0xe0] %v1658
      %1681 = vst [vmem:[#allocation2 + $0x2d8] sm:$0xe0] %v1659
      %1682 = vst [vmem:[#allocation2 + $0x2e0] sm:$0xe0] %v1660
      %1683 = vst [vmem:[#allocation2 + $0x2e8] sm:$0xe0] %v1661
      %1684 = vst [vmem:[#allocation2 + $0x2f0] sm:$0xe0] %v1662
      %1685 = vst [vmem:[#allocation2 + $0x2f8] sm:$0xe0] %v1663
      %1686 = vst [vmem:[#allocation2 + $0x300] sm:$0xe0] %v1664
      %1687 = vst [vmem:[#allocation2 + $0x308] sm:$0xe0] %v1665
      %1688 = vst [vmem:[#allocation2 + $0x310] sm:$0xe0] %v1666
      %1689 = vrot.lane.b32.xlu0 %v184, 104
      %v1690 = vpop.permute.xlu0 %1689
      %1691 = vrot.lane.b32.xlu0 %v172, 104
      %v1692 = vpop.permute.xlu0 %1691
      %1693 = vrot.lane.b32.xlu0 %v185, 104
      %v1694 = vpop.permute.xlu0 %1693
      %1695 = vrot.lane.b32.xlu0 %v173, 104
      %v1696 = vpop.permute.xlu0 %1695
      %1697 = vrot.lane.b32.xlu0 %v186, 104
      %v1698 = vpop.permute.xlu0 %1697
      %1699 = vrot.lane.b32.xlu0 %v174, 104
      %v1700 = vpop.permute.xlu0 %1699
      %1701 = vrot.lane.b32.xlu0 %v187, 104
      %v1702 = vpop.permute.xlu0 %1701
      %1703 = vrot.lane.b32.xlu0 %v175, 104
      %v1704 = vpop.permute.xlu0 %1703
      %1705 = vrot.lane.b32.xlu0 %v188, 104
      %v1706 = vpop.permute.xlu0 %1705
      %1707 = vrot.lane.b32.xlu0 %v176, 104
      %v1708 = vpop.permute.xlu0 %1707
      %1709 = vrot.lane.b32.xlu0 %v205, 104
      %v1710 = vpop.permute.xlu0 %1709
      %1711 = vrot.lane.b32.xlu0 %v177, 104
      %v1712 = vpop.permute.xlu0 %1711
      %vm1713 = vcmask 850944
      %v1714 = vsel %vm1713, %v1690, %v1692
      %v1715 = vsel %vm1713, %v1692, %v1694
      %v1716 = vsel %vm1713, %v1694, %v1696
      %v1717 = vsel %vm1713, %v1696, %v1698
      %v1718 = vsel %vm1713, %v1698, %v1700
      %v1719 = vsel %vm1713, %v1700, %v1702
      %v1720 = vsel %vm1713, %v1702, %v1704
      %v1721 = vsel %vm1713, %v1704, %v1706
      %v1722 = vsel %vm1713, %v1706, %v1708
      %v1723 = vsel %vm1713, %v1708, %v1710
      %v1724 = vsel %vm1713, %v1710, %v1712
      %1736 = vst [vmem:[#allocation2 + $0x318] sm:$0x7] %v1714
      %1737 = vst [vmem:[#allocation2 + $0x320] sm:$0x7] %v1715
      %1738 = vst [vmem:[#allocation2 + $0x328] sm:$0x7] %v1716
      %1739 = vst [vmem:[#allocation2 + $0x330] sm:$0x7] %v1717
      %1740 = vst [vmem:[#allocation2 + $0x338] sm:$0x7] %v1718
      %1741 = vst [vmem:[#allocation2 + $0x340] sm:$0x7] %v1719
      %1742 = vst [vmem:[#allocation2 + $0x348] sm:$0x7] %v1720
      %1743 = vst [vmem:[#allocation2 + $0x350] sm:$0x7] %v1721
      %1744 = vst [vmem:[#allocation2 + $0x358] sm:$0x7] %v1722
      %1745 = vst [vmem:[#allocation2 + $0x360] sm:$0x7] %v1723
      %1746 = vst [vmem:[#allocation2 + $0x368] sm:$0x7] %v1724
      %s1747 = scalar_lea.vmem [#allocation2], 795
      %1748 = vst [vmem:[%s1747] ss:$8 sm:$0xf] 1.0
      %1749 = vst [vmem:[%s1747] ss:$8 sm:$0xf0] 1.0
      %v1750 = vlaneseq
      %vm1751 = vcmp.ge.s32.totalorder %v1750, 0
      %vm1752 = vcmp.lt.s32.totalorder %v1750, 384
      %vm1753 = vmand %vm1751, %vm1752
      %s1754 = scalar_lea.vmem [#allocation2], 859
      %1755 = vst.msk [vmem:[%s1754] ss:$8 sm:$0x7] %vm1753, 1.0
      %1756 = vst.msk [vmem:[%s1754] ss:$8 sm:$0x0] %vm1753, 1.0
      %1757 = vst [vmem:[#allocation2 + $0x318] sm:$0xf0] 0.0
      %1758 = vst [vmem:[#allocation2 + $0x320] sm:$0xf0] 0.0
      %1759 = vst [vmem:[#allocation2 + $0x328] sm:$0xf0] 0.0
      %1760 = vst [vmem:[#allocation2 + $0x330] sm:$0xf0] 0.0
      %1761 = vst [vmem:[#allocation2 + $0x338] sm:$0xf0] 0.0
      %1762 = vst [vmem:[#allocation2 + $0x340] sm:$0xf0] 0.0
      %1763 = vst [vmem:[#allocation2 + $0x348] sm:$0xf0] 0.0
      %1764 = vst [vmem:[#allocation2 + $0x350] sm:$0xf0] 0.0
      %1765 = vst [vmem:[#allocation2 + $0x358] sm:$0xf0] 0.0
      %1766 = vst [vmem:[#allocation2 + $0x360] sm:$0xf0] 0.0
      %1767 = vst [vmem:[#allocation2 + $0x368] sm:$0xf0] 0.0
      %v1768 = vld [vmem:[%s1] sm:$0xff]
      %v1769 = vld [vmem:[%s1 + $0x8] sm:$0xff]
      %v1770 = vld [vmem:[%s1 + $0x10] sm:$0xff]
      %v1771 = vld [vmem:[%s1 + $0x18] sm:$0xff]
      %v1772 = vld [vmem:[#allocation2] sm:$0xff]
      %v1773 = vld [vmem:[#allocation2 + $0x8] sm:$0xff]
      %v1774 = vld [vmem:[#allocation2 + $0x10] sm:$0xff]
      %v1775 = vld [vmem:[#allocation2 + $0x18] sm:$0xff]
      %v1776 = vld [vmem:[#allocation2 + $0x20] sm:$0xff]
      %v1777 = vld [vmem:[#allocation2 + $0x28] sm:$0xff]
      %v1778 = vld [vmem:[#allocation2 + $0x30] sm:$0xff]
      %v1779 = vld [vmem:[#allocation2 + $0x38] sm:$0xff]
      %v1780 = vld [vmem:[#allocation2 + $0x40] sm:$0xff]
      %v1781 = vld [vmem:[#allocation2 + $0x48] sm:$0xff]
      %v1782 = vld [vmem:[#allocation2 + $0x50] sm:$0xff]
      %v1783 = vld [vmem:[#allocation2 + $0x58] sm:$0xff]
      %v1784 = vld [vmem:[#allocation2 + $0x60] sm:$0xff]
      %v1785 = vld [vmem:[#allocation2 + $0x68] sm:$0xff]
      %v1786 = vld [vmem:[#allocation2 + $0x70] sm:$0xff]
      %v1787 = vld [vmem:[#allocation2 + $0x78] sm:$0xff]
      %v1788 = vld [vmem:[#allocation2 + $0x80] sm:$0xff]
      %v1789 = vld [vmem:[#allocation2 + $0x88] sm:$0xff]
      %v1790 = vld [vmem:[#allocation2 + $0x90] sm:$0xff]
      %v1791 = vld [vmem:[#allocation2 + $0x98] sm:$0xff]
      %v1792 = vld [vmem:[#allocation2 + $0xa0] sm:$0xff]
      %v1793 = vld [vmem:[#allocation2 + $0xa8] sm:$0xff]
      %v1794 = vld [vmem:[#allocation2 + $0xb0] sm:$0xff]
      %v1795 = vld [vmem:[#allocation2 + $0xb8] sm:$0xff]
      %v1796 = vld [vmem:[#allocation2 + $0xc0] sm:$0xff]
      %v1797 = vld [vmem:[#allocation2 + $0xc8] sm:$0xff]
      %v1798 = vld [vmem:[#allocation2 + $0xd0] sm:$0xff]
      %v1799 = vld [vmem:[#allocation2 + $0xd8] sm:$0xff]
      %v1800 = vld [vmem:[#allocation2 + $0xe0] sm:$0xff]
      %v1801 = vld [vmem:[#allocation2 + $0xe8] sm:$0xff]
      %v1802 = vld [vmem:[#allocation2 + $0xf0] sm:$0xff]
      %v1803 = vld [vmem:[#allocation2 + $0xf8] sm:$0xff]
      %v1804 = vld [vmem:[#allocation2 + $0x100] sm:$0xff]
      %v1805 = vld [vmem:[#allocation2 + $0x108] sm:$0xff]
      %v1806 = vld [vmem:[#allocation2 + $0x110] sm:$0xff]
      %v1807 = vld [vmem:[#allocation2 + $0x118] sm:$0xff]
      %v1808 = vld [vmem:[#allocation2 + $0x120] sm:$0xff]
      %v1809 = vld [vmem:[#allocation2 + $0x128] sm:$0xff]
      %v1810 = vld [vmem:[#allocation2 + $0x130] sm:$0xff]
      %v1811 = vld [vmem:[#allocation2 + $0x138] sm:$0xff]
      %v1812 = vld [vmem:[#allocation2 + $0x140] sm:$0xff]
      %v1813 = vld [vmem:[#allocation2 + $0x148] sm:$0xff]
      %v1814 = vld [vmem:[#allocation2 + $0x150] sm:$0xff]
      %v1815 = vld [vmem:[#allocation2 + $0x158] sm:$0xff]
      %v1816 = vld [vmem:[#allocation2 + $0x160] sm:$0xff]
      %v1817 = vld [vmem:[#allocation2 + $0x168] sm:$0xff]
      %v1818 = vld [vmem:[#allocation2 + $0x170] sm:$0xff]
      %v1819 = vld [vmem:[#allocation2 + $0x178] sm:$0xff]
      %v1820 = vld [vmem:[#allocation2 + $0x180] sm:$0xff]
      %v1821 = vld [vmem:[#allocation2 + $0x188] sm:$0xff]
      %v1822 = vld [vmem:[#allocation2 + $0x190] sm:$0xff]
      %v1823 = vld [vmem:[#allocation2 + $0x198] sm:$0xff]
      %v1824 = vld [vmem:[#allocation2 + $0x1a0] sm:$0xff]
      %v1825 = vld [vmem:[#allocation2 + $0x1a8] sm:$0xff]
      %v1826 = vld [vmem:[#allocation2 + $0x1b0] sm:$0xff]
      %v1827 = vld [vmem:[#allocation2 + $0x1b8] sm:$0xff]
      %v1828 = vld [vmem:[#allocation2 + $0x1c0] sm:$0xff]
      %v1829 = vld [vmem:[#allocation2 + $0x1c8] sm:$0xff]
      %v1830 = vld [vmem:[#allocation2 + $0x1d0] sm:$0xff]
      %v1831 = vld [vmem:[#allocation2 + $0x1d8] sm:$0xff]
      %v1832 = vld [vmem:[#allocation2 + $0x1e0] sm:$0xff]
      %v1833 = vld [vmem:[#allocation2 + $0x1e8] sm:$0xff]
      %v1834 = vld [vmem:[#allocation2 + $0x1f0] sm:$0xff]
      %v1835 = vld [vmem:[#allocation2 + $0x1f8] sm:$0xff]
      %v1836 = vld [vmem:[#allocation2 + $0x200] sm:$0xff]
      %v1837 = vld [vmem:[#allocation2 + $0x208] sm:$0xff]
      %v1838 = vld [vmem:[#allocation2 + $0x210] sm:$0xff]
      %v1839 = vld [vmem:[#allocation2 + $0x218] sm:$0xff]
      %v1840 = vld [vmem:[#allocation2 + $0x220] sm:$0xff]
      %v1841 = vld [vmem:[#allocation2 + $0x228] sm:$0xff]
      %v1842 = vld [vmem:[#allocation2 + $0x230] sm:$0xff]
      %v1843 = vld [vmem:[#allocation2 + $0x238] sm:$0xff]
      %v1844 = vld [vmem:[#allocation2 + $0x240] sm:$0xff]
      %v1845 = vld [vmem:[#allocation2 + $0x248] sm:$0xff]
      %v1846 = vld [vmem:[#allocation2 + $0x250] sm:$0xff]
      %v1847 = vld [vmem:[#allocation2 + $0x258] sm:$0xff]
      %v1848 = vld [vmem:[#allocation2 + $0x260] sm:$0xff]
      %v1849 = vld [vmem:[#allocation2 + $0x268] sm:$0xff]
      %v1850 = vld [vmem:[#allocation2 + $0x270] sm:$0xff]
      %v1851 = vld [vmem:[#allocation2 + $0x278] sm:$0xff]
      %v1852 = vld [vmem:[#allocation2 + $0x280] sm:$0xff]
      %v1853 = vld [vmem:[#allocation2 + $0x288] sm:$0xff]
      %v1854 = vld [vmem:[#allocation2 + $0x290] sm:$0xff]
      %v1855 = vld [vmem:[#allocation2 + $0x298] sm:$0xff]
      %v1856 = vld [vmem:[#allocation2 + $0x2a0] sm:$0xff]
      %v1857 = vld [vmem:[#allocation2 + $0x2a8] sm:$0xff]
      %v1858 = vld [vmem:[#allocation2 + $0x2b0] sm:$0xff]
      %v1859 = vld [vmem:[#allocation2 + $0x2b8] sm:$0xff]
      %v1860 = vld [vmem:[#allocation2 + $0x2c0] sm:$0xff]
      %v1861 = vld [vmem:[#allocation2 + $0x2c8] sm:$0xff]
      %v1862 = vld [vmem:[#allocation2 + $0x2d0] sm:$0xff]
      %v1863 = vld [vmem:[#allocation2 + $0x2d8] sm:$0xff]
      %v1864 = vld [vmem:[#allocation2 + $0x2e0] sm:$0xff]
      %v1865 = vld [vmem:[#allocation2 + $0x2e8] sm:$0xff]
      %v1866 = vld [vmem:[#allocation2 + $0x2f0] sm:$0xff]
      %v1867 = vld [vmem:[#allocation2 + $0x2f8] sm:$0xff]
      %v1868 = vld [vmem:[#allocation2 + $0x300] sm:$0xff]
      %v1869 = vld [vmem:[#allocation2 + $0x308] sm:$0xff]
      %v1870 = vld [vmem:[#allocation2 + $0x310] sm:$0xff]
      %v1871 = vld [vmem:[#allocation2 + $0x318] sm:$0xff]
      %v1872 = vld [vmem:[#allocation2 + $0x320] sm:$0xff]
      %v1873 = vld [vmem:[#allocation2 + $0x328] sm:$0xff]
      %v1874 = vld [vmem:[#allocation2 + $0x330] sm:$0xff]
      %v1875 = vld [vmem:[#allocation2 + $0x338] sm:$0xff]
      %v1876 = vld [vmem:[#allocation2 + $0x340] sm:$0xff]
      %v1877 = vld [vmem:[#allocation2 + $0x348] sm:$0xff]
      %v1878 = vld [vmem:[#allocation2 + $0x350] sm:$0xff]
      %v1879 = vld [vmem:[#allocation2 + $0x358] sm:$0xff]
      %v1880 = vld [vmem:[#allocation2 + $0x360] sm:$0xff]
      %v1881 = vld [vmem:[#allocation2 + $0x368] sm:$0xff]
      %vm1882 = vcmask 654336
      %v1884 = vsel %vm1882, %v1768, 0
      %v1887 = vsel %vm1882, %v1769, 0
      %v1890 = vsel %vm1882, %v1770, 0
      %v1893 = vsel %vm1882, %v1771, 0
      %v1895 = vand.u32 %v1773, 4294901760
      %1896 = vmatprep.subr.mxu0 %v1895
      %v1897 = vand.u32 %v1772, 4294901760
      %1898 = vmatpush1.msra.mxu0 %v1897
      %v1899 = vand.u32 %v1784, 4294901760
      %1900 = vmatprep.subr.mxu0 %v1899
      %v1901 = vand.u32 %v1783, 4294901760
      %1902 = vmatpush1.msra.mxu0 %v1901
      %v1903 = vand.u32 %v1795, 4294901760
      %1904 = vmatprep.subr.mxu0 %v1903
      %v1905 = vand.u32 %v1794, 4294901760
      %1906 = vmatpush1.msra.mxu0 %v1905
      %v1907 = vand.u32 %v1806, 4294901760
      %1908 = vmatprep.subr.mxu0 %v1907
      %v1909 = vand.u32 %v1805, 4294901760
      %1910 = vmatpush1.msra.mxu0 %v1909
      %v1911 = vand.u32 %v1817, 4294901760
      %1912 = vmatprep.subr.mxu0 %v1911
      %v1913 = vand.u32 %v1816, 4294901760
      %1914 = vmatpush1.msra.mxu0 %v1913
      %v1915 = vand.u32 %v1828, 4294901760
      %1916 = vmatprep.subr.mxu0 %v1915
      %v1917 = vand.u32 %v1827, 4294901760
      %1918 = vmatpush1.msra.mxu0 %v1917
      %v1919 = vand.u32 %v1839, 4294901760
      %1920 = vmatprep.subr.mxu0 %v1919
      %v1921 = vand.u32 %v1838, 4294901760
      %1922 = vmatpush1.msra.mxu0 %v1921
      %v1923 = vand.u32 %v1850, 4294901760
      %1924 = vmatprep.subr.mxu0 %v1923
      %v1925 = vand.u32 %v1849, 4294901760
      %1926 = vmatpush1.msra.mxu0 %v1925
      %v1927 = vand.u32 %v1861, 4294901760
      %1928 = vmatprep.subr.mxu0 %v1927
      %v1929 = vand.u32 %v1860, 4294901760
      %1930 = vmatpush1.msra.mxu0 %v1929
      %v1931 = vand.u32 %v1872, 4294901760
      %1932 = vmatprep.subr.mxu0 %v1931
      %v1933 = vand.u32 %v1871, 4294901760
      %1934 = vmatpush1.msra.mxu0 %v1933
      %1935 = vmatprep.subr.mxu0 0.0
      %1936 = vmatpush1.msra.mxu0 0.0
      %1937 = vmatprep.subr.mxu0 0.0
      %1938 = vmatpush1.msra.mxu0 0.0
      %1939 = vmatprep.subr.mxu0 0.0
      %1940 = vmatpush1.msra.mxu0 0.0
      %1941 = vmatprep.subr.mxu0 0.0
      %1942 = vmatpush1.msra.mxu0 0.0
      %1943 = vmatprep.subr.mxu0 0.0
      %1944 = vmatpush1.msra.mxu0 0.0
      %1945 = vmatprep.subr.mxu0 0.0
      %1946 = vmatpush1.msra.mxu0 0.0
      %1947 = vmatprep.subr.mxu0 0.0
      %1948 = vmatpush1.msra.mxu0 0.0
      %1949 = vmatprep.subr.mxu0 0.0
      %1950 = vmatpush1.msra.mxu0 0.0
      %1951 = vmatprep.subr.mxu0 0.0
      %1952 = vmatpush1.msra.mxu0 0.0
      %1953 = vmatprep.subr.mxu0 0.0
      %1954 = vmatpush1.msra.mxu0 0.0
      %1955 = vmatprep.subr.mxu0 0.0
      %1956 = vmatpush1.msra.mxu0 0.0
      %1957 = vmatprep.subr.mxu0 0.0
      %1958 = vmatpush1.msra.mxu0 0.0
      %1959 = vmatprep.subr.mxu0 0.0
      %1960 = vmatpush1.msra.mxu0 0.0
      %1961 = vmatprep.subr.mxu0 0.0
      %1962 = vmatpush1.msra.mxu0 0.0
      %1963 = vmatprep.subr.mxu0 0.0
      %1964 = vmatpush1.msra.mxu0 0.0
      %1965 = vmatprep.subr.mxu0 0.0
      %1966 = vmatpush1.msra.mxu0 0.0
      %1967 = vmatprep.subr.mxu0 0.0
      %1968 = vmatpush1.msra.mxu0 0.0
      %1969 = vmatprep.subr.mxu0 0.0
      %1970 = vmatpush1.msra.mxu0 0.0
      %1971 = vmatprep.subr.mxu0 0.0
      %1972 = vmatpush1.msra.mxu0 0.0
      %1973 = vmatprep.subr.mxu0 0.0
      %1974 = vmatpush1.msra.mxu0 0.0
      %1975 = vmatprep.subr.mxu0 0.0
      %1976 = vmatpush1.msra.mxu0 0.0
      %1977 = vmatprep.subr.mxu0 0.0
      %1978 = vmatpush1.msra.mxu0 0.0
      %1979 = vmatprep.mubr.f32.mxu0 0.0
      %v1980 = vand.u32 %v1884, 4294901760
      %v1981 = vsub.f32 %v1884, %v1980
      %v1982 = vand.u32 %v1981, 4294901760
      %v1983 = vsub.f32 %v1981, %v1982
      %v1984 = vand.u32 %v1983, 4294901760
      %1985 = vmatmul.mubr.f32.gmra.mrb[0].mxu0 %v1984
      %v1986 = vpop.f32.mrb[0].mxu0
      %v1987 = vadd.f32 0.0, %v1986
      %v1988 = vpop.f32.mrb[0].mxu0
      %v1989 = vadd.f32 0.0, %v1988
      %1990 = vmatprep.mubr.f32.mxu0 0.0
      %v1991 = vand.u32 %v1887, 4294901760
      %v1992 = vsub.f32 %v1887, %v1991
      %v1993 = vand.u32 %v1992, 4294901760
      %v1994 = vsub.f32 %v1992, %v1993
      %v1995 = vand.u32 %v1994, 4294901760
      %1996 = vmatmul.mubr.f32.gmra.mrb[0].mxu0 %v1995
      %v1997 = vpop.f32.mrb[0].mxu0
      %v1998 = vadd.f32 0.0, %v1997
      %v1999 = vpop.f32.mrb[0].mxu0
      %v2000 = vadd.f32 0.0, %v1999
      %2001 = vmatprep.mubr.f32.mxu0 0.0
      %v2002 = vand.u32 %v1890, 4294901760
      %v2003 = vsub.f32 %v1890, %v2002
      %v2004 = vand.u32 %v2003, 4294901760
      %v2005 = vsub.f32 %v2003, %v2004
      %v2006 = vand.u32 %v2005, 4294901760
      %2007 = vmatmul.mubr.f32.gmra.mrb[0].mxu0 %v2006
      %v2008 = vpop.f32.mrb[0].mxu0
      %v2009 = vadd.f32 0.0, %v2008
      %v2010 = vpop.f32.mrb[0].mxu0
      %v2011 = vadd.f32 0.0, %v2010
      %2012 = vmatprep.mubr.f32.mxu0 0.0
      %v2013 = vand.u32 %v1893, 4294901760
      %v2014 = vsub.f32 %v1893, %v2013
      %v2015 = vand.u32 %v2014, 4294901760
      %v2016 = vsub.f32 %v2014, %v2015
      %v2017 = vand.u32 %v2016, 4294901760
      %2018 = vmatmul.mubr.f32.gmra.mrb[0].mxu0 %v2017
      %v2019 = vpop.f32.mrb[0].mxu0
      %v2020 = vadd.f32 0.0, %v2019
      %v2021 = vpop.f32.mrb[0].mxu0
      %v2022 = vadd.f32 0.0, %v2021
      %2023 = vdwg.mxu0
      %v2024 = vand.u32 %v1773, 4294901760
      %v2025 = vsub.f32 %v1773, %v2024
      %v2026 = vand.u32 %v2025, 4294901760
      %v2027 = vsub.f32 %v2025, %v2026
      %v2028 = vand.u32 %v2027, 4294901760
      %2029 = vmatprep.subr.mxu0 %v2028
      %v2030 = vand.u32 %v1772, 4294901760
      %v2031 = vsub.f32 %v1772, %v2030
      %v2032 = vand.u32 %v2031, 4294901760
      %v2033 = vsub.f32 %v2031, %v2032
      %v2034 = vand.u32 %v2033, 4294901760
      %2035 = vmatpush1.msra.mxu0 %v2034
      %v2036 = vand.u32 %v1784, 4294901760
      %v2037 = vsub.f32 %v1784, %v2036
      %v2038 = vand.u32 %v2037, 4294901760
      %v2039 = vsub.f32 %v2037, %v2038
      %v2040 = vand.u32 %v2039, 4294901760
      %2041 = vmatprep.subr.mxu0 %v2040
      %v2042 = vand.u32 %v1783, 4294901760
      %v2043 = vsub.f32 %v1783, %v2042
      %v2044 = vand.u32 %v2043, 4294901760
      %v2045 = vsub.f32 %v2043, %v2044
      %v2046 = vand.u32 %v2045, 4294901760
      %2047 = vmatpush1.msra.mxu0 %v2046
      %v2048 = vand.u32 %v1795, 4294901760
      %v2049 = vsub.f32 %v1795, %v2048
      %v2050 = vand.u32 %v2049, 4294901760
      %v2051 = vsub.f32 %v2049, %v2050
      %v2052 = vand.u32 %v2051, 4294901760
      %2053 = vmatprep.subr.mxu0 %v2052
      %v2054 = vand.u32 %v1794, 4294901760
      %v2055 = vsub.f32 %v1794, %v2054
      %v2056 = vand.u32 %v2055, 4294901760
      %v2057 = vsub.f32 %v2055, %v2056
      %v2058 = vand.u32 %v2057, 4294901760
      %2059 = vmatpush1.msra.mxu0 %v2058
      %v2060 = vand.u32 %v1806, 4294901760
      %v2061 = vsub.f32 %v1806, %v2060
      %v2062 = vand.u32 %v2061, 4294901760
      %v2063 = vsub.f32 %v2061, %v2062
      %v2064 = vand.u32 %v2063, 4294901760
      %2065 = vmatprep.subr.mxu0 %v2064
      %v2066 = vand.u32 %v1805, 4294901760
      %v2067 = vsub.f32 %v1805, %v2066
      %v2068 = vand.u32 %v2067, 4294901760
      %v2069 = vsub.f32 %v2067, %v2068
      %v2070 = vand.u32 %v2069, 4294901760
      %2071 = vmatpush1.msra.mxu0 %v2070
      %v2072 = vand.u32 %v1817, 4294901760
      %v2073 = vsub.f32 %v1817, %v2072
      %v2074 = vand.u32 %v2073, 4294901760
      %v2075 = vsub.f32 %v2073, %v2074
      %v2076 = vand.u32 %v2075, 4294901760
      %2077 = vmatprep.subr.mxu0 %v2076
      %v2078 = vand.u32 %v1816, 4294901760
      %v2079 = vsub.f32 %v1816, %v2078
      %v2080 = vand.u32 %v2079, 4294901760
      %v2081 = vsub.f32 %v2079, %v2080
      %v2082 = vand.u32 %v2081, 4294901760
      %2083 = vmatpush1.msra.mxu0 %v2082
      %v2084 = vand.u32 %v1828, 4294901760
      %v2085 = vsub.f32 %v1828, %v2084
      %v2086 = vand.u32 %v2085, 4294901760
      %v2087 = vsub.f32 %v2085, %v2086
      %v2088 = vand.u32 %v2087, 4294901760
      %2089 = vmatprep.subr.mxu0 %v2088
      %v2090 = vand.u32 %v1827, 4294901760
      %v2091 = vsub.f32 %v1827, %v2090
      %v2092 = vand.u32 %v2091, 4294901760
      %v2093 = vsub.f32 %v2091, %v2092
      %v2094 = vand.u32 %v2093, 4294901760
      %2095 = vmatpush1.msra.mxu0 %v2094
      %v2096 = vand.u32 %v1839, 4294901760
      %v2097 = vsub.f32 %v1839, %v2096
      %v2098 = vand.u32 %v2097, 4294901760
      %v2099 = vsub.f32 %v2097, %v2098
      %v2100 = vand.u32 %v2099, 4294901760
      %2101 = vmatprep.subr.mxu0 %v2100
      %v2102 = vand.u32 %v1838, 4294901760
      %v2103 = vsub.f32 %v1838, %v2102
      %v2104 = vand.u32 %v2103, 4294901760
      %v2105 = vsub.f32 %v2103, %v2104
      %v2106 = vand.u32 %v2105, 4294901760
      %2107 = vmatpush1.msra.mxu0 %v2106
      %v2108 = vand.u32 %v1850, 4294901760
      %v2109 = vsub.f32 %v1850, %v2108
      %v2110 = vand.u32 %v2109, 4294901760
      %v2111 = vsub.f32 %v2109, %v2110
      %v2112 = vand.u32 %v2111, 4294901760
      %2113 = vmatprep.subr.mxu0 %v2112
      %v2114 = vand.u32 %v1849, 4294901760
      %v2115 = vsub.f32 %v1849, %v2114
      %v2116 = vand.u32 %v2115, 4294901760
      %v2117 = vsub.f32 %v2115, %v2116
      %v2118 = vand.u32 %v2117, 4294901760
      %2119 = vmatpush1.msra.mxu0 %v2118
      %v2120 = vand.u32 %v1861, 4294901760
      %v2121 = vsub.f32 %v1861, %v2120
      %v2122 = vand.u32 %v2121, 4294901760
      %v2123 = vsub.f32 %v2121, %v2122
      %v2124 = vand.u32 %v2123, 4294901760
      %2125 = vmatprep.subr.mxu0 %v2124
      %v2126 = vand.u32 %v1860, 4294901760
      %v2127 = vsub.f32 %v1860, %v2126
      %v2128 = vand.u32 %v2127, 4294901760
      %v2129 = vsub.f32 %v2127, %v2128
      %v2130 = vand.u32 %v2129, 4294901760
      %2131 = vmatpush1.msra.mxu0 %v2130
      %v2132 = vand.u32 %v1872, 4294901760
      %v2133 = vsub.f32 %v1872, %v2132
      %v2134 = vand.u32 %v2133, 4294901760
      %v2135 = vsub.f32 %v2133, %v2134
      %v2136 = vand.u32 %v2135, 4294901760
      %2137 = vmatprep.subr.mxu0 %v2136
      %v2138 = vand.u32 %v1871, 4294901760
      %v2139 = vsub.f32 %v1871, %v2138
      %v2140 = vand.u32 %v2139, 4294901760
      %v2141 = vsub.f32 %v2139, %v2140
      %v2142 = vand.u32 %v2141, 4294901760
      %2143 = vmatpush1.msra.mxu0 %v2142
      %2144 = vmatprep.subr.mxu0 0.0
      %2145 = vmatpush1.msra.mxu0 0.0
      %2146 = vmatprep.subr.mxu0 0.0
      %2147 = vmatpush1.msra.mxu0 0.0
      %2148 = vmatprep.subr.mxu0 0.0
      %2149 = vmatpush1.msra.mxu0 0.0
      %2150 = vmatprep.subr.mxu0 0.0
      %2151 = vmatpush1.msra.mxu0 0.0
      %2152 = vmatprep.subr.mxu0 0.0
      %2153 = vmatpush1.msra.mxu0 0.0
      %2154 = vmatprep.subr.mxu0 0.0
      %2155 = vmatpush1.msra.mxu0 0.0
      %2156 = vmatprep.subr.mxu0 0.0
      %2157 = vmatpush1.msra.mxu0 0.0
      %2158 = vmatprep.subr.mxu0 0.0
      %2159 = vmatpush1.msra.mxu0 0.0
      %2160 = vmatprep.subr.mxu0 0.0
      %2161 = vmatpush1.msra.mxu0 0.0
      %2162 = vmatprep.subr.mxu0 0.0
      %2163 = vmatpush1.msra.mxu0 0.0
      %2164 = vmatprep.subr.mxu0 0.0
      %2165 = vmatpush1.msra.mxu0 0.0
      %2166 = vmatprep.subr.mxu0 0.0
      %2167 = vmatpush1.msra.mxu0 0.0
      %2168 = vmatprep.subr.mxu0 0.0
      %2169 = vmatpush1.msra.mxu0 0.0
      %2170 = vmatprep.subr.mxu0 0.0
      %2171 = vmatpush1.msra.mxu0 0.0
      %2172 = vmatprep.subr.mxu0 0.0
      %2173 = vmatpush1.msra.mxu0 0.0
      %2174 = vmatprep.subr.mxu0 0.0
      %2175 = vmatpush1.msra.mxu0 0.0
      %2176 = vmatprep.subr.mxu0 0.0
      %2177 = vmatpush1.msra.mxu0 0.0
      %2178 = vmatprep.subr.mxu0 0.0
      %2179 = vmatpush1.msra.mxu0 0.0
      %2180 = vmatprep.subr.mxu0 0.0
      %2181 = vmatpush1.msra.mxu0 0.0
      %2182 = vmatprep.subr.mxu0 0.0
      %2183 = vmatpush1.msra.mxu0 0.0
      %2184 = vmatprep.subr.mxu0 0.0
      %2185 = vmatpush1.msra.mxu0 0.0
      %2186 = vmatprep.subr.mxu0 0.0
      %2187 = vmatpush1.msra.mxu0 0.0
      %2188 = vmatprep.mubr.f32.mxu0 0.0
      %v2189 = vand.u32 %v1884, 4294901760
      %2190 = vmatmul.mubr.f32.gmra.mrb[0].mxu0 %v2189
      %v2191 = vpop.f32.mrb[0].mxu0
      %v2192 = vadd.f32 %v1987, %v2191
      %v2193 = vpop.f32.mrb[0].mxu0
      %v2194 = vadd.f32 %v1989, %v2193
      %2195 = vmatprep.mubr.f32.mxu0 0.0
      %v2196 = vand.u32 %v1887, 4294901760
      %2197 = vmatmul.mubr.f32.gmra.mrb[0].mxu0 %v2196
      %v2198 = vpop.f32.mrb[0].mxu0
      %v2199 = vadd.f32 %v1998, %v2198
      %v2200 = vpop.f32.mrb[0].mxu0
      %v2201 = vadd.f32 %v2000, %v2200
      %2202 = vmatprep.mubr.f32.mxu0 0.0
      %v2203 = vand.u32 %v1890, 4294901760
      %2204 = vmatmul.mubr.f32.gmra.mrb[0].mxu0 %v2203
      %v2205 = vpop.f32.mrb[0].mxu0
      %v2206 = vadd.f32 %v2009, %v2205
      %v2207 = vpop.f32.mrb[0].mxu0
      %v2208 = vadd.f32 %v2011, %v2207
      %2209 = vmatprep.mubr.f32.mxu0 0.0
      %v2210 = vand.u32 %v1893, 4294901760
      %2211 = vmatmul.mubr.f32.gmra.mrb[0].mxu0 %v2210
      %v2212 = vpop.f32.mrb[0].mxu0
      %v2213 = vadd.f32 %v2020, %v2212
      %v2214 = vpop.f32.mrb[0].mxu0
      %v2215 = vadd.f32 %v2022, %v2214
      %2216 = vdwg.mxu0
      %v2217 = vand.u32 %v1773, 4294901760
      %v2218 = vsub.f32 %v1773, %v2217
      %2219 = vmatprep.subr.mxu0 %v2218
      %v2220 = vand.u32 %v1772, 4294901760
      %v2221 = vsub.f32 %v1772, %v2220
      %2222 = vmatpush1.msra.mxu0 %v2221
      %v2223 = vand.u32 %v1784, 4294901760
      %v2224 = vsub.f32 %v1784, %v2223
      %2225 = vmatprep.subr.mxu0 %v2224
      %v2226 = vand.u32 %v1783, 4294901760
      %v2227 = vsub.f32 %v1783, %v2226
      %2228 = vmatpush1.msra.mxu0 %v2227
      %v2229 = vand.u32 %v1795, 4294901760
      %v2230 = vsub.f32 %v1795, %v2229
      %2231 = vmatprep.subr.mxu0 %v2230
      %v2232 = vand.u32 %v1794, 4294901760
      %v2233 = vsub.f32 %v1794, %v2232
      %2234 = vmatpush1.msra.mxu0 %v2233
      %v2235 = vand.u32 %v1806, 4294901760
      %v2236 = vsub.f32 %v1806, %v2235
      %2237 = vmatprep.subr.mxu0 %v2236
      %v2238 = vand.u32 %v1805, 4294901760
      %v2239 = vsub.f32 %v1805, %v2238
      %2240 = vmatpush1.msra.mxu0 %v2239
      %v2241 = vand.u32 %v1817, 4294901760
      %v2242 = vsub.f32 %v1817, %v2241
      %2243 = vmatprep.subr.mxu0 %v2242
      %v2244 = vand.u32 %v1816, 4294901760
      %v2245 = vsub.f32 %v1816, %v2244
      %2246 = vmatpush1.msra.mxu0 %v2245
      %v2247 = vand.u32 %v1828, 4294901760
      %v2248 = vsub.f32 %v1828, %v2247
      %2249 = vmatprep.subr.mxu0 %v2248
      %v2250 = vand.u32 %v1827, 4294901760
      %v2251 = vsub.f32 %v1827, %v2250
      %2252 = vmatpush1.msra.mxu0 %v2251
      %v2253 = vand.u32 %v1839, 4294901760
      %v2254 = vsub.f32 %v1839, %v2253
      %2255 = vmatprep.subr.mxu0 %v2254
      %v2256 = vand.u32 %v1838, 4294901760
      %v2257 = vsub.f32 %v1838, %v2256
      %2258 = vmatpush1.msra.mxu0 %v2257
      %v2259 = vand.u32 %v1850, 4294901760
      %v2260 = vsub.f32 %v1850, %v2259
      %2261 = vmatprep.subr.mxu0 %v2260
      %v2262 = vand.u32 %v1849, 4294901760
      %v2263 = vsub.f32 %v1849, %v2262
      %2264 = vmatpush1.msra.mxu0 %v2263
      %v2265 = vand.u32 %v1861, 4294901760
      %v2266 = vsub.f32 %v1861, %v2265
      %2267 = vmatprep.subr.mxu0 %v2266
      %v2268 = vand.u32 %v1860, 4294901760
      %v2269 = vsub.f32 %v1860, %v2268
      %2270 = vmatpush1.msra.mxu0 %v2269
      %v2271 = vand.u32 %v1872, 4294901760
      %v2272 = vsub.f32 %v1872, %v2271
      %2273 = vmatprep.subr.mxu0 %v2272
      %v2274 = vand.u32 %v1871, 4294901760
      %v2275 = vsub.f32 %v1871, %v2274
      %2276 = vmatpush1.msra.mxu0 %v2275
      %2277 = vmatprep.subr.mxu0 0.0
      %2278 = vmatpush1.msra.mxu0 0.0
      %2279 = vmatprep.subr.mxu0 0.0
      %2280 = vmatpush1.msra.mxu0 0.0
      %2281 = vmatprep.subr.mxu0 0.0
      %2282 = vmatpush1.msra.mxu0 0.0
      %2283 = vmatprep.subr.mxu0 0.0
      %2284 = vmatpush1.msra.mxu0 0.0
      %2285 = vmatprep.subr.mxu0 0.0
      %2286 = vmatpush1.msra.mxu0 0.0
      %2287 = vmatprep.subr.mxu0 0.0
      %2288 = vmatpush1.msra.mxu0 0.0
      %2289 = vmatprep.subr.mxu0 0.0
      %2290 = vmatpush1.msra.mxu0 0.0
      %2291 = vmatprep.subr.mxu0 0.0
      %2292 = vmatpush1.msra.mxu0 0.0
      %2293 = vmatprep.subr.mxu0 0.0
      %2294 = vmatpush1.msra.mxu0 0.0
      %2295 = vmatprep.subr.mxu0 0.0
      %2296 = vmatpush1.msra.mxu0 0.0
      %2297 = vmatprep.subr.mxu0 0.0
      %2298 = vmatpush1.msra.mxu0 0.0
      %2299 = vmatprep.subr.mxu0 0.0
      %2300 = vmatpush1.msra.mxu0 0.0
      %2301 = vmatprep.subr.mxu0 0.0
      %2302 = vmatpush1.msra.mxu0 0.0
      %2303 = vmatprep.subr.mxu0 0.0
      %2304 = vmatpush1.msra.mxu0 0.0
      %2305 = vmatprep.subr.mxu0 0.0
      %2306 = vmatpush1.msra.mxu0 0.0
      %2307 = vmatprep.subr.mxu0 0.0
      %2308 = vmatpush1.msra.mxu0 0.0
      %2309 = vmatprep.subr.mxu0 0.0
      %2310 = vmatpush1.msra.mxu0 0.0
      %2311 = vmatprep.subr.mxu0 0.0
      %2312 = vmatpush1.msra.mxu0 0.0
      %2313 = vmatprep.subr.mxu0 0.0
      %2314 = vmatpush1.msra.mxu0 0.0
      %2315 = vmatprep.subr.mxu0 0.0
      %2316 = vmatpush1.msra.mxu0 0.0
      %2317 = vmatprep.subr.mxu0 0.0
      %2318 = vmatpush1.msra.mxu0 0.0
      %2319 = vmatprep.subr.mxu0 0.0
      %2320 = vmatpush1.msra.mxu0 0.0
      %2321 = vmatprep.mubr.f32.mxu0 0.0
      %v2322 = vand.u32 %v1884, 4294901760
      %v2323 = vsub.f32 %v1884, %v2322
      %2324 = vmatmul.mubr.f32.gmra.mrb[0].mxu0 %v2323
      %v2325 = vpop.f32.mrb[0].mxu0
      %v2326 = vadd.f32 %v2192, %v2325
      %v2327 = vpop.f32.mrb[0].mxu0
      %v2328 = vadd.f32 %v2194, %v2327
      %2329 = vmatprep.mubr.f32.mxu0 0.0
      %v2330 = vand.u32 %v1887, 4294901760
      %v2331 = vsub.f32 %v1887, %v2330
      %2332 = vmatmul.mubr.f32.gmra.mrb[0].mxu0 %v2331
      %v2333 = vpop.f32.mrb[0].mxu0
      %v2334 = vadd.f32 %v2199, %v2333
      %v2335 = vpop.f32.mrb[0].mxu0
      %v2336 = vadd.f32 %v2201, %v2335
      %2337 = vmatprep.mubr.f32.mxu0 0.0
      %v2338 = vand.u32 %v1890, 4294901760
      %v2339 = vsub.f32 %v1890, %v2338
      %2340 = vmatmul.mubr.f32.gmra.mrb[0].mxu0 %v2339
      %v2341 = vpop.f32.mrb[0].mxu0
      %v2342 = vadd.f32 %v2206, %v2341
      %v2343 = vpop.f32.mrb[0].mxu0
      %v2344 = vadd.f32 %v2208, %v2343
      %2345 = vmatprep.mubr.f32.mxu0 0.0
      %v2346 = vand.u32 %v1893, 4294901760
      %v2347 = vsub.f32 %v1893, %v2346
      %2348 = vmatmul.mubr.f32.gmra.mrb[0].mxu0 %v2347
      %v2349 = vpop.f32.mrb[0].mxu0
      %v2350 = vadd.f32 %v2213, %v2349
      %v2351 = vpop.f32.mrb[0].mxu0
      %v2352 = vadd.f32 %v2215, %v2351
      %2353 = vdwg.mxu0
      %v2354 = vand.u32 %v1773, 4294901760
      %2355 = vmatprep.subr.mxu0 %v2354
      %v2356 = vand.u32 %v1772, 4294901760
      %2357 = vmatpush1.msra.mxu0 %v2356
      %v2358 = vand.u32 %v1784, 4294901760
      %2359 = vmatprep.subr.mxu0 %v2358
      %v2360 = vand.u32 %v1783, 4294901760
      %2361 = vmatpush1.msra.mxu0 %v2360
      %v2362 = vand.u32 %v1795, 4294901760
      %2363 = vmatprep.subr.mxu0 %v2362
      %v2364 = vand.u32 %v1794, 4294901760
      %2365 = vmatpush1.msra.mxu0 %v2364
      %v2366 = vand.u32 %v1806, 4294901760
      %2367 = vmatprep.subr.mxu0 %v2366
      %v2368 = vand.u32 %v1805, 4294901760
      %2369 = vmatpush1.msra.mxu0 %v2368
      %v2370 = vand.u32 %v1817, 4294901760
      %2371 = vmatprep.subr.mxu0 %v2370
      %v2372 = vand.u32 %v1816, 4294901760
      %2373 = vmatpush1.msra.mxu0 %v2372
      %v2374 = vand.u32 %v1828, 4294901760
      %2375 = vmatprep.subr.mxu0 %v2374
      %v2376 = vand.u32 %v1827, 4294901760
      %2377 = vmatpush1.msra.mxu0 %v2376
      %v2378 = vand.u32 %v1839, 4294901760
      %2379 = vmatprep.subr.mxu0 %v2378
      %v2380 = vand.u32 %v1838, 4294901760
      %2381 = vmatpush1.msra.mxu0 %v2380
      %v2382 = vand.u32 %v1850, 4294901760
      %2383 = vmatprep.subr.mxu0 %v2382
      %v2384 = vand.u32 %v1849, 4294901760
      %2385 = vmatpush1.msra.mxu0 %v2384
      %v2386 = vand.u32 %v1861, 4294901760
      %2387 = vmatprep.subr.mxu0 %v2386
      %v2388 = vand.u32 %v1860, 4294901760
      %2389 = vmatpush1.msra.mxu0 %v2388
      %v2390 = vand.u32 %v1872, 4294901760
      %2391 = vmatprep.subr.mxu0 %v2390
      %v2392 = vand.u32 %v1871, 4294901760
      %2393 = vmatpush1.msra.mxu0 %v2392
      %2394 = vmatprep.subr.mxu0 0.0
      %2395 = vmatpush1.msra.mxu0 0.0
      %2396 = vmatprep.subr.mxu0 0.0
      %2397 = vmatpush1.msra.mxu0 0.0
      %2398 = vmatprep.subr.mxu0 0.0
      %2399 = vmatpush1.msra.mxu0 0.0
      %2400 = vmatprep.subr.mxu0 0.0
      %2401 = vmatpush1.msra.mxu0 0.0
      %2402 = vmatprep.subr.mxu0 0.0
      %2403 = vmatpush1.msra.mxu0 0.0
      %2404 = vmatprep.subr.mxu0 0.0
      %2405 = vmatpush1.msra.mxu0 0.0
      %2406 = vmatprep.subr.mxu0 0.0
      %2407 = vmatpush1.msra.mxu0 0.0
      %2408 = vmatprep.subr.mxu0 0.0
      %2409 = vmatpush1.msra.mxu0 0.0
      %2410 = vmatprep.subr.mxu0 0.0
      %2411 = vmatpush1.msra.mxu0 0.0
      %2412 = vmatprep.subr.mxu0 0.0
      %2413 = vmatpush1.msra.mxu0 0.0
      %2414 = vmatprep.subr.mxu0 0.0
      %2415 = vmatpush1.msra.mxu0 0.0
      %2416 = vmatprep.subr.mxu0 0.0
      %2417 = vmatpush1.msra.mxu0 0.0
      %2418 = vmatprep.subr.mxu0 0.0
      %2419 = vmatpush1.msra.mxu0 0.0
      %2420 = vmatprep.subr.mxu0 0.0
      %2421 = vmatpush1.msra.mxu0 0.0
      %2422 = vmatprep.subr.mxu0 0.0
      %2423 = vmatpush1.msra.mxu0 0.0
      %2424 = vmatprep.subr.mxu0 0.0
      %2425 = vmatpush1.msra.mxu0 0.0
      %2426 = vmatprep.subr.mxu0 0.0
      %2427 = vmatpush1.msra.mxu0 0.0
      %2428 = vmatprep.subr.mxu0 0.0
      %2429 = vmatpush1.msra.mxu0 0.0
      %2430 = vmatprep.subr.mxu0 0.0
      %2431 = vmatpush1.msra.mxu0 0.0
      %2432 = vmatprep.subr.mxu0 0.0
      %2433 = vmatpush1.msra.mxu0 0.0
      %2434 = vmatprep.subr.mxu0 0.0
      %2435 = vmatpush1.msra.mxu0 0.0
      %2436 = vmatprep.subr.mxu0 0.0
      %2437 = vmatpush1.msra.mxu0 0.0
      %2438 = vmatprep.mubr.f32.mxu0 0.0
      %v2439 = vand.u32 %v1884, 4294901760
      %v2440 = vsub.f32 %v1884, %v2439
      %v2441 = vand.u32 %v2440, 4294901760
      %2442 = vmatmul.mubr.f32.gmra.mrb[0].mxu0 %v2441
      %v2443 = vpop.f32.mrb[0].mxu0
      %v2444 = vadd.f32 %v2326, %v2443
      %v2445 = vpop.f32.mrb[0].mxu0
      %v2446 = vadd.f32 %v2328, %v2445
      %2447 = vmatprep.mubr.f32.mxu0 0.0
      %v2448 = vand.u32 %v1887, 4294901760
      %v2449 = vsub.f32 %v1887, %v2448
      %v2450 = vand.u32 %v2449, 4294901760
      %2451 = vmatmul.mubr.f32.gmra.mrb[0].mxu0 %v2450
      %v2452 = vpop.f32.mrb[0].mxu0
      %v2453 = vadd.f32 %v2334, %v2452
      %v2454 = vpop.f32.mrb[0].mxu0
      %v2455 = vadd.f32 %v2336, %v2454
      %2456 = vmatprep.mubr.f32.mxu0 0.0
      %v2457 = vand.u32 %v1890, 4294901760
      %v2458 = vsub.f32 %v1890, %v2457
      %v2459 = vand.u32 %v2458, 4294901760
      %2460 = vmatmul.mubr.f32.gmra.mrb[0].mxu0 %v2459
      %v2461 = vpop.f32.mrb[0].mxu0
      %v2462 = vadd.f32 %v2342, %v2461
      %v2463 = vpop.f32.mrb[0].mxu0
      %v2464 = vadd.f32 %v2344, %v2463
      %2465 = vmatprep.mubr.f32.mxu0 0.0
      %v2466 = vand.u32 %v1893, 4294901760
      %v2467 = vsub.f32 %v1893, %v2466
      %v2468 = vand.u32 %v2467, 4294901760
      %2469 = vmatmul.mubr.f32.gmra.mrb[0].mxu0 %v2468
      %v2470 = vpop.f32.mrb[0].mxu0
      %v2471 = vadd.f32 %v2350, %v2470
      %v2472 = vpop.f32.mrb[0].mxu0
      %v2473 = vadd.f32 %v2352, %v2472
      %2474 = vdwg.mxu0
      %v2475 = vand.u32 %v1773, 4294901760
      %v2476 = vsub.f32 %v1773, %v2475
      %v2477 = vand.u32 %v2476, 4294901760
      %2478 = vmatprep.subr.mxu0 %v2477
      %v2479 = vand.u32 %v1772, 4294901760
      %v2480 = vsub.f32 %v1772, %v2479
      %v2481 = vand.u32 %v2480, 4294901760
      %2482 = vmatpush1.msra.mxu0 %v2481
      %v2483 = vand.u32 %v1784, 4294901760
      %v2484 = vsub.f32 %v1784, %v2483
      %v2485 = vand.u32 %v2484, 4294901760
      %2486 = vmatprep.subr.mxu0 %v2485
      %v2487 = vand.u32 %v1783, 4294901760
      %v2488 = vsub.f32 %v1783, %v2487
      %v2489 = vand.u32 %v2488, 4294901760
      %2490 = vmatpush1.msra.mxu0 %v2489
      %v2491 = vand.u32 %v1795, 4294901760
      %v2492 = vsub.f32 %v1795, %v2491
      %v2493 = vand.u32 %v2492, 4294901760
      %2494 = vmatprep.subr.mxu0 %v2493
      %v2495 = vand.u32 %v1794, 4294901760
      %v2496 = vsub.f32 %v1794, %v2495
      %v2497 = vand.u32 %v2496, 4294901760
      %2498 = vmatpush1.msra.mxu0 %v2497
      %v2499 = vand.u32 %v1806, 4294901760
      %v2500 = vsub.f32 %v1806, %v2499
      %v2501 = vand.u32 %v2500, 4294901760
      %2502 = vmatprep.subr.mxu0 %v2501
      %v2503 = vand.u32 %v1805, 4294901760
      %v2504 = vsub.f32 %v1805, %v2503
      %v2505 = vand.u32 %v2504, 4294901760
      %2506 = vmatpush1.msra.mxu0 %v2505
      %v2507 = vand.u32 %v1817, 4294901760
      %v2508 = vsub.f32 %v1817, %v2507
      %v2509 = vand.u32 %v2508, 4294901760
      %2510 = vmatprep.subr.mxu0 %v2509
      %v2511 = vand.u32 %v1816, 4294901760
      %v2512 = vsub.f32 %v1816, %v2511
      %v2513 = vand.u32 %v2512, 4294901760
      %2514 = vmatpush1.msra.mxu0 %v2513
      %v2515 = vand.u32 %v1828, 4294901760
      %v2516 = vsub.f32 %v1828, %v2515
      %v2517 = vand.u32 %v2516, 4294901760
      %2518 = vmatprep.subr.mxu0 %v2517
      %v2519 = vand.u32 %v1827, 4294901760
      %v2520 = vsub.f32 %v1827, %v2519
      %v2521 = vand.u32 %v2520, 4294901760
      %2522 = vmatpush1.msra.mxu0 %v2521
      %v2523 = vand.u32 %v1839, 4294901760
      %v2524 = vsub.f32 %v1839, %v2523
      %v2525 = vand.u32 %v2524, 4294901760
      %2526 = vmatprep.subr.mxu0 %v2525
      %v2527 = vand.u32 %v1838, 4294901760
      %v2528 = vsub.f32 %v1838, %v2527
      %v2529 = vand.u32 %v2528, 4294901760
      %2530 = vmatpush1.msra.mxu0 %v2529
      %v2531 = vand.u32 %v1850, 4294901760
      %v2532 = vsub.f32 %v1850, %v2531
      %v2533 = vand.u32 %v2532, 4294901760
      %2534 = vmatprep.subr.mxu0 %v2533
      %v2535 = vand.u32 %v1849, 4294901760
      %v2536 = vsub.f32 %v1849, %v2535
      %v2537 = vand.u32 %v2536, 4294901760
      %2538 = vmatpush1.msra.mxu0 %v2537
      %v2539 = vand.u32 %v1861, 4294901760
      %v2540 = vsub.f32 %v1861, %v2539
      %v2541 = vand.u32 %v2540, 4294901760
      %2542 = vmatprep.subr.mxu0 %v2541
      %v2543 = vand.u32 %v1860, 4294901760
      %v2544 = vsub.f32 %v1860, %v2543
      %v2545 = vand.u32 %v2544, 4294901760
      %2546 = vmatpush1.msra.mxu0 %v2545
      %v2547 = vand.u32 %v1872, 4294901760
      %v2548 = vsub.f32 %v1872, %v2547
      %v2549 = vand.u32 %v2548, 4294901760
      %2550 = vmatprep.subr.mxu0 %v2549
      %v2551 = vand.u32 %v1871, 4294901760
      %v2552 = vsub.f32 %v1871, %v2551
      %v2553 = vand.u32 %v2552, 4294901760
      %2554 = vmatpush1.msra.mxu0 %v2553
      %2555 = vmatprep.subr.mxu0 0.0
      %2556 = vmatpush1.msra.mxu0 0.0
      %2557 = vmatprep.subr.mxu0 0.0
      %2558 = vmatpush1.msra.mxu0 0.0
      %2559 = vmatprep.subr.mxu0 0.0
      %2560 = vmatpush1.msra.mxu0 0.0
      %2561 = vmatprep.subr.mxu0 0.0
      %2562 = vmatpush1.msra.mxu0 0.0
      %2563 = vmatprep.subr.mxu0 0.0
      %2564 = vmatpush1.msra.mxu0 0.0
      %2565 = vmatprep.subr.mxu0 0.0
      %2566 = vmatpush1.msra.mxu0 0.0
      %2567 = vmatprep.subr.mxu0 0.0
      %2568 = vmatpush1.msra.mxu0 0.0
      %2569 = vmatprep.subr.mxu0 0.0
      %2570 = vmatpush1.msra.mxu0 0.0
      %2571 = vmatprep.subr.mxu0 0.0
      %2572 = vmatpush1.msra.mxu0 0.0
      %2573 = vmatprep.subr.mxu0 0.0
      %2574 = vmatpush1.msra.mxu0 0.0
      %2575 = vmatprep.subr.mxu0 0.0
      %2576 = vmatpush1.msra.mxu0 0.0
      %2577 = vmatprep.subr.mxu0 0.0
      %2578 = vmatpush1.msra.mxu0 0.0
      %2579 = vmatprep.subr.mxu0 0.0
      %2580 = vmatpush1.msra.mxu0 0.0
      %2581 = vmatprep.subr.mxu0 0.0
      %2582 = vmatpush1.msra.mxu0 0.0
      %2583 = vmatprep.subr.mxu0 0.0
      %2584 = vmatpush1.msra.mxu0 0.0
      %2585 = vmatprep.subr.mxu0 0.0
      %2586 = vmatpush1.msra.mxu0 0.0
      %2587 = vmatprep.subr.mxu0 0.0
      %2588 = vmatpush1.msra.mxu0 0.0
      %2589 = vmatprep.subr.mxu0 0.0
      %2590 = vmatpush1.msra.mxu0 0.0
      %2591 = vmatprep.subr.mxu0 0.0
      %2592 = vmatpush1.msra.mxu0 0.0
      %2593 = vmatprep.subr.mxu0 0.0
      %2594 = vmatpush1.msra.mxu0 0.0
      %2595 = vmatprep.subr.mxu0 0.0
      %2596 = vmatpush1.msra.mxu0 0.0
      %2597 = vmatprep.subr.mxu0 0.0
      %2598 = vmatpush1.msra.mxu0 0.0
      %2599 = vmatprep.mubr.f32.mxu0 0.0
      %v2600 = vand.u32 %v1884, 4294901760
      %2601 = vmatmul.mubr.f32.gmra.mrb[0].mxu0 %v2600
      %v2602 = vpop.f32.mrb[0].mxu0
      %v2603 = vadd.f32 %v2444, %v2602
      %v2604 = vpop.f32.mrb[0].mxu0
      %v2605 = vadd.f32 %v2446, %v2604
      %2606 = vmatprep.mubr.f32.mxu0 0.0
      %v2607 = vand.u32 %v1887, 4294901760
      %2608 = vmatmul.mubr.f32.gmra.mrb[0].mxu0 %v2607
      %v2609 = vpop.f32.mrb[0].mxu0
      %v2610 = vadd.f32 %v2453, %v2609
      %v2611 = vpop.f32.mrb[0].mxu0
      %v2612 = vadd.f32 %v2455, %v2611
      %2613 = vmatprep.mubr.f32.mxu0 0.0
      %v2614 = vand.u32 %v1890, 4294901760
      %2615 = vmatmul.mubr.f32.gmra.mrb[0].mxu0 %v2614
      %v2616 = vpop.f32.mrb[0].mxu0
      %v2617 = vadd.f32 %v2462, %v2616
      %v2618 = vpop.f32.mrb[0].mxu0
      %v2619 = vadd.f32 %v2464, %v2618
      %2620 = vmatprep.mubr.f32.mxu0 0.0
      %v2621 = vand.u32 %v1893, 4294901760
      %2622 = vmatmul.mubr.f32.gmra.mrb[0].mxu0 %v2621
      %v2623 = vpop.f32.mrb[0].mxu0
      %v2624 = vadd.f32 %v2471, %v2623
      %v2625 = vpop.f32.mrb[0].mxu0
      %v2626 = vadd.f32 %v2473, %v2625
      %2627 = vdwg.mxu0
      %v2628 = vand.u32 %v1773, 4294901760
      %2629 = vmatprep.subr.mxu0 %v2628
      %v2630 = vand.u32 %v1772, 4294901760
      %2631 = vmatpush1.msra.mxu0 %v2630
      %v2632 = vand.u32 %v1784, 4294901760
      %2633 = vmatprep.subr.mxu0 %v2632
      %v2634 = vand.u32 %v1783, 4294901760
      %2635 = vmatpush1.msra.mxu0 %v2634
      %v2636 = vand.u32 %v1795, 4294901760
      %2637 = vmatprep.subr.mxu0 %v2636
      %v2638 = vand.u32 %v1794, 4294901760
      %2639 = vmatpush1.msra.mxu0 %v2638
      %v2640 = vand.u32 %v1806, 4294901760
      %2641 = vmatprep.subr.mxu0 %v2640
      %v2642 = vand.u32 %v1805, 4294901760
      %2643 = vmatpush1.msra.mxu0 %v2642
      %v2644 = vand.u32 %v1817, 4294901760
      %2645 = vmatprep.subr.mxu0 %v2644
      %v2646 = vand.u32 %v1816, 4294901760
      %2647 = vmatpush1.msra.mxu0 %v2646
      %v2648 = vand.u32 %v1828, 4294901760
      %2649 = vmatprep.subr.mxu0 %v2648
      %v2650 = vand.u32 %v1827, 4294901760
      %2651 = vmatpush1.msra.mxu0 %v2650
      %v2652 = vand.u32 %v1839, 4294901760
      %2653 = vmatprep.subr.mxu0 %v2652
      %v2654 = vand.u32 %v1838, 4294901760
      %2655 = vmatpush1.msra.mxu0 %v2654
      %v2656 = vand.u32 %v1850, 4294901760
      %2657 = vmatprep.subr.mxu0 %v2656
      %v2658 = vand.u32 %v1849, 4294901760
      %2659 = vmatpush1.msra.mxu0 %v2658
      %v2660 = vand.u32 %v1861, 4294901760
      %2661 = vmatprep.subr.mxu0 %v2660
      %v2662 = vand.u32 %v1860, 4294901760
      %2663 = vmatpush1.msra.mxu0 %v2662
      %v2664 = vand.u32 %v1872, 4294901760
      %2665 = vmatprep.subr.mxu0 %v2664
      %v2666 = vand.u32 %v1871, 4294901760
      %2667 = vmatpush1.msra.mxu0 %v2666
      %2668 = vmatprep.subr.mxu0 0.0
      %2669 = vmatpush1.msra.mxu0 0.0
      %2670 = vmatprep.subr.mxu0 0.0
      %2671 = vmatpush1.msra.mxu0 0.0
      %2672 = vmatprep.subr.mxu0 0.0
      %2673 = vmatpush1.msra.mxu0 0.0
      %2674 = vmatprep.subr.mxu0 0.0
      %2675 = vmatpush1.msra.mxu0 0.0
      %2676 = vmatprep.subr.mxu0 0.0
      %2677 = vmatpush1.msra.mxu0 0.0
      %2678 = vmatprep.subr.mxu0 0.0
      %2679 = vmatpush1.msra.mxu0 0.0
      %2680 = vmatprep.subr.mxu0 0.0
      %2681 = vmatpush1.msra.mxu0 0.0
      %2682 = vmatprep.subr.mxu0 0.0
      %2683 = vmatpush1.msra.mxu0 0.0
      %2684 = vmatprep.subr.mxu0 0.0
      %2685 = vmatpush1.msra.mxu0 0.0
      %2686 = vmatprep.subr.mxu0 0.0
      %2687 = vmatpush1.msra.mxu0 0.0
      %2688 = vmatprep.subr.mxu0 0.0
      %2689 = vmatpush1.msra.mxu0 0.0
      %2690 = vmatprep.subr.mxu0 0.0
      %2691 = vmatpush1.msra.mxu0 0.0
      %2692 = vmatprep.subr.mxu0 0.0
      %2693 = vmatpush1.msra.mxu0 0.0
      %2694 = vmatprep.subr.mxu0 0.0
      %2695 = vmatpush1.msra.mxu0 0.0
      %2696 = vmatprep.subr.mxu0 0.0
      %2697 = vmatpush1.msra.mxu0 0.0
      %2698 = vmatprep.subr.mxu0 0.0
      %2699 = vmatpush1.msra.mxu0 0.0
      %2700 = vmatprep.subr.mxu0 0.0
      %2701 = vmatpush1.msra.mxu0 0.0
      %2702 = vmatprep.subr.mxu0 0.0
      %2703 = vmatpush1.msra.mxu0 0.0
      %2704 = vmatprep.subr.mxu0 0.0
      %2705 = vmatpush1.msra.mxu0 0.0
      %2706 = vmatprep.subr.mxu0 0.0
      %2707 = vmatpush1.msra.mxu0 0.0
      %2708 = vmatprep.subr.mxu0 0.0
      %2709 = vmatpush1.msra.mxu0 0.0
      %2710 = vmatprep.subr.mxu0 0.0
      %2711 = vmatpush1.msra.mxu0 0.0
      %2712 = vmatprep.mubr.f32.mxu0 0.0
      %v2713 = vand.u32 %v1884, 4294901760
      %2714 = vmatmul.mubr.f32.gmra.mrb[0].mxu0 %v2713
      %v2715 = vpop.f32.mrb[0].mxu0
      %v2716 = vadd.f32 %v2603, %v2715
      %v2717 = vpop.f32.mrb[0].mxu0
      %v2718 = vadd.f32 %v2605, %v2717
      %2719 = vmatprep.mubr.f32.mxu0 0.0
      %v2720 = vand.u32 %v1887, 4294901760
      %2721 = vmatmul.mubr.f32.gmra.mrb[0].mxu0 %v2720
      %v2722 = vpop.f32.mrb[0].mxu0
      %v2723 = vadd.f32 %v2610, %v2722
      %v2724 = vpop.f32.mrb[0].mxu0
      %v2725 = vadd.f32 %v2612, %v2724
      %2726 = vmatprep.mubr.f32.mxu0 0.0
      %v2727 = vand.u32 %v1890, 4294901760
      %2728 = vmatmul.mubr.f32.gmra.mrb[0].mxu0 %v2727
      %v2729 = vpop.f32.mrb[0].mxu0
      %v2730 = vadd.f32 %v2617, %v2729
      %v2731 = vpop.f32.mrb[0].mxu0
      %v2732 = vadd.f32 %v2619, %v2731
      %2733 = vmatprep.mubr.f32.mxu0 0.0
      %v2734 = vand.u32 %v1893, 4294901760
      %2735 = vmatmul.mubr.f32.gmra.mrb[0].mxu0 %v2734
      %v2736 = vpop.f32.mrb[0].mxu0
      %v2737 = vadd.f32 %v2624, %v2736
      %v2738 = vpop.f32.mrb[0].mxu0
      %v2739 = vadd.f32 %v2626, %v2738
      %2740 = vdwg.mxu0
      %v2741 = vand.u32 %v1775, 4294901760
      %2742 = vmatprep.subr.mxu0 %v2741
      %v2743 = vand.u32 %v1774, 4294901760
      %2744 = vmatpush1.msra.mxu0 %v2743
      %v2745 = vand.u32 %v1786, 4294901760
      %2746 = vmatprep.subr.mxu0 %v2745
      %v2747 = vand.u32 %v1785, 4294901760
      %2748 = vmatpush1.msra.mxu0 %v2747
      %v2749 = vand.u32 %v1797, 4294901760
      %2750 = vmatprep.subr.mxu0 %v2749
      %v2751 = vand.u32 %v1796, 4294901760
      %2752 = vmatpush1.msra.mxu0 %v2751
      %v2753 = vand.u32 %v1808, 4294901760
      %2754 = vmatprep.subr.mxu0 %v2753
      %v2755 = vand.u32 %v1807, 4294901760
      %2756 = vmatpush1.msra.mxu0 %v2755
      %v2757 = vand.u32 %v1819, 4294901760
      %2758 = vmatprep.subr.mxu0 %v2757
      %v2759 = vand.u32 %v1818, 4294901760
      %2760 = vmatpush1.msra.mxu0 %v2759
      %v2761 = vand.u32 %v1830, 4294901760
      %2762 = vmatprep.subr.mxu0 %v2761
      %v2763 = vand.u32 %v1829, 4294901760
      %2764 = vmatpush1.msra.mxu0 %v2763
      %v2765 = vand.u32 %v1841, 4294901760
      %2766 = vmatprep.subr.mxu0 %v2765
      %v2767 = vand.u32 %v1840, 4294901760
      %2768 = vmatpush1.msra.mxu0 %v2767
      %v2769 = vand.u32 %v1852, 4294901760
      %2770 = vmatprep.subr.mxu0 %v2769
      %v2771 = vand.u32 %v1851, 4294901760
      %2772 = vmatpush1.msra.mxu0 %v2771
      %v2773 = vand.u32 %v1863, 4294901760
      %2774 = vmatprep.subr.mxu0 %v2773
      %v2775 = vand.u32 %v1862, 4294901760
      %2776 = vmatpush1.msra.mxu0 %v2775
      %v2777 = vand.u32 %v1874, 4294901760
      %2778 = vmatprep.subr.mxu0 %v2777
      %v2779 = vand.u32 %v1873, 4294901760
      %2780 = vmatpush1.msra.mxu0 %v2779
      %2781 = vmatprep.subr.mxu0 0.0
      %2782 = vmatpush1.msra.mxu0 0.0
      %2783 = vmatprep.subr.mxu0 0.0
      %2784 = vmatpush1.msra.mxu0 0.0
      %2785 = vmatprep.subr.mxu0 0.0
      %2786 = vmatpush1.msra.mxu0 0.0
      %2787 = vmatprep.subr.mxu0 0.0
      %2788 = vmatpush1.msra.mxu0 0.0
      %2789 = vmatprep.subr.mxu0 0.0
      %2790 = vmatpush1.msra.mxu0 0.0
      %2791 = vmatprep.subr.mxu0 0.0
      %2792 = vmatpush1.msra.mxu0 0.0
      %2793 = vmatprep.subr.mxu0 0.0
      %2794 = vmatpush1.msra.mxu0 0.0
      %2795 = vmatprep.subr.mxu0 0.0
      %2796 = vmatpush1.msra.mxu0 0.0
      %2797 = vmatprep.subr.mxu0 0.0
      %2798 = vmatpush1.msra.mxu0 0.0
      %2799 = vmatprep.subr.mxu0 0.0
      %2800 = vmatpush1.msra.mxu0 0.0
      %2801 = vmatprep.subr.mxu0 0.0
      %2802 = vmatpush1.msra.mxu0 0.0
      %2803 = vmatprep.subr.mxu0 0.0
      %2804 = vmatpush1.msra.mxu0 0.0
      %2805 = vmatprep.subr.mxu0 0.0
      %2806 = vmatpush1.msra.mxu0 0.0
      %2807 = vmatprep.subr.mxu0 0.0
      %2808 = vmatpush1.msra.mxu0 0.0
      %2809 = vmatprep.subr.mxu0 0.0
      %2810 = vmatpush1.msra.mxu0 0.0
      %2811 = vmatprep.subr.mxu0 0.0
      %2812 = vmatpush1.msra.mxu0 0.0
      %2813 = vmatprep.subr.mxu0 0.0
      %2814 = vmatpush1.msra.mxu0 0.0
      %2815 = vmatprep.subr.mxu0 0.0
      %2816 = vmatpush1.msra.mxu0 0.0
      %2817 = vmatprep.subr.mxu0 0.0
      %2818 = vmatpush1.msra.mxu0 0.0
      %2819 = vmatprep.subr.mxu0 0.0
      %2820 = vmatpush1.msra.mxu0 0.0
      %2821 = vmatprep.subr.mxu0 0.0
      %2822 = vmatpush1.msra.mxu0 0.0
      %2823 = vmatprep.subr.mxu0 0.0
      %2824 = vmatpush1.msra.mxu0 0.0
      %2825 = vmatprep.mubr.f32.mxu0 0.0
      %v2826 = vand.u32 %v1884, 4294901760
      %v2827 = vsub.f32 %v1884, %v2826
      %v2828 = vand.u32 %v2827, 4294901760
      %v2829 = vsub.f32 %v2827, %v2828
      %v2830 = vand.u32 %v2829, 4294901760
      %2831 = vmatmul.mubr.f32.gmra.mrb[0].mxu0 %v2830
      %v2832 = vpop.f32.mrb[0].mxu0
      %v2833 = vadd.f32 0.0, %v2832
      %v2834 = vpop.f32.mrb[0].mxu0
      %v2835 = vadd.f32 0.0, %v2834
      %2836 = vmatprep.mubr.f32.mxu0 0.0
      %v2837 = vand.u32 %v1887, 4294901760
      %v2838 = vsub.f32 %v1887, %v2837
      %v2839 = vand.u32 %v2838, 4294901760
      %v2840 = vsub.f32 %v2838, %v2839
      %v2841 = vand.u32 %v2840, 4294901760
      %2842 = vmatmul.mubr.f32.gmra.mrb[0].mxu0 %v2841
      %v2843 = vpop.f32.mrb[0].mxu0
      %v2844 = vadd.f32 0.0, %v2843
      %v2845 = vpop.f32.mrb[0].mxu0
      %v2846 = vadd.f32 0.0, %v2845
      %2847 = vmatprep.mubr.f32.mxu0 0.0
      %v2848 = vand.u32 %v1890, 4294901760
      %v2849 = vsub.f32 %v1890, %v2848
      %v2850 = vand.u32 %v2849, 4294901760
      %v2851 = vsub.f32 %v2849, %v2850
      %v2852 = vand.u32 %v2851, 4294901760
      %2853 = vmatmul.mubr.f32.gmra.mrb[0].mxu0 %v2852
      %v2854 = vpop.f32.mrb[0].mxu0
      %v2855 = vadd.f32 0.0, %v2854
      %v2856 = vpop.f32.mrb[0].mxu0
      %v2857 = vadd.f32 0.0, %v2856
      %2858 = vmatprep.mubr.f32.mxu0 0.0
      %v2859 = vand.u32 %v1893, 4294901760
      %v2860 = vsub.f32 %v1893, %v2859
      %v2861 = vand.u32 %v2860, 4294901760
      %v2862 = vsub.f32 %v2860, %v2861
      %v2863 = vand.u32 %v2862, 4294901760
      %2864 = vmatmul.mubr.f32.gmra.mrb[0].mxu0 %v2863
      %v2865 = vpop.f32.mrb[0].mxu0
      %v2866 = vadd.f32 0.0, %v2865
      %v2867 = vpop.f32.mrb[0].mxu0
      %v2868 = vadd.f32 0.0, %v2867
      %2869 = vdwg.mxu0
      %v2870 = vand.u32 %v1775, 4294901760
      %v2871 = vsub.f32 %v1775, %v2870
      %v2872 = vand.u32 %v2871, 4294901760
      %v2873 = vsub.f32 %v2871, %v2872
      %v2874 = vand.u32 %v2873, 4294901760
      %2875 = vmatprep.subr.mxu0 %v2874
      %v2876 = vand.u32 %v1774, 4294901760
      %v2877 = vsub.f32 %v1774, %v2876
      %v2878 = vand.u32 %v2877, 4294901760
      %v2879 = vsub.f32 %v2877, %v2878
      %v2880 = vand.u32 %v2879, 4294901760
      %2881 = vmatpush1.msra.mxu0 %v2880
      %v2882 = vand.u32 %v1786, 4294901760
      %v2883 = vsub.f32 %v1786, %v2882
      %v2884 = vand.u32 %v2883, 4294901760
      %v2885 = vsub.f32 %v2883, %v2884
      %v2886 = vand.u32 %v2885, 4294901760
      %2887 = vmatprep.subr.mxu0 %v2886
      %v2888 = vand.u32 %v1785, 4294901760
      %v2889 = vsub.f32 %v1785, %v2888
      %v2890 = vand.u32 %v2889, 4294901760
      %v2891 = vsub.f32 %v2889, %v2890
      %v2892 = vand.u32 %v2891, 4294901760
      %2893 = vmatpush1.msra.mxu0 %v2892
      %v2894 = vand.u32 %v1797, 4294901760
      %v2895 = vsub.f32 %v1797, %v2894
      %v2896 = vand.u32 %v2895, 4294901760
      %v2897 = vsub.f32 %v2895, %v2896
      %v2898 = vand.u32 %v2897, 4294901760
      %2899 = vmatprep.subr.mxu0 %v2898
      %v2900 = vand.u32 %v1796, 4294901760
      %v2901 = vsub.f32 %v1796, %v2900
      %v2902 = vand.u32 %v2901, 4294901760
      %v2903 = vsub.f32 %v2901, %v2902
      %v2904 = vand.u32 %v2903, 4294901760
      %2905 = vmatpush1.msra.mxu0 %v2904
      %v2906 = vand.u32 %v1808, 4294901760
      %v2907 = vsub.f32 %v1808, %v2906
      %v2908 = vand.u32 %v2907, 4294901760
      %v2909 = vsub.f32 %v2907, %v2908
      %v2910 = vand.u32 %v2909, 4294901760
      %2911 = vmatprep.subr.mxu0 %v2910
      %v2912 = vand.u32 %v1807, 4294901760
      %v2913 = vsub.f32 %v1807, %v2912
      %v2914 = vand.u32 %v2913, 4294901760
      %v2915 = vsub.f32 %v2913, %v2914
      %v2916 = vand.u32 %v2915, 4294901760
      %2917 = vmatpush1.msra.mxu0 %v2916
      %v2918 = vand.u32 %v1819, 4294901760
      %v2919 = vsub.f32 %v1819, %v2918
      %v2920 = vand.u32 %v2919, 4294901760
      %v2921 = vsub.f32 %v2919, %v2920
      %v2922 = vand.u32 %v2921, 4294901760
      %2923 = vmatprep.subr.mxu0 %v2922
      %v2924 = vand.u32 %v1818, 4294901760
      %v2925 = vsub.f32 %v1818, %v2924
      %v2926 = vand.u32 %v2925, 4294901760
      %v2927 = vsub.f32 %v2925, %v2926
      %v2928 = vand.u32 %v2927, 4294901760
      %2929 = vmatpush1.msra.mxu0 %v2928
      %v2930 = vand.u32 %v1830, 4294901760
      %v2931 = vsub.f32 %v1830, %v2930
      %v2932 = vand.u32 %v2931, 4294901760
      %v2933 = vsub.f32 %v2931, %v2932
      %v2934 = vand.u32 %v2933, 4294901760
      %2935 = vmatprep.subr.mxu0 %v2934
      %v2936 = vand.u32 %v1829, 4294901760
      %v2937 = vsub.f32 %v1829, %v2936
      %v2938 = vand.u32 %v2937, 4294901760
      %v2939 = vsub.f32 %v2937, %v2938
      %v2940 = vand.u32 %v2939, 4294901760
      %2941 = vmatpush1.msra.mxu0 %v2940
      %v2942 = vand.u32 %v1841, 4294901760
      %v2943 = vsub.f32 %v1841, %v2942
      %v2944 = vand.u32 %v2943, 4294901760
      %v2945 = vsub.f32 %v2943, %v2944
      %v2946 = vand.u32 %v2945, 4294901760
      %2947 = vmatprep.subr.mxu0 %v2946
      %v2948 = vand.u32 %v1840, 4294901760
      %v2949 = vsub.f32 %v1840, %v2948
      %v2950 = vand.u32 %v2949, 4294901760
      %v2951 = vsub.f32 %v2949, %v2950
      %v2952 = vand.u32 %v2951, 4294901760
      %2953 = vmatpush1.msra.mxu0 %v2952
      %v2954 = vand.u32 %v1852, 4294901760
      %v2955 = vsub.f32 %v1852, %v2954
      %v2956 = vand.u32 %v2955, 4294901760
      %v2957 = vsub.f32 %v2955, %v2956
      %v2958 = vand.u32 %v2957, 4294901760
      %2959 = vmatprep.subr.mxu0 %v2958
      %v2960 = vand.u32 %v1851, 4294901760
      %v2961 = vsub.f32 %v1851, %v2960
      %v2962 = vand.u32 %v2961, 4294901760
      %v2963 = vsub.f32 %v2961, %v2962
      %v2964 = vand.u32 %v2963, 4294901760
      %2965 = vmatpush1.msra.mxu0 %v2964
      %v2966 = vand.u32 %v1863, 4294901760
      %v2967 = vsub.f32 %v1863, %v2966
      %v2968 = vand.u32 %v2967, 4294901760
      %v2969 = vsub.f32 %v2967, %v2968
      %v2970 = vand.u32 %v2969, 4294901760
      %2971 = vmatprep.subr.mxu0 %v2970
      %v2972 = vand.u32 %v1862, 4294901760
      %v2973 = vsub.f32 %v1862, %v2972
      %v2974 = vand.u32 %v2973, 4294901760
      %v2975 = vsub.f32 %v2973, %v2974
      %v2976 = vand.u32 %v2975, 4294901760
      %2977 = vmatpush1.msra.mxu0 %v2976
      %v2978 = vand.u32 %v1874, 4294901760
      %v2979 = vsub.f32 %v1874, %v2978
      %v2980 = vand.u32 %v2979, 4294901760
      %v2981 = vsub.f32 %v2979, %v2980
      %v2982 = vand.u32 %v2981, 4294901760
      %2983 = vmatprep.subr.mxu0 %v2982
      %v2984 = vand.u32 %v1873, 4294901760
      %v2985 = vsub.f32 %v1873, %v2984
      %v2986 = vand.u32 %v2985, 4294901760
      %v2987 = vsub.f32 %v2985, %v2986
      %v2988 = vand.u32 %v2987, 4294901760
      %2989 = vmatpush1.msra.mxu0 %v2988
      %2990 = vmatprep.subr.mxu0 0.0
      %2991 = vmatpush1.msra.mxu0 0.0
      %2992 = vmatprep.subr.mxu0 0.0
      %2993 = vmatpush1.msra.mxu0 0.0
      %2994 = vmatprep.subr.mxu0 0.0
      %2995 = vmatpush1.msra.mxu0 0.0
      %2996 = vmatprep.subr.mxu0 0.0
      %2997 = vmatpush1.msra.mxu0 0.0
      %2998 = vmatprep.subr.mxu0 0.0
      %2999 = vmatpush1.msra.mxu0 0.0
      %3000 = vmatprep.subr.mxu0 0.0
      %3001 = vmatpush1.msra.mxu0 0.0
      %3002 = vmatprep.subr.mxu0 0.0
      %3003 = vmatpush1.msra.mxu0 0.0
      %3004 = vmatprep.subr.mxu0 0.0
      %3005 = vmatpush1.msra.mxu0 0.0
      %3006 = vmatprep.subr.mxu0 0.0
      %3007 = vmatpush1.msra.mxu0 0.0
      %3008 = vmatprep.subr.mxu0 0.0
      %3009 = vmatpush1.msra.mxu0 0.0
      %3010 = vmatprep.subr.mxu0 0.0
      %3011 = vmatpush1.msra.mxu0 0.0
      %3012 = vmatprep.subr.mxu0 0.0
      %3013 = vmatpush1.msra.mxu0 0.0
      %3014 = vmatprep.subr.mxu0 0.0
      %3015 = vmatpush1.msra.mxu0 0.0
      %3016 = vmatprep.subr.mxu0 0.0
      %3017 = vmatpush1.msra.mxu0 0.0
      %3018 = vmatprep.subr.mxu0 0.0
      %3019 = vmatpush1.msra.mxu0 0.0
      %3020 = vmatprep.subr.mxu0 0.0
      %3021 = vmatpush1.msra.mxu0 0.0
      %3022 = vmatprep.subr.mxu0 0.0
      %3023 = vmatpush1.msra.mxu0 0.0
      %3024 = vmatprep.subr.mxu0 0.0
      %3025 = vmatpush1.msra.mxu0 0.0
      %3026 = vmatprep.subr.mxu0 0.0
      %3027 = vmatpush1.msra.mxu0 0.0
      %3028 = vmatprep.subr.mxu0 0.0
      %3029 = vmatpush1.msra.mxu0 0.0
      %3030 = vmatprep.subr.mxu0 0.0
      %3031 = vmatpush1.msra.mxu0 0.0
      %3032 = vmatprep.subr.mxu0 0.0
      %3033 = vmatpush1.msra.mxu0 0.0
      %3034 = vmatprep.mubr.f32.mxu0 0.0
      %v3035 = vand.u32 %v1884, 4294901760
      %3036 = vmatmul.mubr.f32.gmra.mrb[0].mxu0 %v3035
      %v3037 = vpop.f32.mrb[0].mxu0
      %v3038 = vadd.f32 %v2833, %v3037
      %v3039 = vpop.f32.mrb[0].mxu0
      %v3040 = vadd.f32 %v2835, %v3039
      %3041 = vmatprep.mubr.f32.mxu0 0.0
      %v3042 = vand.u32 %v1887, 4294901760
      %3043 = vmatmul.mubr.f32.gmra.mrb[0].mxu0 %v3042
      %v3044 = vpop.f32.mrb[0].mxu0
      %v3045 = vadd.f32 %v2844, %v3044
      %v3046 = vpop.f32.mrb[0].mxu0
      %v3047 = vadd.f32 %v2846, %v3046
      %3048 = vmatprep.mubr.f32.mxu0 0.0
      %v3049 = vand.u32 %v1890, 4294901760
      %3050 = vmatmul.mubr.f32.gmra.mrb[0].mxu0 %v3049
      %v3051 = vpop.f32.mrb[0].mxu0
      %v3052 = vadd.f32 %v2855, %v3051
      %v3053 = vpop.f32.mrb[0].mxu0
      %v3054 = vadd.f32 %v2857, %v3053
      %3055 = vmatprep.mubr.f32.mxu0 0.0
      %v3056 = vand.u32 %v1893, 4294901760
      %3057 = vmatmul.mubr.f32.gmra.mrb[0].mxu0 %v3056
      %v3058 = vpop.f32.mrb[0].mxu0
      %v3059 = vadd.f32 %v2866, %v3058
      %v3060 = vpop.f32.mrb[0].mxu0
      %v3061 = vadd.f32 %v2868, %v3060
      %3062 = vdwg.mxu0
      %v3063 = vand.u32 %v1775, 4294901760
      %v3064 = vsub.f32 %v1775, %v3063
      %3065 = vmatprep.subr.mxu0 %v3064
      %v3066 = vand.u32 %v1774, 4294901760
      %v3067 = vsub.f32 %v1774, %v3066
      %3068 = vmatpush1.msra.mxu0 %v3067
      %v3069 = vand.u32 %v1786, 4294901760
      %v3070 = vsub.f32 %v1786, %v3069
      %3071 = vmatprep.subr.mxu0 %v3070
      %v3072 = vand.u32 %v1785, 4294901760
      %v3073 = vsub.f32 %v1785, %v3072
      %3074 = vmatpush1.msra.mxu0 %v3073
      %v3075 = vand.u32 %v1797, 4294901760
      %v3076 = vsub.f32 %v1797, %v3075
      %3077 = vmatprep.subr.mxu0 %v3076
      %v3078 = vand.u32 %v1796, 4294901760
      %v3079 = vsub.f32 %v1796, %v3078
      %3080 = vmatpush1.msra.mxu0 %v3079
      %v3081 = vand.u32 %v1808, 4294901760
      %v3082 = vsub.f32 %v1808, %v3081
      %3083 = vmatprep.subr.mxu0 %v3082
      %v3084 = vand.u32 %v1807, 4294901760
      %v3085 = vsub.f32 %v1807, %v3084
      %3086 = vmatpush1.msra.mxu0 %v3085
      %v3087 = vand.u32 %v1819, 4294901760
      %v3088 = vsub.f32 %v1819, %v3087
      %3089 = vmatprep.subr.mxu0 %v3088
      %v3090 = vand.u32 %v1818, 4294901760
      %v3091 = vsub.f32 %v1818, %v3090
      %3092 = vmatpush1.msra.mxu0 %v3091
      %v3093 = vand.u32 %v1830, 4294901760
      %v3094 = vsub.f32 %v1830, %v3093
      %3095 = vmatprep.subr.mxu0 %v3094
      %v3096 = vand.u32 %v1829, 4294901760
      %v3097 = vsub.f32 %v1829, %v3096
      %3098 = vmatpush1.msra.mxu0 %v3097
      %v3099 = vand.u32 %v1841, 4294901760
      %v3100 = vsub.f32 %v1841, %v3099
      %3101 = vmatprep.subr.mxu0 %v3100
      %v3102 = vand.u32 %v1840, 4294901760
      %v3103 = vsub.f32 %v1840, %v3102
      %3104 = vmatpush1.msra.mxu0 %v3103
      %v3105 = vand.u32 %v1852, 4294901760
      %v3106 = vsub.f32 %v1852, %v3105
      %3107 = vmatprep.subr.mxu0 %v3106
      %v3108 = vand.u32 %v1851, 4294901760
      %v3109 = vsub.f32 %v1851, %v3108
      %3110 = vmatpush1.msra.mxu0 %v3109
      %v3111 = vand.u32 %v1863, 4294901760
      %v3112 = vsub.f32 %v1863, %v3111
      %3113 = vmatprep.subr.mxu0 %v3112
      %v3114 = vand.u32 %v1862, 4294901760
      %v3115 = vsub.f32 %v1862, %v3114
      %3116 = vmatpush1.msra.mxu0 %v3115
      %v3117 = vand.u32 %v1874, 4294901760
      %v3118 = vsub.f32 %v1874, %v3117
      %3119 = vmatprep.subr.mxu0 %v3118
      %v3120 = vand.u32 %v1873, 4294901760
      %v3121 = vsub.f32 %v1873, %v3120
      %3122 = vmatpush1.msra.mxu0 %v3121
      %3123 = vmatprep.subr.mxu0 0.0
      %3124 = vmatpush1.msra.mxu0 0.0
      %3125 = vmatprep.subr.mxu0 0.0
      %3126 = vmatpush1.msra.mxu0 0.0
      %3127 = vmatprep.subr.mxu0 0.0
      %3128 = vmatpush1.msra.mxu0 0.0
      %3129 = vmatprep.subr.mxu0 0.0
      %3130 = vmatpush1.msra.mxu0 0.0
      %3131 = vmatprep.subr.mxu0 0.0
      %3132 = vmatpush1.msra.mxu0 0.0
      %3133 = vmatprep.subr.mxu0 0.0
      %3134 = vmatpush1.msra.mxu0 0.0
      %3135 = vmatprep.subr.mxu0 0.0
      %3136 = vmatpush1.msra.mxu0 0.0
      %3137 = vmatprep.subr.mxu0 0.0
      %3138 = vmatpush1.msra.mxu0 0.0
      %3139 = vmatprep.subr.mxu0 0.0
      %3140 = vmatpush1.msra.mxu0 0.0
      %3141 = vmatprep.subr.mxu0 0.0
      %3142 = vmatpush1.msra.mxu0 0.0
      %3143 = vmatprep.subr.mxu0 0.0
      %3144 = vmatpush1.msra.mxu0 0.0
      %3145 = vmatprep.subr.mxu0 0.0
      %3146 = vmatpush1.msra.mxu0 0.0
      %3147 = vmatprep.subr.mxu0 0.0
      %3148 = vmatpush1.msra.mxu0 0.0
      %3149 = vmatprep.subr.mxu0 0.0
      %3150 = vmatpush1.msra.mxu0 0.0
      %3151 = vmatprep.subr.mxu0 0.0
      %3152 = vmatpush1.msra.mxu0 0.0
      %3153 = vmatprep.subr.mxu0 0.0
      %3154 = vmatpush1.msra.mxu0 0.0
      %3155 = vmatprep.subr.mxu0 0.0
      %3156 = vmatpush1.msra.mxu0 0.0
      %3157 = vmatprep.subr.mxu0 0.0
      %3158 = vmatpush1.msra.mxu0 0.0
      %3159 = vmatprep.subr.mxu0 0.0
      %3160 = vmatpush1.msra.mxu0 0.0
      %3161 = vmatprep.subr.mxu0 0.0
      %3162 = vmatpush1.msra.mxu0 0.0
      %3163 = vmatprep.subr.mxu0 0.0
      %3164 = vmatpush1.msra.mxu0 0.0
      %3165 = vmatprep.subr.mxu0 0.0
      %3166 = vmatpush1.msra.mxu0 0.0
      %3167 = vmatprep.mubr.f32.mxu0 0.0
      %v3168 = vand.u32 %v1884, 4294901760
      %v3169 = vsub.f32 %v1884, %v3168
      %3170 = vmatmul.mubr.f32.gmra.mrb[0].mxu0 %v3169
      %v3171 = vpop.f32.mrb[0].mxu0
      %v3172 = vadd.f32 %v3038, %v3171
      %v3173 = vpop.f32.mrb[0].mxu0
      %v3174 = vadd.f32 %v3040, %v3173
      %3175 = vmatprep.mubr.f32.mxu0 0.0
      %v3176 = vand.u32 %v1887, 4294901760
      %v3177 = vsub.f32 %v1887, %v3176
      %3178 = vmatmul.mubr.f32.gmra.mrb[0].mxu0 %v3177
      %v3179 = vpop.f32.mrb[0].mxu0
      %v3180 = vadd.f32 %v3045, %v3179
      %v3181 = vpop.f32.mrb[0].mxu0
      %v3182 = vadd.f32 %v3047, %v3181
      %3183 = vmatprep.mubr.f32.mxu0 0.0
      %v3184 = vand.u32 %v1890, 4294901760
      %v3185 = vsub.f32 %v1890, %v3184
      %3186 = vmatmul.mubr.f32.gmra.mrb[0].mxu0 %v3185
      %v3187 = vpop.f32.mrb[0].mxu0
      %v3188 = vadd.f32 %v3052, %v3187
      %v3189 = vpop.f32.mrb[0].mxu0
      %v3190 = vadd.f32 %v3054, %v3189
      %3191 = vmatprep.mubr.f32.mxu0 0.0
      %v3192 = vand.u32 %v1893, 4294901760
      %v3193 = vsub.f32 %v1893, %v3192
      %3194 = vmatmul.mubr.f32.gmra.mrb[0].mxu0 %v3193
      %v3195 = vpop.f32.mrb[0].mxu0
      %v3196 = vadd.f32 %v3059, %v3195
      %v3197 = vpop.f32.mrb[0].mxu0
      %v3198 = vadd.f32 %v3061, %v3197
      %3199 = vdwg.mxu0
      %v3200 = vand.u32 %v1775, 4294901760
      %3201 = vmatprep.subr.mxu0 %v3200
      %v3202 = vand.u32 %v1774, 4294901760
      %3203 = vmatpush1.msra.mxu0 %v3202
      %v3204 = vand.u32 %v1786, 4294901760
      %3205 = vmatprep.subr.mxu0 %v3204
      %v3206 = vand.u32 %v1785, 4294901760
      %3207 = vmatpush1.msra.mxu0 %v3206
      %v3208 = vand.u32 %v1797, 4294901760
      %3209 = vmatprep.subr.mxu0 %v3208
      %v3210 = vand.u32 %v1796, 4294901760
      %3211 = vmatpush1.msra.mxu0 %v3210
      %v3212 = vand.u32 %v1808, 4294901760
      %3213 = vmatprep.subr.mxu0 %v3212
      %v3214 = vand.u32 %v1807, 4294901760
      %3215 = vmatpush1.msra.mxu0 %v3214
      %v3216 = vand.u32 %v1819, 4294901760
      %3217 = vmatprep.subr.mxu0 %v3216
      %v3218 = vand.u32 %v1818, 4294901760
      %3219 = vmatpush1.msra.mxu0 %v3218
      %v3220 = vand.u32 %v1830, 4294901760
      %3221 = vmatprep.subr.mxu0 %v3220
      %v3222 = vand.u32 %v1829, 4294901760
      %3223 = vmatpush1.msra.mxu0 %v3222
      %v3224 = vand.u32 %v1841, 4294901760
      %3225 = vmatprep.subr.mxu0 %v3224
      %v3226 = vand.u32 %v1840, 4294901760
      %3227 = vmatpush1.msra.mxu0 %v3226
      %v3228 = vand.u32 %v1852, 4294901760
      %3229 = vmatprep.subr.mxu0 %v3228
      %v3230 = vand.u32 %v1851, 4294901760
      %3231 = vmatpush1.msra.mxu0 %v3230
      %v3232 = vand.u32 %v1863, 4294901760
      %3233 = vmatprep.subr.mxu0 %v3232
      %v3234 = vand.u32 %v1862, 4294901760
      %3235 = vmatpush1.msra.mxu0 %v3234
      %v3236 = vand.u32 %v1874, 4294901760
      %3237 = vmatprep.subr.mxu0 %v3236
      %v3238 = vand.u32 %v1873, 4294901760
      %3239 = vmatpush1.msra.mxu0 %v3238
      %3240 = vmatprep.subr.mxu0 0.0
      %3241 = vmatpush1.msra.mxu0 0.0
      %3242 = vmatprep.subr.mxu0 0.0
      %3243 = vmatpush1.msra.mxu0 0.0
      %3244 = vmatprep.subr.mxu0 0.0
      %3245 = vmatpush1.msra.mxu0 0.0
      %3246 = vmatprep.subr.mxu0 0.0
      %3247 = vmatpush1.msra.mxu0 0.0
      %3248 = vmatprep.subr.mxu0 0.0
      %3249 = vmatpush1.msra.mxu0 0.0
      %3250 = vmatprep.subr.mxu0 0.0
      %3251 = vmatpush1.msra.mxu0 0.0
      %3252 = vmatprep.subr.mxu0 0.0
      %3253 = vmatpush1.msra.mxu0 0.0
      %3254 = vmatprep.subr.mxu0 0.0
      %3255 = vmatpush1.msra.mxu0 0.0
      %3256 = vmatprep.subr.mxu0 0.0
      %3257 = vmatpush1.msra.mxu0 0.0
      %3258 = vmatprep.subr.mxu0 0.0
      %3259 = vmatpush1.msra.mxu0 0.0
      %3260 = vmatprep.subr.mxu0 0.0
      %3261 = vmatpush1.msra.mxu0 0.0
      %3262 = vmatprep.subr.mxu0 0.0
      %3263 = vmatpush1.msra.mxu0 0.0
      %3264 = vmatprep.subr.mxu0 0.0
      %3265 = vmatpush1.msra.mxu0 0.0
      %3266 = vmatprep.subr.mxu0 0.0
      %3267 = vmatpush1.msra.mxu0 0.0
      %3268 = vmatprep.subr.mxu0 0.0
      %3269 = vmatpush1.msra.mxu0 0.0
      %3270 = vmatprep.subr.mxu0 0.0
      %3271 = vmatpush1.msra.mxu0 0.0
      %3272 = vmatprep.subr.mxu0 0.0
      %3273 = vmatpush1.msra.mxu0 0.0
      %3274 = vmatprep.subr.mxu0 0.0
      %3275 = vmatpush1.msra.mxu0 0.0
      %3276 = vmatprep.subr.mxu0 0.0
      %3277 = vmatpush1.msra.mxu0 0.0
      %3278 = vmatprep.subr.mxu0 0.0
      %3279 = vmatpush1.msra.mxu0 0.0
      %3280 = vmatprep.subr.mxu0 0.0
      %3281 = vmatpush1.msra.mxu0 0.0
      %3282 = vmatprep.subr.mxu0 0.0
      %3283 = vmatpush1.msra.mxu0 0.0
      %3284 = vmatprep.mubr.f32.mxu0 0.0
      %v3285 = vand.u32 %v1884, 4294901760
      %v3286 = vsub.f32 %v1884, %v3285
      %v3287 = vand.u32 %v3286, 4294901760
      %3288 = vmatmul.mubr.f32.gmra.mrb[0].mxu0 %v3287
      %v3289 = vpop.f32.mrb[0].mxu0
      %v3290 = vadd.f32 %v3172, %v3289
      %v3291 = vpop.f32.mrb[0].mxu0
      %v3292 = vadd.f32 %v3174, %v3291
      %3293 = vmatprep.mubr.f32.mxu0 0.0
      %v3294 = vand.u32 %v1887, 4294901760
      %v3295 = vsub.f32 %v1887, %v3294
      %v3296 = vand.u32 %v3295, 4294901760
      %3297 = vmatmul.mubr.f32.gmra.mrb[0].mxu0 %v3296
      %v3298 = vpop.f32.mrb[0].mxu0
      %v3299 = vadd.f32 %v3180, %v3298
      %v3300 = vpop.f32.mrb[0].mxu0
      %v3301 = vadd.f32 %v3182, %v3300
      %3302 = vmatprep.mubr.f32.mxu0 0.0
      %v3303 = vand.u32 %v1890, 4294901760
      %v3304 = vsub.f32 %v1890, %v3303
      %v3305 = vand.u32 %v3304, 4294901760
      %3306 = vmatmul.mubr.f32.gmra.mrb[0].mxu0 %v3305
      %v3307 = vpop.f32.mrb[0].mxu0
      %v3308 = vadd.f32 %v3188, %v3307
      %v3309 = vpop.f32.mrb[0].mxu0
      %v3310 = vadd.f32 %v3190, %v3309
      %3311 = vmatprep.mubr.f32.mxu0 0.0
      %v3312 = vand.u32 %v1893, 4294901760
      %v3313 = vsub.f32 %v1893, %v3312
      %v3314 = vand.u32 %v3313, 4294901760
      %3315 = vmatmul.mubr.f32.gmra.mrb[0].mxu0 %v3314
      %v3316 = vpop.f32.mrb[0].mxu0
      %v3317 = vadd.f32 %v3196, %v3316
      %v3318 = vpop.f32.mrb[0].mxu0
      %v3319 = vadd.f32 %v3198, %v3318
      %3320 = vdwg.mxu0
      %v3321 = vand.u32 %v1775, 4294901760
      %v3322 = vsub.f32 %v1775, %v3321
      %v3323 = vand.u32 %v3322, 4294901760
      %3324 = vmatprep.subr.mxu0 %v3323
      %v3325 = vand.u32 %v1774, 4294901760
      %v3326 = vsub.f32 %v1774, %v3325
      %v3327 = vand.u32 %v3326, 4294901760
      %3328 = vmatpush1.msra.mxu0 %v3327
      %v3329 = vand.u32 %v1786, 4294901760
      %v3330 = vsub.f32 %v1786, %v3329
      %v3331 = vand.u32 %v3330, 4294901760
      %3332 = vmatprep.subr.mxu0 %v3331
      %v3333 = vand.u32 %v1785, 4294901760
      %v3334 = vsub.f32 %v1785, %v3333
      %v3335 = vand.u32 %v3334, 4294901760
      %3336 = vmatpush1.msra.mxu0 %v3335
      %v3337 = vand.u32 %v1797, 4294901760
      %v3338 = vsub.f32 %v1797, %v3337
      %v3339 = vand.u32 %v3338, 4294901760
      %3340 = vmatprep.subr.mxu0 %v3339
      %v3341 = vand.u32 %v1796, 4294901760
      %v3342 = vsub.f32 %v1796, %v3341
      %v3343 = vand.u32 %v3342, 4294901760
      %3344 = vmatpush1.msra.mxu0 %v3343
      %v3345 = vand.u32 %v1808, 4294901760
      %v3346 = vsub.f32 %v1808, %v3345
      %v3347 = vand.u32 %v3346, 4294901760
      %3348 = vmatprep.subr.mxu0 %v3347
      %v3349 = vand.u32 %v1807, 4294901760
      %v3350 = vsub.f32 %v1807, %v3349
      %v3351 = vand.u32 %v3350, 4294901760
      %3352 = vmatpush1.msra.mxu0 %v3351
      %v3353 = vand.u32 %v1819, 4294901760
      %v3354 = vsub.f32 %v1819, %v3353
      %v3355 = vand.u32 %v3354, 4294901760
      %3356 = vmatprep.subr.mxu0 %v3355
      %v3357 = vand.u32 %v1818, 4294901760
      %v3358 = vsub.f32 %v1818, %v3357
      %v3359 = vand.u32 %v3358, 4294901760
      %3360 = vmatpush1.msra.mxu0 %v3359
      %v3361 = vand.u32 %v1830, 4294901760
      %v3362 = vsub.f32 %v1830, %v3361
      %v3363 = vand.u32 %v3362, 4294901760
      %3364 = vmatprep.subr.mxu0 %v3363
      %v3365 = vand.u32 %v1829, 4294901760
      %v3366 = vsub.f32 %v1829, %v3365
      %v3367 = vand.u32 %v3366, 4294901760
      %3368 = vmatpush1.msra.mxu0 %v3367
      %v3369 = vand.u32 %v1841, 4294901760
      %v3370 = vsub.f32 %v1841, %v3369
      %v3371 = vand.u32 %v3370, 4294901760
      %3372 = vmatprep.subr.mxu0 %v3371
      %v3373 = vand.u32 %v1840, 4294901760
      %v3374 = vsub.f32 %v1840, %v3373
      %v3375 = vand.u32 %v3374, 4294901760
      %3376 = vmatpush1.msra.mxu0 %v3375
      %v3377 = vand.u32 %v1852, 4294901760
      %v3378 = vsub.f32 %v1852, %v3377
      %v3379 = vand.u32 %v3378, 4294901760
      %3380 = vmatprep.subr.mxu0 %v3379
      %v3381 = vand.u32 %v1851, 4294901760
      %v3382 = vsub.f32 %v1851, %v3381
      %v3383 = vand.u32 %v3382, 4294901760
      %3384 = vmatpush1.msra.mxu0 %v3383
      %v3385 = vand.u32 %v1863, 4294901760
      %v3386 = vsub.f32 %v1863, %v3385
      %v3387 = vand.u32 %v3386, 4294901760
      %3388 = vmatprep.subr.mxu0 %v3387
      %v3389 = vand.u32 %v1862, 4294901760
      %v3390 = vsub.f32 %v1862, %v3389
      %v3391 = vand.u32 %v3390, 4294901760
      %3392 = vmatpush1.msra.mxu0 %v3391
      %v3393 = vand.u32 %v1874, 4294901760
      %v3394 = vsub.f32 %v1874, %v3393
      %v3395 = vand.u32 %v3394, 4294901760
      %3396 = vmatprep.subr.mxu0 %v3395
      %v3397 = vand.u32 %v1873, 4294901760
      %v3398 = vsub.f32 %v1873, %v3397
      %v3399 = vand.u32 %v3398, 4294901760
      %3400 = vmatpush1.msra.mxu0 %v3399
      %3401 = vmatprep.subr.mxu0 0.0
      %3402 = vmatpush1.msra.mxu0 0.0
      %3403 = vmatprep.subr.mxu0 0.0
      %3404 = vmatpush1.msra.mxu0 0.0
      %3405 = vmatprep.subr.mxu0 0.0
      %3406 = vmatpush1.msra.mxu0 0.0
      %3407 = vmatprep.subr.mxu0 0.0
      %3408 = vmatpush1.msra.mxu0 0.0
      %3409 = vmatprep.subr.mxu0 0.0
      %3410 = vmatpush1.msra.mxu0 0.0
      %3411 = vmatprep.subr.mxu0 0.0
      %3412 = vmatpush1.msra.mxu0 0.0
      %3413 = vmatprep.subr.mxu0 0.0
      %3414 = vmatpush1.msra.mxu0 0.0
      %3415 = vmatprep.subr.mxu0 0.0
      %3416 = vmatpush1.msra.mxu0 0.0
      %3417 = vmatprep.subr.mxu0 0.0
      %3418 = vmatpush1.msra.mxu0 0.0
      %3419 = vmatprep.subr.mxu0 0.0
      %3420 = vmatpush1.msra.mxu0 0.0
      %3421 = vmatprep.subr.mxu0 0.0
      %3422 = vmatpush1.msra.mxu0 0.0
      %3423 = vmatprep.subr.mxu0 0.0
      %3424 = vmatpush1.msra.mxu0 0.0
      %3425 = vmatprep.subr.mxu0 0.0
      %3426 = vmatpush1.msra.mxu0 0.0
      %3427 = vmatprep.subr.mxu0 0.0
      %3428 = vmatpush1.msra.mxu0 0.0
      %3429 = vmatprep.subr.mxu0 0.0
      %3430 = vmatpush1.msra.mxu0 0.0
      %3431 = vmatprep.subr.mxu0 0.0
      %3432 = vmatpush1.msra.mxu0 0.0
      %3433 = vmatprep.subr.mxu0 0.0
      %3434 = vmatpush1.msra.mxu0 0.0
      %3435 = vmatprep.subr.mxu0 0.0
      %3436 = vmatpush1.msra.mxu0 0.0
      %3437 = vmatprep.subr.mxu0 0.0
      %3438 = vmatpush1.msra.mxu0 0.0
      %3439 = vmatprep.subr.mxu0 0.0
      %3440 = vmatpush1.msra.mxu0 0.0
      %3441 = vmatprep.subr.mxu0 0.0
      %3442 = vmatpush1.msra.mxu0 0.0
      %3443 = vmatprep.subr.mxu0 0.0
      %3444 = vmatpush1.msra.mxu0 0.0
      %3445 = vmatprep.mubr.f32.mxu0 0.0
      %v3446 = vand.u32 %v1884, 4294901760
      %3447 = vmatmul.mubr.f32.gmra.mrb[0].mxu0 %v3446
      %v3448 = vpop.f32.mrb[0].mxu0
      %v3449 = vadd.f32 %v3290, %v3448
      %v3450 = vpop.f32.mrb[0].mxu0
      %v3451 = vadd.f32 %v3292, %v3450
      %3452 = vmatprep.mubr.f32.mxu0 0.0
      %v3453 = vand.u32 %v1887, 4294901760
      %3454 = vmatmul.mubr.f32.gmra.mrb[0].mxu0 %v3453
      %v3455 = vpop.f32.mrb[0].mxu0
      %v3456 = vadd.f32 %v3299, %v3455
      %v3457 = vpop.f32.mrb[0].mxu0
      %v3458 = vadd.f32 %v3301, %v3457
      %3459 = vmatprep.mubr.f32.mxu0 0.0
      %v3460 = vand.u32 %v1890, 4294901760
      %3461 = vmatmul.mubr.f32.gmra.mrb[0].mxu0 %v3460
      %v3462 = vpop.f32.mrb[0].mxu0
      %v3463 = vadd.f32 %v3308, %v3462
      %v3464 = vpop.f32.mrb[0].mxu0
      %v3465 = vadd.f32 %v3310, %v3464
      %3466 = vmatprep.mubr.f32.mxu0 0.0
      %v3467 = vand.u32 %v1893, 4294901760
      %3468 = vmatmul.mubr.f32.gmra.mrb[0].mxu0 %v3467
      %v3469 = vpop.f32.mrb[0].mxu0
      %v3470 = vadd.f32 %v3317, %v3469
      %v3471 = vpop.f32.mrb[0].mxu0
      %v3472 = vadd.f32 %v3319, %v3471
      %3473 = vdwg.mxu0
      %v3474 = vand.u32 %v1775, 4294901760
      %3475 = vmatprep.subr.mxu0 %v3474
      %v3476 = vand.u32 %v1774, 4294901760
      %3477 = vmatpush1.msra.mxu0 %v3476
      %v3478 = vand.u32 %v1786, 4294901760
      %3479 = vmatprep.subr.mxu0 %v3478
      %v3480 = vand.u32 %v1785, 4294901760
      %3481 = vmatpush1.msra.mxu0 %v3480
      %v3482 = vand.u32 %v1797, 4294901760
      %3483 = vmatprep.subr.mxu0 %v3482
      %v3484 = vand.u32 %v1796, 4294901760
      %3485 = vmatpush1.msra.mxu0 %v3484
      %v3486 = vand.u32 %v1808, 4294901760
      %3487 = vmatprep.subr.mxu0 %v3486
      %v3488 = vand.u32 %v1807, 4294901760
      %3489 = vmatpush1.msra.mxu0 %v3488
      %v3490 = vand.u32 %v1819, 4294901760
      %3491 = vmatprep.subr.mxu0 %v3490
      %v3492 = vand.u32 %v1818, 4294901760
      %3493 = vmatpush1.msra.mxu0 %v3492
      %v3494 = vand.u32 %v1830, 4294901760
      %3495 = vmatprep.subr.mxu0 %v3494
      %v3496 = vand.u32 %v1829, 4294901760
      %3497 = vmatpush1.msra.mxu0 %v3496
      %v3498 = vand.u32 %v1841, 4294901760
      %3499 = vmatprep.subr.mxu0 %v3498
      %v3500 = vand.u32 %v1840, 4294901760
      %3501 = vmatpush1.msra.mxu0 %v3500
      %v3502 = vand.u32 %v1852, 4294901760
      %3503 = vmatprep.subr.mxu0 %v3502
      %v3504 = vand.u32 %v1851, 4294901760
      %3505 = vmatpush1.msra.mxu0 %v3504
      %v3506 = vand.u32 %v1863, 4294901760
      %3507 = vmatprep.subr.mxu0 %v3506
      %v3508 = vand.u32 %v1862, 4294901760
      %3509 = vmatpush1.msra.mxu0 %v3508
      %v3510 = vand.u32 %v1874, 4294901760
      %3511 = vmatprep.subr.mxu0 %v3510
      %v3512 = vand.u32 %v1873, 4294901760
      %3513 = vmatpush1.msra.mxu0 %v3512
      %3514 = vmatprep.subr.mxu0 0.0
      %3515 = vmatpush1.msra.mxu0 0.0
      %3516 = vmatprep.subr.mxu0 0.0
      %3517 = vmatpush1.msra.mxu0 0.0
      %3518 = vmatprep.subr.mxu0 0.0
      %3519 = vmatpush1.msra.mxu0 0.0
      %3520 = vmatprep.subr.mxu0 0.0
      %3521 = vmatpush1.msra.mxu0 0.0
      %3522 = vmatprep.subr.mxu0 0.0
      %3523 = vmatpush1.msra.mxu0 0.0
      %3524 = vmatprep.subr.mxu0 0.0
      %3525 = vmatpush1.msra.mxu0 0.0
      %3526 = vmatprep.subr.mxu0 0.0
      %3527 = vmatpush1.msra.mxu0 0.0
      %3528 = vmatprep.subr.mxu0 0.0
      %3529 = vmatpush1.msra.mxu0 0.0
      %3530 = vmatprep.subr.mxu0 0.0
      %3531 = vmatpush1.msra.mxu0 0.0
      %3532 = vmatprep.subr.mxu0 0.0
      %3533 = vmatpush1.msra.mxu0 0.0
      %3534 = vmatprep.subr.mxu0 0.0
      %3535 = vmatpush1.msra.mxu0 0.0
      %3536 = vmatprep.subr.mxu0 0.0
      %3537 = vmatpush1.msra.mxu0 0.0
      %3538 = vmatprep.subr.mxu0 0.0
      %3539 = vmatpush1.msra.mxu0 0.0
      %3540 = vmatprep.subr.mxu0 0.0
      %3541 = vmatpush1.msra.mxu0 0.0
      %3542 = vmatprep.subr.mxu0 0.0
      %3543 = vmatpush1.msra.mxu0 0.0
      %3544 = vmatprep.subr.mxu0 0.0
      %3545 = vmatpush1.msra.mxu0 0.0
      %3546 = vmatprep.subr.mxu0 0.0
      %3547 = vmatpush1.msra.mxu0 0.0
      %3548 = vmatprep.subr.mxu0 0.0
      %3549 = vmatpush1.msra.mxu0 0.0
      %3550 = vmatprep.subr.mxu0 0.0
      %3551 = vmatpush1.msra.mxu0 0.0
      %3552 = vmatprep.subr.mxu0 0.0
      %3553 = vmatpush1.msra.mxu0 0.0
      %3554 = vmatprep.subr.mxu0 0.0
      %3555 = vmatpush1.msra.mxu0 0.0
      %3556 = vmatprep.subr.mxu0 0.0
      %3557 = vmatpush1.msra.mxu0 0.0
      %3558 = vmatprep.mubr.f32.mxu0 0.0
      %v3559 = vand.u32 %v1884, 4294901760
      %3560 = vmatmul.mubr.f32.gmra.mrb[0].mxu0 %v3559
      %v3561 = vpop.f32.mrb[0].mxu0
      %v3562 = vadd.f32 %v3449, %v3561
      %v3563 = vpop.f32.mrb[0].mxu0
      %v3564 = vadd.f32 %v3451, %v3563
      %3565 = vmatprep.mubr.f32.mxu0 0.0
      %v3566 = vand.u32 %v1887, 4294901760
      %3567 = vmatmul.mubr.f32.gmra.mrb[0].mxu0 %v3566
      %v3568 = vpop.f32.mrb[0].mxu0
      %v3569 = vadd.f32 %v3456, %v3568
      %v3570 = vpop.f32.mrb[0].mxu0
      %v3571 = vadd.f32 %v3458, %v3570
      %3572 = vmatprep.mubr.f32.mxu0 0.0
      %v3573 = vand.u32 %v1890, 4294901760
      %3574 = vmatmul.mubr.f32.gmra.mrb[0].mxu0 %v3573
      %v3575 = vpop.f32.mrb[0].mxu0
      %v3576 = vadd.f32 %v3463, %v3575
      %v3577 = vpop.f32.mrb[0].mxu0
      %v3578 = vadd.f32 %v3465, %v3577
      %3579 = vmatprep.mubr.f32.mxu0 0.0
      %v3580 = vand.u32 %v1893, 4294901760
      %3581 = vmatmul.mubr.f32.gmra.mrb[0].mxu0 %v3580
      %v3582 = vpop.f32.mrb[0].mxu0
      %v3583 = vadd.f32 %v3470, %v3582
      %v3584 = vpop.f32.mrb[0].mxu0
      %v3585 = vadd.f32 %v3472, %v3584
      %3586 = vdwg.mxu0
      %v3587 = vand.u32 %v1777, 4294901760
      %3588 = vmatprep.subr.mxu0 %v3587
      %v3589 = vand.u32 %v1776, 4294901760
      %3590 = vmatpush1.msra.mxu0 %v3589
      %v3591 = vand.u32 %v1788, 4294901760
      %3592 = vmatprep.subr.mxu0 %v3591
      %v3593 = vand.u32 %v1787, 4294901760
      %3594 = vmatpush1.msra.mxu0 %v3593
      %v3595 = vand.u32 %v1799, 4294901760
      %3596 = vmatprep.subr.mxu0 %v3595
      %v3597 = vand.u32 %v1798, 4294901760
      %3598 = vmatpush1.msra.mxu0 %v3597
      %v3599 = vand.u32 %v1810, 4294901760
      %3600 = vmatprep.subr.mxu0 %v3599
      %v3601 = vand.u32 %v1809, 4294901760
      %3602 = vmatpush1.msra.mxu0 %v3601
      %v3603 = vand.u32 %v1821, 4294901760
      %3604 = vmatprep.subr.mxu0 %v3603
      %v3605 = vand.u32 %v1820, 4294901760
      %3606 = vmatpush1.msra.mxu0 %v3605
      %v3607 = vand.u32 %v1832, 4294901760
      %3608 = vmatprep.subr.mxu0 %v3607
      %v3609 = vand.u32 %v1831, 4294901760
      %3610 = vmatpush1.msra.mxu0 %v3609
      %v3611 = vand.u32 %v1843, 4294901760
      %3612 = vmatprep.subr.mxu0 %v3611
      %v3613 = vand.u32 %v1842, 4294901760
      %3614 = vmatpush1.msra.mxu0 %v3613
      %v3615 = vand.u32 %v1854, 4294901760
      %3616 = vmatprep.subr.mxu0 %v3615
      %v3617 = vand.u32 %v1853, 4294901760
      %3618 = vmatpush1.msra.mxu0 %v3617
      %v3619 = vand.u32 %v1865, 4294901760
      %3620 = vmatprep.subr.mxu0 %v3619
      %v3621 = vand.u32 %v1864, 4294901760
      %3622 = vmatpush1.msra.mxu0 %v3621
      %v3623 = vand.u32 %v1876, 4294901760
      %3624 = vmatprep.subr.mxu0 %v3623
      %v3625 = vand.u32 %v1875, 4294901760
      %3626 = vmatpush1.msra.mxu0 %v3625
      %3627 = vmatprep.subr.mxu0 0.0
      %3628 = vmatpush1.msra.mxu0 0.0
      %3629 = vmatprep.subr.mxu0 0.0
      %3630 = vmatpush1.msra.mxu0 0.0
      %3631 = vmatprep.subr.mxu0 0.0
      %3632 = vmatpush1.msra.mxu0 0.0
      %3633 = vmatprep.subr.mxu0 0.0
      %3634 = vmatpush1.msra.mxu0 0.0
      %3635 = vmatprep.subr.mxu0 0.0
      %3636 = vmatpush1.msra.mxu0 0.0
      %3637 = vmatprep.subr.mxu0 0.0
      %3638 = vmatpush1.msra.mxu0 0.0
      %3639 = vmatprep.subr.mxu0 0.0
      %3640 = vmatpush1.msra.mxu0 0.0
      %3641 = vmatprep.subr.mxu0 0.0
      %3642 = vmatpush1.msra.mxu0 0.0
      %3643 = vmatprep.subr.mxu0 0.0
      %3644 = vmatpush1.msra.mxu0 0.0
      %3645 = vmatprep.subr.mxu0 0.0
      %3646 = vmatpush1.msra.mxu0 0.0
      %3647 = vmatprep.subr.mxu0 0.0
      %3648 = vmatpush1.msra.mxu0 0.0
      %3649 = vmatprep.subr.mxu0 0.0
      %3650 = vmatpush1.msra.mxu0 0.0
      %3651 = vmatprep.subr.mxu0 0.0
      %3652 = vmatpush1.msra.mxu0 0.0
      %3653 = vmatprep.subr.mxu0 0.0
      %3654 = vmatpush1.msra.mxu0 0.0
      %3655 = vmatprep.subr.mxu0 0.0
      %3656 = vmatpush1.msra.mxu0 0.0
      %3657 = vmatprep.subr.mxu0 0.0
      %3658 = vmatpush1.msra.mxu0 0.0
      %3659 = vmatprep.subr.mxu0 0.0
      %3660 = vmatpush1.msra.mxu0 0.0
      %3661 = vmatprep.subr.mxu0 0.0
      %3662 = vmatpush1.msra.mxu0 0.0
      %3663 = vmatprep.subr.mxu0 0.0
      %3664 = vmatpush1.msra.mxu0 0.0
      %3665 = vmatprep.subr.mxu0 0.0
      %3666 = vmatpush1.msra.mxu0 0.0
      %3667 = vmatprep.subr.mxu0 0.0
      %3668 = vmatpush1.msra.mxu0 0.0
      %3669 = vmatprep.subr.mxu0 0.0
      %3670 = vmatpush1.msra.mxu0 0.0
      %3671 = vmatprep.mubr.f32.mxu0 0.0
      %v3672 = vand.u32 %v1884, 4294901760
      %v3673 = vsub.f32 %v1884, %v3672
      %v3674 = vand.u32 %v3673, 4294901760
      %v3675 = vsub.f32 %v3673, %v3674
      %v3676 = vand.u32 %v3675, 4294901760
      %3677 = vmatmul.mubr.f32.gmra.mrb[0].mxu0 %v3676
      %v3678 = vpop.f32.mrb[0].mxu0
      %v3679 = vadd.f32 0.0, %v3678
      %v3680 = vpop.f32.mrb[0].mxu0
      %v3681 = vadd.f32 0.0, %v3680
      %3682 = vmatprep.mubr.f32.mxu0 0.0
      %v3683 = vand.u32 %v1887, 4294901760
      %v3684 = vsub.f32 %v1887, %v3683
      %v3685 = vand.u32 %v3684, 4294901760
      %v3686 = vsub.f32 %v3684, %v3685
      %v3687 = vand.u32 %v3686, 4294901760
      %3688 = vmatmul.mubr.f32.gmra.mrb[0].mxu0 %v3687
      %v3689 = vpop.f32.mrb[0].mxu0
      %v3690 = vadd.f32 0.0, %v3689
      %v3691 = vpop.f32.mrb[0].mxu0
      %v3692 = vadd.f32 0.0, %v3691
      %3693 = vmatprep.mubr.f32.mxu0 0.0
      %v3694 = vand.u32 %v1890, 4294901760
      %v3695 = vsub.f32 %v1890, %v3694
      %v3696 = vand.u32 %v3695, 4294901760
      %v3697 = vsub.f32 %v3695, %v3696
      %v3698 = vand.u32 %v3697, 4294901760
      %3699 = vmatmul.mubr.f32.gmra.mrb[0].mxu0 %v3698
      %v3700 = vpop.f32.mrb[0].mxu0
      %v3701 = vadd.f32 0.0, %v3700
      %v3702 = vpop.f32.mrb[0].mxu0
      %v3703 = vadd.f32 0.0, %v3702
      %3704 = vmatprep.mubr.f32.mxu0 0.0
      %v3705 = vand.u32 %v1893, 4294901760
      %v3706 = vsub.f32 %v1893, %v3705
      %v3707 = vand.u32 %v3706, 4294901760
      %v3708 = vsub.f32 %v3706, %v3707
      %v3709 = vand.u32 %v3708, 4294901760
      %3710 = vmatmul.mubr.f32.gmra.mrb[0].mxu0 %v3709
      %v3711 = vpop.f32.mrb[0].mxu0
      %v3712 = vadd.f32 0.0, %v3711
      %v3713 = vpop.f32.mrb[0].mxu0
      %v3714 = vadd.f32 0.0, %v3713
      %3715 = vdwg.mxu0
      %v3716 = vand.u32 %v1777, 4294901760
      %v3717 = vsub.f32 %v1777, %v3716
      %v3718 = vand.u32 %v3717, 4294901760
      %v3719 = vsub.f32 %v3717, %v3718
      %v3720 = vand.u32 %v3719, 4294901760
      %3721 = vmatprep.subr.mxu0 %v3720
      %v3722 = vand.u32 %v1776, 4294901760
      %v3723 = vsub.f32 %v1776, %v3722
      %v3724 = vand.u32 %v3723, 4294901760
      %v3725 = vsub.f32 %v3723, %v3724
      %v3726 = vand.u32 %v3725, 4294901760
      %3727 = vmatpush1.msra.mxu0 %v3726
      %v3728 = vand.u32 %v1788, 4294901760
      %v3729 = vsub.f32 %v1788, %v3728
      %v3730 = vand.u32 %v3729, 4294901760
      %v3731 = vsub.f32 %v3729, %v3730
      %v3732 = vand.u32 %v3731, 4294901760
      %3733 = vmatprep.subr.mxu0 %v3732
      %v3734 = vand.u32 %v1787, 4294901760
      %v3735 = vsub.f32 %v1787, %v3734
      %v3736 = vand.u32 %v3735, 4294901760
      %v3737 = vsub.f32 %v3735, %v3736
      %v3738 = vand.u32 %v3737, 4294901760
      %3739 = vmatpush1.msra.mxu0 %v3738
      %v3740 = vand.u32 %v1799, 4294901760
      %v3741 = vsub.f32 %v1799, %v3740
      %v3742 = vand.u32 %v3741, 4294901760
      %v3743 = vsub.f32 %v3741, %v3742
      %v3744 = vand.u32 %v3743, 4294901760
      %3745 = vmatprep.subr.mxu0 %v3744
      %v3746 = vand.u32 %v1798, 4294901760
      %v3747 = vsub.f32 %v1798, %v3746
      %v3748 = vand.u32 %v3747, 4294901760
      %v3749 = vsub.f32 %v3747, %v3748
      %v3750 = vand.u32 %v3749, 4294901760
      %3751 = vmatpush1.msra.mxu0 %v3750
      %v3752 = vand.u32 %v1810, 4294901760
      %v3753 = vsub.f32 %v1810, %v3752
      %v3754 = vand.u32 %v3753, 4294901760
      %v3755 = vsub.f32 %v3753, %v3754
      %v3756 = vand.u32 %v3755, 4294901760
      %3757 = vmatprep.subr.mxu0 %v3756
      %v3758 = vand.u32 %v1809, 4294901760
      %v3759 = vsub.f32 %v1809, %v3758
      %v3760 = vand.u32 %v3759, 4294901760
      %v3761 = vsub.f32 %v3759, %v3760
      %v3762 = vand.u32 %v3761, 4294901760
      %3763 = vmatpush1.msra.mxu0 %v3762
      %v3764 = vand.u32 %v1821, 4294901760
      %v3765 = vsub.f32 %v1821, %v3764
      %v3766 = vand.u32 %v3765, 4294901760
      %v3767 = vsub.f32 %v3765, %v3766
      %v3768 = vand.u32 %v3767, 4294901760
      %3769 = vmatprep.subr.mxu0 %v3768
      %v3770 = vand.u32 %v1820, 4294901760
      %v3771 = vsub.f32 %v1820, %v3770
      %v3772 = vand.u32 %v3771, 4294901760
      %v3773 = vsub.f32 %v3771, %v3772
      %v3774 = vand.u32 %v3773, 4294901760
      %3775 = vmatpush1.msra.mxu0 %v3774
      %v3776 = vand.u32 %v1832, 4294901760
      %v3777 = vsub.f32 %v1832, %v3776
      %v3778 = vand.u32 %v3777, 4294901760
      %v3779 = vsub.f32 %v3777, %v3778
      %v3780 = vand.u32 %v3779, 4294901760
      %3781 = vmatprep.subr.mxu0 %v3780
      %v3782 = vand.u32 %v1831, 4294901760
      %v3783 = vsub.f32 %v1831, %v3782
      %v3784 = vand.u32 %v3783, 4294901760
      %v3785 = vsub.f32 %v3783, %v3784
      %v3786 = vand.u32 %v3785, 4294901760
      %3787 = vmatpush1.msra.mxu0 %v3786
      %v3788 = vand.u32 %v1843, 4294901760
      %v3789 = vsub.f32 %v1843, %v3788
      %v3790 = vand.u32 %v3789, 4294901760
      %v3791 = vsub.f32 %v3789, %v3790
      %v3792 = vand.u32 %v3791, 4294901760
      %3793 = vmatprep.subr.mxu0 %v3792
      %v3794 = vand.u32 %v1842, 4294901760
      %v3795 = vsub.f32 %v1842, %v3794
      %v3796 = vand.u32 %v3795, 4294901760
      %v3797 = vsub.f32 %v3795, %v3796
      %v3798 = vand.u32 %v3797, 4294901760
      %3799 = vmatpush1.msra.mxu0 %v3798
      %v3800 = vand.u32 %v1854, 4294901760
      %v3801 = vsub.f32 %v1854, %v3800
      %v3802 = vand.u32 %v3801, 4294901760
      %v3803 = vsub.f32 %v3801, %v3802
      %v3804 = vand.u32 %v3803, 4294901760
      %3805 = vmatprep.subr.mxu0 %v3804
      %v3806 = vand.u32 %v1853, 4294901760
      %v3807 = vsub.f32 %v1853, %v3806
      %v3808 = vand.u32 %v3807, 4294901760
      %v3809 = vsub.f32 %v3807, %v3808
      %v3810 = vand.u32 %v3809, 4294901760
      %3811 = vmatpush1.msra.mxu0 %v3810
      %v3812 = vand.u32 %v1865, 4294901760
      %v3813 = vsub.f32 %v1865, %v3812
      %v3814 = vand.u32 %v3813, 4294901760
      %v3815 = vsub.f32 %v3813, %v3814
      %v3816 = vand.u32 %v3815, 4294901760
      %3817 = vmatprep.subr.mxu0 %v3816
      %v3818 = vand.u32 %v1864, 4294901760
      %v3819 = vsub.f32 %v1864, %v3818
      %v3820 = vand.u32 %v3819, 4294901760
      %v3821 = vsub.f32 %v3819, %v3820
      %v3822 = vand.u32 %v3821, 4294901760
      %3823 = vmatpush1.msra.mxu0 %v3822
      %v3824 = vand.u32 %v1876, 4294901760
      %v3825 = vsub.f32 %v1876, %v3824
      %v3826 = vand.u32 %v3825, 4294901760
      %v3827 = vsub.f32 %v3825, %v3826
      %v3828 = vand.u32 %v3827, 4294901760
      %3829 = vmatprep.subr.mxu0 %v3828
      %v3830 = vand.u32 %v1875, 4294901760
      %v3831 = vsub.f32 %v1875, %v3830
      %v3832 = vand.u32 %v3831, 4294901760
      %v3833 = vsub.f32 %v3831, %v3832
      %v3834 = vand.u32 %v3833, 4294901760
      %3835 = vmatpush1.msra.mxu0 %v3834
      %3836 = vmatprep.subr.mxu0 0.0
      %3837 = vmatpush1.msra.mxu0 0.0
      %3838 = vmatprep.subr.mxu0 0.0
      %3839 = vmatpush1.msra.mxu0 0.0
      %3840 = vmatprep.subr.mxu0 0.0
      %3841 = vmatpush1.msra.mxu0 0.0
      %3842 = vmatprep.subr.mxu0 0.0
      %3843 = vmatpush1.msra.mxu0 0.0
      %3844 = vmatprep.subr.mxu0 0.0
      %3845 = vmatpush1.msra.mxu0 0.0
      %3846 = vmatprep.subr.mxu0 0.0
      %3847 = vmatpush1.msra.mxu0 0.0
      %3848 = vmatprep.subr.mxu0 0.0
      %3849 = vmatpush1.msra.mxu0 0.0
      %3850 = vmatprep.subr.mxu0 0.0
      %3851 = vmatpush1.msra.mxu0 0.0
      %3852 = vmatprep.subr.mxu0 0.0
      %3853 = vmatpush1.msra.mxu0 0.0
      %3854 = vmatprep.subr.mxu0 0.0
      %3855 = vmatpush1.msra.mxu0 0.0
      %3856 = vmatprep.subr.mxu0 0.0
      %3857 = vmatpush1.msra.mxu0 0.0
      %3858 = vmatprep.subr.mxu0 0.0
      %3859 = vmatpush1.msra.mxu0 0.0
      %3860 = vmatprep.subr.mxu0 0.0
      %3861 = vmatpush1.msra.mxu0 0.0
      %3862 = vmatprep.subr.mxu0 0.0
      %3863 = vmatpush1.msra.mxu0 0.0
      %3864 = vmatprep.subr.mxu0 0.0
      %3865 = vmatpush1.msra.mxu0 0.0
      %3866 = vmatprep.subr.mxu0 0.0
      %3867 = vmatpush1.msra.mxu0 0.0
      %3868 = vmatprep.subr.mxu0 0.0
      %3869 = vmatpush1.msra.mxu0 0.0
      %3870 = vmatprep.subr.mxu0 0.0
      %3871 = vmatpush1.msra.mxu0 0.0
      %3872 = vmatprep.subr.mxu0 0.0
      %3873 = vmatpush1.msra.mxu0 0.0
      %3874 = vmatprep.subr.mxu0 0.0
      %3875 = vmatpush1.msra.mxu0 0.0
      %3876 = vmatprep.subr.mxu0 0.0
      %3877 = vmatpush1.msra.mxu0 0.0
      %3878 = vmatprep.subr.mxu0 0.0
      %3879 = vmatpush1.msra.mxu0 0.0
      %3880 = vmatprep.mubr.f32.mxu0 0.0
      %v3881 = vand.u32 %v1884, 4294901760
      %3882 = vmatmul.mubr.f32.gmra.mrb[0].mxu0 %v3881
      %v3883 = vpop.f32.mrb[0].mxu0
      %v3884 = vadd.f32 %v3679, %v3883
      %v3885 = vpop.f32.mrb[0].mxu0
      %v3886 = vadd.f32 %v3681, %v3885
      %3887 = vmatprep.mubr.f32.mxu0 0.0
      %v3888 = vand.u32 %v1887, 4294901760
      %3889 = vmatmul.mubr.f32.gmra.mrb[0].mxu0 %v3888
      %v3890 = vpop.f32.mrb[0].mxu0
      %v3891 = vadd.f32 %v3690, %v3890
      %v3892 = vpop.f32.mrb[0].mxu0
      %v3893 = vadd.f32 %v3692, %v3892
      %3894 = vmatprep.mubr.f32.mxu0 0.0
      %v3895 = vand.u32 %v1890, 4294901760
      %3896 = vmatmul.mubr.f32.gmra.mrb[0].mxu0 %v3895
      %v3897 = vpop.f32.mrb[0].mxu0
      %v3898 = vadd.f32 %v3701, %v3897
      %v3899 = vpop.f32.mrb[0].mxu0
      %v3900 = vadd.f32 %v3703, %v3899
      %3901 = vmatprep.mubr.f32.mxu0 0.0
      %v3902 = vand.u32 %v1893, 4294901760
      %3903 = vmatmul.mubr.f32.gmra.mrb[0].mxu0 %v3902
      %v3904 = vpop.f32.mrb[0].mxu0
      %v3905 = vadd.f32 %v3712, %v3904
      %v3906 = vpop.f32.mrb[0].mxu0
      %v3907 = vadd.f32 %v3714, %v3906
      %3908 = vdwg.mxu0
      %v3909 = vand.u32 %v1777, 4294901760
      %v3910 = vsub.f32 %v1777, %v3909
      %3911 = vmatprep.subr.mxu0 %v3910
      %v3912 = vand.u32 %v1776, 4294901760
      %v3913 = vsub.f32 %v1776, %v3912
      %3914 = vmatpush1.msra.mxu0 %v3913
      %v3915 = vand.u32 %v1788, 4294901760
      %v3916 = vsub.f32 %v1788, %v3915
      %3917 = vmatprep.subr.mxu0 %v3916
      %v3918 = vand.u32 %v1787, 4294901760
      %v3919 = vsub.f32 %v1787, %v3918
      %3920 = vmatpush1.msra.mxu0 %v3919
      %v3921 = vand.u32 %v1799, 4294901760
      %v3922 = vsub.f32 %v1799, %v3921
      %3923 = vmatprep.subr.mxu0 %v3922
      %v3924 = vand.u32 %v1798, 4294901760
      %v3925 = vsub.f32 %v1798, %v3924
      %3926 = vmatpush1.msra.mxu0 %v3925
      %v3927 = vand.u32 %v1810, 4294901760
      %v3928 = vsub.f32 %v1810, %v3927
      %3929 = vmatprep.subr.mxu0 %v3928
      %v3930 = vand.u32 %v1809, 4294901760
      %v3931 = vsub.f32 %v1809, %v3930
      %3932 = vmatpush1.msra.mxu0 %v3931
      %v3933 = vand.u32 %v1821, 4294901760
      %v3934 = vsub.f32 %v1821, %v3933
      %3935 = vmatprep.subr.mxu0 %v3934
      %v3936 = vand.u32 %v1820, 4294901760
      %v3937 = vsub.f32 %v1820, %v3936
      %3938 = vmatpush1.msra.mxu0 %v3937
      %v3939 = vand.u32 %v1832, 4294901760
      %v3940 = vsub.f32 %v1832, %v3939
      %3941 = vmatprep.subr.mxu0 %v3940
      %v3942 = vand.u32 %v1831, 4294901760
      %v3943 = vsub.f32 %v1831, %v3942
      %3944 = vmatpush1.msra.mxu0 %v3943
      %v3945 = vand.u32 %v1843, 4294901760
      %v3946 = vsub.f32 %v1843, %v3945
      %3947 = vmatprep.subr.mxu0 %v3946
      %v3948 = vand.u32 %v1842, 4294901760
      %v3949 = vsub.f32 %v1842, %v3948
      %3950 = vmatpush1.msra.mxu0 %v3949
      %v3951 = vand.u32 %v1854, 4294901760
      %v3952 = vsub.f32 %v1854, %v3951
      %3953 = vmatprep.subr.mxu0 %v3952
      %v3954 = vand.u32 %v1853, 4294901760
      %v3955 = vsub.f32 %v1853, %v3954
      %3956 = vmatpush1.msra.mxu0 %v3955
      %v3957 = vand.u32 %v1865, 4294901760
      %v3958 = vsub.f32 %v1865, %v3957
      %3959 = vmatprep.subr.mxu0 %v3958
      %v3960 = vand.u32 %v1864, 4294901760
      %v3961 = vsub.f32 %v1864, %v3960
      %3962 = vmatpush1.msra.mxu0 %v3961
      %v3963 = vand.u32 %v1876, 4294901760
      %v3964 = vsub.f32 %v1876, %v3963
      %3965 = vmatprep.subr.mxu0 %v3964
      %v3966 = vand.u32 %v1875, 4294901760
      %v3967 = vsub.f32 %v1875, %v3966
      %3968 = vmatpush1.msra.mxu0 %v3967
      %3969 = vmatprep.subr.mxu0 0.0
      %3970 = vmatpush1.msra.mxu0 0.0
      %3971 = vmatprep.subr.mxu0 0.0
      %3972 = vmatpush1.msra.mxu0 0.0
      %3973 = vmatprep.subr.mxu0 0.0
      %3974 = vmatpush1.msra.mxu0 0.0
      %3975 = vmatprep.subr.mxu0 0.0
      %3976 = vmatpush1.msra.mxu0 0.0
      %3977 = vmatprep.subr.mxu0 0.0
      %3978 = vmatpush1.msra.mxu0 0.0
      %3979 = vmatprep.subr.mxu0 0.0
      %3980 = vmatpush1.msra.mxu0 0.0
      %3981 = vmatprep.subr.mxu0 0.0
      %3982 = vmatpush1.msra.mxu0 0.0
      %3983 = vmatprep.subr.mxu0 0.0
      %3984 = vmatpush1.msra.mxu0 0.0
      %3985 = vmatprep.subr.mxu0 0.0
      %3986 = vmatpush1.msra.mxu0 0.0
      %3987 = vmatprep.subr.mxu0 0.0
      %3988 = vmatpush1.msra.mxu0 0.0
      %3989 = vmatprep.subr.mxu0 0.0
      %3990 = vmatpush1.msra.mxu0 0.0
      %3991 = vmatprep.subr.mxu0 0.0
      %3992 = vmatpush1.msra.mxu0 0.0
      %3993 = vmatprep.subr.mxu0 0.0
      %3994 = vmatpush1.msra.mxu0 0.0
      %3995 = vmatprep.subr.mxu0 0.0
      %3996 = vmatpush1.msra.mxu0 0.0
      %3997 = vmatprep.subr.mxu0 0.0
      %3998 = vmatpush1.msra.mxu0 0.0
      %3999 = vmatprep.subr.mxu0 0.0
      %4000 = vmatpush1.msra.mxu0 0.0
      %4001 = vmatprep.subr.mxu0 0.0
      %4002 = vmatpush1.msra.mxu0 0.0
      %4003 = vmatprep.subr.mxu0 0.0
      %4004 = vmatpush1.msra.mxu0 0.0
      %4005 = vmatprep.subr.mxu0 0.0
      %4006 = vmatpush1.msra.mxu0 0.0
      %4007 = vmatprep.subr.mxu0 0.0
      %4008 = vmatpush1.msra.mxu0 0.0
      %4009 = vmatprep.subr.mxu0 0.0
      %4010 = vmatpush1.msra.mxu0 0.0
      %4011 = vmatprep.subr.mxu0 0.0
      %4012 = vmatpush1.msra.mxu0 0.0
      %4013 = vmatprep.mubr.f32.mxu0 0.0
      %v4014 = vand.u32 %v1884, 4294901760
      %v4015 = vsub.f32 %v1884, %v4014
      %4016 = vmatmul.mubr.f32.gmra.mrb[0].mxu0 %v4015
      %v4017 = vpop.f32.mrb[0].mxu0
      %v4018 = vadd.f32 %v3884, %v4017
      %v4019 = vpop.f32.mrb[0].mxu0
      %v4020 = vadd.f32 %v3886, %v4019
      %4021 = vmatprep.mubr.f32.mxu0 0.0
      %v4022 = vand.u32 %v1887, 4294901760
      %v4023 = vsub.f32 %v1887, %v4022
      %4024 = vmatmul.mubr.f32.gmra.mrb[0].mxu0 %v4023
      %v4025 = vpop.f32.mrb[0].mxu0
      %v4026 = vadd.f32 %v3891, %v4025
      %v4027 = vpop.f32.mrb[0].mxu0
      %v4028 = vadd.f32 %v3893, %v4027
      %4029 = vmatprep.mubr.f32.mxu0 0.0
      %v4030 = vand.u32 %v1890, 4294901760
      %v4031 = vsub.f32 %v1890, %v4030
      %4032 = vmatmul.mubr.f32.gmra.mrb[0].mxu0 %v4031
      %v4033 = vpop.f32.mrb[0].mxu0
      %v4034 = vadd.f32 %v3898, %v4033
      %v4035 = vpop.f32.mrb[0].mxu0
      %v4036 = vadd.f32 %v3900, %v4035
      %4037 = vmatprep.mubr.f32.mxu0 0.0
      %v4038 = vand.u32 %v1893, 4294901760
      %v4039 = vsub.f32 %v1893, %v4038
      %4040 = vmatmul.mubr.f32.gmra.mrb[0].mxu0 %v4039
      %v4041 = vpop.f32.mrb[0].mxu0
      %v4042 = vadd.f32 %v3905, %v4041
      %v4043 = vpop.f32.mrb[0].mxu0
      %v4044 = vadd.f32 %v3907, %v4043
      %4045 = vdwg.mxu0
      %v4046 = vand.u32 %v1777, 4294901760
      %4047 = vmatprep.subr.mxu0 %v4046
      %v4048 = vand.u32 %v1776, 4294901760
      %4049 = vmatpush1.msra.mxu0 %v4048
      %v4050 = vand.u32 %v1788, 4294901760
      %4051 = vmatprep.subr.mxu0 %v4050
      %v4052 = vand.u32 %v1787, 4294901760
      %4053 = vmatpush1.msra.mxu0 %v4052
      %v4054 = vand.u32 %v1799, 4294901760
      %4055 = vmatprep.subr.mxu0 %v4054
      %v4056 = vand.u32 %v1798, 4294901760
      %4057 = vmatpush1.msra.mxu0 %v4056
      %v4058 = vand.u32 %v1810, 4294901760
      %4059 = vmatprep.subr.mxu0 %v4058
      %v4060 = vand.u32 %v1809, 4294901760
      %4061 = vmatpush1.msra.mxu0 %v4060
      %v4062 = vand.u32 %v1821, 4294901760
      %4063 = vmatprep.subr.mxu0 %v4062
      %v4064 = vand.u32 %v1820, 4294901760
      %4065 = vmatpush1.msra.mxu0 %v4064
      %v4066 = vand.u32 %v1832, 4294901760
      %4067 = vmatprep.subr.mxu0 %v4066
      %v4068 = vand.u32 %v1831, 4294901760
      %4069 = vmatpush1.msra.mxu0 %v4068
      %v4070 = vand.u32 %v1843, 4294901760
      %4071 = vmatprep.subr.mxu0 %v4070
      %v4072 = vand.u32 %v1842, 4294901760
      %4073 = vmatpush1.msra.mxu0 %v4072
      %v4074 = vand.u32 %v1854, 4294901760
      %4075 = vmatprep.subr.mxu0 %v4074
      %v4076 = vand.u32 %v1853, 4294901760
      %4077 = vmatpush1.msra.mxu0 %v4076
      %v4078 = vand.u32 %v1865, 4294901760
      %4079 = vmatprep.subr.mxu0 %v4078
      %v4080 = vand.u32 %v1864, 4294901760
      %4081 = vmatpush1.msra.mxu0 %v4080
      %v4082 = vand.u32 %v1876, 4294901760
      %4083 = vmatprep.subr.mxu0 %v4082
      %v4084 = vand.u32 %v1875, 4294901760
      %4085 = vmatpush1.msra.mxu0 %v4084
      %4086 = vmatprep.subr.mxu0 0.0
      %4087 = vmatpush1.msra.mxu0 0.0
      %4088 = vmatprep.subr.mxu0 0.0
      %4089 = vmatpush1.msra.mxu0 0.0
      %4090 = vmatprep.subr.mxu0 0.0
      %4091 = vmatpush1.msra.mxu0 0.0
      %4092 = vmatprep.subr.mxu0 0.0
      %4093 = vmatpush1.msra.mxu0 0.0
      %4094 = vmatprep.subr.mxu0 0.0
      %4095 = vmatpush1.msra.mxu0 0.0
      %4096 = vmatprep.subr.mxu0 0.0
      %4097 = vmatpush1.msra.mxu0 0.0
      %4098 = vmatprep.subr.mxu0 0.0
      %4099 = vmatpush1.msra.mxu0 0.0
      %4100 = vmatprep.subr.mxu0 0.0
      %4101 = vmatpush1.msra.mxu0 0.0
      %4102 = vmatprep.subr.mxu0 0.0
      %4103 = vmatpush1.msra.mxu0 0.0
      %4104 = vmatprep.subr.mxu0 0.0
      %4105 = vmatpush1.msra.mxu0 0.0
      %4106 = vmatprep.subr.mxu0 0.0
      %4107 = vmatpush1.msra.mxu0 0.0
      %4108 = vmatprep.subr.mxu0 0.0
      %4109 = vmatpush1.msra.mxu0 0.0
      %4110 = vmatprep.subr.mxu0 0.0
      %4111 = vmatpush1.msra.mxu0 0.0
      %4112 = vmatprep.subr.mxu0 0.0
      %4113 = vmatpush1.msra.mxu0 0.0
      %4114 = vmatprep.subr.mxu0 0.0
      %4115 = vmatpush1.msra.mxu0 0.0
      %4116 = vmatprep.subr.mxu0 0.0
      %4117 = vmatpush1.msra.mxu0 0.0
      %4118 = vmatprep.subr.mxu0 0.0
      %4119 = vmatpush1.msra.mxu0 0.0
      %4120 = vmatprep.subr.mxu0 0.0
      %4121 = vmatpush1.msra.mxu0 0.0
      %4122 = vmatprep.subr.mxu0 0.0
      %4123 = vmatpush1.msra.mxu0 0.0
      %4124 = vmatprep.subr.mxu0 0.0
      %4125 = vmatpush1.msra.mxu0 0.0
      %4126 = vmatprep.subr.mxu0 0.0
      %4127 = vmatpush1.msra.mxu0 0.0
      %4128 = vmatprep.subr.mxu0 0.0
      %4129 = vmatpush1.msra.mxu0 0.0
      %4130 = vmatprep.mubr.f32.mxu0 0.0
      %v4131 = vand.u32 %v1884, 4294901760
      %v4132 = vsub.f32 %v1884, %v4131
      %v4133 = vand.u32 %v4132, 4294901760
      %4134 = vmatmul.mubr.f32.gmra.mrb[0].mxu0 %v4133
      %v4135 = vpop.f32.mrb[0].mxu0
      %v4136 = vadd.f32 %v4018, %v4135
      %v4137 = vpop.f32.mrb[0].mxu0
      %v4138 = vadd.f32 %v4020, %v4137
      %4139 = vmatprep.mubr.f32.mxu0 0.0
      %v4140 = vand.u32 %v1887, 4294901760
      %v4141 = vsub.f32 %v1887, %v4140
      %v4142 = vand.u32 %v4141, 4294901760
      %4143 = vmatmul.mubr.f32.gmra.mrb[0].mxu0 %v4142
      %v4144 = vpop.f32.mrb[0].mxu0
      %v4145 = vadd.f32 %v4026, %v4144
      %v4146 = vpop.f32.mrb[0].mxu0
      %v4147 = vadd.f32 %v4028, %v4146
      %4148 = vmatprep.mubr.f32.mxu0 0.0
      %v4149 = vand.u32 %v1890, 4294901760
      %v4150 = vsub.f32 %v1890, %v4149
      %v4151 = vand.u32 %v4150, 4294901760
      %4152 = vmatmul.mubr.f32.gmra.mrb[0].mxu0 %v4151
      %v4153 = vpop.f32.mrb[0].mxu0
      %v4154 = vadd.f32 %v4034, %v4153
      %v4155 = vpop.f32.mrb[0].mxu0
      %v4156 = vadd.f32 %v4036, %v4155
      %4157 = vmatprep.mubr.f32.mxu0 0.0
      %v4158 = vand.u32 %v1893, 4294901760
      %v4159 = vsub.f32 %v1893, %v4158
      %v4160 = vand.u32 %v4159, 4294901760
      %4161 = vmatmul.mubr.f32.gmra.mrb[0].mxu0 %v4160
      %v4162 = vpop.f32.mrb[0].mxu0
      %v4163 = vadd.f32 %v4042, %v4162
      %v4164 = vpop.f32.mrb[0].mxu0
      %v4165 = vadd.f32 %v4044, %v4164
      %4166 = vdwg.mxu0
      %v4167 = vand.u32 %v1777, 4294901760
      %v4168 = vsub.f32 %v1777, %v4167
      %v4169 = vand.u32 %v4168, 4294901760
      %4170 = vmatprep.subr.mxu0 %v4169
      %v4171 = vand.u32 %v1776, 4294901760
      %v4172 = vsub.f32 %v1776, %v4171
      %v4173 = vand.u32 %v4172, 4294901760
      %4174 = vmatpush1.msra.mxu0 %v4173
      %v4175 = vand.u32 %v1788, 4294901760
      %v4176 = vsub.f32 %v1788, %v4175
      %v4177 = vand.u32 %v4176, 4294901760
      %4178 = vmatprep.subr.mxu0 %v4177
      %v4179 = vand.u32 %v1787, 4294901760
      %v4180 = vsub.f32 %v1787, %v4179
      %v4181 = vand.u32 %v4180, 4294901760
      %4182 = vmatpush1.msra.mxu0 %v4181
      %v4183 = vand.u32 %v1799, 4294901760
      %v4184 = vsub.f32 %v1799, %v4183
      %v4185 = vand.u32 %v4184, 4294901760
      %4186 = vmatprep.subr.mxu0 %v4185
      %v4187 = vand.u32 %v1798, 4294901760
      %v4188 = vsub.f32 %v1798, %v4187
      %v4189 = vand.u32 %v4188, 4294901760
      %4190 = vmatpush1.msra.mxu0 %v4189
      %v4191 = vand.u32 %v1810, 4294901760
      %v4192 = vsub.f32 %v1810, %v4191
      %v4193 = vand.u32 %v4192, 4294901760
      %4194 = vmatprep.subr.mxu0 %v4193
      %v4195 = vand.u32 %v1809, 4294901760
      %v4196 = vsub.f32 %v1809, %v4195
      %v4197 = vand.u32 %v4196, 4294901760
      %4198 = vmatpush1.msra.mxu0 %v4197
      %v4199 = vand.u32 %v1821, 4294901760
      %v4200 = vsub.f32 %v1821, %v4199
      %v4201 = vand.u32 %v4200, 4294901760
      %4202 = vmatprep.subr.mxu0 %v4201
      %v4203 = vand.u32 %v1820, 4294901760
      %v4204 = vsub.f32 %v1820, %v4203
      %v4205 = vand.u32 %v4204, 4294901760
      %4206 = vmatpush1.msra.mxu0 %v4205
      %v4207 = vand.u32 %v1832, 4294901760
      %v4208 = vsub.f32 %v1832, %v4207
      %v4209 = vand.u32 %v4208, 4294901760
      %4210 = vmatprep.subr.mxu0 %v4209
      %v4211 = vand.u32 %v1831, 4294901760
      %v4212 = vsub.f32 %v1831, %v4211
      %v4213 = vand.u32 %v4212, 4294901760
      %4214 = vmatpush1.msra.mxu0 %v4213
      %v4215 = vand.u32 %v1843, 4294901760
      %v4216 = vsub.f32 %v1843, %v4215
      %v4217 = vand.u32 %v4216, 4294901760
      %4218 = vmatprep.subr.mxu0 %v4217
      %v4219 = vand.u32 %v1842, 4294901760
      %v4220 = vsub.f32 %v1842, %v4219
      %v4221 = vand.u32 %v4220, 4294901760
      %4222 = vmatpush1.msra.mxu0 %v4221
      %v4223 = vand.u32 %v1854, 4294901760
      %v4224 = vsub.f32 %v1854, %v4223
      %v4225 = vand.u32 %v4224, 4294901760
      %4226 = vmatprep.subr.mxu0 %v4225
      %v4227 = vand.u32 %v1853, 4294901760
      %v4228 = vsub.f32 %v1853, %v4227
      %v4229 = vand.u32 %v4228, 4294901760
      %4230 = vmatpush1.msra.mxu0 %v4229
      %v4231 = vand.u32 %v1865, 4294901760
      %v4232 = vsub.f32 %v1865, %v4231
      %v4233 = vand.u32 %v4232, 4294901760
      %4234 = vmatprep.subr.mxu0 %v4233
      %v4235 = vand.u32 %v1864, 4294901760
      %v4236 = vsub.f32 %v1864, %v4235
      %v4237 = vand.u32 %v4236, 4294901760
      %4238 = vmatpush1.msra.mxu0 %v4237
      %v4239 = vand.u32 %v1876, 4294901760
      %v4240 = vsub.f32 %v1876, %v4239
      %v4241 = vand.u32 %v4240, 4294901760
      %4242 = vmatprep.subr.mxu0 %v4241
      %v4243 = vand.u32 %v1875, 4294901760
      %v4244 = vsub.f32 %v1875, %v4243
      %v4245 = vand.u32 %v4244, 4294901760
      %4246 = vmatpush1.msra.mxu0 %v4245
      %4247 = vmatprep.subr.mxu0 0.0
      %4248 = vmatpush1.msra.mxu0 0.0
      %4249 = vmatprep.subr.mxu0 0.0
      %4250 = vmatpush1.msra.mxu0 0.0
      %4251 = vmatprep.subr.mxu0 0.0
      %4252 = vmatpush1.msra.mxu0 0.0
      %4253 = vmatprep.subr.mxu0 0.0
      %4254 = vmatpush1.msra.mxu0 0.0
      %4255 = vmatprep.subr.mxu0 0.0
      %4256 = vmatpush1.msra.mxu0 0.0
      %4257 = vmatprep.subr.mxu0 0.0
      %4258 = vmatpush1.msra.mxu0 0.0
      %4259 = vmatprep.subr.mxu0 0.0
      %4260 = vmatpush1.msra.mxu0 0.0
      %4261 = vmatprep.subr.mxu0 0.0
      %4262 = vmatpush1.msra.mxu0 0.0
      %4263 = vmatprep.subr.mxu0 0.0
      %4264 = vmatpush1.msra.mxu0 0.0
      %4265 = vmatprep.subr.mxu0 0.0
      %4266 = vmatpush1.msra.mxu0 0.0
      %4267 = vmatprep.subr.mxu0 0.0
      %4268 = vmatpush1.msra.mxu0 0.0
      %4269 = vmatprep.subr.mxu0 0.0
      %4270 = vmatpush1.msra.mxu0 0.0
      %4271 = vmatprep.subr.mxu0 0.0
      %4272 = vmatpush1.msra.mxu0 0.0
      %4273 = vmatprep.subr.mxu0 0.0
      %4274 = vmatpush1.msra.mxu0 0.0
      %4275 = vmatprep.subr.mxu0 0.0
      %4276 = vmatpush1.msra.mxu0 0.0
      %4277 = vmatprep.subr.mxu0 0.0
      %4278 = vmatpush1.msra.mxu0 0.0
      %4279 = vmatprep.subr.mxu0 0.0
      %4280 = vmatpush1.msra.mxu0 0.0
      %4281 = vmatprep.subr.mxu0 0.0
      %4282 = vmatpush1.msra.mxu0 0.0
      %4283 = vmatprep.subr.mxu0 0.0
      %4284 = vmatpush1.msra.mxu0 0.0
      %4285 = vmatprep.subr.mxu0 0.0
      %4286 = vmatpush1.msra.mxu0 0.0
      %4287 = vmatprep.subr.mxu0 0.0
      %4288 = vmatpush1.msra.mxu0 0.0
      %4289 = vmatprep.subr.mxu0 0.0
      %4290 = vmatpush1.msra.mxu0 0.0
      %4291 = vmatprep.mubr.f32.mxu0 0.0
      %v4292 = vand.u32 %v1884, 4294901760
      %4293 = vmatmul.mubr.f32.gmra.mrb[0].mxu0 %v4292
      %v4294 = vpop.f32.mrb[0].mxu0
      %v4295 = vadd.f32 %v4136, %v4294
      %v4296 = vpop.f32.mrb[0].mxu0
      %v4297 = vadd.f32 %v4138, %v4296
      %4298 = vmatprep.mubr.f32.mxu0 0.0
      %v4299 = vand.u32 %v1887, 4294901760
      %4300 = vmatmul.mubr.f32.gmra.mrb[0].mxu0 %v4299
      %v4301 = vpop.f32.mrb[0].mxu0
      %v4302 = vadd.f32 %v4145, %v4301
      %v4303 = vpop.f32.mrb[0].mxu0
      %v4304 = vadd.f32 %v4147, %v4303
      %4305 = vmatprep.mubr.f32.mxu0 0.0
      %v4306 = vand.u32 %v1890, 4294901760
      %4307 = vmatmul.mubr.f32.gmra.mrb[0].mxu0 %v4306
      %v4308 = vpop.f32.mrb[0].mxu0
      %v4309 = vadd.f32 %v4154, %v4308
      %v4310 = vpop.f32.mrb[0].mxu0
      %v4311 = vadd.f32 %v4156, %v4310
      %4312 = vmatprep.mubr.f32.mxu0 0.0
      %v4313 = vand.u32 %v1893, 4294901760
      %4314 = vmatmul.mubr.f32.gmra.mrb[0].mxu0 %v4313
      %v4315 = vpop.f32.mrb[0].mxu0
      %v4316 = vadd.f32 %v4163, %v4315
      %v4317 = vpop.f32.mrb[0].mxu0
      %v4318 = vadd.f32 %v4165, %v4317
      %4319 = vdwg.mxu0
      %v4320 = vand.u32 %v1777, 4294901760
      %4321 = vmatprep.subr.mxu0 %v4320
      %v4322 = vand.u32 %v1776, 4294901760
      %4323 = vmatpush1.msra.mxu0 %v4322
      %v4324 = vand.u32 %v1788, 4294901760
      %4325 = vmatprep.subr.mxu0 %v4324
      %v4326 = vand.u32 %v1787, 4294901760
      %4327 = vmatpush1.msra.mxu0 %v4326
      %v4328 = vand.u32 %v1799, 4294901760
      %4329 = vmatprep.subr.mxu0 %v4328
      %v4330 = vand.u32 %v1798, 4294901760
      %4331 = vmatpush1.msra.mxu0 %v4330
      %v4332 = vand.u32 %v1810, 4294901760
      %4333 = vmatprep.subr.mxu0 %v4332
      %v4334 = vand.u32 %v1809, 4294901760
      %4335 = vmatpush1.msra.mxu0 %v4334
      %v4336 = vand.u32 %v1821, 4294901760
      %4337 = vmatprep.subr.mxu0 %v4336
      %v4338 = vand.u32 %v1820, 4294901760
      %4339 = vmatpush1.msra.mxu0 %v4338
      %v4340 = vand.u32 %v1832, 4294901760
      %4341 = vmatprep.subr.mxu0 %v4340
      %v4342 = vand.u32 %v1831, 4294901760
      %4343 = vmatpush1.msra.mxu0 %v4342
      %v4344 = vand.u32 %v1843, 4294901760
      %4345 = vmatprep.subr.mxu0 %v4344
      %v4346 = vand.u32 %v1842, 4294901760
      %4347 = vmatpush1.msra.mxu0 %v4346
      %v4348 = vand.u32 %v1854, 4294901760
      %4349 = vmatprep.subr.mxu0 %v4348
      %v4350 = vand.u32 %v1853, 4294901760
      %4351 = vmatpush1.msra.mxu0 %v4350
      %v4352 = vand.u32 %v1865, 4294901760
      %4353 = vmatprep.subr.mxu0 %v4352
      %v4354 = vand.u32 %v1864, 4294901760
      %4355 = vmatpush1.msra.mxu0 %v4354
      %v4356 = vand.u32 %v1876, 4294901760
      %4357 = vmatprep.subr.mxu0 %v4356
      %v4358 = vand.u32 %v1875, 4294901760
      %4359 = vmatpush1.msra.mxu0 %v4358
      %4360 = vmatprep.subr.mxu0 0.0
      %4361 = vmatpush1.msra.mxu0 0.0
      %4362 = vmatprep.subr.mxu0 0.0
      %4363 = vmatpush1.msra.mxu0 0.0
      %4364 = vmatprep.subr.mxu0 0.0
      %4365 = vmatpush1.msra.mxu0 0.0
      %4366 = vmatprep.subr.mxu0 0.0
      %4367 = vmatpush1.msra.mxu0 0.0
      %4368 = vmatprep.subr.mxu0 0.0
      %4369 = vmatpush1.msra.mxu0 0.0
      %4370 = vmatprep.subr.mxu0 0.0
      %4371 = vmatpush1.msra.mxu0 0.0
      %4372 = vmatprep.subr.mxu0 0.0
      %4373 = vmatpush1.msra.mxu0 0.0
      %4374 = vmatprep.subr.mxu0 0.0
      %4375 = vmatpush1.msra.mxu0 0.0
      %4376 = vmatprep.subr.mxu0 0.0
      %4377 = vmatpush1.msra.mxu0 0.0
      %4378 = vmatprep.subr.mxu0 0.0
      %4379 = vmatpush1.msra.mxu0 0.0
      %4380 = vmatprep.subr.mxu0 0.0
      %4381 = vmatpush1.msra.mxu0 0.0
      %4382 = vmatprep.subr.mxu0 0.0
      %4383 = vmatpush1.msra.mxu0 0.0
      %4384 = vmatprep.subr.mxu0 0.0
      %4385 = vmatpush1.msra.mxu0 0.0
      %4386 = vmatprep.subr.mxu0 0.0
      %4387 = vmatpush1.msra.mxu0 0.0
      %4388 = vmatprep.subr.mxu0 0.0
      %4389 = vmatpush1.msra.mxu0 0.0
      %4390 = vmatprep.subr.mxu0 0.0
      %4391 = vmatpush1.msra.mxu0 0.0
      %4392 = vmatprep.subr.mxu0 0.0
      %4393 = vmatpush1.msra.mxu0 0.0
      %4394 = vmatprep.subr.mxu0 0.0
      %4395 = vmatpush1.msra.mxu0 0.0
      %4396 = vmatprep.subr.mxu0 0.0
      %4397 = vmatpush1.msra.mxu0 0.0
      %4398 = vmatprep.subr.mxu0 0.0
      %4399 = vmatpush1.msra.mxu0 0.0
      %4400 = vmatprep.subr.mxu0 0.0
      %4401 = vmatpush1.msra.mxu0 0.0
      %4402 = vmatprep.subr.mxu0 0.0
      %4403 = vmatpush1.msra.mxu0 0.0
      %4404 = vmatprep.mubr.f32.mxu0 0.0
      %v4405 = vand.u32 %v1884, 4294901760
      %4406 = vmatmul.mubr.f32.gmra.mrb[0].mxu0 %v4405
      %v4407 = vpop.f32.mrb[0].mxu0
      %v4408 = vadd.f32 %v4295, %v4407
      %v4409 = vpop.f32.mrb[0].mxu0
      %v4410 = vadd.f32 %v4297, %v4409
      %4411 = vmatprep.mubr.f32.mxu0 0.0
      %v4412 = vand.u32 %v1887, 4294901760
      %4413 = vmatmul.mubr.f32.gmra.mrb[0].mxu0 %v4412
      %v4414 = vpop.f32.mrb[0].mxu0
      %v4415 = vadd.f32 %v4302, %v4414
      %v4416 = vpop.f32.mrb[0].mxu0
      %v4417 = vadd.f32 %v4304, %v4416
      %4418 = vmatprep.mubr.f32.mxu0 0.0
      %v4419 = vand.u32 %v1890, 4294901760
      %4420 = vmatmul.mubr.f32.gmra.mrb[0].mxu0 %v4419
      %v4421 = vpop.f32.mrb[0].mxu0
      %v4422 = vadd.f32 %v4309, %v4421
      %v4423 = vpop.f32.mrb[0].mxu0
      %v4424 = vadd.f32 %v4311, %v4423
      %4425 = vmatprep.mubr.f32.mxu0 0.0
      %v4426 = vand.u32 %v1893, 4294901760
      %4427 = vmatmul.mubr.f32.gmra.mrb[0].mxu0 %v4426
      %v4428 = vpop.f32.mrb[0].mxu0
      %v4429 = vadd.f32 %v4316, %v4428
      %v4430 = vpop.f32.mrb[0].mxu0
      %v4431 = vadd.f32 %v4318, %v4430
      %4432 = vdwg.mxu0
      %v4433 = vand.u32 %v1779, 4294901760
      %4434 = vmatprep.subr.mxu0 %v4433
      %v4435 = vand.u32 %v1778, 4294901760
      %4436 = vmatpush1.msra.mxu0 %v4435
      %v4437 = vand.u32 %v1790, 4294901760
      %4438 = vmatprep.subr.mxu0 %v4437
      %v4439 = vand.u32 %v1789, 4294901760
      %4440 = vmatpush1.msra.mxu0 %v4439
      %v4441 = vand.u32 %v1801, 4294901760
      %4442 = vmatprep.subr.mxu0 %v4441
      %v4443 = vand.u32 %v1800, 4294901760
      %4444 = vmatpush1.msra.mxu0 %v4443
      %v4445 = vand.u32 %v1812, 4294901760
      %4446 = vmatprep.subr.mxu0 %v4445
      %v4447 = vand.u32 %v1811, 4294901760
      %4448 = vmatpush1.msra.mxu0 %v4447
      %v4449 = vand.u32 %v1823, 4294901760
      %4450 = vmatprep.subr.mxu0 %v4449
      %v4451 = vand.u32 %v1822, 4294901760
      %4452 = vmatpush1.msra.mxu0 %v4451
      %v4453 = vand.u32 %v1834, 4294901760
      %4454 = vmatprep.subr.mxu0 %v4453
      %v4455 = vand.u32 %v1833, 4294901760
      %4456 = vmatpush1.msra.mxu0 %v4455
      %v4457 = vand.u32 %v1845, 4294901760
      %4458 = vmatprep.subr.mxu0 %v4457
      %v4459 = vand.u32 %v1844, 4294901760
      %4460 = vmatpush1.msra.mxu0 %v4459
      %v4461 = vand.u32 %v1856, 4294901760
      %4462 = vmatprep.subr.mxu0 %v4461
      %v4463 = vand.u32 %v1855, 4294901760
      %4464 = vmatpush1.msra.mxu0 %v4463
      %v4465 = vand.u32 %v1867, 4294901760
      %4466 = vmatprep.subr.mxu0 %v4465
      %v4467 = vand.u32 %v1866, 4294901760
      %4468 = vmatpush1.msra.mxu0 %v4467
      %v4469 = vand.u32 %v1878, 4294901760
      %4470 = vmatprep.subr.mxu0 %v4469
      %v4471 = vand.u32 %v1877, 4294901760
      %4472 = vmatpush1.msra.mxu0 %v4471
      %4473 = vmatprep.subr.mxu0 0.0
      %4474 = vmatpush1.msra.mxu0 0.0
      %4475 = vmatprep.subr.mxu0 0.0
      %4476 = vmatpush1.msra.mxu0 0.0
      %4477 = vmatprep.subr.mxu0 0.0
      %4478 = vmatpush1.msra.mxu0 0.0
      %4479 = vmatprep.subr.mxu0 0.0
      %4480 = vmatpush1.msra.mxu0 0.0
      %4481 = vmatprep.subr.mxu0 0.0
      %4482 = vmatpush1.msra.mxu0 0.0
      %4483 = vmatprep.subr.mxu0 0.0
      %4484 = vmatpush1.msra.mxu0 0.0
      %4485 = vmatprep.subr.mxu0 0.0
      %4486 = vmatpush1.msra.mxu0 0.0
      %4487 = vmatprep.subr.mxu0 0.0
      %4488 = vmatpush1.msra.mxu0 0.0
      %4489 = vmatprep.subr.mxu0 0.0
      %4490 = vmatpush1.msra.mxu0 0.0
      %4491 = vmatprep.subr.mxu0 0.0
      %4492 = vmatpush1.msra.mxu0 0.0
      %4493 = vmatprep.subr.mxu0 0.0
      %4494 = vmatpush1.msra.mxu0 0.0
      %4495 = vmatprep.subr.mxu0 0.0
      %4496 = vmatpush1.msra.mxu0 0.0
      %4497 = vmatprep.subr.mxu0 0.0
      %4498 = vmatpush1.msra.mxu0 0.0
      %4499 = vmatprep.subr.mxu0 0.0
      %4500 = vmatpush1.msra.mxu0 0.0
      %4501 = vmatprep.subr.mxu0 0.0
      %4502 = vmatpush1.msra.mxu0 0.0
      %4503 = vmatprep.subr.mxu0 0.0
      %4504 = vmatpush1.msra.mxu0 0.0
      %4505 = vmatprep.subr.mxu0 0.0
      %4506 = vmatpush1.msra.mxu0 0.0
      %4507 = vmatprep.subr.mxu0 0.0
      %4508 = vmatpush1.msra.mxu0 0.0
      %4509 = vmatprep.subr.mxu0 0.0
      %4510 = vmatpush1.msra.mxu0 0.0
      %4511 = vmatprep.subr.mxu0 0.0
      %4512 = vmatpush1.msra.mxu0 0.0
      %4513 = vmatprep.subr.mxu0 0.0
      %4514 = vmatpush1.msra.mxu0 0.0
      %4515 = vmatprep.subr.mxu0 0.0
      %4516 = vmatpush1.msra.mxu0 0.0
      %4517 = vmatprep.mubr.f32.mxu0 0.0
      %v4518 = vand.u32 %v1884, 4294901760
      %v4519 = vsub.f32 %v1884, %v4518
      %v4520 = vand.u32 %v4519, 4294901760
      %v4521 = vsub.f32 %v4519, %v4520
      %v4522 = vand.u32 %v4521, 4294901760
      %4523 = vmatmul.mubr.f32.gmra.mrb[0].mxu0 %v4522
      %v4524 = vpop.f32.mrb[0].mxu0
      %v4525 = vadd.f32 0.0, %v4524
      %v4526 = vpop.f32.mrb[0].mxu0
      %v4527 = vadd.f32 0.0, %v4526
      %4528 = vmatprep.mubr.f32.mxu0 0.0
      %v4529 = vand.u32 %v1887, 4294901760
      %v4530 = vsub.f32 %v1887, %v4529
      %v4531 = vand.u32 %v4530, 4294901760
      %v4532 = vsub.f32 %v4530, %v4531
      %v4533 = vand.u32 %v4532, 4294901760
      %4534 = vmatmul.mubr.f32.gmra.mrb[0].mxu0 %v4533
      %v4535 = vpop.f32.mrb[0].mxu0
      %v4536 = vadd.f32 0.0, %v4535
      %v4537 = vpop.f32.mrb[0].mxu0
      %v4538 = vadd.f32 0.0, %v4537
      %4539 = vmatprep.mubr.f32.mxu0 0.0
      %v4540 = vand.u32 %v1890, 4294901760
      %v4541 = vsub.f32 %v1890, %v4540
      %v4542 = vand.u32 %v4541, 4294901760
      %v4543 = vsub.f32 %v4541, %v4542
      %v4544 = vand.u32 %v4543, 4294901760
      %4545 = vmatmul.mubr.f32.gmra.mrb[0].mxu0 %v4544
      %v4546 = vpop.f32.mrb[0].mxu0
      %v4547 = vadd.f32 0.0, %v4546
      %v4548 = vpop.f32.mrb[0].mxu0
      %v4549 = vadd.f32 0.0, %v4548
      %4550 = vmatprep.mubr.f32.mxu0 0.0
      %v4551 = vand.u32 %v1893, 4294901760
      %v4552 = vsub.f32 %v1893, %v4551
      %v4553 = vand.u32 %v4552, 4294901760
      %v4554 = vsub.f32 %v4552, %v4553
      %v4555 = vand.u32 %v4554, 4294901760
      %4556 = vmatmul.mubr.f32.gmra.mrb[0].mxu0 %v4555
      %v4557 = vpop.f32.mrb[0].mxu0
      %v4558 = vadd.f32 0.0, %v4557
      %v4559 = vpop.f32.mrb[0].mxu0
      %v4560 = vadd.f32 0.0, %v4559
      %4561 = vdwg.mxu0
      %v4562 = vand.u32 %v1779, 4294901760
      %v4563 = vsub.f32 %v1779, %v4562
      %v4564 = vand.u32 %v4563, 4294901760
      %v4565 = vsub.f32 %v4563, %v4564
      %v4566 = vand.u32 %v4565, 4294901760
      %4567 = vmatprep.subr.mxu0 %v4566
      %v4568 = vand.u32 %v1778, 4294901760
      %v4569 = vsub.f32 %v1778, %v4568
      %v4570 = vand.u32 %v4569, 4294901760
      %v4571 = vsub.f32 %v4569, %v4570
      %v4572 = vand.u32 %v4571, 4294901760
      %4573 = vmatpush1.msra.mxu0 %v4572
      %v4574 = vand.u32 %v1790, 4294901760
      %v4575 = vsub.f32 %v1790, %v4574
      %v4576 = vand.u32 %v4575, 4294901760
      %v4577 = vsub.f32 %v4575, %v4576
      %v4578 = vand.u32 %v4577, 4294901760
      %4579 = vmatprep.subr.mxu0 %v4578
      %v4580 = vand.u32 %v1789, 4294901760
      %v4581 = vsub.f32 %v1789, %v4580
      %v4582 = vand.u32 %v4581, 4294901760
      %v4583 = vsub.f32 %v4581, %v4582
      %v4584 = vand.u32 %v4583, 4294901760
      %4585 = vmatpush1.msra.mxu0 %v4584
      %v4586 = vand.u32 %v1801, 4294901760
      %v4587 = vsub.f32 %v1801, %v4586
      %v4588 = vand.u32 %v4587, 4294901760
      %v4589 = vsub.f32 %v4587, %v4588
      %v4590 = vand.u32 %v4589, 4294901760
      %4591 = vmatprep.subr.mxu0 %v4590
      %v4592 = vand.u32 %v1800, 4294901760
      %v4593 = vsub.f32 %v1800, %v4592
      %v4594 = vand.u32 %v4593, 4294901760
      %v4595 = vsub.f32 %v4593, %v4594
      %v4596 = vand.u32 %v4595, 4294901760
      %4597 = vmatpush1.msra.mxu0 %v4596
      %v4598 = vand.u32 %v1812, 4294901760
      %v4599 = vsub.f32 %v1812, %v4598
      %v4600 = vand.u32 %v4599, 4294901760
      %v4601 = vsub.f32 %v4599, %v4600
      %v4602 = vand.u32 %v4601, 4294901760
      %4603 = vmatprep.subr.mxu0 %v4602
      %v4604 = vand.u32 %v1811, 4294901760
      %v4605 = vsub.f32 %v1811, %v4604
      %v4606 = vand.u32 %v4605, 4294901760
      %v4607 = vsub.f32 %v4605, %v4606
      %v4608 = vand.u32 %v4607, 4294901760
      %4609 = vmatpush1.msra.mxu0 %v4608
      %v4610 = vand.u32 %v1823, 4294901760
      %v4611 = vsub.f32 %v1823, %v4610
      %v4612 = vand.u32 %v4611, 4294901760
      %v4613 = vsub.f32 %v4611, %v4612
      %v4614 = vand.u32 %v4613, 4294901760
      %4615 = vmatprep.subr.mxu0 %v4614
      %v4616 = vand.u32 %v1822, 4294901760
      %v4617 = vsub.f32 %v1822, %v4616
      %v4618 = vand.u32 %v4617, 4294901760
      %v4619 = vsub.f32 %v4617, %v4618
      %v4620 = vand.u32 %v4619, 4294901760
      %4621 = vmatpush1.msra.mxu0 %v4620
      %v4622 = vand.u32 %v1834, 4294901760
      %v4623 = vsub.f32 %v1834, %v4622
      %v4624 = vand.u32 %v4623, 4294901760
      %v4625 = vsub.f32 %v4623, %v4624
      %v4626 = vand.u32 %v4625, 4294901760
      %4627 = vmatprep.subr.mxu0 %v4626
      %v4628 = vand.u32 %v1833, 4294901760
      %v4629 = vsub.f32 %v1833, %v4628
      %v4630 = vand.u32 %v4629, 4294901760
      %v4631 = vsub.f32 %v4629, %v4630
      %v4632 = vand.u32 %v4631, 4294901760
      %4633 = vmatpush1.msra.mxu0 %v4632
      %v4634 = vand.u32 %v1845, 4294901760
      %v4635 = vsub.f32 %v1845, %v4634
      %v4636 = vand.u32 %v4635, 4294901760
      %v4637 = vsub.f32 %v4635, %v4636
      %v4638 = vand.u32 %v4637, 4294901760
      %4639 = vmatprep.subr.mxu0 %v4638
      %v4640 = vand.u32 %v1844, 4294901760
      %v4641 = vsub.f32 %v1844, %v4640
      %v4642 = vand.u32 %v4641, 4294901760
      %v4643 = vsub.f32 %v4641, %v4642
      %v4644 = vand.u32 %v4643, 4294901760
      %4645 = vmatpush1.msra.mxu0 %v4644
      %v4646 = vand.u32 %v1856, 4294901760
      %v4647 = vsub.f32 %v1856, %v4646
      %v4648 = vand.u32 %v4647, 4294901760
      %v4649 = vsub.f32 %v4647, %v4648
      %v4650 = vand.u32 %v4649, 4294901760
      %4651 = vmatprep.subr.mxu0 %v4650
      %v4652 = vand.u32 %v1855, 4294901760
      %v4653 = vsub.f32 %v1855, %v4652
      %v4654 = vand.u32 %v4653, 4294901760
      %v4655 = vsub.f32 %v4653, %v4654
      %v4656 = vand.u32 %v4655, 4294901760
      %4657 = vmatpush1.msra.mxu0 %v4656
      %v4658 = vand.u32 %v1867, 4294901760
      %v4659 = vsub.f32 %v1867, %v4658
      %v4660 = vand.u32 %v4659, 4294901760
      %v4661 = vsub.f32 %v4659, %v4660
      %v4662 = vand.u32 %v4661, 4294901760
      %4663 = vmatprep.subr.mxu0 %v4662
      %v4664 = vand.u32 %v1866, 4294901760
      %v4665 = vsub.f32 %v1866, %v4664
      %v4666 = vand.u32 %v4665, 4294901760
      %v4667 = vsub.f32 %v4665, %v4666
      %v4668 = vand.u32 %v4667, 4294901760
      %4669 = vmatpush1.msra.mxu0 %v4668
      %v4670 = vand.u32 %v1878, 4294901760
      %v4671 = vsub.f32 %v1878, %v4670
      %v4672 = vand.u32 %v4671, 4294901760
      %v4673 = vsub.f32 %v4671, %v4672
      %v4674 = vand.u32 %v4673, 4294901760
      %4675 = vmatprep.subr.mxu0 %v4674
      %v4676 = vand.u32 %v1877, 4294901760
      %v4677 = vsub.f32 %v1877, %v4676
      %v4678 = vand.u32 %v4677, 4294901760
      %v4679 = vsub.f32 %v4677, %v4678
      %v4680 = vand.u32 %v4679, 4294901760
      %4681 = vmatpush1.msra.mxu0 %v4680
      %4682 = vmatprep.subr.mxu0 0.0
      %4683 = vmatpush1.msra.mxu0 0.0
      %4684 = vmatprep.subr.mxu0 0.0
      %4685 = vmatpush1.msra.mxu0 0.0
      %4686 = vmatprep.subr.mxu0 0.0
      %4687 = vmatpush1.msra.mxu0 0.0
      %4688 = vmatprep.subr.mxu0 0.0
      %4689 = vmatpush1.msra.mxu0 0.0
      %4690 = vmatprep.subr.mxu0 0.0
      %4691 = vmatpush1.msra.mxu0 0.0
      %4692 = vmatprep.subr.mxu0 0.0
      %4693 = vmatpush1.msra.mxu0 0.0
      %4694 = vmatprep.subr.mxu0 0.0
      %4695 = vmatpush1.msra.mxu0 0.0
      %4696 = vmatprep.subr.mxu0 0.0
      %4697 = vmatpush1.msra.mxu0 0.0
      %4698 = vmatprep.subr.mxu0 0.0
      %4699 = vmatpush1.msra.mxu0 0.0
      %4700 = vmatprep.subr.mxu0 0.0
      %4701 = vmatpush1.msra.mxu0 0.0
      %4702 = vmatprep.subr.mxu0 0.0
      %4703 = vmatpush1.msra.mxu0 0.0
      %4704 = vmatprep.subr.mxu0 0.0
      %4705 = vmatpush1.msra.mxu0 0.0
      %4706 = vmatprep.subr.mxu0 0.0
      %4707 = vmatpush1.msra.mxu0 0.0
      %4708 = vmatprep.subr.mxu0 0.0
      %4709 = vmatpush1.msra.mxu0 0.0
      %4710 = vmatprep.subr.mxu0 0.0
      %4711 = vmatpush1.msra.mxu0 0.0
      %4712 = vmatprep.subr.mxu0 0.0
      %4713 = vmatpush1.msra.mxu0 0.0
      %4714 = vmatprep.subr.mxu0 0.0
      %4715 = vmatpush1.msra.mxu0 0.0
      %4716 = vmatprep.subr.mxu0 0.0
      %4717 = vmatpush1.msra.mxu0 0.0
      %4718 = vmatprep.subr.mxu0 0.0
      %4719 = vmatpush1.msra.mxu0 0.0
      %4720 = vmatprep.subr.mxu0 0.0
      %4721 = vmatpush1.msra.mxu0 0.0
      %4722 = vmatprep.subr.mxu0 0.0
      %4723 = vmatpush1.msra.mxu0 0.0
      %4724 = vmatprep.subr.mxu0 0.0
      %4725 = vmatpush1.msra.mxu0 0.0
      %4726 = vmatprep.mubr.f32.mxu0 0.0
      %v4727 = vand.u32 %v1884, 4294901760
      %4728 = vmatmul.mubr.f32.gmra.mrb[0].mxu0 %v4727
      %v4729 = vpop.f32.mrb[0].mxu0
      %v4730 = vadd.f32 %v4525, %v4729
      %v4731 = vpop.f32.mrb[0].mxu0
      %v4732 = vadd.f32 %v4527, %v4731
      %4733 = vmatprep.mubr.f32.mxu0 0.0
      %v4734 = vand.u32 %v1887, 4294901760
      %4735 = vmatmul.mubr.f32.gmra.mrb[0].mxu0 %v4734
      %v4736 = vpop.f32.mrb[0].mxu0
      %v4737 = vadd.f32 %v4536, %v4736
      %v4738 = vpop.f32.mrb[0].mxu0
      %v4739 = vadd.f32 %v4538, %v4738
      %4740 = vmatprep.mubr.f32.mxu0 0.0
      %v4741 = vand.u32 %v1890, 4294901760
      %4742 = vmatmul.mubr.f32.gmra.mrb[0].mxu0 %v4741
      %v4743 = vpop.f32.mrb[0].mxu0
      %v4744 = vadd.f32 %v4547, %v4743
      %v4745 = vpop.f32.mrb[0].mxu0
      %v4746 = vadd.f32 %v4549, %v4745
      %4747 = vmatprep.mubr.f32.mxu0 0.0
      %v4748 = vand.u32 %v1893, 4294901760
      %4749 = vmatmul.mubr.f32.gmra.mrb[0].mxu0 %v4748
      %v4750 = vpop.f32.mrb[0].mxu0
      %v4751 = vadd.f32 %v4558, %v4750
      %v4752 = vpop.f32.mrb[0].mxu0
      %v4753 = vadd.f32 %v4560, %v4752
      %4754 = vdwg.mxu0
      %v4755 = vand.u32 %v1779, 4294901760
      %v4756 = vsub.f32 %v1779, %v4755
      %4757 = vmatprep.subr.mxu0 %v4756
      %v4758 = vand.u32 %v1778, 4294901760
      %v4759 = vsub.f32 %v1778, %v4758
      %4760 = vmatpush1.msra.mxu0 %v4759
      %v4761 = vand.u32 %v1790, 4294901760
      %v4762 = vsub.f32 %v1790, %v4761
      %4763 = vmatprep.subr.mxu0 %v4762
      %v4764 = vand.u32 %v1789, 4294901760
      %v4765 = vsub.f32 %v1789, %v4764
      %4766 = vmatpush1.msra.mxu0 %v4765
      %v4767 = vand.u32 %v1801, 4294901760
      %v4768 = vsub.f32 %v1801, %v4767
      %4769 = vmatprep.subr.mxu0 %v4768
      %v4770 = vand.u32 %v1800, 4294901760
      %v4771 = vsub.f32 %v1800, %v4770
      %4772 = vmatpush1.msra.mxu0 %v4771
      %v4773 = vand.u32 %v1812, 4294901760
      %v4774 = vsub.f32 %v1812, %v4773
      %4775 = vmatprep.subr.mxu0 %v4774
      %v4776 = vand.u32 %v1811, 4294901760
      %v4777 = vsub.f32 %v1811, %v4776
      %4778 = vmatpush1.msra.mxu0 %v4777
      %v4779 = vand.u32 %v1823, 4294901760
      %v4780 = vsub.f32 %v1823, %v4779
      %4781 = vmatprep.subr.mxu0 %v4780
      %v4782 = vand.u32 %v1822, 4294901760
      %v4783 = vsub.f32 %v1822, %v4782
      %4784 = vmatpush1.msra.mxu0 %v4783
      %v4785 = vand.u32 %v1834, 4294901760
      %v4786 = vsub.f32 %v1834, %v4785
      %4787 = vmatprep.subr.mxu0 %v4786
      %v4788 = vand.u32 %v1833, 4294901760
      %v4789 = vsub.f32 %v1833, %v4788
      %4790 = vmatpush1.msra.mxu0 %v4789
      %v4791 = vand.u32 %v1845, 4294901760
      %v4792 = vsub.f32 %v1845, %v4791
      %4793 = vmatprep.subr.mxu0 %v4792
      %v4794 = vand.u32 %v1844, 4294901760
      %v4795 = vsub.f32 %v1844, %v4794
      %4796 = vmatpush1.msra.mxu0 %v4795
      %v4797 = vand.u32 %v1856, 4294901760
      %v4798 = vsub.f32 %v1856, %v4797
      %4799 = vmatprep.subr.mxu0 %v4798
      %v4800 = vand.u32 %v1855, 4294901760
      %v4801 = vsub.f32 %v1855, %v4800
      %4802 = vmatpush1.msra.mxu0 %v4801
      %v4803 = vand.u32 %v1867, 4294901760
      %v4804 = vsub.f32 %v1867, %v4803
      %4805 = vmatprep.subr.mxu0 %v4804
      %v4806 = vand.u32 %v1866, 4294901760
      %v4807 = vsub.f32 %v1866, %v4806
      %4808 = vmatpush1.msra.mxu0 %v4807
      %v4809 = vand.u32 %v1878, 4294901760
      %v4810 = vsub.f32 %v1878, %v4809
      %4811 = vmatprep.subr.mxu0 %v4810
      %v4812 = vand.u32 %v1877, 4294901760
      %v4813 = vsub.f32 %v1877, %v4812
      %4814 = vmatpush1.msra.mxu0 %v4813
      %4815 = vmatprep.subr.mxu0 0.0
      %4816 = vmatpush1.msra.mxu0 0.0
      %4817 = vmatprep.subr.mxu0 0.0
      %4818 = vmatpush1.msra.mxu0 0.0
      %4819 = vmatprep.subr.mxu0 0.0
      %4820 = vmatpush1.msra.mxu0 0.0
      %4821 = vmatprep.subr.mxu0 0.0
      %4822 = vmatpush1.msra.mxu0 0.0
      %4823 = vmatprep.subr.mxu0 0.0
      %4824 = vmatpush1.msra.mxu0 0.0
      %4825 = vmatprep.subr.mxu0 0.0
      %4826 = vmatpush1.msra.mxu0 0.0
      %4827 = vmatprep.subr.mxu0 0.0
      %4828 = vmatpush1.msra.mxu0 0.0
      %4829 = vmatprep.subr.mxu0 0.0
      %4830 = vmatpush1.msra.mxu0 0.0
      %4831 = vmatprep.subr.mxu0 0.0
      %4832 = vmatpush1.msra.mxu0 0.0
      %4833 = vmatprep.subr.mxu0 0.0
      %4834 = vmatpush1.msra.mxu0 0.0
      %4835 = vmatprep.subr.mxu0 0.0
      %4836 = vmatpush1.msra.mxu0 0.0
      %4837 = vmatprep.subr.mxu0 0.0
      %4838 = vmatpush1.msra.mxu0 0.0
      %4839 = vmatprep.subr.mxu0 0.0
      %4840 = vmatpush1.msra.mxu0 0.0
      %4841 = vmatprep.subr.mxu0 0.0
      %4842 = vmatpush1.msra.mxu0 0.0
      %4843 = vmatprep.subr.mxu0 0.0
      %4844 = vmatpush1.msra.mxu0 0.0
      %4845 = vmatprep.subr.mxu0 0.0
      %4846 = vmatpush1.msra.mxu0 0.0
      %4847 = vmatprep.subr.mxu0 0.0
      %4848 = vmatpush1.msra.mxu0 0.0
      %4849 = vmatprep.subr.mxu0 0.0
      %4850 = vmatpush1.msra.mxu0 0.0
      %4851 = vmatprep.subr.mxu0 0.0
      %4852 = vmatpush1.msra.mxu0 0.0
      %4853 = vmatprep.subr.mxu0 0.0
      %4854 = vmatpush1.msra.mxu0 0.0
      %4855 = vmatprep.subr.mxu0 0.0
      %4856 = vmatpush1.msra.mxu0 0.0
      %4857 = vmatprep.subr.mxu0 0.0
      %4858 = vmatpush1.msra.mxu0 0.0
      %4859 = vmatprep.mubr.f32.mxu0 0.0
      %v4860 = vand.u32 %v1884, 4294901760
      %v4861 = vsub.f32 %v1884, %v4860
      %4862 = vmatmul.mubr.f32.gmra.mrb[0].mxu0 %v4861
      %v4863 = vpop.f32.mrb[0].mxu0
      %v4864 = vadd.f32 %v4730, %v4863
      %v4865 = vpop.f32.mrb[0].mxu0
      %v4866 = vadd.f32 %v4732, %v4865
      %4867 = vmatprep.mubr.f32.mxu0 0.0
      %v4868 = vand.u32 %v1887, 4294901760
      %v4869 = vsub.f32 %v1887, %v4868
      %4870 = vmatmul.mubr.f32.gmra.mrb[0].mxu0 %v4869
      %v4871 = vpop.f32.mrb[0].mxu0
      %v4872 = vadd.f32 %v4737, %v4871
      %v4873 = vpop.f32.mrb[0].mxu0
      %v4874 = vadd.f32 %v4739, %v4873
      %4875 = vmatprep.mubr.f32.mxu0 0.0
      %v4876 = vand.u32 %v1890, 4294901760
      %v4877 = vsub.f32 %v1890, %v4876
      %4878 = vmatmul.mubr.f32.gmra.mrb[0].mxu0 %v4877
      %v4879 = vpop.f32.mrb[0].mxu0
      %v4880 = vadd.f32 %v4744, %v4879
      %v4881 = vpop.f32.mrb[0].mxu0
      %v4882 = vadd.f32 %v4746, %v4881
      %4883 = vmatprep.mubr.f32.mxu0 0.0
      %v4884 = vand.u32 %v1893, 4294901760
      %v4885 = vsub.f32 %v1893, %v4884
      %4886 = vmatmul.mubr.f32.gmra.mrb[0].mxu0 %v4885
      %v4887 = vpop.f32.mrb[0].mxu0
      %v4888 = vadd.f32 %v4751, %v4887
      %v4889 = vpop.f32.mrb[0].mxu0
      %v4890 = vadd.f32 %v4753, %v4889
      %4891 = vdwg.mxu0
      %v4892 = vand.u32 %v1779, 4294901760
      %4893 = vmatprep.subr.mxu0 %v4892
      %v4894 = vand.u32 %v1778, 4294901760
      %4895 = vmatpush1.msra.mxu0 %v4894
      %v4896 = vand.u32 %v1790, 4294901760
      %4897 = vmatprep.subr.mxu0 %v4896
      %v4898 = vand.u32 %v1789, 4294901760
      %4899 = vmatpush1.msra.mxu0 %v4898
      %v4900 = vand.u32 %v1801, 4294901760
      %4901 = vmatprep.subr.mxu0 %v4900
      %v4902 = vand.u32 %v1800, 4294901760
      %4903 = vmatpush1.msra.mxu0 %v4902
      %v4904 = vand.u32 %v1812, 4294901760
      %4905 = vmatprep.subr.mxu0 %v4904
      %v4906 = vand.u32 %v1811, 4294901760
      %4907 = vmatpush1.msra.mxu0 %v4906
      %v4908 = vand.u32 %v1823, 4294901760
      %4909 = vmatprep.subr.mxu0 %v4908
      %v4910 = vand.u32 %v1822, 4294901760
      %4911 = vmatpush1.msra.mxu0 %v4910
      %v4912 = vand.u32 %v1834, 4294901760
      %4913 = vmatprep.subr.mxu0 %v4912
      %v4914 = vand.u32 %v1833, 4294901760
      %4915 = vmatpush1.msra.mxu0 %v4914
      %v4916 = vand.u32 %v1845, 4294901760
      %4917 = vmatprep.subr.mxu0 %v4916
      %v4918 = vand.u32 %v1844, 4294901760
      %4919 = vmatpush1.msra.mxu0 %v4918
      %v4920 = vand.u32 %v1856, 4294901760
      %4921 = vmatprep.subr.mxu0 %v4920
      %v4922 = vand.u32 %v1855, 4294901760
      %4923 = vmatpush1.msra.mxu0 %v4922
      %v4924 = vand.u32 %v1867, 4294901760
      %4925 = vmatprep.subr.mxu0 %v4924
      %v4926 = vand.u32 %v1866, 4294901760
      %4927 = vmatpush1.msra.mxu0 %v4926
      %v4928 = vand.u32 %v1878, 4294901760
      %4929 = vmatprep.subr.mxu0 %v4928
      %v4930 = vand.u32 %v1877, 4294901760
      %4931 = vmatpush1.msra.mxu0 %v4930
      %4932 = vmatprep.subr.mxu0 0.0
      %4933 = vmatpush1.msra.mxu0 0.0
      %4934 = vmatprep.subr.mxu0 0.0
      %4935 = vmatpush1.msra.mxu0 0.0
      %4936 = vmatprep.subr.mxu0 0.0
      %4937 = vmatpush1.msra.mxu0 0.0
      %4938 = vmatprep.subr.mxu0 0.0
      %4939 = vmatpush1.msra.mxu0 0.0
      %4940 = vmatprep.subr.mxu0 0.0
      %4941 = vmatpush1.msra.mxu0 0.0
      %4942 = vmatprep.subr.mxu0 0.0
      %4943 = vmatpush1.msra.mxu0 0.0
      %4944 = vmatprep.subr.mxu0 0.0
      %4945 = vmatpush1.msra.mxu0 0.0
      %4946 = vmatprep.subr.mxu0 0.0
      %4947 = vmatpush1.msra.mxu0 0.0
      %4948 = vmatprep.subr.mxu0 0.0
      %4949 = vmatpush1.msra.mxu0 0.0
      %4950 = vmatprep.subr.mxu0 0.0
      %4951 = vmatpush1.msra.mxu0 0.0
      %4952 = vmatprep.subr.mxu0 0.0
      %4953 = vmatpush1.msra.mxu0 0.0
      %4954 = vmatprep.subr.mxu0 0.0
      %4955 = vmatpush1.msra.mxu0 0.0
      %4956 = vmatprep.subr.mxu0 0.0
      %4957 = vmatpush1.msra.mxu0 0.0
      %4958 = vmatprep.subr.mxu0 0.0
      %4959 = vmatpush1.msra.mxu0 0.0
      %4960 = vmatprep.subr.mxu0 0.0
      %4961 = vmatpush1.msra.mxu0 0.0
      %4962 = vmatprep.subr.mxu0 0.0
      %4963 = vmatpush1.msra.mxu0 0.0
      %4964 = vmatprep.subr.mxu0 0.0
      %4965 = vmatpush1.msra.mxu0 0.0
      %4966 = vmatprep.subr.mxu0 0.0
      %4967 = vmatpush1.msra.mxu0 0.0
      %4968 = vmatprep.subr.mxu0 0.0
      %4969 = vmatpush1.msra.mxu0 0.0
      %4970 = vmatprep.subr.mxu0 0.0
      %4971 = vmatpush1.msra.mxu0 0.0
      %4972 = vmatprep.subr.mxu0 0.0
      %4973 = vmatpush1.msra.mxu0 0.0
      %4974 = vmatprep.subr.mxu0 0.0
      %4975 = vmatpush1.msra.mxu0 0.0
      %4976 = vmatprep.mubr.f32.mxu0 0.0
      %v4977 = vand.u32 %v1884, 4294901760
      %v4978 = vsub.f32 %v1884, %v4977
      %v4979 = vand.u32 %v4978, 4294901760
      %4980 = vmatmul.mubr.f32.gmra.mrb[0].mxu0 %v4979
      %v4981 = vpop.f32.mrb[0].mxu0
      %v4982 = vadd.f32 %v4864, %v4981
      %v4983 = vpop.f32.mrb[0].mxu0
      %v4984 = vadd.f32 %v4866, %v4983
      %4985 = vmatprep.mubr.f32.mxu0 0.0
      %v4986 = vand.u32 %v1887, 4294901760
      %v4987 = vsub.f32 %v1887, %v4986
      %v4988 = vand.u32 %v4987, 4294901760
      %4989 = vmatmul.mubr.f32.gmra.mrb[0].mxu0 %v4988
      %v4990 = vpop.f32.mrb[0].mxu0
      %v4991 = vadd.f32 %v4872, %v4990
      %v4992 = vpop.f32.mrb[0].mxu0
      %v4993 = vadd.f32 %v4874, %v4992
      %4994 = vmatprep.mubr.f32.mxu0 0.0
      %v4995 = vand.u32 %v1890, 4294901760
      %v4996 = vsub.f32 %v1890, %v4995
      %v4997 = vand.u32 %v4996, 4294901760
      %4998 = vmatmul.mubr.f32.gmra.mrb[0].mxu0 %v4997
      %v4999 = vpop.f32.mrb[0].mxu0
      %v5000 = vadd.f32 %v4880, %v4999
      %v5001 = vpop.f32.mrb[0].mxu0
      %v5002 = vadd.f32 %v4882, %v5001
      %5003 = vmatprep.mubr.f32.mxu0 0.0
      %v5004 = vand.u32 %v1893, 4294901760
      %v5005 = vsub.f32 %v1893, %v5004
      %v5006 = vand.u32 %v5005, 4294901760
      %5007 = vmatmul.mubr.f32.gmra.mrb[0].mxu0 %v5006
      %v5008 = vpop.f32.mrb[0].mxu0
      %v5009 = vadd.f32 %v4888, %v5008
      %v5010 = vpop.f32.mrb[0].mxu0
      %v5011 = vadd.f32 %v4890, %v5010
      %5012 = vdwg.mxu0
      %v5013 = vand.u32 %v1779, 4294901760
      %v5014 = vsub.f32 %v1779, %v5013
      %v5015 = vand.u32 %v5014, 4294901760
      %5016 = vmatprep.subr.mxu0 %v5015
      %v5017 = vand.u32 %v1778, 4294901760
      %v5018 = vsub.f32 %v1778, %v5017
      %v5019 = vand.u32 %v5018, 4294901760
      %5020 = vmatpush1.msra.mxu0 %v5019
      %v5021 = vand.u32 %v1790, 4294901760
      %v5022 = vsub.f32 %v1790, %v5021
      %v5023 = vand.u32 %v5022, 4294901760
      %5024 = vmatprep.subr.mxu0 %v5023
      %v5025 = vand.u32 %v1789, 4294901760
      %v5026 = vsub.f32 %v1789, %v5025
      %v5027 = vand.u32 %v5026, 4294901760
      %5028 = vmatpush1.msra.mxu0 %v5027
      %v5029 = vand.u32 %v1801, 4294901760
      %v5030 = vsub.f32 %v1801, %v5029
      %v5031 = vand.u32 %v5030, 4294901760
      %5032 = vmatprep.subr.mxu0 %v5031
      %v5033 = vand.u32 %v1800, 4294901760
      %v5034 = vsub.f32 %v1800, %v5033
      %v5035 = vand.u32 %v5034, 4294901760
      %5036 = vmatpush1.msra.mxu0 %v5035
      %v5037 = vand.u32 %v1812, 4294901760
      %v5038 = vsub.f32 %v1812, %v5037
      %v5039 = vand.u32 %v5038, 4294901760
      %5040 = vmatprep.subr.mxu0 %v5039
      %v5041 = vand.u32 %v1811, 4294901760
      %v5042 = vsub.f32 %v1811, %v5041
      %v5043 = vand.u32 %v5042, 4294901760
      %5044 = vmatpush1.msra.mxu0 %v5043
      %v5045 = vand.u32 %v1823, 4294901760
      %v5046 = vsub.f32 %v1823, %v5045
      %v5047 = vand.u32 %v5046, 4294901760
      %5048 = vmatprep.subr.mxu0 %v5047
      %v5049 = vand.u32 %v1822, 4294901760
      %v5050 = vsub.f32 %v1822, %v5049
      %v5051 = vand.u32 %v5050, 4294901760
      %5052 = vmatpush1.msra.mxu0 %v5051
      %v5053 = vand.u32 %v1834, 4294901760
      %v5054 = vsub.f32 %v1834, %v5053
      %v5055 = vand.u32 %v5054, 4294901760
      %5056 = vmatprep.subr.mxu0 %v5055
      %v5057 = vand.u32 %v1833, 4294901760
      %v5058 = vsub.f32 %v1833, %v5057
      %v5059 = vand.u32 %v5058, 4294901760
      %5060 = vmatpush1.msra.mxu0 %v5059
      %v5061 = vand.u32 %v1845, 4294901760
      %v5062 = vsub.f32 %v1845, %v5061
      %v5063 = vand.u32 %v5062, 4294901760
      %5064 = vmatprep.subr.mxu0 %v5063
      %v5065 = vand.u32 %v1844, 4294901760
      %v5066 = vsub.f32 %v1844, %v5065
      %v5067 = vand.u32 %v5066, 4294901760
      %5068 = vmatpush1.msra.mxu0 %v5067
      %v5069 = vand.u32 %v1856, 4294901760
      %v5070 = vsub.f32 %v1856, %v5069
      %v5071 = vand.u32 %v5070, 4294901760
      %5072 = vmatprep.subr.mxu0 %v5071
      %v5073 = vand.u32 %v1855, 4294901760
      %v5074 = vsub.f32 %v1855, %v5073
      %v5075 = vand.u32 %v5074, 4294901760
      %5076 = vmatpush1.msra.mxu0 %v5075
      %v5077 = vand.u32 %v1867, 4294901760
      %v5078 = vsub.f32 %v1867, %v5077
      %v5079 = vand.u32 %v5078, 4294901760
      %5080 = vmatprep.subr.mxu0 %v5079
      %v5081 = vand.u32 %v1866, 4294901760
      %v5082 = vsub.f32 %v1866, %v5081
      %v5083 = vand.u32 %v5082, 4294901760
      %5084 = vmatpush1.msra.mxu0 %v5083
      %v5085 = vand.u32 %v1878, 4294901760
      %v5086 = vsub.f32 %v1878, %v5085
      %v5087 = vand.u32 %v5086, 4294901760
      %5088 = vmatprep.subr.mxu0 %v5087
      %v5089 = vand.u32 %v1877, 4294901760
      %v5090 = vsub.f32 %v1877, %v5089
      %v5091 = vand.u32 %v5090, 4294901760
      %5092 = vmatpush1.msra.mxu0 %v5091
      %5093 = vmatprep.subr.mxu0 0.0
      %5094 = vmatpush1.msra.mxu0 0.0
      %5095 = vmatprep.subr.mxu0 0.0
      %5096 = vmatpush1.msra.mxu0 0.0
      %5097 = vmatprep.subr.mxu0 0.0
      %5098 = vmatpush1.msra.mxu0 0.0
      %5099 = vmatprep.subr.mxu0 0.0
      %5100 = vmatpush1.msra.mxu0 0.0
      %5101 = vmatprep.subr.mxu0 0.0
      %5102 = vmatpush1.msra.mxu0 0.0
      %5103 = vmatprep.subr.mxu0 0.0
      %5104 = vmatpush1.msra.mxu0 0.0
      %5105 = vmatprep.subr.mxu0 0.0
      %5106 = vmatpush1.msra.mxu0 0.0
      %5107 = vmatprep.subr.mxu0 0.0
      %5108 = vmatpush1.msra.mxu0 0.0
      %5109 = vmatprep.subr.mxu0 0.0
      %5110 = vmatpush1.msra.mxu0 0.0
      %5111 = vmatprep.subr.mxu0 0.0
      %5112 = vmatpush1.msra.mxu0 0.0
      %5113 = vmatprep.subr.mxu0 0.0
      %5114 = vmatpush1.msra.mxu0 0.0
      %5115 = vmatprep.subr.mxu0 0.0
      %5116 = vmatpush1.msra.mxu0 0.0
      %5117 = vmatprep.subr.mxu0 0.0
      %5118 = vmatpush1.msra.mxu0 0.0
      %5119 = vmatprep.subr.mxu0 0.0
      %5120 = vmatpush1.msra.mxu0 0.0
      %5121 = vmatprep.subr.mxu0 0.0
      %5122 = vmatpush1.msra.mxu0 0.0
      %5123 = vmatprep.subr.mxu0 0.0
      %5124 = vmatpush1.msra.mxu0 0.0
      %5125 = vmatprep.subr.mxu0 0.0
      %5126 = vmatpush1.msra.mxu0 0.0
      %5127 = vmatprep.subr.mxu0 0.0
      %5128 = vmatpush1.msra.mxu0 0.0
      %5129 = vmatprep.subr.mxu0 0.0
      %5130 = vmatpush1.msra.mxu0 0.0
      %5131 = vmatprep.subr.mxu0 0.0
      %5132 = vmatpush1.msra.mxu0 0.0
      %5133 = vmatprep.subr.mxu0 0.0
      %5134 = vmatpush1.msra.mxu0 0.0
      %5135 = vmatprep.subr.mxu0 0.0
      %5136 = vmatpush1.msra.mxu0 0.0
      %5137 = vmatprep.mubr.f32.mxu0 0.0
      %v5138 = vand.u32 %v1884, 4294901760
      %5139 = vmatmul.mubr.f32.gmra.mrb[0].mxu0 %v5138
      %v5140 = vpop.f32.mrb[0].mxu0
      %v5141 = vadd.f32 %v4982, %v5140
      %v5142 = vpop.f32.mrb[0].mxu0
      %v5143 = vadd.f32 %v4984, %v5142
      %5144 = vmatprep.mubr.f32.mxu0 0.0
      %v5145 = vand.u32 %v1887, 4294901760
      %5146 = vmatmul.mubr.f32.gmra.mrb[0].mxu0 %v5145
      %v5147 = vpop.f32.mrb[0].mxu0
      %v5148 = vadd.f32 %v4991, %v5147
      %v5149 = vpop.f32.mrb[0].mxu0
      %v5150 = vadd.f32 %v4993, %v5149
      %5151 = vmatprep.mubr.f32.mxu0 0.0
      %v5152 = vand.u32 %v1890, 4294901760
      %5153 = vmatmul.mubr.f32.gmra.mrb[0].mxu0 %v5152
      %v5154 = vpop.f32.mrb[0].mxu0
      %v5155 = vadd.f32 %v5000, %v5154
      %v5156 = vpop.f32.mrb[0].mxu0
      %v5157 = vadd.f32 %v5002, %v5156
      %5158 = vmatprep.mubr.f32.mxu0 0.0
      %v5159 = vand.u32 %v1893, 4294901760
      %5160 = vmatmul.mubr.f32.gmra.mrb[0].mxu0 %v5159
      %v5161 = vpop.f32.mrb[0].mxu0
      %v5162 = vadd.f32 %v5009, %v5161
      %v5163 = vpop.f32.mrb[0].mxu0
      %v5164 = vadd.f32 %v5011, %v5163
      %5165 = vdwg.mxu0
      %v5166 = vand.u32 %v1779, 4294901760
      %5167 = vmatprep.subr.mxu0 %v5166
      %v5168 = vand.u32 %v1778, 4294901760
      %5169 = vmatpush1.msra.mxu0 %v5168
      %v5170 = vand.u32 %v1790, 4294901760
      %5171 = vmatprep.subr.mxu0 %v5170
      %v5172 = vand.u32 %v1789, 4294901760
      %5173 = vmatpush1.msra.mxu0 %v5172
      %v5174 = vand.u32 %v1801, 4294901760
      %5175 = vmatprep.subr.mxu0 %v5174
      %v5176 = vand.u32 %v1800, 4294901760
      %5177 = vmatpush1.msra.mxu0 %v5176
      %v5178 = vand.u32 %v1812, 4294901760
      %5179 = vmatprep.subr.mxu0 %v5178
      %v5180 = vand.u32 %v1811, 4294901760
      %5181 = vmatpush1.msra.mxu0 %v5180
      %v5182 = vand.u32 %v1823, 4294901760
      %5183 = vmatprep.subr.mxu0 %v5182
      %v5184 = vand.u32 %v1822, 4294901760
      %5185 = vmatpush1.msra.mxu0 %v5184
      %v5186 = vand.u32 %v1834, 4294901760
      %5187 = vmatprep.subr.mxu0 %v5186
      %v5188 = vand.u32 %v1833, 4294901760
      %5189 = vmatpush1.msra.mxu0 %v5188
      %v5190 = vand.u32 %v1845, 4294901760
      %5191 = vmatprep.subr.mxu0 %v5190
      %v5192 = vand.u32 %v1844, 4294901760
      %5193 = vmatpush1.msra.mxu0 %v5192
      %v5194 = vand.u32 %v1856, 4294901760
      %5195 = vmatprep.subr.mxu0 %v5194
      %v5196 = vand.u32 %v1855, 4294901760
      %5197 = vmatpush1.msra.mxu0 %v5196
      %v5198 = vand.u32 %v1867, 4294901760
      %5199 = vmatprep.subr.mxu0 %v5198
      %v5200 = vand.u32 %v1866, 4294901760
      %5201 = vmatpush1.msra.mxu0 %v5200
      %v5202 = vand.u32 %v1878, 4294901760
      %5203 = vmatprep.subr.mxu0 %v5202
      %v5204 = vand.u32 %v1877, 4294901760
      %5205 = vmatpush1.msra.mxu0 %v5204
      %5206 = vmatprep.subr.mxu0 0.0
      %5207 = vmatpush1.msra.mxu0 0.0
      %5208 = vmatprep.subr.mxu0 0.0
      %5209 = vmatpush1.msra.mxu0 0.0
      %5210 = vmatprep.subr.mxu0 0.0
      %5211 = vmatpush1.msra.mxu0 0.0
      %5212 = vmatprep.subr.mxu0 0.0
      %5213 = vmatpush1.msra.mxu0 0.0
      %5214 = vmatprep.subr.mxu0 0.0
      %5215 = vmatpush1.msra.mxu0 0.0
      %5216 = vmatprep.subr.mxu0 0.0
      %5217 = vmatpush1.msra.mxu0 0.0
      %5218 = vmatprep.subr.mxu0 0.0
      %5219 = vmatpush1.msra.mxu0 0.0
      %5220 = vmatprep.subr.mxu0 0.0
      %5221 = vmatpush1.msra.mxu0 0.0
      %5222 = vmatprep.subr.mxu0 0.0
      %5223 = vmatpush1.msra.mxu0 0.0
      %5224 = vmatprep.subr.mxu0 0.0
      %5225 = vmatpush1.msra.mxu0 0.0
      %5226 = vmatprep.subr.mxu0 0.0
      %5227 = vmatpush1.msra.mxu0 0.0
      %5228 = vmatprep.subr.mxu0 0.0
      %5229 = vmatpush1.msra.mxu0 0.0
      %5230 = vmatprep.subr.mxu0 0.0
      %5231 = vmatpush1.msra.mxu0 0.0
      %5232 = vmatprep.subr.mxu0 0.0
      %5233 = vmatpush1.msra.mxu0 0.0
      %5234 = vmatprep.subr.mxu0 0.0
      %5235 = vmatpush1.msra.mxu0 0.0
      %5236 = vmatprep.subr.mxu0 0.0
      %5237 = vmatpush1.msra.mxu0 0.0
      %5238 = vmatprep.subr.mxu0 0.0
      %5239 = vmatpush1.msra.mxu0 0.0
      %5240 = vmatprep.subr.mxu0 0.0
      %5241 = vmatpush1.msra.mxu0 0.0
      %5242 = vmatprep.subr.mxu0 0.0
      %5243 = vmatpush1.msra.mxu0 0.0
      %5244 = vmatprep.subr.mxu0 0.0
      %5245 = vmatpush1.msra.mxu0 0.0
      %5246 = vmatprep.subr.mxu0 0.0
      %5247 = vmatpush1.msra.mxu0 0.0
      %5248 = vmatprep.subr.mxu0 0.0
      %5249 = vmatpush1.msra.mxu0 0.0
      %5250 = vmatprep.mubr.f32.mxu0 0.0
      %v5251 = vand.u32 %v1884, 4294901760
      %5252 = vmatmul.mubr.f32.gmra.mrb[0].mxu0 %v5251
      %v5253 = vpop.f32.mrb[0].mxu0
      %v5254 = vadd.f32 %v5141, %v5253
      %v5255 = vpop.f32.mrb[0].mxu0
      %v5256 = vadd.f32 %v5143, %v5255
      %5257 = vmatprep.mubr.f32.mxu0 0.0
      %v5258 = vand.u32 %v1887, 4294901760
      %5259 = vmatmul.mubr.f32.gmra.mrb[0].mxu0 %v5258
      %v5260 = vpop.f32.mrb[0].mxu0
      %v5261 = vadd.f32 %v5148, %v5260
      %v5262 = vpop.f32.mrb[0].mxu0
      %v5263 = vadd.f32 %v5150, %v5262
      %5264 = vmatprep.mubr.f32.mxu0 0.0
      %v5265 = vand.u32 %v1890, 4294901760
      %5266 = vmatmul.mubr.f32.gmra.mrb[0].mxu0 %v5265
      %v5267 = vpop.f32.mrb[0].mxu0
      %v5268 = vadd.f32 %v5155, %v5267
      %v5269 = vpop.f32.mrb[0].mxu0
      %v5270 = vadd.f32 %v5157, %v5269
      %5271 = vmatprep.mubr.f32.mxu0 0.0
      %v5272 = vand.u32 %v1893, 4294901760
      %5273 = vmatmul.mubr.f32.gmra.mrb[0].mxu0 %v5272
      %v5274 = vpop.f32.mrb[0].mxu0
      %v5275 = vadd.f32 %v5162, %v5274
      %v5276 = vpop.f32.mrb[0].mxu0
      %v5277 = vadd.f32 %v5164, %v5276
      %5278 = vdwg.mxu0
      %v5279 = vand.u32 %v1781, 4294901760
      %5280 = vmatprep.subr.mxu0 %v5279
      %v5281 = vand.u32 %v1780, 4294901760
      %5282 = vmatpush1.msra.mxu0 %v5281
      %v5283 = vand.u32 %v1792, 4294901760
      %5284 = vmatprep.subr.mxu0 %v5283
      %v5285 = vand.u32 %v1791, 4294901760
      %5286 = vmatpush1.msra.mxu0 %v5285
      %v5287 = vand.u32 %v1803, 4294901760
      %5288 = vmatprep.subr.mxu0 %v5287
      %v5289 = vand.u32 %v1802, 4294901760
      %5290 = vmatpush1.msra.mxu0 %v5289
      %v5291 = vand.u32 %v1814, 4294901760
      %5292 = vmatprep.subr.mxu0 %v5291
      %v5293 = vand.u32 %v1813, 4294901760
      %5294 = vmatpush1.msra.mxu0 %v5293
      %v5295 = vand.u32 %v1825, 4294901760
      %5296 = vmatprep.subr.mxu0 %v5295
      %v5297 = vand.u32 %v1824, 4294901760
      %5298 = vmatpush1.msra.mxu0 %v5297
      %v5299 = vand.u32 %v1836, 4294901760
      %5300 = vmatprep.subr.mxu0 %v5299
      %v5301 = vand.u32 %v1835, 4294901760
      %5302 = vmatpush1.msra.mxu0 %v5301
      %v5303 = vand.u32 %v1847, 4294901760
      %5304 = vmatprep.subr.mxu0 %v5303
      %v5305 = vand.u32 %v1846, 4294901760
      %5306 = vmatpush1.msra.mxu0 %v5305
      %v5307 = vand.u32 %v1858, 4294901760
      %5308 = vmatprep.subr.mxu0 %v5307
      %v5309 = vand.u32 %v1857, 4294901760
      %5310 = vmatpush1.msra.mxu0 %v5309
      %v5311 = vand.u32 %v1869, 4294901760
      %5312 = vmatprep.subr.mxu0 %v5311
      %v5313 = vand.u32 %v1868, 4294901760
      %5314 = vmatpush1.msra.mxu0 %v5313
      %v5315 = vand.u32 %v1880, 4294901760
      %5316 = vmatprep.subr.mxu0 %v5315
      %v5317 = vand.u32 %v1879, 4294901760
      %5318 = vmatpush1.msra.mxu0 %v5317
      %5319 = vmatprep.subr.mxu0 0.0
      %5320 = vmatpush1.msra.mxu0 0.0
      %5321 = vmatprep.subr.mxu0 0.0
      %5322 = vmatpush1.msra.mxu0 0.0
      %5323 = vmatprep.subr.mxu0 0.0
      %5324 = vmatpush1.msra.mxu0 0.0
      %5325 = vmatprep.subr.mxu0 0.0
      %5326 = vmatpush1.msra.mxu0 0.0
      %5327 = vmatprep.subr.mxu0 0.0
      %5328 = vmatpush1.msra.mxu0 0.0
      %5329 = vmatprep.subr.mxu0 0.0
      %5330 = vmatpush1.msra.mxu0 0.0
      %5331 = vmatprep.subr.mxu0 0.0
      %5332 = vmatpush1.msra.mxu0 0.0
      %5333 = vmatprep.subr.mxu0 0.0
      %5334 = vmatpush1.msra.mxu0 0.0
      %5335 = vmatprep.subr.mxu0 0.0
      %5336 = vmatpush1.msra.mxu0 0.0
      %5337 = vmatprep.subr.mxu0 0.0
      %5338 = vmatpush1.msra.mxu0 0.0
      %5339 = vmatprep.subr.mxu0 0.0
      %5340 = vmatpush1.msra.mxu0 0.0
      %5341 = vmatprep.subr.mxu0 0.0
      %5342 = vmatpush1.msra.mxu0 0.0
      %5343 = vmatprep.subr.mxu0 0.0
      %5344 = vmatpush1.msra.mxu0 0.0
      %5345 = vmatprep.subr.mxu0 0.0
      %5346 = vmatpush1.msra.mxu0 0.0
      %5347 = vmatprep.subr.mxu0 0.0
      %5348 = vmatpush1.msra.mxu0 0.0
      %5349 = vmatprep.subr.mxu0 0.0
      %5350 = vmatpush1.msra.mxu0 0.0
      %5351 = vmatprep.subr.mxu0 0.0
      %5352 = vmatpush1.msra.mxu0 0.0
      %5353 = vmatprep.subr.mxu0 0.0
      %5354 = vmatpush1.msra.mxu0 0.0
      %5355 = vmatprep.subr.mxu0 0.0
      %5356 = vmatpush1.msra.mxu0 0.0
      %5357 = vmatprep.subr.mxu0 0.0
      %5358 = vmatpush1.msra.mxu0 0.0
      %5359 = vmatprep.subr.mxu0 0.0
      %5360 = vmatpush1.msra.mxu0 0.0
      %5361 = vmatprep.subr.mxu0 0.0
      %5362 = vmatpush1.msra.mxu0 0.0
      %5363 = vmatprep.mubr.f32.mxu0 0.0
      %v5364 = vand.u32 %v1884, 4294901760
      %v5365 = vsub.f32 %v1884, %v5364
      %v5366 = vand.u32 %v5365, 4294901760
      %v5367 = vsub.f32 %v5365, %v5366
      %v5368 = vand.u32 %v5367, 4294901760
      %5369 = vmatmul.mubr.f32.gmra.mrb[0].mxu0 %v5368
      %v5370 = vpop.f32.mrb[0].mxu0
      %v5371 = vadd.f32 0.0, %v5370
      %v5372 = vpop.f32.mrb[0].mxu0
      %v5373 = vadd.f32 0.0, %v5372
      %5374 = vmatprep.mubr.f32.mxu0 0.0
      %v5375 = vand.u32 %v1887, 4294901760
      %v5376 = vsub.f32 %v1887, %v5375
      %v5377 = vand.u32 %v5376, 4294901760
      %v5378 = vsub.f32 %v5376, %v5377
      %v5379 = vand.u32 %v5378, 4294901760
      %5380 = vmatmul.mubr.f32.gmra.mrb[0].mxu0 %v5379
      %v5381 = vpop.f32.mrb[0].mxu0
      %v5382 = vadd.f32 0.0, %v5381
      %v5383 = vpop.f32.mrb[0].mxu0
      %v5384 = vadd.f32 0.0, %v5383
      %5385 = vmatprep.mubr.f32.mxu0 0.0
      %v5386 = vand.u32 %v1890, 4294901760
      %v5387 = vsub.f32 %v1890, %v5386
      %v5388 = vand.u32 %v5387, 4294901760
      %v5389 = vsub.f32 %v5387, %v5388
      %v5390 = vand.u32 %v5389, 4294901760
      %5391 = vmatmul.mubr.f32.gmra.mrb[0].mxu0 %v5390
      %v5392 = vpop.f32.mrb[0].mxu0
      %v5393 = vadd.f32 0.0, %v5392
      %v5394 = vpop.f32.mrb[0].mxu0
      %v5395 = vadd.f32 0.0, %v5394
      %5396 = vmatprep.mubr.f32.mxu0 0.0
      %v5397 = vand.u32 %v1893, 4294901760
      %v5398 = vsub.f32 %v1893, %v5397
      %v5399 = vand.u32 %v5398, 4294901760
      %v5400 = vsub.f32 %v5398, %v5399
      %v5401 = vand.u32 %v5400, 4294901760
      %5402 = vmatmul.mubr.f32.gmra.mrb[0].mxu0 %v5401
      %v5403 = vpop.f32.mrb[0].mxu0
      %v5404 = vadd.f32 0.0, %v5403
      %v5405 = vpop.f32.mrb[0].mxu0
      %v5406 = vadd.f32 0.0, %v5405
      %5407 = vdwg.mxu0
      %v5408 = vand.u32 %v1781, 4294901760
      %v5409 = vsub.f32 %v1781, %v5408
      %v5410 = vand.u32 %v5409, 4294901760
      %v5411 = vsub.f32 %v5409, %v5410
      %v5412 = vand.u32 %v5411, 4294901760
      %5413 = vmatprep.subr.mxu0 %v5412
      %v5414 = vand.u32 %v1780, 4294901760
      %v5415 = vsub.f32 %v1780, %v5414
      %v5416 = vand.u32 %v5415, 4294901760
      %v5417 = vsub.f32 %v5415, %v5416
      %v5418 = vand.u32 %v5417, 4294901760
      %5419 = vmatpush1.msra.mxu0 %v5418
      %v5420 = vand.u32 %v1792, 4294901760
      %v5421 = vsub.f32 %v1792, %v5420
      %v5422 = vand.u32 %v5421, 4294901760
      %v5423 = vsub.f32 %v5421, %v5422
      %v5424 = vand.u32 %v5423, 4294901760
      %5425 = vmatprep.subr.mxu0 %v5424
      %v5426 = vand.u32 %v1791, 4294901760
      %v5427 = vsub.f32 %v1791, %v5426
      %v5428 = vand.u32 %v5427, 4294901760
      %v5429 = vsub.f32 %v5427, %v5428
      %v5430 = vand.u32 %v5429, 4294901760
      %5431 = vmatpush1.msra.mxu0 %v5430
      %v5432 = vand.u32 %v1803, 4294901760
      %v5433 = vsub.f32 %v1803, %v5432
      %v5434 = vand.u32 %v5433, 4294901760
      %v5435 = vsub.f32 %v5433, %v5434
      %v5436 = vand.u32 %v5435, 4294901760
      %5437 = vmatprep.subr.mxu0 %v5436
      %v5438 = vand.u32 %v1802, 4294901760
      %v5439 = vsub.f32 %v1802, %v5438
      %v5440 = vand.u32 %v5439, 4294901760
      %v5441 = vsub.f32 %v5439, %v5440
      %v5442 = vand.u32 %v5441, 4294901760
      %5443 = vmatpush1.msra.mxu0 %v5442
      %v5444 = vand.u32 %v1814, 4294901760
      %v5445 = vsub.f32 %v1814, %v5444
      %v5446 = vand.u32 %v5445, 4294901760
      %v5447 = vsub.f32 %v5445, %v5446
      %v5448 = vand.u32 %v5447, 4294901760
      %5449 = vmatprep.subr.mxu0 %v5448
      %v5450 = vand.u32 %v1813, 4294901760
      %v5451 = vsub.f32 %v1813, %v5450
      %v5452 = vand.u32 %v5451, 4294901760
      %v5453 = vsub.f32 %v5451, %v5452
      %v5454 = vand.u32 %v5453, 4294901760
      %5455 = vmatpush1.msra.mxu0 %v5454
      %v5456 = vand.u32 %v1825, 4294901760
      %v5457 = vsub.f32 %v1825, %v5456
      %v5458 = vand.u32 %v5457, 4294901760
      %v5459 = vsub.f32 %v5457, %v5458
      %v5460 = vand.u32 %v5459, 4294901760
      %5461 = vmatprep.subr.mxu0 %v5460
      %v5462 = vand.u32 %v1824, 4294901760
      %v5463 = vsub.f32 %v1824, %v5462
      %v5464 = vand.u32 %v5463, 4294901760
      %v5465 = vsub.f32 %v5463, %v5464
      %v5466 = vand.u32 %v5465, 4294901760
      %5467 = vmatpush1.msra.mxu0 %v5466
      %v5468 = vand.u32 %v1836, 4294901760
      %v5469 = vsub.f32 %v1836, %v5468
      %v5470 = vand.u32 %v5469, 4294901760
      %v5471 = vsub.f32 %v5469, %v5470
      %v5472 = vand.u32 %v5471, 4294901760
      %5473 = vmatprep.subr.mxu0 %v5472
      %v5474 = vand.u32 %v1835, 4294901760
      %v5475 = vsub.f32 %v1835, %v5474
      %v5476 = vand.u32 %v5475, 4294901760
      %v5477 = vsub.f32 %v5475, %v5476
      %v5478 = vand.u32 %v5477, 4294901760
      %5479 = vmatpush1.msra.mxu0 %v5478
      %v5480 = vand.u32 %v1847, 4294901760
      %v5481 = vsub.f32 %v1847, %v5480
      %v5482 = vand.u32 %v5481, 4294901760
      %v5483 = vsub.f32 %v5481, %v5482
      %v5484 = vand.u32 %v5483, 4294901760
      %5485 = vmatprep.subr.mxu0 %v5484
      %v5486 = vand.u32 %v1846, 4294901760
      %v5487 = vsub.f32 %v1846, %v5486
      %v5488 = vand.u32 %v5487, 4294901760
      %v5489 = vsub.f32 %v5487, %v5488
      %v5490 = vand.u32 %v5489, 4294901760
      %5491 = vmatpush1.msra.mxu0 %v5490
      %v5492 = vand.u32 %v1858, 4294901760
      %v5493 = vsub.f32 %v1858, %v5492
      %v5494 = vand.u32 %v5493, 4294901760
      %v5495 = vsub.f32 %v5493, %v5494
      %v5496 = vand.u32 %v5495, 4294901760
      %5497 = vmatprep.subr.mxu0 %v5496
      %v5498 = vand.u32 %v1857, 4294901760
      %v5499 = vsub.f32 %v1857, %v5498
      %v5500 = vand.u32 %v5499, 4294901760
      %v5501 = vsub.f32 %v5499, %v5500
      %v5502 = vand.u32 %v5501, 4294901760
      %5503 = vmatpush1.msra.mxu0 %v5502
      %v5504 = vand.u32 %v1869, 4294901760
      %v5505 = vsub.f32 %v1869, %v5504
      %v5506 = vand.u32 %v5505, 4294901760
      %v5507 = vsub.f32 %v5505, %v5506
      %v5508 = vand.u32 %v5507, 4294901760
      %5509 = vmatprep.subr.mxu0 %v5508
      %v5510 = vand.u32 %v1868, 4294901760
      %v5511 = vsub.f32 %v1868, %v5510
      %v5512 = vand.u32 %v5511, 4294901760
      %v5513 = vsub.f32 %v5511, %v5512
      %v5514 = vand.u32 %v5513, 4294901760
      %5515 = vmatpush1.msra.mxu0 %v5514
      %v5516 = vand.u32 %v1880, 4294901760
      %v5517 = vsub.f32 %v1880, %v5516
      %v5518 = vand.u32 %v5517, 4294901760
      %v5519 = vsub.f32 %v5517, %v5518
      %v5520 = vand.u32 %v5519, 4294901760
      %5521 = vmatprep.subr.mxu0 %v5520
      %v5522 = vand.u32 %v1879, 4294901760
      %v5523 = vsub.f32 %v1879, %v5522
      %v5524 = vand.u32 %v5523, 4294901760
      %v5525 = vsub.f32 %v5523, %v5524
      %v5526 = vand.u32 %v5525, 4294901760
      %5527 = vmatpush1.msra.mxu0 %v5526
      %5528 = vmatprep.subr.mxu0 0.0
      %5529 = vmatpush1.msra.mxu0 0.0
      %5530 = vmatprep.subr.mxu0 0.0
      %5531 = vmatpush1.msra.mxu0 0.0
      %5532 = vmatprep.subr.mxu0 0.0
      %5533 = vmatpush1.msra.mxu0 0.0
      %5534 = vmatprep.subr.mxu0 0.0
      %5535 = vmatpush1.msra.mxu0 0.0
      %5536 = vmatprep.subr.mxu0 0.0
      %5537 = vmatpush1.msra.mxu0 0.0
      %5538 = vmatprep.subr.mxu0 0.0
      %5539 = vmatpush1.msra.mxu0 0.0
      %5540 = vmatprep.subr.mxu0 0.0
      %5541 = vmatpush1.msra.mxu0 0.0
      %5542 = vmatprep.subr.mxu0 0.0
      %5543 = vmatpush1.msra.mxu0 0.0
      %5544 = vmatprep.subr.mxu0 0.0
      %5545 = vmatpush1.msra.mxu0 0.0
      %5546 = vmatprep.subr.mxu0 0.0
      %5547 = vmatpush1.msra.mxu0 0.0
      %5548 = vmatprep.subr.mxu0 0.0
      %5549 = vmatpush1.msra.mxu0 0.0
      %5550 = vmatprep.subr.mxu0 0.0
      %5551 = vmatpush1.msra.mxu0 0.0
      %5552 = vmatprep.subr.mxu0 0.0
      %5553 = vmatpush1.msra.mxu0 0.0
      %5554 = vmatprep.subr.mxu0 0.0
      %5555 = vmatpush1.msra.mxu0 0.0
      %5556 = vmatprep.subr.mxu0 0.0
      %5557 = vmatpush1.msra.mxu0 0.0
      %5558 = vmatprep.subr.mxu0 0.0
      %5559 = vmatpush1.msra.mxu0 0.0
      %5560 = vmatprep.subr.mxu0 0.0
      %5561 = vmatpush1.msra.mxu0 0.0
      %5562 = vmatprep.subr.mxu0 0.0
      %5563 = vmatpush1.msra.mxu0 0.0
      %5564 = vmatprep.subr.mxu0 0.0
      %5565 = vmatpush1.msra.mxu0 0.0
      %5566 = vmatprep.subr.mxu0 0.0
      %5567 = vmatpush1.msra.mxu0 0.0
      %5568 = vmatprep.subr.mxu0 0.0
      %5569 = vmatpush1.msra.mxu0 0.0
      %5570 = vmatprep.subr.mxu0 0.0
      %5571 = vmatpush1.msra.mxu0 0.0
      %5572 = vmatprep.mubr.f32.mxu0 0.0
      %v5573 = vand.u32 %v1884, 4294901760
      %5574 = vmatmul.mubr.f32.gmra.mrb[0].mxu0 %v5573
      %v5575 = vpop.f32.mrb[0].mxu0
      %v5576 = vadd.f32 %v5371, %v5575
      %v5577 = vpop.f32.mrb[0].mxu0
      %v5578 = vadd.f32 %v5373, %v5577
      %5579 = vmatprep.mubr.f32.mxu0 0.0
      %v5580 = vand.u32 %v1887, 4294901760
      %5581 = vmatmul.mubr.f32.gmra.mrb[0].mxu0 %v5580
      %v5582 = vpop.f32.mrb[0].mxu0
      %v5583 = vadd.f32 %v5382, %v5582
      %v5584 = vpop.f32.mrb[0].mxu0
      %v5585 = vadd.f32 %v5384, %v5584
      %5586 = vmatprep.mubr.f32.mxu0 0.0
      %v5587 = vand.u32 %v1890, 4294901760
      %5588 = vmatmul.mubr.f32.gmra.mrb[0].mxu0 %v5587
      %v5589 = vpop.f32.mrb[0].mxu0
      %v5590 = vadd.f32 %v5393, %v5589
      %v5591 = vpop.f32.mrb[0].mxu0
      %v5592 = vadd.f32 %v5395, %v5591
      %5593 = vmatprep.mubr.f32.mxu0 0.0
      %v5594 = vand.u32 %v1893, 4294901760
      %5595 = vmatmul.mubr.f32.gmra.mrb[0].mxu0 %v5594
      %v5596 = vpop.f32.mrb[0].mxu0
      %v5597 = vadd.f32 %v5404, %v5596
      %v5598 = vpop.f32.mrb[0].mxu0
      %v5599 = vadd.f32 %v5406, %v5598
      %5600 = vdwg.mxu0
      %v5601 = vand.u32 %v1781, 4294901760
      %v5602 = vsub.f32 %v1781, %v5601
      %5603 = vmatprep.subr.mxu0 %v5602
      %v5604 = vand.u32 %v1780, 4294901760
      %v5605 = vsub.f32 %v1780, %v5604
      %5606 = vmatpush1.msra.mxu0 %v5605
      %v5607 = vand.u32 %v1792, 4294901760
      %v5608 = vsub.f32 %v1792, %v5607
      %5609 = vmatprep.subr.mxu0 %v5608
      %v5610 = vand.u32 %v1791, 4294901760
      %v5611 = vsub.f32 %v1791, %v5610
      %5612 = vmatpush1.msra.mxu0 %v5611
      %v5613 = vand.u32 %v1803, 4294901760
      %v5614 = vsub.f32 %v1803, %v5613
      %5615 = vmatprep.subr.mxu0 %v5614
      %v5616 = vand.u32 %v1802, 4294901760
      %v5617 = vsub.f32 %v1802, %v5616
      %5618 = vmatpush1.msra.mxu0 %v5617
      %v5619 = vand.u32 %v1814, 4294901760
      %v5620 = vsub.f32 %v1814, %v5619
      %5621 = vmatprep.subr.mxu0 %v5620
      %v5622 = vand.u32 %v1813, 4294901760
      %v5623 = vsub.f32 %v1813, %v5622
      %5624 = vmatpush1.msra.mxu0 %v5623
      %v5625 = vand.u32 %v1825, 4294901760
      %v5626 = vsub.f32 %v1825, %v5625
      %5627 = vmatprep.subr.mxu0 %v5626
      %v5628 = vand.u32 %v1824, 4294901760
      %v5629 = vsub.f32 %v1824, %v5628
      %5630 = vmatpush1.msra.mxu0 %v5629
      %v5631 = vand.u32 %v1836, 4294901760
      %v5632 = vsub.f32 %v1836, %v5631
      %5633 = vmatprep.subr.mxu0 %v5632
      %v5634 = vand.u32 %v1835, 4294901760
      %v5635 = vsub.f32 %v1835, %v5634
      %5636 = vmatpush1.msra.mxu0 %v5635
      %v5637 = vand.u32 %v1847, 4294901760
      %v5638 = vsub.f32 %v1847, %v5637
      %5639 = vmatprep.subr.mxu0 %v5638
      %v5640 = vand.u32 %v1846, 4294901760
      %v5641 = vsub.f32 %v1846, %v5640
      %5642 = vmatpush1.msra.mxu0 %v5641
      %v5643 = vand.u32 %v1858, 4294901760
      %v5644 = vsub.f32 %v1858, %v5643
      %5645 = vmatprep.subr.mxu0 %v5644
      %v5646 = vand.u32 %v1857, 4294901760
      %v5647 = vsub.f32 %v1857, %v5646
      %5648 = vmatpush1.msra.mxu0 %v5647
      %v5649 = vand.u32 %v1869, 4294901760
      %v5650 = vsub.f32 %v1869, %v5649
      %5651 = vmatprep.subr.mxu0 %v5650
      %v5652 = vand.u32 %v1868, 4294901760
      %v5653 = vsub.f32 %v1868, %v5652
      %5654 = vmatpush1.msra.mxu0 %v5653
      %v5655 = vand.u32 %v1880, 4294901760
      %v5656 = vsub.f32 %v1880, %v5655
      %5657 = vmatprep.subr.mxu0 %v5656
      %v5658 = vand.u32 %v1879, 4294901760
      %v5659 = vsub.f32 %v1879, %v5658
      %5660 = vmatpush1.msra.mxu0 %v5659
      %5661 = vmatprep.subr.mxu0 0.0
      %5662 = vmatpush1.msra.mxu0 0.0
      %5663 = vmatprep.subr.mxu0 0.0
      %5664 = vmatpush1.msra.mxu0 0.0
      %5665 = vmatprep.subr.mxu0 0.0
      %5666 = vmatpush1.msra.mxu0 0.0
      %5667 = vmatprep.subr.mxu0 0.0
      %5668 = vmatpush1.msra.mxu0 0.0
      %5669 = vmatprep.subr.mxu0 0.0
      %5670 = vmatpush1.msra.mxu0 0.0
      %5671 = vmatprep.subr.mxu0 0.0
      %5672 = vmatpush1.msra.mxu0 0.0
      %5673 = vmatprep.subr.mxu0 0.0
      %5674 = vmatpush1.msra.mxu0 0.0
      %5675 = vmatprep.subr.mxu0 0.0
      %5676 = vmatpush1.msra.mxu0 0.0
      %5677 = vmatprep.subr.mxu0 0.0
      %5678 = vmatpush1.msra.mxu0 0.0
      %5679 = vmatprep.subr.mxu0 0.0
      %5680 = vmatpush1.msra.mxu0 0.0
      %5681 = vmatprep.subr.mxu0 0.0
      %5682 = vmatpush1.msra.mxu0 0.0
      %5683 = vmatprep.subr.mxu0 0.0
      %5684 = vmatpush1.msra.mxu0 0.0
      %5685 = vmatprep.subr.mxu0 0.0
      %5686 = vmatpush1.msra.mxu0 0.0
      %5687 = vmatprep.subr.mxu0 0.0
      %5688 = vmatpush1.msra.mxu0 0.0
      %5689 = vmatprep.subr.mxu0 0.0
      %5690 = vmatpush1.msra.mxu0 0.0
      %5691 = vmatprep.subr.mxu0 0.0
      %5692 = vmatpush1.msra.mxu0 0.0
      %5693 = vmatprep.subr.mxu0 0.0
      %5694 = vmatpush1.msra.mxu0 0.0
      %5695 = vmatprep.subr.mxu0 0.0
      %5696 = vmatpush1.msra.mxu0 0.0
      %5697 = vmatprep.subr.mxu0 0.0
      %5698 = vmatpush1.msra.mxu0 0.0
      %5699 = vmatprep.subr.mxu0 0.0
      %5700 = vmatpush1.msra.mxu0 0.0
      %5701 = vmatprep.subr.mxu0 0.0
      %5702 = vmatpush1.msra.mxu0 0.0
      %5703 = vmatprep.subr.mxu0 0.0
      %5704 = vmatpush1.msra.mxu0 0.0
      %5705 = vmatprep.mubr.f32.mxu0 0.0
      %v5706 = vand.u32 %v1884, 4294901760
      %v5707 = vsub.f32 %v1884, %v5706
      %5708 = vmatmul.mubr.f32.gmra.mrb[0].mxu0 %v5707
      %v5709 = vpop.f32.mrb[0].mxu0
      %v5710 = vadd.f32 %v5576, %v5709
      %v5711 = vpop.f32.mrb[0].mxu0
      %v5712 = vadd.f32 %v5578, %v5711
      %5713 = vmatprep.mubr.f32.mxu0 0.0
      %v5714 = vand.u32 %v1887, 4294901760
      %v5715 = vsub.f32 %v1887, %v5714
      %5716 = vmatmul.mubr.f32.gmra.mrb[0].mxu0 %v5715
      %v5717 = vpop.f32.mrb[0].mxu0
      %v5718 = vadd.f32 %v5583, %v5717
      %v5719 = vpop.f32.mrb[0].mxu0
      %v5720 = vadd.f32 %v5585, %v5719
      %5721 = vmatprep.mubr.f32.mxu0 0.0
      %v5722 = vand.u32 %v1890, 4294901760
      %v5723 = vsub.f32 %v1890, %v5722
      %5724 = vmatmul.mubr.f32.gmra.mrb[0].mxu0 %v5723
      %v5725 = vpop.f32.mrb[0].mxu0
      %v5726 = vadd.f32 %v5590, %v5725
      %v5727 = vpop.f32.mrb[0].mxu0
      %v5728 = vadd.f32 %v5592, %v5727
      %5729 = vmatprep.mubr.f32.mxu0 0.0
      %v5730 = vand.u32 %v1893, 4294901760
      %v5731 = vsub.f32 %v1893, %v5730
      %5732 = vmatmul.mubr.f32.gmra.mrb[0].mxu0 %v5731
      %v5733 = vpop.f32.mrb[0].mxu0
      %v5734 = vadd.f32 %v5597, %v5733
      %v5735 = vpop.f32.mrb[0].mxu0
      %v5736 = vadd.f32 %v5599, %v5735
      %5737 = vdwg.mxu0
      %v5738 = vand.u32 %v1781, 4294901760
      %5739 = vmatprep.subr.mxu0 %v5738
      %v5740 = vand.u32 %v1780, 4294901760
      %5741 = vmatpush1.msra.mxu0 %v5740
      %v5742 = vand.u32 %v1792, 4294901760
      %5743 = vmatprep.subr.mxu0 %v5742
      %v5744 = vand.u32 %v1791, 4294901760
      %5745 = vmatpush1.msra.mxu0 %v5744
      %v5746 = vand.u32 %v1803, 4294901760
      %5747 = vmatprep.subr.mxu0 %v5746
      %v5748 = vand.u32 %v1802, 4294901760
      %5749 = vmatpush1.msra.mxu0 %v5748
      %v5750 = vand.u32 %v1814, 4294901760
      %5751 = vmatprep.subr.mxu0 %v5750
      %v5752 = vand.u32 %v1813, 4294901760
      %5753 = vmatpush1.msra.mxu0 %v5752
      %v5754 = vand.u32 %v1825, 4294901760
      %5755 = vmatprep.subr.mxu0 %v5754
      %v5756 = vand.u32 %v1824, 4294901760
      %5757 = vmatpush1.msra.mxu0 %v5756
      %v5758 = vand.u32 %v1836, 4294901760
      %5759 = vmatprep.subr.mxu0 %v5758
      %v5760 = vand.u32 %v1835, 4294901760
      %5761 = vmatpush1.msra.mxu0 %v5760
      %v5762 = vand.u32 %v1847, 4294901760
      %5763 = vmatprep.subr.mxu0 %v5762
      %v5764 = vand.u32 %v1846, 4294901760
      %5765 = vmatpush1.msra.mxu0 %v5764
      %v5766 = vand.u32 %v1858, 4294901760
      %5767 = vmatprep.subr.mxu0 %v5766
      %v5768 = vand.u32 %v1857, 4294901760
      %5769 = vmatpush1.msra.mxu0 %v5768
      %v5770 = vand.u32 %v1869, 4294901760
      %5771 = vmatprep.subr.mxu0 %v5770
      %v5772 = vand.u32 %v1868, 4294901760
      %5773 = vmatpush1.msra.mxu0 %v5772
      %v5774 = vand.u32 %v1880, 4294901760
      %5775 = vmatprep.subr.mxu0 %v5774
      %v5776 = vand.u32 %v1879, 4294901760
      %5777 = vmatpush1.msra.mxu0 %v5776
      %5778 = vmatprep.subr.mxu0 0.0
      %5779 = vmatpush1.msra.mxu0 0.0
      %5780 = vmatprep.subr.mxu0 0.0
      %5781 = vmatpush1.msra.mxu0 0.0
      %5782 = vmatprep.subr.mxu0 0.0
      %5783 = vmatpush1.msra.mxu0 0.0
      %5784 = vmatprep.subr.mxu0 0.0
      %5785 = vmatpush1.msra.mxu0 0.0
      %5786 = vmatprep.subr.mxu0 0.0
      %5787 = vmatpush1.msra.mxu0 0.0
      %5788 = vmatprep.subr.mxu0 0.0
      %5789 = vmatpush1.msra.mxu0 0.0
      %5790 = vmatprep.subr.mxu0 0.0
      %5791 = vmatpush1.msra.mxu0 0.0
      %5792 = vmatprep.subr.mxu0 0.0
      %5793 = vmatpush1.msra.mxu0 0.0
      %5794 = vmatprep.subr.mxu0 0.0
      %5795 = vmatpush1.msra.mxu0 0.0
      %5796 = vmatprep.subr.mxu0 0.0
      %5797 = vmatpush1.msra.mxu0 0.0
      %5798 = vmatprep.subr.mxu0 0.0
      %5799 = vmatpush1.msra.mxu0 0.0
      %5800 = vmatprep.subr.mxu0 0.0
      %5801 = vmatpush1.msra.mxu0 0.0
      %5802 = vmatprep.subr.mxu0 0.0
      %5803 = vmatpush1.msra.mxu0 0.0
      %5804 = vmatprep.subr.mxu0 0.0
      %5805 = vmatpush1.msra.mxu0 0.0
      %5806 = vmatprep.subr.mxu0 0.0
      %5807 = vmatpush1.msra.mxu0 0.0
      %5808 = vmatprep.subr.mxu0 0.0
      %5809 = vmatpush1.msra.mxu0 0.0
      %5810 = vmatprep.subr.mxu0 0.0
      %5811 = vmatpush1.msra.mxu0 0.0
      %5812 = vmatprep.subr.mxu0 0.0
      %5813 = vmatpush1.msra.mxu0 0.0
      %5814 = vmatprep.subr.mxu0 0.0
      %5815 = vmatpush1.msra.mxu0 0.0
      %5816 = vmatprep.subr.mxu0 0.0
      %5817 = vmatpush1.msra.mxu0 0.0
      %5818 = vmatprep.subr.mxu0 0.0
      %5819 = vmatpush1.msra.mxu0 0.0
      %5820 = vmatprep.subr.mxu0 0.0
      %5821 = vmatpush1.msra.mxu0 0.0
      %5822 = vmatprep.mubr.f32.mxu0 0.0
      %v5823 = vand.u32 %v1884, 4294901760
      %v5824 = vsub.f32 %v1884, %v5823
      %v5825 = vand.u32 %v5824, 4294901760
      %5826 = vmatmul.mubr.f32.gmra.mrb[0].mxu0 %v5825
      %v5827 = vpop.f32.mrb[0].mxu0
      %v5828 = vadd.f32 %v5710, %v5827
      %v5829 = vpop.f32.mrb[0].mxu0
      %v5830 = vadd.f32 %v5712, %v5829
      %5831 = vmatprep.mubr.f32.mxu0 0.0
      %v5832 = vand.u32 %v1887, 4294901760
      %v5833 = vsub.f32 %v1887, %v5832
      %v5834 = vand.u32 %v5833, 4294901760
      %5835 = vmatmul.mubr.f32.gmra.mrb[0].mxu0 %v5834
      %v5836 = vpop.f32.mrb[0].mxu0
      %v5837 = vadd.f32 %v5718, %v5836
      %v5838 = vpop.f32.mrb[0].mxu0
      %v5839 = vadd.f32 %v5720, %v5838
      %5840 = vmatprep.mubr.f32.mxu0 0.0
      %v5841 = vand.u32 %v1890, 4294901760
      %v5842 = vsub.f32 %v1890, %v5841
      %v5843 = vand.u32 %v5842, 4294901760
      %5844 = vmatmul.mubr.f32.gmra.mrb[0].mxu0 %v5843
      %v5845 = vpop.f32.mrb[0].mxu0
      %v5846 = vadd.f32 %v5726, %v5845
      %v5847 = vpop.f32.mrb[0].mxu0
      %v5848 = vadd.f32 %v5728, %v5847
      %5849 = vmatprep.mubr.f32.mxu0 0.0
      %v5850 = vand.u32 %v1893, 4294901760
      %v5851 = vsub.f32 %v1893, %v5850
      %v5852 = vand.u32 %v5851, 4294901760
      %5853 = vmatmul.mubr.f32.gmra.mrb[0].mxu0 %v5852
      %v5854 = vpop.f32.mrb[0].mxu0
      %v5855 = vadd.f32 %v5734, %v5854
      %v5856 = vpop.f32.mrb[0].mxu0
      %v5857 = vadd.f32 %v5736, %v5856
      %5858 = vdwg.mxu0
      %v5859 = vand.u32 %v1781, 4294901760
      %v5860 = vsub.f32 %v1781, %v5859
      %v5861 = vand.u32 %v5860, 4294901760
      %5862 = vmatprep.subr.mxu0 %v5861
      %v5863 = vand.u32 %v1780, 4294901760
      %v5864 = vsub.f32 %v1780, %v5863
      %v5865 = vand.u32 %v5864, 4294901760
      %5866 = vmatpush1.msra.mxu0 %v5865
      %v5867 = vand.u32 %v1792, 4294901760
      %v5868 = vsub.f32 %v1792, %v5867
      %v5869 = vand.u32 %v5868, 4294901760
      %5870 = vmatprep.subr.mxu0 %v5869
      %v5871 = vand.u32 %v1791, 4294901760
      %v5872 = vsub.f32 %v1791, %v5871
      %v5873 = vand.u32 %v5872, 4294901760
      %5874 = vmatpush1.msra.mxu0 %v5873
      %v5875 = vand.u32 %v1803, 4294901760
      %v5876 = vsub.f32 %v1803, %v5875
      %v5877 = vand.u32 %v5876, 4294901760
      %5878 = vmatprep.subr.mxu0 %v5877
      %v5879 = vand.u32 %v1802, 4294901760
      %v5880 = vsub.f32 %v1802, %v5879
      %v5881 = vand.u32 %v5880, 4294901760
      %5882 = vmatpush1.msra.mxu0 %v5881
      %v5883 = vand.u32 %v1814, 4294901760
      %v5884 = vsub.f32 %v1814, %v5883
      %v5885 = vand.u32 %v5884, 4294901760
      %5886 = vmatprep.subr.mxu0 %v5885
      %v5887 = vand.u32 %v1813, 4294901760
      %v5888 = vsub.f32 %v1813, %v5887
      %v5889 = vand.u32 %v5888, 4294901760
      %5890 = vmatpush1.msra.mxu0 %v5889
      %v5891 = vand.u32 %v1825, 4294901760
      %v5892 = vsub.f32 %v1825, %v5891
      %v5893 = vand.u32 %v5892, 4294901760
      %5894 = vmatprep.subr.mxu0 %v5893
      %v5895 = vand.u32 %v1824, 4294901760
      %v5896 = vsub.f32 %v1824, %v5895
      %v5897 = vand.u32 %v5896, 4294901760
      %5898 = vmatpush1.msra.mxu0 %v5897
      %v5899 = vand.u32 %v1836, 4294901760
      %v5900 = vsub.f32 %v1836, %v5899
      %v5901 = vand.u32 %v5900, 4294901760
      %5902 = vmatprep.subr.mxu0 %v5901
      %v5903 = vand.u32 %v1835, 4294901760
      %v5904 = vsub.f32 %v1835, %v5903
      %v5905 = vand.u32 %v5904, 4294901760
      %5906 = vmatpush1.msra.mxu0 %v5905
      %v5907 = vand.u32 %v1847, 4294901760
      %v5908 = vsub.f32 %v1847, %v5907
      %v5909 = vand.u32 %v5908, 4294901760
      %5910 = vmatprep.subr.mxu0 %v5909
      %v5911 = vand.u32 %v1846, 4294901760
      %v5912 = vsub.f32 %v1846, %v5911
      %v5913 = vand.u32 %v5912, 4294901760
      %5914 = vmatpush1.msra.mxu0 %v5913
      %v5915 = vand.u32 %v1858, 4294901760
      %v5916 = vsub.f32 %v1858, %v5915
      %v5917 = vand.u32 %v5916, 4294901760
      %5918 = vmatprep.subr.mxu0 %v5917
      %v5919 = vand.u32 %v1857, 4294901760
      %v5920 = vsub.f32 %v1857, %v5919
      %v5921 = vand.u32 %v5920, 4294901760
      %5922 = vmatpush1.msra.mxu0 %v5921
      %v5923 = vand.u32 %v1869, 4294901760
      %v5924 = vsub.f32 %v1869, %v5923
      %v5925 = vand.u32 %v5924, 4294901760
      %5926 = vmatprep.subr.mxu0 %v5925
      %v5927 = vand.u32 %v1868, 4294901760
      %v5928 = vsub.f32 %v1868, %v5927
      %v5929 = vand.u32 %v5928, 4294901760
      %5930 = vmatpush1.msra.mxu0 %v5929
      %v5931 = vand.u32 %v1880, 4294901760
      %v5932 = vsub.f32 %v1880, %v5931
      %v5933 = vand.u32 %v5932, 4294901760
      %5934 = vmatprep.subr.mxu0 %v5933
      %v5935 = vand.u32 %v1879, 4294901760
      %v5936 = vsub.f32 %v1879, %v5935
      %v5937 = vand.u32 %v5936, 4294901760
      %5938 = vmatpush1.msra.mxu0 %v5937
      %5939 = vmatprep.subr.mxu0 0.0
      %5940 = vmatpush1.msra.mxu0 0.0
      %5941 = vmatprep.subr.mxu0 0.0
      %5942 = vmatpush1.msra.mxu0 0.0
      %5943 = vmatprep.subr.mxu0 0.0
      %5944 = vmatpush1.msra.mxu0 0.0
      %5945 = vmatprep.subr.mxu0 0.0
      %5946 = vmatpush1.msra.mxu0 0.0
      %5947 = vmatprep.subr.mxu0 0.0
      %5948 = vmatpush1.msra.mxu0 0.0
      %5949 = vmatprep.subr.mxu0 0.0
      %5950 = vmatpush1.msra.mxu0 0.0
      %5951 = vmatprep.subr.mxu0 0.0
      %5952 = vmatpush1.msra.mxu0 0.0
      %5953 = vmatprep.subr.mxu0 0.0
      %5954 = vmatpush1.msra.mxu0 0.0
      %5955 = vmatprep.subr.mxu0 0.0
      %5956 = vmatpush1.msra.mxu0 0.0
      %5957 = vmatprep.subr.mxu0 0.0
      %5958 = vmatpush1.msra.mxu0 0.0
      %5959 = vmatprep.subr.mxu0 0.0
      %5960 = vmatpush1.msra.mxu0 0.0
      %5961 = vmatprep.subr.mxu0 0.0
      %5962 = vmatpush1.msra.mxu0 0.0
      %5963 = vmatprep.subr.mxu0 0.0
      %5964 = vmatpush1.msra.mxu0 0.0
      %5965 = vmatprep.subr.mxu0 0.0
      %5966 = vmatpush1.msra.mxu0 0.0
      %5967 = vmatprep.subr.mxu0 0.0
      %5968 = vmatpush1.msra.mxu0 0.0
      %5969 = vmatprep.subr.mxu0 0.0
      %5970 = vmatpush1.msra.mxu0 0.0
      %5971 = vmatprep.subr.mxu0 0.0
      %5972 = vmatpush1.msra.mxu0 0.0
      %5973 = vmatprep.subr.mxu0 0.0
      %5974 = vmatpush1.msra.mxu0 0.0
      %5975 = vmatprep.subr.mxu0 0.0
      %5976 = vmatpush1.msra.mxu0 0.0
      %5977 = vmatprep.subr.mxu0 0.0
      %5978 = vmatpush1.msra.mxu0 0.0
      %5979 = vmatprep.subr.mxu0 0.0
      %5980 = vmatpush1.msra.mxu0 0.0
      %5981 = vmatprep.subr.mxu0 0.0
      %5982 = vmatpush1.msra.mxu0 0.0
      %5983 = vmatprep.mubr.f32.mxu0 0.0
      %v5984 = vand.u32 %v1884, 4294901760
      %5985 = vmatmul.mubr.f32.gmra.mrb[0].mxu0 %v5984
      %v5986 = vpop.f32.mrb[0].mxu0
      %v5987 = vadd.f32 %v5828, %v5986
      %v5988 = vpop.f32.mrb[0].mxu0
      %v5989 = vadd.f32 %v5830, %v5988
      %5990 = vmatprep.mubr.f32.mxu0 0.0
      %v5991 = vand.u32 %v1887, 4294901760
      %5992 = vmatmul.mubr.f32.gmra.mrb[0].mxu0 %v5991
      %v5993 = vpop.f32.mrb[0].mxu0
      %v5994 = vadd.f32 %v5837, %v5993
      %v5995 = vpop.f32.mrb[0].mxu0
      %v5996 = vadd.f32 %v5839, %v5995
      %5997 = vmatprep.mubr.f32.mxu0 0.0
      %v5998 = vand.u32 %v1890, 4294901760
      %5999 = vmatmul.mubr.f32.gmra.mrb[0].mxu0 %v5998
      %v6000 = vpop.f32.mrb[0].mxu0
      %v6001 = vadd.f32 %v5846, %v6000
      %v6002 = vpop.f32.mrb[0].mxu0
      %v6003 = vadd.f32 %v5848, %v6002
      %6004 = vmatprep.mubr.f32.mxu0 0.0
      %v6005 = vand.u32 %v1893, 4294901760
      %6006 = vmatmul.mubr.f32.gmra.mrb[0].mxu0 %v6005
      %v6007 = vpop.f32.mrb[0].mxu0
      %v6008 = vadd.f32 %v5855, %v6007
      %v6009 = vpop.f32.mrb[0].mxu0
      %v6010 = vadd.f32 %v5857, %v6009
      %6011 = vdwg.mxu0
      %v6012 = vand.u32 %v1781, 4294901760
      %6013 = vmatprep.subr.mxu0 %v6012
      %v6014 = vand.u32 %v1780, 4294901760
      %6015 = vmatpush1.msra.mxu0 %v6014
      %v6016 = vand.u32 %v1792, 4294901760
      %6017 = vmatprep.subr.mxu0 %v6016
      %v6018 = vand.u32 %v1791, 4294901760
      %6019 = vmatpush1.msra.mxu0 %v6018
      %v6020 = vand.u32 %v1803, 4294901760
      %6021 = vmatprep.subr.mxu0 %v6020
      %v6022 = vand.u32 %v1802, 4294901760
      %6023 = vmatpush1.msra.mxu0 %v6022
      %v6024 = vand.u32 %v1814, 4294901760
      %6025 = vmatprep.subr.mxu0 %v6024
      %v6026 = vand.u32 %v1813, 4294901760
      %6027 = vmatpush1.msra.mxu0 %v6026
      %v6028 = vand.u32 %v1825, 4294901760
      %6029 = vmatprep.subr.mxu0 %v6028
      %v6030 = vand.u32 %v1824, 4294901760
      %6031 = vmatpush1.msra.mxu0 %v6030
      %v6032 = vand.u32 %v1836, 4294901760
      %6033 = vmatprep.subr.mxu0 %v6032
      %v6034 = vand.u32 %v1835, 4294901760
      %6035 = vmatpush1.msra.mxu0 %v6034
      %v6036 = vand.u32 %v1847, 4294901760
      %6037 = vmatprep.subr.mxu0 %v6036
      %v6038 = vand.u32 %v1846, 4294901760
      %6039 = vmatpush1.msra.mxu0 %v6038
      %v6040 = vand.u32 %v1858, 4294901760
      %6041 = vmatprep.subr.mxu0 %v6040
      %v6042 = vand.u32 %v1857, 4294901760
      %6043 = vmatpush1.msra.mxu0 %v6042
      %v6044 = vand.u32 %v1869, 4294901760
      %6045 = vmatprep.subr.mxu0 %v6044
      %v6046 = vand.u32 %v1868, 4294901760
      %6047 = vmatpush1.msra.mxu0 %v6046
      %v6048 = vand.u32 %v1880, 4294901760
      %6049 = vmatprep.subr.mxu0 %v6048
      %v6050 = vand.u32 %v1879, 4294901760
      %6051 = vmatpush1.msra.mxu0 %v6050
      %6052 = vmatprep.subr.mxu0 0.0
      %6053 = vmatpush1.msra.mxu0 0.0
      %6054 = vmatprep.subr.mxu0 0.0
      %6055 = vmatpush1.msra.mxu0 0.0
      %6056 = vmatprep.subr.mxu0 0.0
      %6057 = vmatpush1.msra.mxu0 0.0
      %6058 = vmatprep.subr.mxu0 0.0
      %6059 = vmatpush1.msra.mxu0 0.0
      %6060 = vmatprep.subr.mxu0 0.0
      %6061 = vmatpush1.msra.mxu0 0.0
      %6062 = vmatprep.subr.mxu0 0.0
      %6063 = vmatpush1.msra.mxu0 0.0
      %6064 = vmatprep.subr.mxu0 0.0
      %6065 = vmatpush1.msra.mxu0 0.0
      %6066 = vmatprep.subr.mxu0 0.0
      %6067 = vmatpush1.msra.mxu0 0.0
      %6068 = vmatprep.subr.mxu0 0.0
      %6069 = vmatpush1.msra.mxu0 0.0
      %6070 = vmatprep.subr.mxu0 0.0
      %6071 = vmatpush1.msra.mxu0 0.0
      %6072 = vmatprep.subr.mxu0 0.0
      %6073 = vmatpush1.msra.mxu0 0.0
      %6074 = vmatprep.subr.mxu0 0.0
      %6075 = vmatpush1.msra.mxu0 0.0
      %6076 = vmatprep.subr.mxu0 0.0
      %6077 = vmatpush1.msra.mxu0 0.0
      %6078 = vmatprep.subr.mxu0 0.0
      %6079 = vmatpush1.msra.mxu0 0.0
      %6080 = vmatprep.subr.mxu0 0.0
      %6081 = vmatpush1.msra.mxu0 0.0
      %6082 = vmatprep.subr.mxu0 0.0
      %6083 = vmatpush1.msra.mxu0 0.0
      %6084 = vmatprep.subr.mxu0 0.0
      %6085 = vmatpush1.msra.mxu0 0.0
      %6086 = vmatprep.subr.mxu0 0.0
      %6087 = vmatpush1.msra.mxu0 0.0
      %6088 = vmatprep.subr.mxu0 0.0
      %6089 = vmatpush1.msra.mxu0 0.0
      %6090 = vmatprep.subr.mxu0 0.0
      %6091 = vmatpush1.msra.mxu0 0.0
      %6092 = vmatprep.subr.mxu0 0.0
      %6093 = vmatpush1.msra.mxu0 0.0
      %6094 = vmatprep.subr.mxu0 0.0
      %6095 = vmatpush1.msra.mxu0 0.0
      %6096 = vmatprep.mubr.f32.mxu0 0.0
      %v6097 = vand.u32 %v1884, 4294901760
      %6098 = vmatmul.mubr.f32.gmra.mrb[0].mxu0 %v6097
      %v6099 = vpop.f32.mrb[0].mxu0
      %v6100 = vadd.f32 %v5987, %v6099
      %v6101 = vpop.f32.mrb[0].mxu0
      %v6102 = vadd.f32 %v5989, %v6101
      %6103 = vmatprep.mubr.f32.mxu0 0.0
      %v6104 = vand.u32 %v1887, 4294901760
      %6105 = vmatmul.mubr.f32.gmra.mrb[0].mxu0 %v6104
      %v6106 = vpop.f32.mrb[0].mxu0
      %v6107 = vadd.f32 %v5994, %v6106
      %v6108 = vpop.f32.mrb[0].mxu0
      %v6109 = vadd.f32 %v5996, %v6108
      %6110 = vmatprep.mubr.f32.mxu0 0.0
      %v6111 = vand.u32 %v1890, 4294901760
      %6112 = vmatmul.mubr.f32.gmra.mrb[0].mxu0 %v6111
      %v6113 = vpop.f32.mrb[0].mxu0
      %v6114 = vadd.f32 %v6001, %v6113
      %v6115 = vpop.f32.mrb[0].mxu0
      %v6116 = vadd.f32 %v6003, %v6115
      %6117 = vmatprep.mubr.f32.mxu0 0.0
      %v6118 = vand.u32 %v1893, 4294901760
      %6119 = vmatmul.mubr.f32.gmra.mrb[0].mxu0 %v6118
      %v6120 = vpop.f32.mrb[0].mxu0
      %v6121 = vadd.f32 %v6008, %v6120
      %v6122 = vpop.f32.mrb[0].mxu0
      %v6123 = vadd.f32 %v6010, %v6122
      %6124 = vdwg.mxu0
      %6125 = vmatprep.subr.mxu0 0.0
      %v6126 = vand.u32 %v1782, 4294901760
      %6127 = vmatpush1.msra.mxu0 %v6126
      %6128 = vmatprep.subr.mxu0 0.0
      %v6129 = vand.u32 %v1793, 4294901760
      %6130 = vmatpush1.msra.mxu0 %v6129
      %6131 = vmatprep.subr.mxu0 0.0
      %v6132 = vand.u32 %v1804, 4294901760
      %6133 = vmatpush1.msra.mxu0 %v6132
      %6134 = vmatprep.subr.mxu0 0.0
      %v6135 = vand.u32 %v1815, 4294901760
      %6136 = vmatpush1.msra.mxu0 %v6135
      %6137 = vmatprep.subr.mxu0 0.0
      %v6138 = vand.u32 %v1826, 4294901760
      %6139 = vmatpush1.msra.mxu0 %v6138
      %6140 = vmatprep.subr.mxu0 0.0
      %v6141 = vand.u32 %v1837, 4294901760
      %6142 = vmatpush1.msra.mxu0 %v6141
      %6143 = vmatprep.subr.mxu0 0.0
      %v6144 = vand.u32 %v1848, 4294901760
      %6145 = vmatpush1.msra.mxu0 %v6144
      %6146 = vmatprep.subr.mxu0 0.0
      %v6147 = vand.u32 %v1859, 4294901760
      %6148 = vmatpush1.msra.mxu0 %v6147
      %6149 = vmatprep.subr.mxu0 0.0
      %v6150 = vand.u32 %v1870, 4294901760
      %6151 = vmatpush1.msra.mxu0 %v6150
      %6152 = vmatprep.subr.mxu0 0.0
      %v6153 = vand.u32 %v1881, 4294901760
      %6154 = vmatpush1.msra.mxu0 %v6153
      %6155 = vmatprep.subr.mxu0 0.0
      %6156 = vmatpush1.msra.mxu0 0.0
      %6157 = vmatprep.subr.mxu0 0.0
      %6158 = vmatpush1.msra.mxu0 0.0
      %6159 = vmatprep.subr.mxu0 0.0
      %6160 = vmatpush1.msra.mxu0 0.0
      %6161 = vmatprep.subr.mxu0 0.0
      %6162 = vmatpush1.msra.mxu0 0.0
      %6163 = vmatprep.subr.mxu0 0.0
      %6164 = vmatpush1.msra.mxu0 0.0
      %6165 = vmatprep.subr.mxu0 0.0
      %6166 = vmatpush1.msra.mxu0 0.0
      %6167 = vmatprep.subr.mxu0 0.0
      %6168 = vmatpush1.msra.mxu0 0.0
      %6169 = vmatprep.subr.mxu0 0.0
      %6170 = vmatpush1.msra.mxu0 0.0
      %6171 = vmatprep.subr.mxu0 0.0
      %6172 = vmatpush1.msra.mxu0 0.0
      %6173 = vmatprep.subr.mxu0 0.0
      %6174 = vmatpush1.msra.mxu0 0.0
      %6175 = vmatprep.subr.mxu0 0.0
      %6176 = vmatpush1.msra.mxu0 0.0
      %6177 = vmatprep.subr.mxu0 0.0
      %6178 = vmatpush1.msra.mxu0 0.0
      %6179 = vmatprep.subr.mxu0 0.0
      %6180 = vmatpush1.msra.mxu0 0.0
      %6181 = vmatprep.subr.mxu0 0.0
      %6182 = vmatpush1.msra.mxu0 0.0
      %6183 = vmatprep.subr.mxu0 0.0
      %6184 = vmatpush1.msra.mxu0 0.0
      %6185 = vmatprep.subr.mxu0 0.0
      %6186 = vmatpush1.msra.mxu0 0.0
      %6187 = vmatprep.subr.mxu0 0.0
      %6188 = vmatpush1.msra.mxu0 0.0
      %6189 = vmatprep.subr.mxu0 0.0
      %6190 = vmatpush1.msra.mxu0 0.0
      %6191 = vmatprep.subr.mxu0 0.0
      %6192 = vmatpush1.msra.mxu0 0.0
      %6193 = vmatprep.subr.mxu0 0.0
      %6194 = vmatpush1.msra.mxu0 0.0
      %6195 = vmatprep.subr.mxu0 0.0
      %6196 = vmatpush1.msra.mxu0 0.0
      %6197 = vmatprep.subr.mxu0 0.0
      %6198 = vmatpush1.msra.mxu0 0.0
      %6199 = vmatprep.mubr.f32.mxu0 0.0
      %v6200 = vand.u32 %v1884, 4294901760
      %v6201 = vsub.f32 %v1884, %v6200
      %v6202 = vand.u32 %v6201, 4294901760
      %v6203 = vsub.f32 %v6201, %v6202
      %v6204 = vand.u32 %v6203, 4294901760
      %6205 = vmatmul.mubr.f32.gmra.mrb[0].mxu0 %v6204
      %v6206 = vpop.f32.mrb[0].mxu0
      %v6207 = vadd.f32 0.0, %v6206
      %v6208 = vpop.f32.mrb[0].mxu0
      %6209 = vmatprep.mubr.f32.mxu0 0.0
      %v6210 = vand.u32 %v1887, 4294901760
      %v6211 = vsub.f32 %v1887, %v6210
      %v6212 = vand.u32 %v6211, 4294901760
      %v6213 = vsub.f32 %v6211, %v6212
      %v6214 = vand.u32 %v6213, 4294901760
      %6215 = vmatmul.mubr.f32.gmra.mrb[0].mxu0 %v6214
      %v6216 = vpop.f32.mrb[0].mxu0
      %v6217 = vadd.f32 0.0, %v6216
      %v6218 = vpop.f32.mrb[0].mxu0
      %6219 = vmatprep.mubr.f32.mxu0 0.0
      %v6220 = vand.u32 %v1890, 4294901760
      %v6221 = vsub.f32 %v1890, %v6220
      %v6222 = vand.u32 %v6221, 4294901760
      %v6223 = vsub.f32 %v6221, %v6222
      %v6224 = vand.u32 %v6223, 4294901760
      %6225 = vmatmul.mubr.f32.gmra.mrb[0].mxu0 %v6224
      %v6226 = vpop.f32.mrb[0].mxu0
      %v6227 = vadd.f32 0.0, %v6226
      %v6228 = vpop.f32.mrb[0].mxu0
      %6229 = vmatprep.mubr.f32.mxu0 0.0
      %v6230 = vand.u32 %v1893, 4294901760
      %v6231 = vsub.f32 %v1893, %v6230
      %v6232 = vand.u32 %v6231, 4294901760
      %v6233 = vsub.f32 %v6231, %v6232
      %v6234 = vand.u32 %v6233, 4294901760
      %6235 = vmatmul.mubr.f32.gmra.mrb[0].mxu0 %v6234
      %v6236 = vpop.f32.mrb[0].mxu0
      %v6237 = vadd.f32 0.0, %v6236
      %v6238 = vpop.f32.mrb[0].mxu0
      %6239 = vdwg.mxu0
      %6240 = vmatprep.subr.mxu0 0.0
      %v6241 = vand.u32 %v1782, 4294901760
      %v6242 = vsub.f32 %v1782, %v6241
      %v6243 = vand.u32 %v6242, 4294901760
      %v6244 = vsub.f32 %v6242, %v6243
      %v6245 = vand.u32 %v6244, 4294901760
      %6246 = vmatpush1.msra.mxu0 %v6245
      %6247 = vmatprep.subr.mxu0 0.0
      %v6248 = vand.u32 %v1793, 4294901760
      %v6249 = vsub.f32 %v1793, %v6248
      %v6250 = vand.u32 %v6249, 4294901760
      %v6251 = vsub.f32 %v6249, %v6250
      %v6252 = vand.u32 %v6251, 4294901760
      %6253 = vmatpush1.msra.mxu0 %v6252
      %6254 = vmatprep.subr.mxu0 0.0
      %v6255 = vand.u32 %v1804, 4294901760
      %v6256 = vsub.f32 %v1804, %v6255
      %v6257 = vand.u32 %v6256, 4294901760
      %v6258 = vsub.f32 %v6256, %v6257
      %v6259 = vand.u32 %v6258, 4294901760
      %6260 = vmatpush1.msra.mxu0 %v6259
      %6261 = vmatprep.subr.mxu0 0.0
      %v6262 = vand.u32 %v1815, 4294901760
      %v6263 = vsub.f32 %v1815, %v6262
      %v6264 = vand.u32 %v6263, 4294901760
      %v6265 = vsub.f32 %v6263, %v6264
      %v6266 = vand.u32 %v6265, 4294901760
      %6267 = vmatpush1.msra.mxu0 %v6266
      %6268 = vmatprep.subr.mxu0 0.0
      %v6269 = vand.u32 %v1826, 4294901760
      %v6270 = vsub.f32 %v1826, %v6269
      %v6271 = vand.u32 %v6270, 4294901760
      %v6272 = vsub.f32 %v6270, %v6271
      %v6273 = vand.u32 %v6272, 4294901760
      %6274 = vmatpush1.msra.mxu0 %v6273
      %6275 = vmatprep.subr.mxu0 0.0
      %v6276 = vand.u32 %v1837, 4294901760
      %v6277 = vsub.f32 %v1837, %v6276
      %v6278 = vand.u32 %v6277, 4294901760
      %v6279 = vsub.f32 %v6277, %v6278
      %v6280 = vand.u32 %v6279, 4294901760
      %6281 = vmatpush1.msra.mxu0 %v6280
      %6282 = vmatprep.subr.mxu0 0.0
      %v6283 = vand.u32 %v1848, 4294901760
      %v6284 = vsub.f32 %v1848, %v6283
      %v6285 = vand.u32 %v6284, 4294901760
      %v6286 = vsub.f32 %v6284, %v6285
      %v6287 = vand.u32 %v6286, 4294901760
      %6288 = vmatpush1.msra.mxu0 %v6287
      %6289 = vmatprep.subr.mxu0 0.0
      %v6290 = vand.u32 %v1859, 4294901760
      %v6291 = vsub.f32 %v1859, %v6290
      %v6292 = vand.u32 %v6291, 4294901760
      %v6293 = vsub.f32 %v6291, %v6292
      %v6294 = vand.u32 %v6293, 4294901760
      %6295 = vmatpush1.msra.mxu0 %v6294
      %6296 = vmatprep.subr.mxu0 0.0
      %v6297 = vand.u32 %v1870, 4294901760
      %v6298 = vsub.f32 %v1870, %v6297
      %v6299 = vand.u32 %v6298, 4294901760
      %v6300 = vsub.f32 %v6298, %v6299
      %v6301 = vand.u32 %v6300, 4294901760
      %6302 = vmatpush1.msra.mxu0 %v6301
      %6303 = vmatprep.subr.mxu0 0.0
      %v6304 = vand.u32 %v1881, 4294901760
      %v6305 = vsub.f32 %v1881, %v6304
      %v6306 = vand.u32 %v6305, 4294901760
      %v6307 = vsub.f32 %v6305, %v6306
      %v6308 = vand.u32 %v6307, 4294901760
      %6309 = vmatpush1.msra.mxu0 %v6308
      %6310 = vmatprep.subr.mxu0 0.0
      %6311 = vmatpush1.msra.mxu0 0.0
      %6312 = vmatprep.subr.mxu0 0.0
      %6313 = vmatpush1.msra.mxu0 0.0
      %6314 = vmatprep.subr.mxu0 0.0
      %6315 = vmatpush1.msra.mxu0 0.0
      %6316 = vmatprep.subr.mxu0 0.0
      %6317 = vmatpush1.msra.mxu0 0.0
      %6318 = vmatprep.subr.mxu0 0.0
      %6319 = vmatpush1.msra.mxu0 0.0
      %6320 = vmatprep.subr.mxu0 0.0
      %6321 = vmatpush1.msra.mxu0 0.0
      %6322 = vmatprep.subr.mxu0 0.0
      %6323 = vmatpush1.msra.mxu0 0.0
      %6324 = vmatprep.subr.mxu0 0.0
      %6325 = vmatpush1.msra.mxu0 0.0
      %6326 = vmatprep.subr.mxu0 0.0
      %6327 = vmatpush1.msra.mxu0 0.0
      %6328 = vmatprep.subr.mxu0 0.0
      %6329 = vmatpush1.msra.mxu0 0.0
      %6330 = vmatprep.subr.mxu0 0.0
      %6331 = vmatpush1.msra.mxu0 0.0
      %6332 = vmatprep.subr.mxu0 0.0
      %6333 = vmatpush1.msra.mxu0 0.0
      %6334 = vmatprep.subr.mxu0 0.0
      %6335 = vmatpush1.msra.mxu0 0.0
      %6336 = vmatprep.subr.mxu0 0.0
      %6337 = vmatpush1.msra.mxu0 0.0
      %6338 = vmatprep.subr.mxu0 0.0
      %6339 = vmatpush1.msra.mxu0 0.0
      %6340 = vmatprep.subr.mxu0 0.0
      %6341 = vmatpush1.msra.mxu0 0.0
      %6342 = vmatprep.subr.mxu0 0.0
      %6343 = vmatpush1.msra.mxu0 0.0
      %6344 = vmatprep.subr.mxu0 0.0
      %6345 = vmatpush1.msra.mxu0 0.0
      %6346 = vmatprep.subr.mxu0 0.0
      %6347 = vmatpush1.msra.mxu0 0.0
      %6348 = vmatprep.subr.mxu0 0.0
      %6349 = vmatpush1.msra.mxu0 0.0
      %6350 = vmatprep.subr.mxu0 0.0
      %6351 = vmatpush1.msra.mxu0 0.0
      %6352 = vmatprep.subr.mxu0 0.0
      %6353 = vmatpush1.msra.mxu0 0.0
      %6354 = vmatprep.mubr.f32.mxu0 0.0
      %v6355 = vand.u32 %v1884, 4294901760
      %6356 = vmatmul.mubr.f32.gmra.mrb[0].mxu0 %v6355
      %v6357 = vpop.f32.mrb[0].mxu0
      %v6358 = vadd.f32 %v6207, %v6357
      %v6359 = vpop.f32.mrb[0].mxu0
      %6360 = vmatprep.mubr.f32.mxu0 0.0
      %v6361 = vand.u32 %v1887, 4294901760
      %6362 = vmatmul.mubr.f32.gmra.mrb[0].mxu0 %v6361
      %v6363 = vpop.f32.mrb[0].mxu0
      %v6364 = vadd.f32 %v6217, %v6363
      %v6365 = vpop.f32.mrb[0].mxu0
      %6366 = vmatprep.mubr.f32.mxu0 0.0
      %v6367 = vand.u32 %v1890, 4294901760
      %6368 = vmatmul.mubr.f32.gmra.mrb[0].mxu0 %v6367
      %v6369 = vpop.f32.mrb[0].mxu0
      %v6370 = vadd.f32 %v6227, %v6369
      %v6371 = vpop.f32.mrb[0].mxu0
      %6372 = vmatprep.mubr.f32.mxu0 0.0
      %v6373 = vand.u32 %v1893, 4294901760
      %6374 = vmatmul.mubr.f32.gmra.mrb[0].mxu0 %v6373
      %v6375 = vpop.f32.mrb[0].mxu0
      %v6376 = vadd.f32 %v6237, %v6375
      %v6377 = vpop.f32.mrb[0].mxu0
      %6378 = vdwg.mxu0
      %6379 = vmatprep.subr.mxu0 0.0
      %v6380 = vand.u32 %v1782, 4294901760
      %v6381 = vsub.f32 %v1782, %v6380
      %6382 = vmatpush1.msra.mxu0 %v6381
      %6383 = vmatprep.subr.mxu0 0.0
      %v6384 = vand.u32 %v1793, 4294901760
      %v6385 = vsub.f32 %v1793, %v6384
      %6386 = vmatpush1.msra.mxu0 %v6385
      %6387 = vmatprep.subr.mxu0 0.0
      %v6388 = vand.u32 %v1804, 4294901760
      %v6389 = vsub.f32 %v1804, %v6388
      %6390 = vmatpush1.msra.mxu0 %v6389
      %6391 = vmatprep.subr.mxu0 0.0
      %v6392 = vand.u32 %v1815, 4294901760
      %v6393 = vsub.f32 %v1815, %v6392
      %6394 = vmatpush1.msra.mxu0 %v6393
      %6395 = vmatprep.subr.mxu0 0.0
      %v6396 = vand.u32 %v1826, 4294901760
      %v6397 = vsub.f32 %v1826, %v6396
      %6398 = vmatpush1.msra.mxu0 %v6397
      %6399 = vmatprep.subr.mxu0 0.0
      %v6400 = vand.u32 %v1837, 4294901760
      %v6401 = vsub.f32 %v1837, %v6400
      %6402 = vmatpush1.msra.mxu0 %v6401
      %6403 = vmatprep.subr.mxu0 0.0
      %v6404 = vand.u32 %v1848, 4294901760
      %v6405 = vsub.f32 %v1848, %v6404
      %6406 = vmatpush1.msra.mxu0 %v6405
      %6407 = vmatprep.subr.mxu0 0.0
      %v6408 = vand.u32 %v1859, 4294901760
      %v6409 = vsub.f32 %v1859, %v6408
      %6410 = vmatpush1.msra.mxu0 %v6409
      %6411 = vmatprep.subr.mxu0 0.0
      %v6412 = vand.u32 %v1870, 4294901760
      %v6413 = vsub.f32 %v1870, %v6412
      %6414 = vmatpush1.msra.mxu0 %v6413
      %6415 = vmatprep.subr.mxu0 0.0
      %v6416 = vand.u32 %v1881, 4294901760
      %v6417 = vsub.f32 %v1881, %v6416
      %6418 = vmatpush1.msra.mxu0 %v6417
      %6419 = vmatprep.subr.mxu0 0.0
      %6420 = vmatpush1.msra.mxu0 0.0
      %6421 = vmatprep.subr.mxu0 0.0
      %6422 = vmatpush1.msra.mxu0 0.0
      %6423 = vmatprep.subr.mxu0 0.0
      %6424 = vmatpush1.msra.mxu0 0.0
      %6425 = vmatprep.subr.mxu0 0.0
      %6426 = vmatpush1.msra.mxu0 0.0
      %6427 = vmatprep.subr.mxu0 0.0
      %6428 = vmatpush1.msra.mxu0 0.0
      %6429 = vmatprep.subr.mxu0 0.0
      %6430 = vmatpush1.msra.mxu0 0.0
      %6431 = vmatprep.subr.mxu0 0.0
      %6432 = vmatpush1.msra.mxu0 0.0
      %6433 = vmatprep.subr.mxu0 0.0
      %6434 = vmatpush1.msra.mxu0 0.0
      %6435 = vmatprep.subr.mxu0 0.0
      %6436 = vmatpush1.msra.mxu0 0.0
      %6437 = vmatprep.subr.mxu0 0.0
      %6438 = vmatpush1.msra.mxu0 0.0
      %6439 = vmatprep.subr.mxu0 0.0
      %6440 = vmatpush1.msra.mxu0 0.0
      %6441 = vmatprep.subr.mxu0 0.0
      %6442 = vmatpush1.msra.mxu0 0.0
      %6443 = vmatprep.subr.mxu0 0.0
      %6444 = vmatpush1.msra.mxu0 0.0
      %6445 = vmatprep.subr.mxu0 0.0
      %6446 = vmatpush1.msra.mxu0 0.0
      %6447 = vmatprep.subr.mxu0 0.0
      %6448 = vmatpush1.msra.mxu0 0.0
      %6449 = vmatprep.subr.mxu0 0.0
      %6450 = vmatpush1.msra.mxu0 0.0
      %6451 = vmatprep.subr.mxu0 0.0
      %6452 = vmatpush1.msra.mxu0 0.0
      %6453 = vmatprep.subr.mxu0 0.0
      %6454 = vmatpush1.msra.mxu0 0.0
      %6455 = vmatprep.subr.mxu0 0.0
      %6456 = vmatpush1.msra.mxu0 0.0
      %6457 = vmatprep.subr.mxu0 0.0
      %6458 = vmatpush1.msra.mxu0 0.0
      %6459 = vmatprep.subr.mxu0 0.0
      %6460 = vmatpush1.msra.mxu0 0.0
      %6461 = vmatprep.subr.mxu0 0.0
      %6462 = vmatpush1.msra.mxu0 0.0
      %6463 = vmatprep.mubr.f32.mxu0 0.0
      %v6464 = vand.u32 %v1884, 4294901760
      %v6465 = vsub.f32 %v1884, %v6464
      %6466 = vmatmul.mubr.f32.gmra.mrb[0].mxu0 %v6465
      %v6467 = vpop.f32.mrb[0].mxu0
      %v6468 = vadd.f32 %v6358, %v6467
      %v6469 = vpop.f32.mrb[0].mxu0
      %6470 = vmatprep.mubr.f32.mxu0 0.0
      %v6471 = vand.u32 %v1887, 4294901760
      %v6472 = vsub.f32 %v1887, %v6471
      %6473 = vmatmul.mubr.f32.gmra.mrb[0].mxu0 %v6472
      %v6474 = vpop.f32.mrb[0].mxu0
      %v6475 = vadd.f32 %v6364, %v6474
      %v6476 = vpop.f32.mrb[0].mxu0
      %6477 = vmatprep.mubr.f32.mxu0 0.0
      %v6478 = vand.u32 %v1890, 4294901760
      %v6479 = vsub.f32 %v1890, %v6478
      %6480 = vmatmul.mubr.f32.gmra.mrb[0].mxu0 %v6479
      %v6481 = vpop.f32.mrb[0].mxu0
      %v6482 = vadd.f32 %v6370, %v6481
      %v6483 = vpop.f32.mrb[0].mxu0
      %6484 = vmatprep.mubr.f32.mxu0 0.0
      %v6485 = vand.u32 %v1893, 4294901760
      %v6486 = vsub.f32 %v1893, %v6485
      %6487 = vmatmul.mubr.f32.gmra.mrb[0].mxu0 %v6486
      %v6488 = vpop.f32.mrb[0].mxu0
      %v6489 = vadd.f32 %v6376, %v6488
      %v6490 = vpop.f32.mrb[0].mxu0
      %6491 = vdwg.mxu0
      %6492 = vmatprep.subr.mxu0 0.0
      %v6493 = vand.u32 %v1782, 4294901760
      %6494 = vmatpush1.msra.mxu0 %v6493
      %6495 = vmatprep.subr.mxu0 0.0
      %v6496 = vand.u32 %v1793, 4294901760
      %6497 = vmatpush1.msra.mxu0 %v6496
      %6498 = vmatprep.subr.mxu0 0.0
      %v6499 = vand.u32 %v1804, 4294901760
      %6500 = vmatpush1.msra.mxu0 %v6499
      %6501 = vmatprep.subr.mxu0 0.0
      %v6502 = vand.u32 %v1815, 4294901760
      %6503 = vmatpush1.msra.mxu0 %v6502
      %6504 = vmatprep.subr.mxu0 0.0
      %v6505 = vand.u32 %v1826, 4294901760
      %6506 = vmatpush1.msra.mxu0 %v6505
      %6507 = vmatprep.subr.mxu0 0.0
      %v6508 = vand.u32 %v1837, 4294901760
      %6509 = vmatpush1.msra.mxu0 %v6508
      %6510 = vmatprep.subr.mxu0 0.0
      %v6511 = vand.u32 %v1848, 4294901760
      %6512 = vmatpush1.msra.mxu0 %v6511
      %6513 = vmatprep.subr.mxu0 0.0
      %v6514 = vand.u32 %v1859, 4294901760
      %6515 = vmatpush1.msra.mxu0 %v6514
      %6516 = vmatprep.subr.mxu0 0.0
      %v6517 = vand.u32 %v1870, 4294901760
      %6518 = vmatpush1.msra.mxu0 %v6517
      %6519 = vmatprep.subr.mxu0 0.0
      %v6520 = vand.u32 %v1881, 4294901760
      %6521 = vmatpush1.msra.mxu0 %v6520
      %6522 = vmatprep.subr.mxu0 0.0
      %6523 = vmatpush1.msra.mxu0 0.0
      %6524 = vmatprep.subr.mxu0 0.0
      %6525 = vmatpush1.msra.mxu0 0.0
      %6526 = vmatprep.subr.mxu0 0.0
      %6527 = vmatpush1.msra.mxu0 0.0
      %6528 = vmatprep.subr.mxu0 0.0
      %6529 = vmatpush1.msra.mxu0 0.0
      %6530 = vmatprep.subr.mxu0 0.0
      %6531 = vmatpush1.msra.mxu0 0.0
      %6532 = vmatprep.subr.mxu0 0.0
      %6533 = vmatpush1.msra.mxu0 0.0
      %6534 = vmatprep.subr.mxu0 0.0
      %6535 = vmatpush1.msra.mxu0 0.0
      %6536 = vmatprep.subr.mxu0 0.0
      %6537 = vmatpush1.msra.mxu0 0.0
      %6538 = vmatprep.subr.mxu0 0.0
      %6539 = vmatpush1.msra.mxu0 0.0
      %6540 = vmatprep.subr.mxu0 0.0
      %6541 = vmatpush1.msra.mxu0 0.0
      %6542 = vmatprep.subr.mxu0 0.0
      %6543 = vmatpush1.msra.mxu0 0.0
      %6544 = vmatprep.subr.mxu0 0.0
      %6545 = vmatpush1.msra.mxu0 0.0
      %6546 = vmatprep.subr.mxu0 0.0
      %6547 = vmatpush1.msra.mxu0 0.0
      %6548 = vmatprep.subr.mxu0 0.0
      %6549 = vmatpush1.msra.mxu0 0.0
      %6550 = vmatprep.subr.mxu0 0.0
      %6551 = vmatpush1.msra.mxu0 0.0
      %6552 = vmatprep.subr.mxu0 0.0
      %6553 = vmatpush1.msra.mxu0 0.0
      %6554 = vmatprep.subr.mxu0 0.0
      %6555 = vmatpush1.msra.mxu0 0.0
      %6556 = vmatprep.subr.mxu0 0.0
      %6557 = vmatpush1.msra.mxu0 0.0
      %6558 = vmatprep.subr.mxu0 0.0
      %6559 = vmatpush1.msra.mxu0 0.0
      %6560 = vmatprep.subr.mxu0 0.0
      %6561 = vmatpush1.msra.mxu0 0.0
      %6562 = vmatprep.subr.mxu0 0.0
      %6563 = vmatpush1.msra.mxu0 0.0
      %6564 = vmatprep.subr.mxu0 0.0
      %6565 = vmatpush1.msra.mxu0 0.0
      %6566 = vmatprep.mubr.f32.mxu0 0.0
      %v6567 = vand.u32 %v1884, 4294901760
      %v6568 = vsub.f32 %v1884, %v6567
      %v6569 = vand.u32 %v6568, 4294901760
      %6570 = vmatmul.mubr.f32.gmra.mrb[0].mxu0 %v6569
      %v6571 = vpop.f32.mrb[0].mxu0
      %v6572 = vadd.f32 %v6468, %v6571
      %v6573 = vpop.f32.mrb[0].mxu0
      %6574 = vmatprep.mubr.f32.mxu0 0.0
      %v6575 = vand.u32 %v1887, 4294901760
      %v6576 = vsub.f32 %v1887, %v6575
      %v6577 = vand.u32 %v6576, 4294901760
      %6578 = vmatmul.mubr.f32.gmra.mrb[0].mxu0 %v6577
      %v6579 = vpop.f32.mrb[0].mxu0
      %v6580 = vadd.f32 %v6475, %v6579
      %v6581 = vpop.f32.mrb[0].mxu0
      %6582 = vmatprep.mubr.f32.mxu0 0.0
      %v6583 = vand.u32 %v1890, 4294901760
      %v6584 = vsub.f32 %v1890, %v6583
      %v6585 = vand.u32 %v6584, 4294901760
      %6586 = vmatmul.mubr.f32.gmra.mrb[0].mxu0 %v6585
      %v6587 = vpop.f32.mrb[0].mxu0
      %v6588 = vadd.f32 %v6482, %v6587
      %v6589 = vpop.f32.mrb[0].mxu0
      %6590 = vmatprep.mubr.f32.mxu0 0.0
      %v6591 = vand.u32 %v1893, 4294901760
      %v6592 = vsub.f32 %v1893, %v6591
      %v6593 = vand.u32 %v6592, 4294901760
      %6594 = vmatmul.mubr.f32.gmra.mrb[0].mxu0 %v6593
      %v6595 = vpop.f32.mrb[0].mxu0
      %v6596 = vadd.f32 %v6489, %v6595
      %v6597 = vpop.f32.mrb[0].mxu0
      %6598 = vdwg.mxu0
      %6599 = vmatprep.subr.mxu0 0.0
      %v6600 = vand.u32 %v1782, 4294901760
      %v6601 = vsub.f32 %v1782, %v6600
      %v6602 = vand.u32 %v6601, 4294901760
      %6603 = vmatpush1.msra.mxu0 %v6602
      %6604 = vmatprep.subr.mxu0 0.0
      %v6605 = vand.u32 %v1793, 4294901760
      %v6606 = vsub.f32 %v1793, %v6605
      %v6607 = vand.u32 %v6606, 4294901760
      %6608 = vmatpush1.msra.mxu0 %v6607
      %6609 = vmatprep.subr.mxu0 0.0
      %v6610 = vand.u32 %v1804, 4294901760
      %v6611 = vsub.f32 %v1804, %v6610
      %v6612 = vand.u32 %v6611, 4294901760
      %6613 = vmatpush1.msra.mxu0 %v6612
      %6614 = vmatprep.subr.mxu0 0.0
      %v6615 = vand.u32 %v1815, 4294901760
      %v6616 = vsub.f32 %v1815, %v6615
      %v6617 = vand.u32 %v6616, 4294901760
      %6618 = vmatpush1.msra.mxu0 %v6617
      %6619 = vmatprep.subr.mxu0 0.0
      %v6620 = vand.u32 %v1826, 4294901760
      %v6621 = vsub.f32 %v1826, %v6620
      %v6622 = vand.u32 %v6621, 4294901760
      %6623 = vmatpush1.msra.mxu0 %v6622
      %6624 = vmatprep.subr.mxu0 0.0
      %v6625 = vand.u32 %v1837, 4294901760
      %v6626 = vsub.f32 %v1837, %v6625
      %v6627 = vand.u32 %v6626, 4294901760
      %6628 = vmatpush1.msra.mxu0 %v6627
      %6629 = vmatprep.subr.mxu0 0.0
      %v6630 = vand.u32 %v1848, 4294901760
      %v6631 = vsub.f32 %v1848, %v6630
      %v6632 = vand.u32 %v6631, 4294901760
      %6633 = vmatpush1.msra.mxu0 %v6632
      %6634 = vmatprep.subr.mxu0 0.0
      %v6635 = vand.u32 %v1859, 4294901760
      %v6636 = vsub.f32 %v1859, %v6635
      %v6637 = vand.u32 %v6636, 4294901760
      %6638 = vmatpush1.msra.mxu0 %v6637
      %6639 = vmatprep.subr.mxu0 0.0
      %v6640 = vand.u32 %v1870, 4294901760
      %v6641 = vsub.f32 %v1870, %v6640
      %v6642 = vand.u32 %v6641, 4294901760
      %6643 = vmatpush1.msra.mxu0 %v6642
      %6644 = vmatprep.subr.mxu0 0.0
      %v6645 = vand.u32 %v1881, 4294901760
      %v6646 = vsub.f32 %v1881, %v6645
      %v6647 = vand.u32 %v6646, 4294901760
      %6648 = vmatpush1.msra.mxu0 %v6647
      %6649 = vmatprep.subr.mxu0 0.0
      %6650 = vmatpush1.msra.mxu0 0.0
      %6651 = vmatprep.subr.mxu0 0.0
      %6652 = vmatpush1.msra.mxu0 0.0
      %6653 = vmatprep.subr.mxu0 0.0
      %6654 = vmatpush1.msra.mxu0 0.0
      %6655 = vmatprep.subr.mxu0 0.0
      %6656 = vmatpush1.msra.mxu0 0.0
      %6657 = vmatprep.subr.mxu0 0.0
      %6658 = vmatpush1.msra.mxu0 0.0
      %6659 = vmatprep.subr.mxu0 0.0
      %6660 = vmatpush1.msra.mxu0 0.0
      %6661 = vmatprep.subr.mxu0 0.0
      %6662 = vmatpush1.msra.mxu0 0.0
      %6663 = vmatprep.subr.mxu0 0.0
      %6664 = vmatpush1.msra.mxu0 0.0
      %6665 = vmatprep.subr.mxu0 0.0
      %6666 = vmatpush1.msra.mxu0 0.0
      %6667 = vmatprep.subr.mxu0 0.0
      %6668 = vmatpush1.msra.mxu0 0.0
      %6669 = vmatprep.subr.mxu0 0.0
      %6670 = vmatpush1.msra.mxu0 0.0
      %6671 = vmatprep.subr.mxu0 0.0
      %6672 = vmatpush1.msra.mxu0 0.0
      %6673 = vmatprep.subr.mxu0 0.0
      %6674 = vmatpush1.msra.mxu0 0.0
      %6675 = vmatprep.subr.mxu0 0.0
      %6676 = vmatpush1.msra.mxu0 0.0
      %6677 = vmatprep.subr.mxu0 0.0
      %6678 = vmatpush1.msra.mxu0 0.0
      %6679 = vmatprep.subr.mxu0 0.0
      %6680 = vmatpush1.msra.mxu0 0.0
      %6681 = vmatprep.subr.mxu0 0.0
      %6682 = vmatpush1.msra.mxu0 0.0
      %6683 = vmatprep.subr.mxu0 0.0
      %6684 = vmatpush1.msra.mxu0 0.0
      %6685 = vmatprep.subr.mxu0 0.0
      %6686 = vmatpush1.msra.mxu0 0.0
      %6687 = vmatprep.subr.mxu0 0.0
      %6688 = vmatpush1.msra.mxu0 0.0
      %6689 = vmatprep.subr.mxu0 0.0
      %6690 = vmatpush1.msra.mxu0 0.0
      %6691 = vmatprep.subr.mxu0 0.0
      %6692 = vmatpush1.msra.mxu0 0.0
      %6693 = vmatprep.mubr.f32.mxu0 0.0
      %v6694 = vand.u32 %v1884, 4294901760
      %6695 = vmatmul.mubr.f32.gmra.mrb[0].mxu0 %v6694
      %v6696 = vpop.f32.mrb[0].mxu0
      %v6697 = vadd.f32 %v6572, %v6696
      %v6698 = vpop.f32.mrb[0].mxu0
      %6699 = vmatprep.mubr.f32.mxu0 0.0
      %v6700 = vand.u32 %v1887, 4294901760
      %6701 = vmatmul.mubr.f32.gmra.mrb[0].mxu0 %v6700
      %v6702 = vpop.f32.mrb[0].mxu0
      %v6703 = vadd.f32 %v6580, %v6702
      %v6704 = vpop.f32.mrb[0].mxu0
      %6705 = vmatprep.mubr.f32.mxu0 0.0
      %v6706 = vand.u32 %v1890, 4294901760
      %6707 = vmatmul.mubr.f32.gmra.mrb[0].mxu0 %v6706
      %v6708 = vpop.f32.mrb[0].mxu0
      %v6709 = vadd.f32 %v6588, %v6708
      %v6710 = vpop.f32.mrb[0].mxu0
      %6711 = vmatprep.mubr.f32.mxu0 0.0
      %v6712 = vand.u32 %v1893, 4294901760
      %6713 = vmatmul.mubr.f32.gmra.mrb[0].mxu0 %v6712
      %v6714 = vpop.f32.mrb[0].mxu0
      %v6715 = vadd.f32 %v6596, %v6714
      %v6716 = vpop.f32.mrb[0].mxu0
      %6717 = vdwg.mxu0
      %6718 = vmatprep.subr.mxu0 0.0
      %v6719 = vand.u32 %v1782, 4294901760
      %6720 = vmatpush1.msra.mxu0 %v6719
      %6721 = vmatprep.subr.mxu0 0.0
      %v6722 = vand.u32 %v1793, 4294901760
      %6723 = vmatpush1.msra.mxu0 %v6722
      %6724 = vmatprep.subr.mxu0 0.0
      %v6725 = vand.u32 %v1804, 4294901760
      %6726 = vmatpush1.msra.mxu0 %v6725
      %6727 = vmatprep.subr.mxu0 0.0
      %v6728 = vand.u32 %v1815, 4294901760
      %6729 = vmatpush1.msra.mxu0 %v6728
      %6730 = vmatprep.subr.mxu0 0.0
      %v6731 = vand.u32 %v1826, 4294901760
      %6732 = vmatpush1.msra.mxu0 %v6731
      %6733 = vmatprep.subr.mxu0 0.0
      %v6734 = vand.u32 %v1837, 4294901760
      %6735 = vmatpush1.msra.mxu0 %v6734
      %6736 = vmatprep.subr.mxu0 0.0
      %v6737 = vand.u32 %v1848, 4294901760
      %6738 = vmatpush1.msra.mxu0 %v6737
      %6739 = vmatprep.subr.mxu0 0.0
      %v6740 = vand.u32 %v1859, 4294901760
      %6741 = vmatpush1.msra.mxu0 %v6740
      %6742 = vmatprep.subr.mxu0 0.0
      %v6743 = vand.u32 %v1870, 4294901760
      %6744 = vmatpush1.msra.mxu0 %v6743
      %6745 = vmatprep.subr.mxu0 0.0
      %v6746 = vand.u32 %v1881, 4294901760
      %6747 = vmatpush1.msra.mxu0 %v6746
      %6748 = vmatprep.subr.mxu0 0.0
      %6749 = vmatpush1.msra.mxu0 0.0
      %6750 = vmatprep.subr.mxu0 0.0
      %6751 = vmatpush1.msra.mxu0 0.0
      %6752 = vmatprep.subr.mxu0 0.0
      %6753 = vmatpush1.msra.mxu0 0.0
      %6754 = vmatprep.subr.mxu0 0.0
      %6755 = vmatpush1.msra.mxu0 0.0
      %6756 = vmatprep.subr.mxu0 0.0
      %6757 = vmatpush1.msra.mxu0 0.0
      %6758 = vmatprep.subr.mxu0 0.0
      %6759 = vmatpush1.msra.mxu0 0.0
      %6760 = vmatprep.subr.mxu0 0.0
      %6761 = vmatpush1.msra.mxu0 0.0
      %6762 = vmatprep.subr.mxu0 0.0
      %6763 = vmatpush1.msra.mxu0 0.0
      %6764 = vmatprep.subr.mxu0 0.0
      %6765 = vmatpush1.msra.mxu0 0.0
      %6766 = vmatprep.subr.mxu0 0.0
      %6767 = vmatpush1.msra.mxu0 0.0
      %6768 = vmatprep.subr.mxu0 0.0
      %6769 = vmatpush1.msra.mxu0 0.0
      %6770 = vmatprep.subr.mxu0 0.0
      %6771 = vmatpush1.msra.mxu0 0.0
      %6772 = vmatprep.subr.mxu0 0.0
      %6773 = vmatpush1.msra.mxu0 0.0
      %6774 = vmatprep.subr.mxu0 0.0
      %6775 = vmatpush1.msra.mxu0 0.0
      %6776 = vmatprep.subr.mxu0 0.0
      %6777 = vmatpush1.msra.mxu0 0.0
      %6778 = vmatprep.subr.mxu0 0.0
      %6779 = vmatpush1.msra.mxu0 0.0
      %6780 = vmatprep.subr.mxu0 0.0
      %6781 = vmatpush1.msra.mxu0 0.0
      %6782 = vmatprep.subr.mxu0 0.0
      %6783 = vmatpush1.msra.mxu0 0.0
      %6784 = vmatprep.subr.mxu0 0.0
      %6785 = vmatpush1.msra.mxu0 0.0
      %6786 = vmatprep.subr.mxu0 0.0
      %6787 = vmatpush1.msra.mxu0 0.0
      %6788 = vmatprep.subr.mxu0 0.0
      %6789 = vmatpush1.msra.mxu0 0.0
      %6790 = vmatprep.subr.mxu0 0.0
      %6791 = vmatpush1.msra.mxu0 0.0
      %6792 = vmatprep.mubr.f32.mxu0 0.0
      %v6793 = vand.u32 %v1884, 4294901760
      %6794 = vmatmul.mubr.f32.gmra.mrb[0].mxu0 %v6793
      %v6795 = vpop.f32.mrb[0].mxu0
      %v6796 = vadd.f32 %v6697, %v6795
      %v6797 = vpop.f32.mrb[0].mxu0
      %6798 = vmatprep.mubr.f32.mxu0 0.0
      %v6799 = vand.u32 %v1887, 4294901760
      %6800 = vmatmul.mubr.f32.gmra.mrb[0].mxu0 %v6799
      %v6801 = vpop.f32.mrb[0].mxu0
      %v6802 = vadd.f32 %v6703, %v6801
      %v6803 = vpop.f32.mrb[0].mxu0
      %6804 = vmatprep.mubr.f32.mxu0 0.0
      %v6805 = vand.u32 %v1890, 4294901760
      %6806 = vmatmul.mubr.f32.gmra.mrb[0].mxu0 %v6805
      %v6807 = vpop.f32.mrb[0].mxu0
      %v6808 = vadd.f32 %v6709, %v6807
      %v6809 = vpop.f32.mrb[0].mxu0
      %6810 = vmatprep.mubr.f32.mxu0 0.0
      %v6811 = vand.u32 %v1893, 4294901760
      %6812 = vmatmul.mubr.f32.gmra.mrb[0].mxu0 %v6811
      %v6813 = vpop.f32.mrb[0].mxu0
      %v6814 = vadd.f32 %v6715, %v6813
      %v6815 = vpop.f32.mrb[0].mxu0
      %6816 = vdwg.mxu0
      %v6817 = vld [vmem:[%s2] sm:$0xff]
      %v6818 = vld [vmem:[%s2 + $0x8] sm:$0x7]
      %vm6819 = vcmp.gt.f32.partialorder %v6817, 0.5
      %vm6820 = vcmp.gt.f32.partialorder %v6818, 0.5
      %v6821 = vsel %vm6819, 1, 0
      %v6822 = vsel %vm6820, 1, 0
      %v6823 = vlaneseq
      %v6824 = vshrl.u32 %v6823, 7
      %v6825 = vsub.s32 0, %v6824
      %v6826 = vrot.slane %v6821, %v6825
      %v6827 = vlaneseq
      %v6828 = vshrl.u32 %v6827, 7
      %v6829 = vsub.s32 1, %v6828
      %v6830 = vrot.slane %v6821, %v6829
      %v6831 = vlaneseq
      %v6832 = vshrl.u32 %v6831, 7
      %v6833 = vsub.s32 2, %v6832
      %v6834 = vrot.slane %v6821, %v6833
      %v6835 = vlaneseq
      %v6836 = vshrl.u32 %v6835, 7
      %v6837 = vsub.s32 3, %v6836
      %v6838 = vrot.slane %v6821, %v6837
      %v6839 = vlaneseq
      %v6840 = vshrl.u32 %v6839, 7
      %v6841 = vsub.s32 4, %v6840
      %v6842 = vrot.slane %v6821, %v6841
      %v6843 = vlaneseq
      %v6844 = vshrl.u32 %v6843, 7
      %v6845 = vsub.s32 5, %v6844
      %v6846 = vrot.slane %v6821, %v6845
      %v6847 = vlaneseq
      %v6848 = vshrl.u32 %v6847, 7
      %v6849 = vsub.s32 6, %v6848
      %v6850 = vrot.slane %v6821, %v6849
      %v6851 = vlaneseq
      %v6852 = vshrl.u32 %v6851, 7
      %v6853 = vsub.s32 7, %v6852
      %v6854 = vrot.slane %v6821, %v6853
      %v6855 = vlaneseq
      %v6856 = vshrl.u32 %v6855, 7
      %v6857 = vsub.s32 0, %v6856
      %v6858 = vrot.slane %v6822, %v6857
      %v6859 = vlaneseq
      %v6860 = vshrl.u32 %v6859, 7
      %v6861 = vsub.s32 1, %v6860
      %v6862 = vrot.slane %v6822, %v6861
      %v6863 = vlaneseq
      %v6864 = vshrl.u32 %v6863, 7
      %v6865 = vsub.s32 2, %v6864
      %v6866 = vrot.slane %v6822, %v6865
      %vm6867 = vcmp.eq.s32.totalorder %v6826, 1
      %vm6868 = vcmp.eq.s32.totalorder %v6830, 1
      %vm6869 = vcmp.eq.s32.totalorder %v6834, 1
      %vm6870 = vcmp.eq.s32.totalorder %v6838, 1
      %vm6871 = vcmp.eq.s32.totalorder %v6842, 1
      %vm6872 = vcmp.eq.s32.totalorder %v6846, 1
      %vm6873 = vcmp.eq.s32.totalorder %v6850, 1
      %vm6874 = vcmp.eq.s32.totalorder %v6854, 1
      %vm6875 = vcmp.eq.s32.totalorder %v6858, 1
      %vm6876 = vcmp.eq.s32.totalorder %v6862, 1
      %vm6877 = vcmp.eq.s32.totalorder %v6866, 1
      %v6878 = vsel %vm6867, %v2716, -1e+30
      %v6879 = vsel %vm6868, %v2718, -1e+30
      %v6880 = vsel %vm6869, %v3562, -1e+30
      %v6881 = vsel %vm6870, %v3564, -1e+30
      %v6882 = vsel %vm6871, %v4408, -1e+30
      %v6883 = vsel %vm6872, %v4410, -1e+30
      %v6884 = vsel %vm6873, %v5254, -1e+30
      %v6885 = vsel %vm6874, %v5256, -1e+30
      %v6886 = vsel %vm6875, %v6100, -1e+30
      %v6887 = vsel %vm6876, %v6102, -1e+30
      %v6888 = vsel %vm6877, %v6796, -1e+30
      %v6889 = vsel %vm6867, %v2723, -1e+30
      %v6890 = vsel %vm6868, %v2725, -1e+30
      %v6891 = vsel %vm6869, %v3569, -1e+30
      %v6892 = vsel %vm6870, %v3571, -1e+30
      %v6893 = vsel %vm6871, %v4415, -1e+30
      %v6894 = vsel %vm6872, %v4417, -1e+30
      %v6895 = vsel %vm6873, %v5261, -1e+30
      %v6896 = vsel %vm6874, %v5263, -1e+30
      %v6897 = vsel %vm6875, %v6107, -1e+30
      %v6898 = vsel %vm6876, %v6109, -1e+30
      %v6899 = vsel %vm6877, %v6802, -1e+30
      %v6900 = vsel %vm6867, %v2730, -1e+30
      %v6901 = vsel %vm6868, %v2732, -1e+30
      %v6902 = vsel %vm6869, %v3576, -1e+30
      %v6903 = vsel %vm6870, %v3578, -1e+30
      %v6904 = vsel %vm6871, %v4422, -1e+30
      %v6905 = vsel %vm6872, %v4424, -1e+30
      %v6906 = vsel %vm6873, %v5268, -1e+30
      %v6907 = vsel %vm6874, %v5270, -1e+30
      %v6908 = vsel %vm6875, %v6114, -1e+30
      %v6909 = vsel %vm6876, %v6116, -1e+30
      %v6910 = vsel %vm6877, %v6808, -1e+30
      %v6911 = vsel %vm6867, %v2737, -1e+30
      %v6912 = vsel %vm6868, %v2739, -1e+30
      %v6913 = vsel %vm6869, %v3583, -1e+30
      %v6914 = vsel %vm6870, %v3585, -1e+30
      %v6915 = vsel %vm6871, %v4429, -1e+30
      %v6916 = vsel %vm6872, %v4431, -1e+30
      %v6917 = vsel %vm6873, %v5275, -1e+30
      %v6918 = vsel %vm6874, %v5277, -1e+30
      %v6919 = vsel %vm6875, %v6121, -1e+30
      %v6920 = vsel %vm6876, %v6123, -1e+30
      %v6921 = vsel %vm6877, %v6814, -1e+30
      %6966 = vrot.lane.b32.xlu0 %v6878, 127
      %v6967 = vpop.permute.xlu0 %6966
      %6968 = vrot.lane.b32.xlu0 %v6879, 127
      %v6969 = vpop.permute.xlu0 %6968
      %6970 = vrot.lane.b32.xlu0 %v6880, 127
      %v6971 = vpop.permute.xlu0 %6970
      %6972 = vrot.lane.b32.xlu0 %v6881, 127
      %v6973 = vpop.permute.xlu0 %6972
      %6974 = vrot.lane.b32.xlu0 %v6882, 127
      %v6975 = vpop.permute.xlu0 %6974
      %6976 = vrot.lane.b32.xlu0 %v6883, 127
      %v6977 = vpop.permute.xlu0 %6976
      %6978 = vrot.lane.b32.xlu0 %v6884, 127
      %v6979 = vpop.permute.xlu0 %6978
      %6980 = vrot.lane.b32.xlu0 %v6885, 127
      %v6981 = vpop.permute.xlu0 %6980
      %6982 = vrot.lane.b32.xlu0 %v6886, 127
      %v6983 = vpop.permute.xlu0 %6982
      %6984 = vrot.lane.b32.xlu0 %v6887, 127
      %v6985 = vpop.permute.xlu0 %6984
      %6986 = vrot.lane.b32.xlu0 %v6888, 127
      %v6987 = vpop.permute.xlu0 %6986
      %6988 = vrot.lane.b32.xlu0 %v6889, 127
      %v6989 = vpop.permute.xlu0 %6988
      %6990 = vrot.lane.b32.xlu0 %v6890, 127
      %v6991 = vpop.permute.xlu0 %6990
      %6992 = vrot.lane.b32.xlu0 %v6891, 127
      %v6993 = vpop.permute.xlu0 %6992
      %6994 = vrot.lane.b32.xlu0 %v6892, 127
      %v6995 = vpop.permute.xlu0 %6994
      %6996 = vrot.lane.b32.xlu0 %v6893, 127
      %v6997 = vpop.permute.xlu0 %6996
      %6998 = vrot.lane.b32.xlu0 %v6894, 127
      %v6999 = vpop.permute.xlu0 %6998
      %7000 = vrot.lane.b32.xlu0 %v6895, 127
      %v7001 = vpop.permute.xlu0 %7000
      %7002 = vrot.lane.b32.xlu0 %v6896, 127
      %v7003 = vpop.permute.xlu0 %7002
      %7004 = vrot.lane.b32.xlu0 %v6897, 127
      %v7005 = vpop.permute.xlu0 %7004
      %7006 = vrot.lane.b32.xlu0 %v6898, 127
      %v7007 = vpop.permute.xlu0 %7006
      %7008 = vrot.lane.b32.xlu0 %v6899, 127
      %v7009 = vpop.permute.xlu0 %7008
      %7010 = vrot.lane.b32.xlu0 %v6900, 127
      %v7011 = vpop.permute.xlu0 %7010
      %7012 = vrot.lane.b32.xlu0 %v6901, 127
      %v7013 = vpop.permute.xlu0 %7012
      %7014 = vrot.lane.b32.xlu0 %v6902, 127
      %v7015 = vpop.permute.xlu0 %7014
      %7016 = vrot.lane.b32.xlu0 %v6903, 127
      %v7017 = vpop.permute.xlu0 %7016
      %7018 = vrot.lane.b32.xlu0 %v6904, 127
      %v7019 = vpop.permute.xlu0 %7018
      %7020 = vrot.lane.b32.xlu0 %v6905, 127
      %v7021 = vpop.permute.xlu0 %7020
      %7022 = vrot.lane.b32.xlu0 %v6906, 127
      %v7023 = vpop.permute.xlu0 %7022
      %7024 = vrot.lane.b32.xlu0 %v6907, 127
      %v7025 = vpop.permute.xlu0 %7024
      %7026 = vrot.lane.b32.xlu0 %v6908, 127
      %v7027 = vpop.permute.xlu0 %7026
      %7028 = vrot.lane.b32.xlu0 %v6909, 127
      %v7029 = vpop.permute.xlu0 %7028
      %7030 = vrot.lane.b32.xlu0 %v6910, 127
      %v7031 = vpop.permute.xlu0 %7030
      %7032 = vrot.lane.b32.xlu0 %v6911, 127
      %v7033 = vpop.permute.xlu0 %7032
      %7034 = vrot.lane.b32.xlu0 %v6912, 127
      %v7035 = vpop.permute.xlu0 %7034
      %7036 = vrot.lane.b32.xlu0 %v6913, 127
      %v7037 = vpop.permute.xlu0 %7036
      %7038 = vrot.lane.b32.xlu0 %v6914, 127
      %v7039 = vpop.permute.xlu0 %7038
      %7040 = vrot.lane.b32.xlu0 %v6915, 127
      %v7041 = vpop.permute.xlu0 %7040
      %7042 = vrot.lane.b32.xlu0 %v6916, 127
      %v7043 = vpop.permute.xlu0 %7042
      %7044 = vrot.lane.b32.xlu0 %v6917, 127
      %v7045 = vpop.permute.xlu0 %7044
      %7046 = vrot.lane.b32.xlu0 %v6918, 127
      %v7047 = vpop.permute.xlu0 %7046
      %7048 = vrot.lane.b32.xlu0 %v6919, 127
      %v7049 = vpop.permute.xlu0 %7048
      %7050 = vrot.lane.b32.xlu0 %v6920, 127
      %v7051 = vpop.permute.xlu0 %7050
      %7052 = vrot.lane.b32.xlu0 %v6921, 127
      %v7053 = vpop.permute.xlu0 %7052
      %v7054 = vsel %vm242, %v6967, %v6969
      %v7055 = vsel %vm242, %v6969, %v6971
      %v7056 = vsel %vm242, %v6971, %v6973
      %v7057 = vsel %vm242, %v6973, %v6975
      %v7058 = vsel %vm242, %v6975, %v6977
      %v7059 = vsel %vm242, %v6977, %v6979
      %v7060 = vsel %vm242, %v6979, %v6981
      %v7061 = vsel %vm242, %v6981, %v6983
      %v7062 = vsel %vm242, %v6983, %v6985
      %v7063 = vsel %vm242, %v6985, %v6987
      %v7064 = vsel %vm242, %v6989, %v6991
      %v7065 = vsel %vm242, %v6991, %v6993
      %v7066 = vsel %vm242, %v6993, %v6995
      %v7067 = vsel %vm242, %v6995, %v6997
      %v7068 = vsel %vm242, %v6997, %v6999
      %v7069 = vsel %vm242, %v6999, %v7001
      %v7070 = vsel %vm242, %v7001, %v7003
      %v7071 = vsel %vm242, %v7003, %v7005
      %v7072 = vsel %vm242, %v7005, %v7007
      %v7073 = vsel %vm242, %v7007, %v7009
      %v7074 = vsel %vm242, %v7011, %v7013
      %v7075 = vsel %vm242, %v7013, %v7015
      %v7076 = vsel %vm242, %v7015, %v7017
      %v7077 = vsel %vm242, %v7017, %v7019
      %v7078 = vsel %vm242, %v7019, %v7021
      %v7079 = vsel %vm242, %v7021, %v7023
      %v7080 = vsel %vm242, %v7023, %v7025
      %v7081 = vsel %vm242, %v7025, %v7027
      %v7082 = vsel %vm242, %v7027, %v7029
      %v7083 = vsel %vm242, %v7029, %v7031
      %v7084 = vsel %vm242, %v7033, %v7035
      %v7085 = vsel %vm242, %v7035, %v7037
      %v7086 = vsel %vm242, %v7037, %v7039
      %v7087 = vsel %vm242, %v7039, %v7041
      %v7088 = vsel %vm242, %v7041, %v7043
      %v7089 = vsel %vm242, %v7043, %v7045
      %v7090 = vsel %vm242, %v7045, %v7047
      %v7091 = vsel %vm242, %v7047, %v7049
      %v7092 = vsel %vm242, %v7049, %v7051
      %v7093 = vsel %vm242, %v7051, %v7053
      %v7138 = vmax.f32 %v6878, %v7054
      %v7139 = vmax.f32 %v6879, %v7055
      %v7140 = vmax.f32 %v6880, %v7056
      %v7141 = vmax.f32 %v6881, %v7057
      %v7142 = vmax.f32 %v6882, %v7058
      %v7143 = vmax.f32 %v6883, %v7059
      %v7144 = vmax.f32 %v6884, %v7060
      %v7145 = vmax.f32 %v6885, %v7061
      %v7146 = vmax.f32 %v6886, %v7062
      %v7147 = vmax.f32 %v6887, %v7063
      %v7148 = vmax.f32 %v6888, %v6987
      %v7149 = vmax.f32 %v6889, %v7064
      %v7150 = vmax.f32 %v6890, %v7065
      %v7151 = vmax.f32 %v6891, %v7066
      %v7152 = vmax.f32 %v6892, %v7067
      %v7153 = vmax.f32 %v6893, %v7068
      %v7154 = vmax.f32 %v6894, %v7069
      %v7155 = vmax.f32 %v6895, %v7070
      %v7156 = vmax.f32 %v6896, %v7071
      %v7157 = vmax.f32 %v6897, %v7072
      %v7158 = vmax.f32 %v6898, %v7073
      %v7159 = vmax.f32 %v6899, %v7009
      %v7160 = vmax.f32 %v6900, %v7074
      %v7161 = vmax.f32 %v6901, %v7075
      %v7162 = vmax.f32 %v6902, %v7076
      %v7163 = vmax.f32 %v6903, %v7077
      %v7164 = vmax.f32 %v6904, %v7078
      %v7165 = vmax.f32 %v6905, %v7079
      %v7166 = vmax.f32 %v6906, %v7080
      %v7167 = vmax.f32 %v6907, %v7081
      %v7168 = vmax.f32 %v6908, %v7082
      %v7169 = vmax.f32 %v6909, %v7083
      %v7170 = vmax.f32 %v6910, %v7031
      %v7171 = vmax.f32 %v6911, %v7084
      %v7172 = vmax.f32 %v6912, %v7085
      %v7173 = vmax.f32 %v6913, %v7086
      %v7174 = vmax.f32 %v6914, %v7087
      %v7175 = vmax.f32 %v6915, %v7088
      %v7176 = vmax.f32 %v6916, %v7089
      %v7177 = vmax.f32 %v6917, %v7090
      %v7178 = vmax.f32 %v6918, %v7091
      %v7179 = vmax.f32 %v6919, %v7092
      %v7180 = vmax.f32 %v6920, %v7093
      %v7181 = vmax.f32 %v6921, %v7053
      %7182 = vrot.lane.b32.xlu0 %v6878, 126
      %v7183 = vpop.permute.xlu0 %7182
      %7184 = vrot.lane.b32.xlu0 %v6879, 126
      %v7185 = vpop.permute.xlu0 %7184
      %7186 = vrot.lane.b32.xlu0 %v6880, 126
      %v7187 = vpop.permute.xlu0 %7186
      %7188 = vrot.lane.b32.xlu0 %v6881, 126
      %v7189 = vpop.permute.xlu0 %7188
      %7190 = vrot.lane.b32.xlu0 %v6882, 126
      %v7191 = vpop.permute.xlu0 %7190
      %7192 = vrot.lane.b32.xlu0 %v6883, 126
      %v7193 = vpop.permute.xlu0 %7192
      %7194 = vrot.lane.b32.xlu0 %v6884, 126
      %v7195 = vpop.permute.xlu0 %7194
      %7196 = vrot.lane.b32.xlu0 %v6885, 126
      %v7197 = vpop.permute.xlu0 %7196
      %7198 = vrot.lane.b32.xlu0 %v6886, 126
      %v7199 = vpop.permute.xlu0 %7198
      %7200 = vrot.lane.b32.xlu0 %v6887, 126
      %v7201 = vpop.permute.xlu0 %7200
      %7202 = vrot.lane.b32.xlu0 %v6888, 126
      %v7203 = vpop.permute.xlu0 %7202
      %7204 = vrot.lane.b32.xlu0 %v6889, 126
      %v7205 = vpop.permute.xlu0 %7204
      %7206 = vrot.lane.b32.xlu0 %v6890, 126
      %v7207 = vpop.permute.xlu0 %7206
      %7208 = vrot.lane.b32.xlu0 %v6891, 126
      %v7209 = vpop.permute.xlu0 %7208
      %7210 = vrot.lane.b32.xlu0 %v6892, 126
      %v7211 = vpop.permute.xlu0 %7210
      %7212 = vrot.lane.b32.xlu0 %v6893, 126
      %v7213 = vpop.permute.xlu0 %7212
      %7214 = vrot.lane.b32.xlu0 %v6894, 126
      %v7215 = vpop.permute.xlu0 %7214
      %7216 = vrot.lane.b32.xlu0 %v6895, 126
      %v7217 = vpop.permute.xlu0 %7216
      %7218 = vrot.lane.b32.xlu0 %v6896, 126
      %v7219 = vpop.permute.xlu0 %7218
      %7220 = vrot.lane.b32.xlu0 %v6897, 126
      %v7221 = vpop.permute.xlu0 %7220
      %7222 = vrot.lane.b32.xlu0 %v6898, 126
      %v7223 = vpop.permute.xlu0 %7222
      %7224 = vrot.lane.b32.xlu0 %v6899, 126
      %v7225 = vpop.permute.xlu0 %7224
      %7226 = vrot.lane.b32.xlu0 %v6900, 126
      %v7227 = vpop.permute.xlu0 %7226
      %7228 = vrot.lane.b32.xlu0 %v6901, 126
      %v7229 = vpop.permute.xlu0 %7228
      %7230 = vrot.lane.b32.xlu0 %v6902, 126
      %v7231 = vpop.permute.xlu0 %7230
      %7232 = vrot.lane.b32.xlu0 %v6903, 126
      %v7233 = vpop.permute.xlu0 %7232
      %7234 = vrot.lane.b32.xlu0 %v6904, 126
      %v7235 = vpop.permute.xlu0 %7234
      %7236 = vrot.lane.b32.xlu0 %v6905, 126
      %v7237 = vpop.permute.xlu0 %7236
      %7238 = vrot.lane.b32.xlu0 %v6906, 126
      %v7239 = vpop.permute.xlu0 %7238
      %7240 = vrot.lane.b32.xlu0 %v6907, 126
      %v7241 = vpop.permute.xlu0 %7240
      %7242 = vrot.lane.b32.xlu0 %v6908, 126
      %v7243 = vpop.permute.xlu0 %7242
      %7244 = vrot.lane.b32.xlu0 %v6909, 126
      %v7245 = vpop.permute.xlu0 %7244
      %7246 = vrot.lane.b32.xlu0 %v6910, 126
      %v7247 = vpop.permute.xlu0 %7246
      %7248 = vrot.lane.b32.xlu0 %v6911, 126
      %v7249 = vpop.permute.xlu0 %7248
      %7250 = vrot.lane.b32.xlu0 %v6912, 126
      %v7251 = vpop.permute.xlu0 %7250
      %7252 = vrot.lane.b32.xlu0 %v6913, 126
      %v7253 = vpop.permute.xlu0 %7252
      %7254 = vrot.lane.b32.xlu0 %v6914, 126
      %v7255 = vpop.permute.xlu0 %7254
      %7256 = vrot.lane.b32.xlu0 %v6915, 126
      %v7257 = vpop.permute.xlu0 %7256
      %7258 = vrot.lane.b32.xlu0 %v6916, 126
      %v7259 = vpop.permute.xlu0 %7258
      %7260 = vrot.lane.b32.xlu0 %v6917, 126
      %v7261 = vpop.permute.xlu0 %7260
      %7262 = vrot.lane.b32.xlu0 %v6918, 126
      %v7263 = vpop.permute.xlu0 %7262
      %7264 = vrot.lane.b32.xlu0 %v6919, 126
      %v7265 = vpop.permute.xlu0 %7264
      %7266 = vrot.lane.b32.xlu0 %v6920, 126
      %v7267 = vpop.permute.xlu0 %7266
      %7268 = vrot.lane.b32.xlu0 %v6921, 126
      %v7269 = vpop.permute.xlu0 %7268
      %v7270 = vsel %vm312, %v7183, %v7185
      %v7271 = vsel %vm312, %v7185, %v7187
      %v7272 = vsel %vm312, %v7187, %v7189
      %v7273 = vsel %vm312, %v7189, %v7191
      %v7274 = vsel %vm312, %v7191, %v7193
      %v7275 = vsel %vm312, %v7193, %v7195
      %v7276 = vsel %vm312, %v7195, %v7197
      %v7277 = vsel %vm312, %v7197, %v7199
      %v7278 = vsel %vm312, %v7199, %v7201
      %v7279 = vsel %vm312, %v7201, %v7203
      %v7280 = vsel %vm312, %v7205, %v7207
      %v7281 = vsel %vm312, %v7207, %v7209
      %v7282 = vsel %vm312, %v7209, %v7211
      %v7283 = vsel %vm312, %v7211, %v7213
      %v7284 = vsel %vm312, %v7213, %v7215
      %v7285 = vsel %vm312, %v7215, %v7217
      %v7286 = vsel %vm312, %v7217, %v7219
      %v7287 = vsel %vm312, %v7219, %v7221
      %v7288 = vsel %vm312, %v7221, %v7223
      %v7289 = vsel %vm312, %v7223, %v7225
      %v7290 = vsel %vm312, %v7227, %v7229
      %v7291 = vsel %vm312, %v7229, %v7231
      %v7292 = vsel %vm312, %v7231, %v7233
      %v7293 = vsel %vm312, %v7233, %v7235
      %v7294 = vsel %vm312, %v7235, %v7237
      %v7295 = vsel %vm312, %v7237, %v7239
      %v7296 = vsel %vm312, %v7239, %v7241
      %v7297 = vsel %vm312, %v7241, %v7243
      %v7298 = vsel %vm312, %v7243, %v7245
      %v7299 = vsel %vm312, %v7245, %v7247
      %v7300 = vsel %vm312, %v7249, %v7251
      %v7301 = vsel %vm312, %v7251, %v7253
      %v7302 = vsel %vm312, %v7253, %v7255
      %v7303 = vsel %vm312, %v7255, %v7257
      %v7304 = vsel %vm312, %v7257, %v7259
      %v7305 = vsel %vm312, %v7259, %v7261
      %v7306 = vsel %vm312, %v7261, %v7263
      %v7307 = vsel %vm312, %v7263, %v7265
      %v7308 = vsel %vm312, %v7265, %v7267
      %v7309 = vsel %vm312, %v7267, %v7269
      %v7354 = vmax.f32 %v7138, %v7270
      %v7355 = vmax.f32 %v7139, %v7271
      %v7356 = vmax.f32 %v7140, %v7272
      %v7357 = vmax.f32 %v7141, %v7273
      %v7358 = vmax.f32 %v7142, %v7274
      %v7359 = vmax.f32 %v7143, %v7275
      %v7360 = vmax.f32 %v7144, %v7276
      %v7361 = vmax.f32 %v7145, %v7277
      %v7362 = vmax.f32 %v7146, %v7278
      %v7363 = vmax.f32 %v7147, %v7279
      %v7364 = vmax.f32 %v7148, %v7203
      %v7365 = vmax.f32 %v7149, %v7280
      %v7366 = vmax.f32 %v7150, %v7281
      %v7367 = vmax.f32 %v7151, %v7282
      %v7368 = vmax.f32 %v7152, %v7283
      %v7369 = vmax.f32 %v7153, %v7284
      %v7370 = vmax.f32 %v7154, %v7285
      %v7371 = vmax.f32 %v7155, %v7286
      %v7372 = vmax.f32 %v7156, %v7287
      %v7373 = vmax.f32 %v7157, %v7288
      %v7374 = vmax.f32 %v7158, %v7289
      %v7375 = vmax.f32 %v7159, %v7225
      %v7376 = vmax.f32 %v7160, %v7290
      %v7377 = vmax.f32 %v7161, %v7291
      %v7378 = vmax.f32 %v7162, %v7292
      %v7379 = vmax.f32 %v7163, %v7293
      %v7380 = vmax.f32 %v7164, %v7294
      %v7381 = vmax.f32 %v7165, %v7295
      %v7382 = vmax.f32 %v7166, %v7296
      %v7383 = vmax.f32 %v7167, %v7297
      %v7384 = vmax.f32 %v7168, %v7298
      %v7385 = vmax.f32 %v7169, %v7299
      %v7386 = vmax.f32 %v7170, %v7247
      %v7387 = vmax.f32 %v7171, %v7300
      %v7388 = vmax.f32 %v7172, %v7301
      %v7389 = vmax.f32 %v7173, %v7302
      %v7390 = vmax.f32 %v7174, %v7303
      %v7391 = vmax.f32 %v7175, %v7304
      %v7392 = vmax.f32 %v7176, %v7305
      %v7393 = vmax.f32 %v7177, %v7306
      %v7394 = vmax.f32 %v7178, %v7307
      %v7395 = vmax.f32 %v7179, %v7308
      %v7396 = vmax.f32 %v7180, %v7309
      %v7397 = vmax.f32 %v7181, %v7269
      %7442 = vrot.lane.b32.xlu0 %v7354, 91
      %v7443 = vpop.permute.xlu0 %7442
      %7444 = vrot.lane.b32.xlu0 %v7355, 91
      %v7445 = vpop.permute.xlu0 %7444
      %7446 = vrot.lane.b32.xlu0 %v7356, 91
      %v7447 = vpop.permute.xlu0 %7446
      %7448 = vrot.lane.b32.xlu0 %v7357, 91
      %v7449 = vpop.permute.xlu0 %7448
      %7450 = vrot.lane.b32.xlu0 %v7358, 91
      %v7451 = vpop.permute.xlu0 %7450
      %7452 = vrot.lane.b32.xlu0 %v7359, 91
      %v7453 = vpop.permute.xlu0 %7452
      %7454 = vrot.lane.b32.xlu0 %v7360, 91
      %v7455 = vpop.permute.xlu0 %7454
      %7456 = vrot.lane.b32.xlu0 %v7361, 91
      %v7457 = vpop.permute.xlu0 %7456
      %7458 = vrot.lane.b32.xlu0 %v7362, 91
      %v7459 = vpop.permute.xlu0 %7458
      %7460 = vrot.lane.b32.xlu0 %v7363, 91
      %v7461 = vpop.permute.xlu0 %7460
      %7462 = vrot.lane.b32.xlu0 %v7364, 91
      %v7463 = vpop.permute.xlu0 %7462
      %7464 = vrot.lane.b32.xlu0 %v7365, 91
      %v7465 = vpop.permute.xlu0 %7464
      %7466 = vrot.lane.b32.xlu0 %v7366, 91
      %v7467 = vpop.permute.xlu0 %7466
      %7468 = vrot.lane.b32.xlu0 %v7367, 91
      %v7469 = vpop.permute.xlu0 %7468
      %7470 = vrot.lane.b32.xlu0 %v7368, 91
      %v7471 = vpop.permute.xlu0 %7470
      %7472 = vrot.lane.b32.xlu0 %v7369, 91
      %v7473 = vpop.permute.xlu0 %7472
      %7474 = vrot.lane.b32.xlu0 %v7370, 91
      %v7475 = vpop.permute.xlu0 %7474
      %7476 = vrot.lane.b32.xlu0 %v7371, 91
      %v7477 = vpop.permute.xlu0 %7476
      %7478 = vrot.lane.b32.xlu0 %v7372, 91
      %v7479 = vpop.permute.xlu0 %7478
      %7480 = vrot.lane.b32.xlu0 %v7373, 91
      %v7481 = vpop.permute.xlu0 %7480
      %7482 = vrot.lane.b32.xlu0 %v7374, 91
      %v7483 = vpop.permute.xlu0 %7482
      %7484 = vrot.lane.b32.xlu0 %v7375, 91
      %v7485 = vpop.permute.xlu0 %7484
      %7486 = vrot.lane.b32.xlu0 %v7376, 91
      %v7487 = vpop.permute.xlu0 %7486
      %7488 = vrot.lane.b32.xlu0 %v7377, 91
      %v7489 = vpop.permute.xlu0 %7488
      %7490 = vrot.lane.b32.xlu0 %v7378, 91
      %v7491 = vpop.permute.xlu0 %7490
      %7492 = vrot.lane.b32.xlu0 %v7379, 91
      %v7493 = vpop.permute.xlu0 %7492
      %7494 = vrot.lane.b32.xlu0 %v7380, 91
      %v7495 = vpop.permute.xlu0 %7494
      %7496 = vrot.lane.b32.xlu0 %v7381, 91
      %v7497 = vpop.permute.xlu0 %7496
      %7498 = vrot.lane.b32.xlu0 %v7382, 91
      %v7499 = vpop.permute.xlu0 %7498
      %7500 = vrot.lane.b32.xlu0 %v7383, 91
      %v7501 = vpop.permute.xlu0 %7500
      %7502 = vrot.lane.b32.xlu0 %v7384, 91
      %v7503 = vpop.permute.xlu0 %7502
      %7504 = vrot.lane.b32.xlu0 %v7385, 91
      %v7505 = vpop.permute.xlu0 %7504
      %7506 = vrot.lane.b32.xlu0 %v7386, 91
      %v7507 = vpop.permute.xlu0 %7506
      %7508 = vrot.lane.b32.xlu0 %v7387, 91
      %v7509 = vpop.permute.xlu0 %7508
      %7510 = vrot.lane.b32.xlu0 %v7388, 91
      %v7511 = vpop.permute.xlu0 %7510
      %7512 = vrot.lane.b32.xlu0 %v7389, 91
      %v7513 = vpop.permute.xlu0 %7512
      %7514 = vrot.lane.b32.xlu0 %v7390, 91
      %v7515 = vpop.permute.xlu0 %7514
      %7516 = vrot.lane.b32.xlu0 %v7391, 91
      %v7517 = vpop.permute.xlu0 %7516
      %7518 = vrot.lane.b32.xlu0 %v7392, 91
      %v7519 = vpop.permute.xlu0 %7518
      %7520 = vrot.lane.b32.xlu0 %v7393, 91
      %v7521 = vpop.permute.xlu0 %7520
      %7522 = vrot.lane.b32.xlu0 %v7394, 91
      %v7523 = vpop.permute.xlu0 %7522
      %7524 = vrot.lane.b32.xlu0 %v7395, 91
      %v7525 = vpop.permute.xlu0 %7524
      %7526 = vrot.lane.b32.xlu0 %v7396, 91
      %v7527 = vpop.permute.xlu0 %7526
      %7528 = vrot.lane.b32.xlu0 %v7397, 91
      %v7529 = vpop.permute.xlu0 %7528
      %v7530 = vsel %vm527, %v7443, %v7445
      %v7531 = vsel %vm527, %v7445, %v7447
      %v7532 = vsel %vm527, %v7447, %v7449
      %v7533 = vsel %vm527, %v7449, %v7451
      %v7534 = vsel %vm527, %v7451, %v7453
      %v7535 = vsel %vm527, %v7453, %v7455
      %v7536 = vsel %vm527, %v7455, %v7457
      %v7537 = vsel %vm527, %v7457, %v7459
      %v7538 = vsel %vm527, %v7459, %v7461
      %v7539 = vsel %vm527, %v7461, %v7463
      %v7540 = vsel %vm527, %v7465, %v7467
      %v7541 = vsel %vm527, %v7467, %v7469
      %v7542 = vsel %vm527, %v7469, %v7471
      %v7543 = vsel %vm527, %v7471, %v7473
      %v7544 = vsel %vm527, %v7473, %v7475
      %v7545 = vsel %vm527, %v7475, %v7477
      %v7546 = vsel %vm527, %v7477, %v7479
      %v7547 = vsel %vm527, %v7479, %v7481
      %v7548 = vsel %vm527, %v7481, %v7483
      %v7549 = vsel %vm527, %v7483, %v7485
      %v7550 = vsel %vm527, %v7487, %v7489
      %v7551 = vsel %vm527, %v7489, %v7491
      %v7552 = vsel %vm527, %v7491, %v7493
      %v7553 = vsel %vm527, %v7493, %v7495
      %v7554 = vsel %vm527, %v7495, %v7497
      %v7555 = vsel %vm527, %v7497, %v7499
      %v7556 = vsel %vm527, %v7499, %v7501
      %v7557 = vsel %vm527, %v7501, %v7503
      %v7558 = vsel %vm527, %v7503, %v7505
      %v7559 = vsel %vm527, %v7505, %v7507
      %v7560 = vsel %vm527, %v7509, %v7511
      %v7561 = vsel %vm527, %v7511, %v7513
      %v7562 = vsel %vm527, %v7513, %v7515
      %v7563 = vsel %vm527, %v7515, %v7517
      %v7564 = vsel %vm527, %v7517, %v7519
      %v7565 = vsel %vm527, %v7519, %v7521
      %v7566 = vsel %vm527, %v7521, %v7523
      %v7567 = vsel %vm527, %v7523, %v7525
      %v7568 = vsel %vm527, %v7525, %v7527
      %v7569 = vsel %vm527, %v7527, %v7529
      %v7614 = vmax.f32 %v7354, %v7530
      %v7615 = vmax.f32 %v7355, %v7531
      %v7616 = vmax.f32 %v7356, %v7532
      %v7617 = vmax.f32 %v7357, %v7533
      %v7618 = vmax.f32 %v7358, %v7534
      %v7619 = vmax.f32 %v7359, %v7535
      %v7620 = vmax.f32 %v7360, %v7536
      %v7621 = vmax.f32 %v7361, %v7537
      %v7622 = vmax.f32 %v7362, %v7538
      %v7623 = vmax.f32 %v7363, %v7539
      %v7624 = vmax.f32 %v7364, %v7463
      %v7625 = vmax.f32 %v7365, %v7540
      %v7626 = vmax.f32 %v7366, %v7541
      %v7627 = vmax.f32 %v7367, %v7542
      %v7628 = vmax.f32 %v7368, %v7543
      %v7629 = vmax.f32 %v7369, %v7544
      %v7630 = vmax.f32 %v7370, %v7545
      %v7631 = vmax.f32 %v7371, %v7546
      %v7632 = vmax.f32 %v7372, %v7547
      %v7633 = vmax.f32 %v7373, %v7548
      %v7634 = vmax.f32 %v7374, %v7549
      %v7635 = vmax.f32 %v7375, %v7485
      %v7636 = vmax.f32 %v7376, %v7550
      %v7637 = vmax.f32 %v7377, %v7551
      %v7638 = vmax.f32 %v7378, %v7552
      %v7639 = vmax.f32 %v7379, %v7553
      %v7640 = vmax.f32 %v7380, %v7554
      %v7641 = vmax.f32 %v7381, %v7555
      %v7642 = vmax.f32 %v7382, %v7556
      %v7643 = vmax.f32 %v7383, %v7557
      %v7644 = vmax.f32 %v7384, %v7558
      %v7645 = vmax.f32 %v7385, %v7559
      %v7646 = vmax.f32 %v7386, %v7507
      %v7647 = vmax.f32 %v7387, %v7560
      %v7648 = vmax.f32 %v7388, %v7561
      %v7649 = vmax.f32 %v7389, %v7562
      %v7650 = vmax.f32 %v7390, %v7563
      %v7651 = vmax.f32 %v7391, %v7564
      %v7652 = vmax.f32 %v7392, %v7565
      %v7653 = vmax.f32 %v7393, %v7566
      %v7654 = vmax.f32 %v7394, %v7567
      %v7655 = vmax.f32 %v7395, %v7568
      %v7656 = vmax.f32 %v7396, %v7569
      %v7657 = vmax.f32 %v7397, %v7529
      %7658 = vrot.lane.b32.xlu0 %v7354, 54
      %v7659 = vpop.permute.xlu0 %7658
      %7660 = vrot.lane.b32.xlu0 %v7355, 54
      %v7661 = vpop.permute.xlu0 %7660
      %7662 = vrot.lane.b32.xlu0 %v7356, 54
      %v7663 = vpop.permute.xlu0 %7662
      %7664 = vrot.lane.b32.xlu0 %v7357, 54
      %v7665 = vpop.permute.xlu0 %7664
      %7666 = vrot.lane.b32.xlu0 %v7358, 54
      %v7667 = vpop.permute.xlu0 %7666
      %7668 = vrot.lane.b32.xlu0 %v7359, 54
      %v7669 = vpop.permute.xlu0 %7668
      %7670 = vrot.lane.b32.xlu0 %v7360, 54
      %v7671 = vpop.permute.xlu0 %7670
      %7672 = vrot.lane.b32.xlu0 %v7361, 54
      %v7673 = vpop.permute.xlu0 %7672
      %7674 = vrot.lane.b32.xlu0 %v7362, 54
      %v7675 = vpop.permute.xlu0 %7674
      %7676 = vrot.lane.b32.xlu0 %v7363, 54
      %v7677 = vpop.permute.xlu0 %7676
      %7678 = vrot.lane.b32.xlu0 %v7364, 54
      %v7679 = vpop.permute.xlu0 %7678
      %7680 = vrot.lane.b32.xlu0 %v7365, 54
      %v7681 = vpop.permute.xlu0 %7680
      %7682 = vrot.lane.b32.xlu0 %v7366, 54
      %v7683 = vpop.permute.xlu0 %7682
      %7684 = vrot.lane.b32.xlu0 %v7367, 54
      %v7685 = vpop.permute.xlu0 %7684
      %7686 = vrot.lane.b32.xlu0 %v7368, 54
      %v7687 = vpop.permute.xlu0 %7686
      %7688 = vrot.lane.b32.xlu0 %v7369, 54
      %v7689 = vpop.permute.xlu0 %7688
      %7690 = vrot.lane.b32.xlu0 %v7370, 54
      %v7691 = vpop.permute.xlu0 %7690
      %7692 = vrot.lane.b32.xlu0 %v7371, 54
      %v7693 = vpop.permute.xlu0 %7692
      %7694 = vrot.lane.b32.xlu0 %v7372, 54
      %v7695 = vpop.permute.xlu0 %7694
      %7696 = vrot.lane.b32.xlu0 %v7373, 54
      %v7697 = vpop.permute.xlu0 %7696
      %7698 = vrot.lane.b32.xlu0 %v7374, 54
      %v7699 = vpop.permute.xlu0 %7698
      %7700 = vrot.lane.b32.xlu0 %v7375, 54
      %v7701 = vpop.permute.xlu0 %7700
      %7702 = vrot.lane.b32.xlu0 %v7376, 54
      %v7703 = vpop.permute.xlu0 %7702
      %7704 = vrot.lane.b32.xlu0 %v7377, 54
      %v7705 = vpop.permute.xlu0 %7704
      %7706 = vrot.lane.b32.xlu0 %v7378, 54
      %v7707 = vpop.permute.xlu0 %7706
      %7708 = vrot.lane.b32.xlu0 %v7379, 54
      %v7709 = vpop.permute.xlu0 %7708
      %7710 = vrot.lane.b32.xlu0 %v7380, 54
      %v7711 = vpop.permute.xlu0 %7710
      %7712 = vrot.lane.b32.xlu0 %v7381, 54
      %v7713 = vpop.permute.xlu0 %7712
      %7714 = vrot.lane.b32.xlu0 %v7382, 54
      %v7715 = vpop.permute.xlu0 %7714
      %7716 = vrot.lane.b32.xlu0 %v7383, 54
      %v7717 = vpop.permute.xlu0 %7716
      %7718 = vrot.lane.b32.xlu0 %v7384, 54
      %v7719 = vpop.permute.xlu0 %7718
      %7720 = vrot.lane.b32.xlu0 %v7385, 54
      %v7721 = vpop.permute.xlu0 %7720
      %7722 = vrot.lane.b32.xlu0 %v7386, 54
      %v7723 = vpop.permute.xlu0 %7722
      %7724 = vrot.lane.b32.xlu0 %v7387, 54
      %v7725 = vpop.permute.xlu0 %7724
      %7726 = vrot.lane.b32.xlu0 %v7388, 54
      %v7727 = vpop.permute.xlu0 %7726
      %7728 = vrot.lane.b32.xlu0 %v7389, 54
      %v7729 = vpop.permute.xlu0 %7728
      %7730 = vrot.lane.b32.xlu0 %v7390, 54
      %v7731 = vpop.permute.xlu0 %7730
      %7732 = vrot.lane.b32.xlu0 %v7391, 54
      %v7733 = vpop.permute.xlu0 %7732
      %7734 = vrot.lane.b32.xlu0 %v7392, 54
      %v7735 = vpop.permute.xlu0 %7734
      %7736 = vrot.lane.b32.xlu0 %v7393, 54
      %v7737 = vpop.permute.xlu0 %7736
      %7738 = vrot.lane.b32.xlu0 %v7394, 54
      %v7739 = vpop.permute.xlu0 %7738
      %7740 = vrot.lane.b32.xlu0 %v7395, 54
      %v7741 = vpop.permute.xlu0 %7740
      %7742 = vrot.lane.b32.xlu0 %v7396, 54
      %v7743 = vpop.permute.xlu0 %7742
      %7744 = vrot.lane.b32.xlu0 %v7397, 54
      %v7745 = vpop.permute.xlu0 %7744
      %v7746 = vsel %vm852, %v7659, %v7661
      %v7747 = vsel %vm852, %v7661, %v7663
      %v7748 = vsel %vm852, %v7663, %v7665
      %v7749 = vsel %vm852, %v7665, %v7667
      %v7750 = vsel %vm852, %v7667, %v7669
      %v7751 = vsel %vm852, %v7669, %v7671
      %v7752 = vsel %vm852, %v7671, %v7673
      %v7753 = vsel %vm852, %v7673, %v7675
      %v7754 = vsel %vm852, %v7675, %v7677
      %v7755 = vsel %vm852, %v7677, %v7679
      %v7756 = vsel %vm852, %v7681, %v7683
      %v7757 = vsel %vm852, %v7683, %v7685
      %v7758 = vsel %vm852, %v7685, %v7687
      %v7759 = vsel %vm852, %v7687, %v7689
      %v7760 = vsel %vm852, %v7689, %v7691
      %v7761 = vsel %vm852, %v7691, %v7693
      %v7762 = vsel %vm852, %v7693, %v7695
      %v7763 = vsel %vm852, %v7695, %v7697
      %v7764 = vsel %vm852, %v7697, %v7699
      %v7765 = vsel %vm852, %v7699, %v7701
      %v7766 = vsel %vm852, %v7703, %v7705
      %v7767 = vsel %vm852, %v7705, %v7707
      %v7768 = vsel %vm852, %v7707, %v7709
      %v7769 = vsel %vm852, %v7709, %v7711
      %v7770 = vsel %vm852, %v7711, %v7713
      %v7771 = vsel %vm852, %v7713, %v7715
      %v7772 = vsel %vm852, %v7715, %v7717
      %v7773 = vsel %vm852, %v7717, %v7719
      %v7774 = vsel %vm852, %v7719, %v7721
      %v7775 = vsel %vm852, %v7721, %v7723
      %v7776 = vsel %vm852, %v7725, %v7727
      %v7777 = vsel %vm852, %v7727, %v7729
      %v7778 = vsel %vm852, %v7729, %v7731
      %v7779 = vsel %vm852, %v7731, %v7733
      %v7780 = vsel %vm852, %v7733, %v7735
      %v7781 = vsel %vm852, %v7735, %v7737
      %v7782 = vsel %vm852, %v7737, %v7739
      %v7783 = vsel %vm852, %v7739, %v7741
      %v7784 = vsel %vm852, %v7741, %v7743
      %v7785 = vsel %vm852, %v7743, %v7745
      %v7830 = vmax.f32 %v7614, %v7746
      %v7831 = vmax.f32 %v7615, %v7747
      %v7832 = vmax.f32 %v7616, %v7748
      %v7833 = vmax.f32 %v7617, %v7749
      %v7834 = vmax.f32 %v7618, %v7750
      %v7835 = vmax.f32 %v7619, %v7751
      %v7836 = vmax.f32 %v7620, %v7752
      %v7837 = vmax.f32 %v7621, %v7753
      %v7838 = vmax.f32 %v7622, %v7754
      %v7839 = vmax.f32 %v7623, %v7755
      %v7840 = vmax.f32 %v7624, %v7679
      %v7841 = vmax.f32 %v7625, %v7756
      %v7842 = vmax.f32 %v7626, %v7757
      %v7843 = vmax.f32 %v7627, %v7758
      %v7844 = vmax.f32 %v7628, %v7759
      %v7845 = vmax.f32 %v7629, %v7760
      %v7846 = vmax.f32 %v7630, %v7761
      %v7847 = vmax.f32 %v7631, %v7762
      %v7848 = vmax.f32 %v7632, %v7763
      %v7849 = vmax.f32 %v7633, %v7764
      %v7850 = vmax.f32 %v7634, %v7765
      %v7851 = vmax.f32 %v7635, %v7701
      %v7852 = vmax.f32 %v7636, %v7766
      %v7853 = vmax.f32 %v7637, %v7767
      %v7854 = vmax.f32 %v7638, %v7768
      %v7855 = vmax.f32 %v7639, %v7769
      %v7856 = vmax.f32 %v7640, %v7770
      %v7857 = vmax.f32 %v7641, %v7771
      %v7858 = vmax.f32 %v7642, %v7772
      %v7859 = vmax.f32 %v7643, %v7773
      %v7860 = vmax.f32 %v7644, %v7774
      %v7861 = vmax.f32 %v7645, %v7775
      %v7862 = vmax.f32 %v7646, %v7723
      %v7863 = vmax.f32 %v7647, %v7776
      %v7864 = vmax.f32 %v7648, %v7777
      %v7865 = vmax.f32 %v7649, %v7778
      %v7866 = vmax.f32 %v7650, %v7779
      %v7867 = vmax.f32 %v7651, %v7780
      %v7868 = vmax.f32 %v7652, %v7781
      %v7869 = vmax.f32 %v7653, %v7782
      %v7870 = vmax.f32 %v7654, %v7783
      %v7871 = vmax.f32 %v7655, %v7784
      %v7872 = vmax.f32 %v7656, %v7785
      %v7873 = vmax.f32 %v7657, %v7745
      %v7874 = vmax.f32 %v7830, 0.0
      %v7875 = vmax.f32 %v7831, 0.0
      %v7876 = vmax.f32 %v7832, 0.0
      %v7877 = vmax.f32 %v7833, 0.0
      %v7878 = vmax.f32 %v7834, 0.0
      %v7879 = vmax.f32 %v7835, 0.0
      %v7880 = vmax.f32 %v7836, 0.0
      %v7881 = vmax.f32 %v7837, 0.0
      %v7882 = vmax.f32 %v7838, 0.0
      %v7883 = vmax.f32 %v7839, 0.0
      %v7884 = vmax.f32 %v7840, 0.0
      %v7885 = vmax.f32 %v7841, 0.0
      %v7886 = vmax.f32 %v7842, 0.0
      %v7887 = vmax.f32 %v7843, 0.0
      %v7888 = vmax.f32 %v7844, 0.0
      %v7889 = vmax.f32 %v7845, 0.0
      %v7890 = vmax.f32 %v7846, 0.0
      %v7891 = vmax.f32 %v7847, 0.0
      %v7892 = vmax.f32 %v7848, 0.0
      %v7893 = vmax.f32 %v7849, 0.0
      %v7894 = vmax.f32 %v7850, 0.0
      %v7895 = vmax.f32 %v7851, 0.0
      %v7896 = vmax.f32 %v7852, 0.0
      %v7897 = vmax.f32 %v7853, 0.0
      %v7898 = vmax.f32 %v7854, 0.0
      %v7899 = vmax.f32 %v7855, 0.0
      %v7900 = vmax.f32 %v7856, 0.0
      %v7901 = vmax.f32 %v7857, 0.0
      %v7902 = vmax.f32 %v7858, 0.0
      %v7903 = vmax.f32 %v7859, 0.0
      %v7904 = vmax.f32 %v7860, 0.0
      %v7905 = vmax.f32 %v7861, 0.0
      %v7906 = vmax.f32 %v7862, 0.0
      %v7907 = vmax.f32 %v7863, 0.0
      %v7908 = vmax.f32 %v7864, 0.0
      %v7909 = vmax.f32 %v7865, 0.0
      %v7910 = vmax.f32 %v7866, 0.0
      %v7911 = vmax.f32 %v7867, 0.0
      %v7912 = vmax.f32 %v7868, 0.0
      %v7913 = vmax.f32 %v7869, 0.0
      %v7914 = vmax.f32 %v7870, 0.0
      %v7915 = vmax.f32 %v7871, 0.0
      %v7916 = vmax.f32 %v7872, 0.0
      %v7917 = vmax.f32 %v7873, 0.0
      %v7918 = vmin.f32 %v7874, 6.4
      %v7919 = vmin.f32 %v7875, 6.4
      %v7920 = vmin.f32 %v7876, 6.4
      %v7921 = vmin.f32 %v7877, 6.4
      %v7922 = vmin.f32 %v7878, 6.4
      %v7923 = vmin.f32 %v7879, 6.4
      %v7924 = vmin.f32 %v7880, 6.4
      %v7925 = vmin.f32 %v7881, 6.4
      %v7926 = vmin.f32 %v7882, 6.4
      %v7927 = vmin.f32 %v7883, 6.4
      %v7928 = vmin.f32 %v7884, 6.4
      %v7929 = vmin.f32 %v7885, 6.4
      %v7930 = vmin.f32 %v7886, 6.4
      %v7931 = vmin.f32 %v7887, 6.4
      %v7932 = vmin.f32 %v7888, 6.4
      %v7933 = vmin.f32 %v7889, 6.4
      %v7934 = vmin.f32 %v7890, 6.4
      %v7935 = vmin.f32 %v7891, 6.4
      %v7936 = vmin.f32 %v7892, 6.4
      %v7937 = vmin.f32 %v7893, 6.4
      %v7938 = vmin.f32 %v7894, 6.4
      %v7939 = vmin.f32 %v7895, 6.4
      %v7940 = vmin.f32 %v7896, 6.4
      %v7941 = vmin.f32 %v7897, 6.4
      %v7942 = vmin.f32 %v7898, 6.4
      %v7943 = vmin.f32 %v7899, 6.4
      %v7944 = vmin.f32 %v7900, 6.4
      %v7945 = vmin.f32 %v7901, 6.4
      %v7946 = vmin.f32 %v7902, 6.4
      %v7947 = vmin.f32 %v7903, 6.4
      %v7948 = vmin.f32 %v7904, 6.4
      %v7949 = vmin.f32 %v7905, 6.4
      %v7950 = vmin.f32 %v7906, 6.4
      %v7951 = vmin.f32 %v7907, 6.4
      %v7952 = vmin.f32 %v7908, 6.4
      %v7953 = vmin.f32 %v7909, 6.4
      %v7954 = vmin.f32 %v7910, 6.4
      %v7955 = vmin.f32 %v7911, 6.4
      %v7956 = vmin.f32 %v7912, 6.4
      %v7957 = vmin.f32 %v7913, 6.4
      %v7958 = vmin.f32 %v7914, 6.4
      %v7959 = vmin.f32 %v7915, 6.4
      %v7960 = vmin.f32 %v7916, 6.4
      %v7961 = vmin.f32 %v7917, 6.4
      %8006 = vrot.lane.b32.xlu0 %v7918, 126
      %v8007 = vpop.permute.xlu0 %8006
      %8008 = vrot.lane.b32.xlu0 %v7919, 126
      %v8009 = vpop.permute.xlu0 %8008
      %8010 = vrot.lane.b32.xlu0 %v7920, 126
      %v8011 = vpop.permute.xlu0 %8010
      %8012 = vrot.lane.b32.xlu0 %v7921, 126
      %v8013 = vpop.permute.xlu0 %8012
      %8014 = vrot.lane.b32.xlu0 %v7922, 126
      %v8015 = vpop.permute.xlu0 %8014
      %8016 = vrot.lane.b32.xlu0 %v7923, 126
      %v8017 = vpop.permute.xlu0 %8016
      %8018 = vrot.lane.b32.xlu0 %v7924, 126
      %v8019 = vpop.permute.xlu0 %8018
      %8020 = vrot.lane.b32.xlu0 %v7925, 126
      %v8021 = vpop.permute.xlu0 %8020
      %8022 = vrot.lane.b32.xlu0 %v7926, 126
      %v8023 = vpop.permute.xlu0 %8022
      %8024 = vrot.lane.b32.xlu0 %v7927, 126
      %v8025 = vpop.permute.xlu0 %8024
      %8026 = vrot.lane.b32.xlu0 %v7928, 126
      %v8027 = vpop.permute.xlu0 %8026
      %8028 = vrot.lane.b32.xlu0 %v7929, 126
      %v8029 = vpop.permute.xlu0 %8028
      %8030 = vrot.lane.b32.xlu0 %v7930, 126
      %v8031 = vpop.permute.xlu0 %8030
      %8032 = vrot.lane.b32.xlu0 %v7931, 126
      %v8033 = vpop.permute.xlu0 %8032
      %8034 = vrot.lane.b32.xlu0 %v7932, 126
      %v8035 = vpop.permute.xlu0 %8034
      %8036 = vrot.lane.b32.xlu0 %v7933, 126
      %v8037 = vpop.permute.xlu0 %8036
      %8038 = vrot.lane.b32.xlu0 %v7934, 126
      %v8039 = vpop.permute.xlu0 %8038
      %8040 = vrot.lane.b32.xlu0 %v7935, 126
      %v8041 = vpop.permute.xlu0 %8040
      %8042 = vrot.lane.b32.xlu0 %v7936, 126
      %v8043 = vpop.permute.xlu0 %8042
      %8044 = vrot.lane.b32.xlu0 %v7937, 126
      %v8045 = vpop.permute.xlu0 %8044
      %8046 = vrot.lane.b32.xlu0 %v7938, 126
      %v8047 = vpop.permute.xlu0 %8046
      %8048 = vrot.lane.b32.xlu0 %v7939, 126
      %v8049 = vpop.permute.xlu0 %8048
      %8050 = vrot.lane.b32.xlu0 %v7940, 126
      %v8051 = vpop.permute.xlu0 %8050
      %8052 = vrot.lane.b32.xlu0 %v7941, 126
      %v8053 = vpop.permute.xlu0 %8052
      %8054 = vrot.lane.b32.xlu0 %v7942, 126
      %v8055 = vpop.permute.xlu0 %8054
      %8056 = vrot.lane.b32.xlu0 %v7943, 126
      %v8057 = vpop.permute.xlu0 %8056
      %8058 = vrot.lane.b32.xlu0 %v7944, 126
      %v8059 = vpop.permute.xlu0 %8058
      %8060 = vrot.lane.b32.xlu0 %v7945, 126
      %v8061 = vpop.permute.xlu0 %8060
      %8062 = vrot.lane.b32.xlu0 %v7946, 126
      %v8063 = vpop.permute.xlu0 %8062
      %8064 = vrot.lane.b32.xlu0 %v7947, 126
      %v8065 = vpop.permute.xlu0 %8064
      %8066 = vrot.lane.b32.xlu0 %v7948, 126
      %v8067 = vpop.permute.xlu0 %8066
      %8068 = vrot.lane.b32.xlu0 %v7949, 126
      %v8069 = vpop.permute.xlu0 %8068
      %8070 = vrot.lane.b32.xlu0 %v7950, 126
      %v8071 = vpop.permute.xlu0 %8070
      %8072 = vrot.lane.b32.xlu0 %v7951, 126
      %v8073 = vpop.permute.xlu0 %8072
      %8074 = vrot.lane.b32.xlu0 %v7952, 126
      %v8075 = vpop.permute.xlu0 %8074
      %8076 = vrot.lane.b32.xlu0 %v7953, 126
      %v8077 = vpop.permute.xlu0 %8076
      %8078 = vrot.lane.b32.xlu0 %v7954, 126
      %v8079 = vpop.permute.xlu0 %8078
      %8080 = vrot.lane.b32.xlu0 %v7955, 126
      %v8081 = vpop.permute.xlu0 %8080
      %8082 = vrot.lane.b32.xlu0 %v7956, 126
      %v8083 = vpop.permute.xlu0 %8082
      %8084 = vrot.lane.b32.xlu0 %v7957, 126
      %v8085 = vpop.permute.xlu0 %8084
      %8086 = vrot.lane.b32.xlu0 %v7958, 126
      %v8087 = vpop.permute.xlu0 %8086
      %8088 = vrot.lane.b32.xlu0 %v7959, 126
      %v8089 = vpop.permute.xlu0 %8088
      %8090 = vrot.lane.b32.xlu0 %v7960, 126
      %v8091 = vpop.permute.xlu0 %8090
      %8092 = vrot.lane.b32.xlu0 %v7961, 126
      %v8093 = vpop.permute.xlu0 %8092
      %v8094 = vsel %vm312, %v8007, %v8009
      %v8095 = vsel %vm312, %v8009, %v8011
      %v8096 = vsel %vm312, %v8011, %v8013
      %v8097 = vsel %vm312, %v8013, %v8015
      %v8098 = vsel %vm312, %v8015, %v8017
      %v8099 = vsel %vm312, %v8017, %v8019
      %v8100 = vsel %vm312, %v8019, %v8021
      %v8101 = vsel %vm312, %v8021, %v8023
      %v8102 = vsel %vm312, %v8023, %v8025
      %v8103 = vsel %vm312, %v8025, %v8027
      %v8104 = vsel %vm312, %v8029, %v8031
      %v8105 = vsel %vm312, %v8031, %v8033
      %v8106 = vsel %vm312, %v8033, %v8035
      %v8107 = vsel %vm312, %v8035, %v8037
      %v8108 = vsel %vm312, %v8037, %v8039
      %v8109 = vsel %vm312, %v8039, %v8041
      %v8110 = vsel %vm312, %v8041, %v8043
      %v8111 = vsel %vm312, %v8043, %v8045
      %v8112 = vsel %vm312, %v8045, %v8047
      %v8113 = vsel %vm312, %v8047, %v8049
      %v8114 = vsel %vm312, %v8051, %v8053
      %v8115 = vsel %vm312, %v8053, %v8055
      %v8116 = vsel %vm312, %v8055, %v8057
      %v8117 = vsel %vm312, %v8057, %v8059
      %v8118 = vsel %vm312, %v8059, %v8061
      %v8119 = vsel %vm312, %v8061, %v8063
      %v8120 = vsel %vm312, %v8063, %v8065
      %v8121 = vsel %vm312, %v8065, %v8067
      %v8122 = vsel %vm312, %v8067, %v8069
      %v8123 = vsel %vm312, %v8069, %v8071
      %v8124 = vsel %vm312, %v8073, %v8075
      %v8125 = vsel %vm312, %v8075, %v8077
      %v8126 = vsel %vm312, %v8077, %v8079
      %v8127 = vsel %vm312, %v8079, %v8081
      %v8128 = vsel %vm312, %v8081, %v8083
      %v8129 = vsel %vm312, %v8083, %v8085
      %v8130 = vsel %vm312, %v8085, %v8087
      %v8131 = vsel %vm312, %v8087, %v8089
      %v8132 = vsel %vm312, %v8089, %v8091
      %v8133 = vsel %vm312, %v8091, %v8093
      %8174 = vst [vmem:[%s170] sm:$0xff] %v8094
      %8175 = vst [vmem:[%s170 + $0x8] sm:$0xff] %v8095
      %8176 = vst [vmem:[%s170 + $0x10] sm:$0xff] %v8096
      %8177 = vst [vmem:[%s170 + $0x18] sm:$0xff] %v8097
      %8178 = vst [vmem:[%s170 + $0x20] sm:$0xff] %v8098
      %8179 = vst [vmem:[%s170 + $0x28] sm:$0xff] %v8099
      %8180 = vst [vmem:[%s170 + $0x30] sm:$0xff] %v8100
      %8181 = vst [vmem:[%s170 + $0x38] sm:$0xff] %v8101
      %8182 = vst [vmem:[%s170 + $0x40] sm:$0xff] %v8102
      %8183 = vst [vmem:[%s170 + $0x48] sm:$0xff] %v8103
      %8184 = vst [vmem:[%s170 + $0x50] sm:$0xff] %v8104
      %8185 = vst [vmem:[%s170 + $0x58] sm:$0xff] %v8105
      %8186 = vst [vmem:[%s170 + $0x60] sm:$0xff] %v8106
      %8187 = vst [vmem:[%s170 + $0x68] sm:$0xff] %v8107
      %8188 = vst [vmem:[%s170 + $0x70] sm:$0xff] %v8108
      %8189 = vst [vmem:[%s170 + $0x78] sm:$0xff] %v8109
      %8190 = vst [vmem:[%s170 + $0x80] sm:$0xff] %v8110
      %8191 = vst [vmem:[%s170 + $0x88] sm:$0xff] %v8111
      %8192 = vst [vmem:[%s170 + $0x90] sm:$0xff] %v8112
      %8193 = vst [vmem:[%s170 + $0x98] sm:$0xff] %v8113
      %8194 = vst [vmem:[%s170 + $0xa0] sm:$0xff] %v8114
      %8195 = vst [vmem:[%s170 + $0xa8] sm:$0xff] %v8115
      %8196 = vst [vmem:[%s170 + $0xb0] sm:$0xff] %v8116
      %8197 = vst [vmem:[%s170 + $0xb8] sm:$0xff] %v8117
      %8198 = vst [vmem:[%s170 + $0xc0] sm:$0xff] %v8118
      %8199 = vst [vmem:[%s170 + $0xc8] sm:$0xff] %v8119
      %8200 = vst [vmem:[%s170 + $0xd0] sm:$0xff] %v8120
      %8201 = vst [vmem:[%s170 + $0xd8] sm:$0xff] %v8121
      %8202 = vst [vmem:[%s170 + $0xe0] sm:$0xff] %v8122
      %8203 = vst [vmem:[%s170 + $0xe8] sm:$0xff] %v8123
      %8204 = vst [vmem:[%s170 + $0xf0] sm:$0xff] %v8124
      %8205 = vst [vmem:[%s170 + $0xf8] sm:$0xff] %v8125
      %8206 = vst [vmem:[%s170 + $0x100] sm:$0xff] %v8126
      %8207 = vst [vmem:[%s170 + $0x108] sm:$0xff] %v8127
      %8208 = vst [vmem:[%s170 + $0x110] sm:$0xff] %v8128
      %8209 = vst [vmem:[%s170 + $0x118] sm:$0xff] %v8129
      %8210 = vst [vmem:[%s170 + $0x120] sm:$0xff] %v8130
      %8211 = vst [vmem:[%s170 + $0x128] sm:$0xff] %v8131
      %8212 = vst [vmem:[%s170 + $0x130] sm:$0xff] %v8132
      %8213 = vst [vmem:[%s170 + $0x138] sm:$0xff] %v8133
      %p8214 = scmp.lt.s32.totalorder %s14, 1
      %s8215 = scalar_select %p8214, %s14, 1
      %s8216 = smul.addr %s8215, 40
      %s8217 = smul.addr %s8216, 8
      %s8218 = scalar_lea.vmem %s3, %s8217
      // Predicated region
      $region33: #{model_forward.1} parent=31 // pred_check
        %p8219 = pneg %p100
      $region34: #{model_forward.1} parent=31 // pred_check_branch
        %8221 = sbr.rel (%p8219) target = $region36
      $region35: #{model_forward.1} parent=31 // pred_region
        _
      $region36: #{model_forward.1} parent=31 // pred_fallthru
        _
    $region32: #{model_forward.1} parent=5 // pred_fallthru
      _
    %p8222 = scmp.le.s32.totalorder 2, %s9
    // Predicated region
    $region37: #{model_forward.1} parent=5 // pred_check
      %p8223 = pneg %p8222
    $region38: #{model_forward.1} parent=5 // pred_check_branch
      %8225 = sbr.rel (%p8223) target = $region40
    $region39: #{model_forward.1} parent=5 // pred_region
      %s8226 = ssub.s32 %s9, 2
      // Predicated region
      $region41: #{model_forward.1} parent=39 // pred_check
        %p8227 = pneg %p106
      $region42: #{model_forward.1} parent=39 // pred_check_branch
        %8229 = sbr.rel (%p8227) target = $region44
      $region43: #{model_forward.1} parent=39 // pred_region
        %p8230 = scmp.lt.s32.totalorder %s15, 1
        %s8231 = scalar_select %p8230, %s15, 1
        %s8232 = smul.addr %s8231, 40
        %s8233 = smul.addr %s8232, 8
        %s8234 = scalar_lea.vmem %s3, %s8233
      $region44: #{model_forward.1} parent=39 // pred_fallthru
        _
    $region40: #{model_forward.1} parent=5 // pred_fallthru
      _
  $region6: #{model_forward.1} parent=0 // loop_footer
    %s13 = sadd.s32 1, %s9
  $region7: #{model_forward.1} parent=0 // loop_footer_branch
    %8 = sbr.rel target = $region3
  $region8: #{model_forward.1} parent=0 // loop_exit
    _

</llo_original>
